<compile_context>
chip_gen: v7x
topology: tpu7x:2x2x1
jax: 0.10.0
libtpu: 0.0.40
codegen_flags: <defaults>
</compile_context>

<pallas_src>
import functools

import jax
import jax.numpy as jnp
from jax.experimental import pallas as pl
from jax.experimental.pallas import tpu as pltpu


def _sigmoid(x):
    # exp + reciprocal both land on the EUP slot (cheap next to VPU/MXU work).
    return pl.reciprocal(1.0 + jnp.exp(-x), approx=True)


# --------------------------------------------------------------------------
# Fused bottleneck kernel (one grid step == one batch element)
# --------------------------------------------------------------------------
def _bottleneck_kernel(x_ref, w1t_ref, s1_ref, b1_ref,
                       w2r_ref, s2_ref, b2_ref,
                       w3t_ref, s3_ref, b3_ref,
                       widt_ref, sid_ref, bid_ref,
                       wca1_ref, wca2_ref, wsp_ref,
                       o_ref,
                       pad2_ref, pad7_ref,
                       *, H, W, use_cbam, use_projection, mxu_dtype):
    f32 = jnp.float32
    HW = H * W
    Cmid = w1t_ref.shape[0]
    Cexp = w3t_ref.shape[0]

    x_cf = x_ref[0].astype(mxu_dtype)                        # (Cin, HW) channels-first

    # ---- conv1 (1x1) + BN + ReLU : lane-dense matmul (Cmid, Cin) @ (Cin, HW) ----
    h1 = jnp.dot(w1t_ref[...].astype(mxu_dtype), x_cf,
                 preferred_element_type=f32)                 # (Cmid, HW)
    h1 = jnp.maximum(h1 * s1_ref[...] + b1_ref[...], 0.0)

    # ---- conv2 (3x3, pad=1) + BN + ReLU : pad in VMEM, single im2col matmul ----
    pad2_ref[...] = jnp.zeros_like(pad2_ref)
    pad2_ref[1:H + 1, 1:W + 1, :] = h1.T.reshape(H, W, Cmid)
    cols = [pad2_ref[kh:kh + H, kw:kw + W, :].reshape(HW, Cmid)
            for kh in range(3) for kw in range(3)]
    col2 = jnp.concatenate(cols, axis=1).astype(mxu_dtype)   # (HW, 9*Cmid)
    h2 = jnp.dot(col2, w2r_ref[...].astype(mxu_dtype),
                 preferred_element_type=f32).T               # (Cmid, HW)
    h2 = jnp.maximum(h2 * s2_ref[...] + b2_ref[...], 0.0)

    # ---- conv3 (1x1) + BN (no ReLU) ----
    h3 = jnp.dot(w3t_ref[...].astype(mxu_dtype), h2.astype(mxu_dtype),
                 preferred_element_type=f32)                 # (Cexp, HW)
    h3 = h3 * s3_ref[...] + b3_ref[...]

    if use_cbam:
        # ---- CBAM channel attention: avg/max pool over HW -> shared MLP -> sigmoid ----
        avg_c = jnp.mean(h3, axis=1, keepdims=True)          # (Cexp, 1)
        max_c = jnp.max(h3, axis=1, keepdims=True)           # (Cexp, 1)
        pooled = jnp.concatenate([avg_c, max_c], axis=1)     # (Cexp, 2)
        z = jnp.maximum(
            jnp.dot(wca1_ref[...], pooled, preferred_element_type=f32), 0.0)   # (Cr, 2)
        logit = jnp.dot(wca2_ref[...], z, preferred_element_type=f32)          # (Cexp, 2)
        att_c = _sigmoid(logit[:, 0:1] + logit[:, 1:2])      # (Cexp, 1)
        h3 = h3 * att_c

        # ---- CBAM spatial attention: channel avg/max -> 7x7 conv (im2col matmul) ----
        s_avg = jnp.mean(h3, axis=0, keepdims=True)          # (1, HW)
        s_max = jnp.max(h3, axis=0, keepdims=True)           # (1, HW)
        smap = jnp.concatenate([s_avg, s_max], axis=0).T     # (HW, 2): ch0=avg, ch1=max
        pad7_ref[...] = jnp.zeros_like(pad7_ref)
        pad7_ref[3:3 + H, 3:3 + W, :] = smap.reshape(H, W, 2)
        cols7 = [pad7_ref[kh:kh + H, kw:kw + W, :].reshape(HW, 2)
                 for kh in range(7) for kw in range(7)]
        col7 = jnp.concatenate(cols7, axis=1)                # (HW, 98)
        att_sp = _sigmoid(jnp.dot(col7, wsp_ref[...],
                                  preferred_element_type=f32))   # (HW, 1)
        h3 = h3 * jnp.broadcast_to(att_sp, (HW, Cexp)).T     # (Cexp, HW)

    # ---- identity / projection branch (1x1 conv + BN) ----
    if use_projection:
        idn = jnp.dot(widt_ref[...].astype(mxu_dtype), x_cf,
                      preferred_element_type=f32)            # (Cexp, HW)
        idn = idn * sid_ref[...] + bid_ref[...]
    else:
        idn = x_ref[0].astype(f32)

    # Final residual add + ReLU, stored lane-dense directly in NCHW-flat layout.
    o_ref[0] = jnp.maximum(h3 + idn, 0.0).astype(o_ref.dtype)


# --------------------------------------------------------------------------
# Wrapper: one pallas_call for the whole block
# --------------------------------------------------------------------------
def bottleneck_forward(x_nchw, p, *, stride=1, use_cbam=True, mxu_dtype=jnp.float32):
    N, Cin, H, W = x_nchw.shape
    # Strided 1x1 conv == subsample first, then 1x1 conv (stride is on conv1 / identity).
    xs = x_nchw[:, :, ::stride, ::stride]
    Hs, Ws = xs.shape[2], xs.shape[3]
    HW = Hs * Ws
    x_flat = xs.reshape(N, Cin, HW)          # free reshape: NCHW is already contiguous

    Cmid = p['w1t'].shape[0]
    Cexp = p['w3t'].shape[0]
    use_projection = (stride != 1) or (Cin != Cexp)

    def rep(a):  # full-array block, replicated across the batch grid
        return pl.BlockSpec(a.shape, lambda n, _nd=a.ndim: (0,) * _nd)

    weights = [p['w1t'], p['s1'], p['b1'],
               p['w2r'], p['s2'], p['b2'],
               p['w3t'], p['s3'], p['b3'],
               p['widt'], p['sid'], p['bid'],
               p['wca1t'], p['wca2t'], p['wsp']]

    kernel = functools.partial(
        _bottleneck_kernel, H=Hs, W=Ws, use_cbam=use_cbam,
        use_projection=use_projection, mxu_dtype=mxu_dtype)

    out = pl.pallas_call(
        kernel,
        out_shape=jax.ShapeDtypeStruct((N, Cexp, HW), x_nchw.dtype),
        grid=(N,),
        in_specs=[pl.BlockSpec((1, Cin, HW), lambda n: (n, 0, 0))]
                 + [rep(w) for w in weights],
        out_specs=pl.BlockSpec((1, Cexp, HW), lambda n: (n, 0, 0)),
        scratch_shapes=[
            pltpu.VMEM((Hs + 2, Ws + 2, Cmid), jnp.float32),   # conv2 zero-pad buffer
            pltpu.VMEM((Hs + 6, Ws + 6, 2), jnp.float32),      # 7x7 spatial-att pad buffer
        ],
        compiler_params=pltpu.CompilerParams(
            dimension_semantics=("parallel",)),                # megacore over batch
    )(x_flat, *weights)

    return out.reshape(N, Cexp, Hs, Ws)                        # free reshape to NCHW


# --------------------------------------------------------------------------
# Synthetic parameters in PyTorch layout, then packed into kernel layout
# --------------------------------------------------------------------------
def init_torch_params(key, in_channels, out_channels, expansion=4, reduction=4):
    Cin, Cmid = in_channels, out_channels
    Cexp = out_channels * expansion
    Cr = max(Cexp // reduction, 1)
    ks = jax.random.split(key, 11)

    def conv(k, cout, cin, kh, kw):
        return jax.random.normal(k, (cout, cin, kh, kw), jnp.float32) * 0.1

    def bn(k, c):
        k1, k2, k3, k4 = jax.random.split(k, 4)
        gamma = jax.random.uniform(k1, (c,), jnp.float32, 0.5, 1.5)
        beta = jax.random.normal(k2, (c,), jnp.float32) * 0.1
        mean = jax.random.normal(k3, (c,), jnp.float32) * 0.1
        var = jax.random.uniform(k4, (c,), jnp.float32, 0.5, 1.5)
        return gamma, beta, mean, var

    return {
        'conv1_w': conv(ks[0], Cmid, Cin, 1, 1), 'bn1': bn(ks[1], Cmid),
        'conv2_w': conv(ks[2], Cmid, Cmid, 3, 3), 'bn2': bn(ks[3], Cmid),
        'conv3_w': conv(ks[4], Cexp, Cmid, 1, 1), 'bn3': bn(ks[5], Cexp),
        'id_conv_w': conv(ks[6], Cexp, Cin, 1, 1), 'id_bn': bn(ks[7], Cexp),
        'ca_w1': conv(ks[8], Cr, Cexp, 1, 1),      # CBAM shared MLP (bias-free)
        'ca_w2': conv(ks[9], Cexp, Cr, 1, 1),
        'sa_w': conv(ks[10], 1, 2, 7, 7),          # CBAM spatial conv, input = [avg, max]
    }


def pack_params(tp, eps=1e-5):
    def bn_fuse(bn):
        gamma, beta, mean, var = bn
        scale = gamma / jnp.sqrt(var + eps)
        return scale.reshape(-1, 1), (beta - mean * scale).reshape(-1, 1)

    Cmid = tp['conv2_w'].shape[0]
    p = {}
    p['w1t'] = tp['conv1_w'][:, :, 0, 0]                                    # (Cmid, Cin)
    p['s1'], p['b1'] = bn_fuse(tp['bn1'])
    # im2col column order: tap-major (kh*3+kw), input-channel-minor.
    p['w2r'] = jnp.transpose(tp['conv2_w'], (2, 3, 1, 0)).reshape(9 * Cmid, Cmid)
    p['s2'], p['b2'] = bn_fuse(tp['bn2'])
    p['w3t'] = tp['conv3_w'][:, :, 0, 0]                                    # (Cexp, Cmid)
    p['s3'], p['b3'] = bn_fuse(tp['bn3'])
    p['widt'] = tp['id_conv_w'][:, :, 0, 0]                                 # (Cexp, Cin)
    p['sid'], p['bid'] = bn_fuse(tp['id_bn'])
    p['wca1t'] = tp['ca_w1'][:, :, 0, 0]                                    # (Cr, Cexp)
    p['wca2t'] = tp['ca_w2'][:, :, 0, 0]                                    # (Cexp, Cr)
    # 7x7 spatial conv as a (98, 1) im2col weight: tap-major, channel([avg,max])-minor.
    p['wsp'] = jnp.transpose(tp['sa_w'][0], (1, 2, 0)).reshape(98, 1)
    return p


if __name__ == "__main__":
    key = jax.random.PRNGKey(0)
    kx, kp = jax.random.split(key)

    # BottleNeck(in_channels=4, out_channels=4, expansion=4, stride=1, use_cbam=True)
    N, Cin, H, W = 2, 4, 16, 16
    out_channels, expansion, stride = 4, 4, 1

    x = jax.random.normal(kx, (N, Cin, H, W), jnp.float32)
    torch_params = init_torch_params(kp, Cin, out_channels, expansion)
    params = pack_params(torch_params)

    fwd = jax.jit(functools.partial(bottleneck_forward, stride=stride, use_cbam=True))
    out = jax.block_until_ready(fwd(x, params))

    assert out.shape == (N, out_channels * expansion, H, W), out.shape
    assert bool(jnp.all(jnp.isfinite(out)))
    print("KERNEL_OK")
</pallas_src>

<mosaic_0001>
module attributes {stable_mosaic.version = 11 : i64} {
  func.func @_bottleneck_kernel(%arg0: i32, %arg1: memref<1x4x256xf32, #tpu.memory_space<vmem>>, %arg2: memref<4x4xf32, #tpu.memory_space<vmem>>, %arg3: memref<4x1xf32, #tpu.memory_space<vmem>>, %arg4: memref<4x1xf32, #tpu.memory_space<vmem>>, %arg5: memref<36x4xf32, #tpu.memory_space<vmem>>, %arg6: memref<4x1xf32, #tpu.memory_space<vmem>>, %arg7: memref<4x1xf32, #tpu.memory_space<vmem>>, %arg8: memref<16x4xf32, #tpu.memory_space<vmem>>, %arg9: memref<16x1xf32, #tpu.memory_space<vmem>>, %arg10: memref<16x1xf32, #tpu.memory_space<vmem>>, %arg11: memref<16x4xf32, #tpu.memory_space<vmem>>, %arg12: memref<16x1xf32, #tpu.memory_space<vmem>>, %arg13: memref<16x1xf32, #tpu.memory_space<vmem>>, %arg14: memref<4x16xf32, #tpu.memory_space<vmem>>, %arg15: memref<16x4xf32, #tpu.memory_space<vmem>>, %arg16: memref<98x1xf32, #tpu.memory_space<vmem>>, %arg17: memref<1x16x256xf32, #tpu.memory_space<vmem>>, %arg18: memref<18x18x4xf32, #tpu.memory_space<vmem>>, %arg19: memref<22x22x2xf32, #tpu.memory_space<vmem>>) attributes {dimension_semantics = [#tpu.dimension_semantics<parallel>], iteration_bounds = array<i64: 2>, scalar_prefetch = 0 : i64, scratch_operands = 2 : i64, tpu.core_type = #tpu.core_type<tc>, window_params = [{transform_indices = @transform_0, window_bounds = array<i64: 1, 4, 256>}, {pipeline_mode = #tpu.pipeline_mode<synchronous>, transform_indices = @transform_1, window_bounds = array<i64: 4, 4>}, {pipeline_mode = #tpu.pipeline_mode<synchronous>, transform_indices = @transform_2, window_bounds = array<i64: 4, 1>}, {pipeline_mode = #tpu.pipeline_mode<synchronous>, transform_indices = @transform_3, window_bounds = array<i64: 4, 1>}, {pipeline_mode = #tpu.pipeline_mode<synchronous>, transform_indices = @transform_4, window_bounds = array<i64: 36, 4>}, {pipeline_mode = #tpu.pipeline_mode<synchronous>, transform_indices = @transform_5, window_bounds = array<i64: 4, 1>}, {pipeline_mode = #tpu.pipeline_mode<synchronous>, transform_indices = @transform_6, window_bounds = array<i64: 4, 1>}, {pipeline_mode = #tpu.pipeline_mode<synchronous>, transform_indices = @transform_7, window_bounds = array<i64: 16, 4>}, {pipeline_mode = #tpu.pipeline_mode<synchronous>, transform_indices = @transform_8, window_bounds = array<i64: 16, 1>}, {pipeline_mode = #tpu.pipeline_mode<synchronous>, transform_indices = @transform_9, window_bounds = array<i64: 16, 1>}, {pipeline_mode = #tpu.pipeline_mode<synchronous>, transform_indices = @transform_10, window_bounds = array<i64: 16, 4>}, {pipeline_mode = #tpu.pipeline_mode<synchronous>, transform_indices = @transform_11, window_bounds = array<i64: 16, 1>}, {pipeline_mode = #tpu.pipeline_mode<synchronous>, transform_indices = @transform_12, window_bounds = array<i64: 16, 1>}, {pipeline_mode = #tpu.pipeline_mode<synchronous>, transform_indices = @transform_13, window_bounds = array<i64: 4, 16>}, {pipeline_mode = #tpu.pipeline_mode<synchronous>, transform_indices = @transform_14, window_bounds = array<i64: 16, 4>}, {pipeline_mode = #tpu.pipeline_mode<synchronous>, transform_indices = @transform_15, window_bounds = array<i64: 98, 1>}, {transform_indices = @transform_16, window_bounds = array<i64: 1, 16, 256>}]} {
    %c0 = arith.constant 0 : index
    %c0_0 = arith.constant 0 : index
    %c0_1 = arith.constant 0 : index
    %0 = vector.load %arg1[%c0, %c0_0, %c0_1] : memref<1x4x256xf32, #tpu.memory_space<vmem>>, vector<1x4x256xf32>
    %1 = vector.shape_cast %0 : vector<1x4x256xf32> to vector<4x256xf32>
    %c0_2 = arith.constant 0 : index
    %c0_3 = arith.constant 0 : index
    %2 = vector.load %arg2[%c0_2, %c0_3] : memref<4x4xf32, #tpu.memory_space<vmem>>, vector<4x4xf32>
    %cst = arith.constant dense<0.000000e+00> : vector<4x256xf32>
    %3 = tpu.matmul %2, %1, %cst {dimension_numbers = #tpu.dot_dimension_numbers<[1], [0], [0], [1], [0, 0, 1, 1], [], []>} : vector<4x4xf32>, vector<4x256xf32>, vector<4x256xf32> -> vector<4x256xf32>
    %c0_4 = arith.constant 0 : index
    %c0_5 = arith.constant 0 : index
    %4 = vector.load %arg3[%c0_4, %c0_5] : memref<4x1xf32, #tpu.memory_space<vmem>>, vector<4x1xf32>
    %5 = vector.broadcast %4 : vector<4x1xf32> to vector<4x256xf32>
    %6 = arith.mulf %3, %5 : vector<4x256xf32>
    %c0_6 = arith.constant 0 : index
    %c0_7 = arith.constant 0 : index
    %7 = vector.load %arg4[%c0_6, %c0_7] : memref<4x1xf32, #tpu.memory_space<vmem>>, vector<4x1xf32>
    %8 = vector.broadcast %7 : vector<4x1xf32> to vector<4x256xf32>
    %9 = arith.addf %6, %8 : vector<4x256xf32>
    %cst_8 = arith.constant 0.000000e+00 : f32
    %10 = vector.broadcast %cst_8 : f32 to vector<4x256xf32>
    %11 = arith.maximumf %9, %10 : vector<4x256xf32>
    %cst_9 = arith.constant 0.000000e+00 : f32
    %12 = vector.broadcast %cst_9 : f32 to vector<18x18x4xf32>
    %c0_10 = arith.constant 0 : index
    %c0_11 = arith.constant 0 : index
    %c0_12 = arith.constant 0 : index
    %13 = vector.load %arg18[%c0_10, %c0_11, %c0_12] : memref<18x18x4xf32, #tpu.memory_space<vmem>>, vector<18x18x4xf32>
    tpu.vector_store %arg18[%c0_10, %c0_11, %c0_12], %12 {strides = array<i32>} : memref<18x18x4xf32, #tpu.memory_space<vmem>>, vector<18x18x4xf32>,
    %14 = tpu.transpose %11, [1, 0] : vector<4x256xf32> -> vector<256x4xf32>
    %15 = vector.shape_cast %14 : vector<256x4xf32> to vector<16x16x4xf32>
    %c1 = arith.constant 1 : index
    %c1_13 = arith.constant 1 : index
    %c0_14 = arith.constant 0 : index
    %16 = vector.load %arg18[%c1, %c1_13, %c0_14] : memref<18x18x4xf32, #tpu.memory_space<vmem>>, vector<16x16x4xf32>
    tpu.vector_store %arg18[%c1, %c1_13, %c0_14], %15 {strides = array<i32>} : memref<18x18x4xf32, #tpu.memory_space<vmem>>, vector<16x16x4xf32>,
    %c0_15 = arith.constant 0 : index
    %c0_16 = arith.constant 0 : index
    %c0_17 = arith.constant 0 : index
    %17 = vector.load %arg18[%c0_15, %c0_16, %c0_17] : memref<18x18x4xf32, #tpu.memory_space<vmem>>, vector<16x16x4xf32>
    %18 = vector.shape_cast %17 : vector<16x16x4xf32> to vector<256x4xf32>
    %c0_18 = arith.constant 0 : index
    %c1_19 = arith.constant 1 : index
    %c0_20 = arith.constant 0 : index
    %19 = vector.load %arg18[%c0_18, %c1_19, %c0_20] : memref<18x18x4xf32, #tpu.memory_space<vmem>>, vector<16x16x4xf32>
    %20 = vector.shape_cast %19 : vector<16x16x4xf32> to vector<256x4xf32>
    %c0_21 = arith.constant 0 : index
    %c2 = arith.constant 2 : index
    %c0_22 = arith.constant 0 : index
    %21 = vector.load %arg18[%c0_21, %c2, %c0_22] : memref<18x18x4xf32, #tpu.memory_space<vmem>>, vector<16x16x4xf32>
    %22 = vector.shape_cast %21 : vector<16x16x4xf32> to vector<256x4xf32>
    %c1_23 = arith.constant 1 : index
    %c0_24 = arith.constant 0 : index
    %c0_25 = arith.constant 0 : index
    %23 = vector.load %arg18[%c1_23, %c0_24, %c0_25] : memref<18x18x4xf32, #tpu.memory_space<vmem>>, vector<16x16x4xf32>
    %24 = vector.shape_cast %23 : vector<16x16x4xf32> to vector<256x4xf32>
    %c1_26 = arith.constant 1 : index
    %c1_27 = arith.constant 1 : index
    %c0_28 = arith.constant 0 : index
    %25 = vector.load %arg18[%c1_26, %c1_27, %c0_28] : memref<18x18x4xf32, #tpu.memory_space<vmem>>, vector<16x16x4xf32>
    %26 = vector.shape_cast %25 : vector<16x16x4xf32> to vector<256x4xf32>
    %c1_29 = arith.constant 1 : index
    %c2_30 = arith.constant 2 : index
    %c0_31 = arith.constant 0 : index
    %27 = vector.load %arg18[%c1_29, %c2_30, %c0_31] : memref<18x18x4xf32, #tpu.memory_space<vmem>>, vector<16x16x4xf32>
    %28 = vector.shape_cast %27 : vector<16x16x4xf32> to vector<256x4xf32>
    %c2_32 = arith.constant 2 : index
    %c0_33 = arith.constant 0 : index
    %c0_34 = arith.constant 0 : index
    %29 = vector.load %arg18[%c2_32, %c0_33, %c0_34] : memref<18x18x4xf32, #tpu.memory_space<vmem>>, vector<16x16x4xf32>
    %30 = vector.shape_cast %29 : vector<16x16x4xf32> to vector<256x4xf32>
    %c2_35 = arith.constant 2 : index
    %c1_36 = arith.constant 1 : index
    %c0_37 = arith.constant 0 : index
    %31 = vector.load %arg18[%c2_35, %c1_36, %c0_37] : memref<18x18x4xf32, #tpu.memory_space<vmem>>, vector<16x16x4xf32>
    %32 = vector.shape_cast %31 : vector<16x16x4xf32> to vector<256x4xf32>
    %c2_38 = arith.constant 2 : index
    %c2_39 = arith.constant 2 : index
    %c0_40 = arith.constant 0 : index
    %33 = vector.load %arg18[%c2_38, %c2_39, %c0_40] : memref<18x18x4xf32, #tpu.memory_space<vmem>>, vector<16x16x4xf32>
    %34 = vector.shape_cast %33 : vector<16x16x4xf32> to vector<256x4xf32>
    %35 = tpu.concatenate %18, %20, %22, %24, %26, %28, %30, %32, %34 in 1 : vector<256x4xf32>, vector<256x4xf32>, vector<256x4xf32>, vector<256x4xf32>, vector<256x4xf32>, vector<256x4xf32>, vector<256x4xf32>, vector<256x4xf32>, vector<256x4xf32> -> vector<256x36xf32>
    %c0_41 = arith.constant 0 : index
    %c0_42 = arith.constant 0 : index
    %36 = vector.load %arg5[%c0_41, %c0_42] : memref<36x4xf32, #tpu.memory_space<vmem>>, vector<36x4xf32>
    %cst_43 = arith.constant dense<0.000000e+00> : vector<256x4xf32>
    %37 = tpu.matmul %35, %36, %cst_43 {dimension_numbers = #tpu.dot_dimension_numbers<[1], [0], [0], [1], [0, 0, 1, 1], [], []>} : vector<256x36xf32>, vector<36x4xf32>, vector<256x4xf32> -> vector<256x4xf32>
    %38 = tpu.transpose %37, [1, 0] : vector<256x4xf32> -> vector<4x256xf32>
    %c0_44 = arith.constant 0 : index
    %c0_45 = arith.constant 0 : index
    %39 = vector.load %arg6[%c0_44, %c0_45] : memref<4x1xf32, #tpu.memory_space<vmem>>, vector<4x1xf32>
    %40 = vector.broadcast %39 : vector<4x1xf32> to vector<4x256xf32>
    %41 = arith.mulf %38, %40 : vector<4x256xf32>
    %c0_46 = arith.constant 0 : index
    %c0_47 = arith.constant 0 : index
    %42 = vector.load %arg7[%c0_46, %c0_47] : memref<4x1xf32, #tpu.memory_space<vmem>>, vector<4x1xf32>
    %43 = vector.broadcast %42 : vector<4x1xf32> to vector<4x256xf32>
    %44 = arith.addf %41, %43 : vector<4x256xf32>
    %cst_48 = arith.constant 0.000000e+00 : f32
    %45 = vector.broadcast %cst_48 : f32 to vector<4x256xf32>
    %46 = arith.maximumf %44, %45 : vector<4x256xf32>
    %c0_49 = arith.constant 0 : index
    %c0_50 = arith.constant 0 : index
    %47 = vector.load %arg8[%c0_49, %c0_50] : memref<16x4xf32, #tpu.memory_space<vmem>>, vector<16x4xf32>
    %cst_51 = arith.constant dense<0.000000e+00> : vector<16x256xf32>
    %48 = tpu.matmul %47, %46, %cst_51 {dimension_numbers = #tpu.dot_dimension_numbers<[1], [0], [0], [1], [0, 0, 1, 1], [], []>} : vector<16x4xf32>, vector<4x256xf32>, vector<16x256xf32> -> vector<16x256xf32>
    %c0_52 = arith.constant 0 : index
    %c0_53 = arith.constant 0 : index
    %49 = vector.load %arg9[%c0_52, %c0_53] : memref<16x1xf32, #tpu.memory_space<vmem>>, vector<16x1xf32>
    %50 = vector.broadcast %49 : vector<16x1xf32> to vector<16x256xf32>
    %51 = arith.mulf %48, %50 : vector<16x256xf32>
    %c0_54 = arith.constant 0 : index
    %c0_55 = arith.constant 0 : index
    %52 = vector.load %arg10[%c0_54, %c0_55] : memref<16x1xf32, #tpu.memory_space<vmem>>, vector<16x1xf32>
    %53 = vector.broadcast %52 : vector<16x1xf32> to vector<16x256xf32>
    %54 = arith.addf %51, %53 : vector<16x256xf32>
    %cst_56 = arith.constant dense<0.000000e+00> : vector<16xf32>
    %55 = vector.multi_reduction <add>, %54, %cst_56 [1] : vector<16x256xf32> to vector<16xf32>
    %56 = vector.shape_cast %55 : vector<16xf32> to vector<16x1xf32>
    %cst_57 = arith.constant 2.560000e+02 : f32
    %57 = vector.broadcast %cst_57 : f32 to vector<16x1xf32>
    %58 = arith.divf %56, %57 : vector<16x1xf32>
    %cst_58 = arith.constant dense<0xFF800000> : vector<16xf32>
    %59 = vector.multi_reduction <maximumf>, %54, %cst_58 [1] : vector<16x256xf32> to vector<16xf32>
    %60 = vector.shape_cast %59 : vector<16xf32> to vector<16x1xf32>
    %61 = tpu.concatenate %58, %60 in 1 : vector<16x1xf32>, vector<16x1xf32> -> vector<16x2xf32>
    %c0_59 = arith.constant 0 : index
    %c0_60 = arith.constant 0 : index
    %62 = vector.load %arg14[%c0_59, %c0_60] : memref<4x16xf32, #tpu.memory_space<vmem>>, vector<4x16xf32>
    %cst_61 = arith.constant dense<0.000000e+00> : vector<4x2xf32>
    %63 = tpu.matmul %62, %61, %cst_61 {dimension_numbers = #tpu.dot_dimension_numbers<[1], [0], [0], [1], [0, 0, 1, 1], [], []>} : vector<4x16xf32>, vector<16x2xf32>, vector<4x2xf32> -> vector<4x2xf32>
    %cst_62 = arith.constant 0.000000e+00 : f32
    %64 = vector.broadcast %cst_62 : f32 to vector<4x2xf32>
    %65 = arith.maximumf %63, %64 : vector<4x2xf32>
    %c0_63 = arith.constant 0 : index
    %c0_64 = arith.constant 0 : index
    %66 = vector.load %arg15[%c0_63, %c0_64] : memref<16x4xf32, #tpu.memory_space<vmem>>, vector<16x4xf32>
    %cst_65 = arith.constant dense<0.000000e+00> : vector<16x2xf32>
    %67 = tpu.matmul %66, %65, %cst_65 {dimension_numbers = #tpu.dot_dimension_numbers<[1], [0], [0], [1], [0, 0, 1, 1], [], []>} : vector<16x4xf32>, vector<4x2xf32>, vector<16x2xf32> -> vector<16x2xf32>
    %68 = vector.extract_strided_slice %67 {offsets = [0, 0], sizes = [16, 1], strides = [1, 1]} : vector<16x2xf32> to vector<16x1xf32>
    %69 = vector.extract_strided_slice %67 {offsets = [0, 1], sizes = [16, 1], strides = [1, 1]} : vector<16x2xf32> to vector<16x1xf32>
    %70 = arith.addf %68, %69 : vector<16x1xf32>
    %cst_66 = arith.constant 0.000000e+00 : f32
    %71 = vector.broadcast %cst_66 : f32 to vector<16x1xf32>
    %72 = arith.subf %71, %70 : vector<16x1xf32>
    %73 = math.exp %72 : vector<16x1xf32>
    %cst_67 = arith.constant 1.000000e+00 : f32
    %74 = vector.broadcast %cst_67 : f32 to vector<16x1xf32>
    %75 = arith.addf %74, %73 : vector<16x1xf32>
    %76 = tpu.reciprocal %75 {approx = true} : vector<16x1xf32> -> vector<16x1xf32>
    %77 = vector.broadcast %76 : vector<16x1xf32> to vector<16x256xf32>
    %78 = arith.mulf %54, %77 : vector<16x256xf32>
    %cst_68 = arith.constant dense<0.000000e+00> : vector<256xf32>
    %79 = vector.multi_reduction <add>, %78, %cst_68 [0] : vector<16x256xf32> to vector<256xf32>
    %80 = vector.shape_cast %79 : vector<256xf32> to vector<1x256xf32>
    %cst_69 = arith.constant 1.600000e+01 : f32
    %81 = vector.broadcast %cst_69 : f32 to vector<1x256xf32>
    %82 = arith.divf %80, %81 : vector<1x256xf32>
    %cst_70 = arith.constant dense<0xFF800000> : vector<256xf32>
    %83 = vector.multi_reduction <maximumf>, %78, %cst_70 [0] : vector<16x256xf32> to vector<256xf32>
    %84 = vector.shape_cast %83 : vector<256xf32> to vector<1x256xf32>
    %85 = tpu.concatenate %82, %84 in 0 : vector<1x256xf32>, vector<1x256xf32> -> vector<2x256xf32>
    %86 = tpu.transpose %85, [1, 0] : vector<2x256xf32> -> vector<256x2xf32>
    %cst_71 = arith.constant 0.000000e+00 : f32
    %87 = vector.broadcast %cst_71 : f32 to vector<22x22x2xf32>
    %c0_72 = arith.constant 0 : index
    %c0_73 = arith.constant 0 : index
    %c0_74 = arith.constant 0 : index
    %88 = vector.load %arg19[%c0_72, %c0_73, %c0_74] : memref<22x22x2xf32, #tpu.memory_space<vmem>>, vector<22x22x2xf32>
    tpu.vector_store %arg19[%c0_72, %c0_73, %c0_74], %87 {strides = array<i32>} : memref<22x22x2xf32, #tpu.memory_space<vmem>>, vector<22x22x2xf32>,
    %89 = vector.shape_cast %86 : vector<256x2xf32> to vector<16x16x2xf32>
    %c3 = arith.constant 3 : index
    %c3_75 = arith.constant 3 : index
    %c0_76 = arith.constant 0 : index
    %90 = vector.load %arg19[%c3, %c3_75, %c0_76] : memref<22x22x2xf32, #tpu.memory_space<vmem>>, vector<16x16x2xf32>
    tpu.vector_store %arg19[%c3, %c3_75, %c0_76], %89 {strides = array<i32>} : memref<22x22x2xf32, #tpu.memory_space<vmem>>, vector<16x16x2xf32>,
    %c0_77 = arith.constant 0 : index
    %c0_78 = arith.constant 0 : index
    %c0_79 = arith.constant 0 : index
    %91 = vector.load %arg19[%c0_77, %c0_78, %c0_79] : memref<22x22x2xf32, #tpu.memory_space<vmem>>, vector<16x16x2xf32>
    %92 = vector.shape_cast %91 : vector<16x16x2xf32> to vector<256x2xf32>
    %c0_80 = arith.constant 0 : index
    %c1_81 = arith.constant 1 : index
    %c0_82 = arith.constant 0 : index
    %93 = vector.load %arg19[%c0_80, %c1_81, %c0_82] : memref<22x22x2xf32, #tpu.memory_space<vmem>>, vector<16x16x2xf32>
    %94 = vector.shape_cast %93 : vector<16x16x2xf32> to vector<256x2xf32>
    %c0_83 = arith.constant 0 : index
    %c2_84 = arith.constant 2 : index
    %c0_85 = arith.constant 0 : index
    %95 = vector.load %arg19[%c0_83, %c2_84, %c0_85] : memref<22x22x2xf32, #tpu.memory_space<vmem>>, vector<16x16x2xf32>
    %96 = vector.shape_cast %95 : vector<16x16x2xf32> to vector<256x2xf32>
    %c0_86 = arith.constant 0 : index
    %c3_87 = arith.constant 3 : index
    %c0_88 = arith.constant 0 : index
    %97 = vector.load %arg19[%c0_86, %c3_87, %c0_88] : memref<22x22x2xf32, #tpu.memory_space<vmem>>, vector<16x16x2xf32>
    %98 = vector.shape_cast %97 : vector<16x16x2xf32> to vector<256x2xf32>
    %c0_89 = arith.constant 0 : index
    %c4 = arith.constant 4 : index
    %c0_90 = arith.constant 0 : index
    %99 = vector.load %arg19[%c0_89, %c4, %c0_90] : memref<22x22x2xf32, #tpu.memory_space<vmem>>, vector<16x16x2xf32>
    %100 = vector.shape_cast %99 : vector<16x16x2xf32> to vector<256x2xf32>
    %c0_91 = arith.constant 0 : index
    %c5 = arith.constant 5 : index
    %c0_92 = arith.constant 0 : index
    %101 = vector.load %arg19[%c0_91, %c5, %c0_92] : memref<22x22x2xf32, #tpu.memory_space<vmem>>, vector<16x16x2xf32>
    %102 = vector.shape_cast %101 : vector<16x16x2xf32> to vector<256x2xf32>
    %c0_93 = arith.constant 0 : index
    %c6 = arith.constant 6 : index
    %c0_94 = arith.constant 0 : index
    %103 = vector.load %arg19[%c0_93, %c6, %c0_94] : memref<22x22x2xf32, #tpu.memory_space<vmem>>, vector<16x16x2xf32>
    %104 = vector.shape_cast %103 : vector<16x16x2xf32> to vector<256x2xf32>
    %c1_95 = arith.constant 1 : index
    %c0_96 = arith.constant 0 : index
    %c0_97 = arith.constant 0 : index
    %105 = vector.load %arg19[%c1_95, %c0_96, %c0_97] : memref<22x22x2xf32, #tpu.memory_space<vmem>>, vector<16x16x2xf32>
    %106 = vector.shape_cast %105 : vector<16x16x2xf32> to vector<256x2xf32>
    %c1_98 = arith.constant 1 : index
    %c1_99 = arith.constant 1 : index
    %c0_100 = arith.constant 0 : index
    %107 = vector.load %arg19[%c1_98, %c1_99, %c0_100] : memref<22x22x2xf32, #tpu.memory_space<vmem>>, vector<16x16x2xf32>
    %108 = vector.shape_cast %107 : vector<16x16x2xf32> to vector<256x2xf32>
    %c1_101 = arith.constant 1 : index
    %c2_102 = arith.constant 2 : index
    %c0_103 = arith.constant 0 : index
    %109 = vector.load %arg19[%c1_101, %c2_102, %c0_103] : memref<22x22x2xf32, #tpu.memory_space<vmem>>, vector<16x16x2xf32>
    %110 = vector.shape_cast %109 : vector<16x16x2xf32> to vector<256x2xf32>
    %c1_104 = arith.constant 1 : index
    %c3_105 = arith.constant 3 : index
    %c0_106 = arith.constant 0 : index
    %111 = vector.load %arg19[%c1_104, %c3_105, %c0_106] : memref<22x22x2xf32, #tpu.memory_space<vmem>>, vector<16x16x2xf32>
    %112 = vector.shape_cast %111 : vector<16x16x2xf32> to vector<256x2xf32>
    %c1_107 = arith.constant 1 : index
    %c4_108 = arith.constant 4 : index
    %c0_109 = arith.constant 0 : index
    %113 = vector.load %arg19[%c1_107, %c4_108, %c0_109] : memref<22x22x2xf32, #tpu.memory_space<vmem>>, vector<16x16x2xf32>
    %114 = vector.shape_cast %113 : vector<16x16x2xf32> to vector<256x2xf32>
    %c1_110 = arith.constant 1 : index
    %c5_111 = arith.constant 5 : index
    %c0_112 = arith.constant 0 : index
    %115 = vector.load %arg19[%c1_110, %c5_111, %c0_112] : memref<22x22x2xf32, #tpu.memory_space<vmem>>, vector<16x16x2xf32>
    %116 = vector.shape_cast %115 : vector<16x16x2xf32> to vector<256x2xf32>
    %c1_113 = arith.constant 1 : index
    %c6_114 = arith.constant 6 : index
    %c0_115 = arith.constant 0 : index
    %117 = vector.load %arg19[%c1_113, %c6_114, %c0_115] : memref<22x22x2xf32, #tpu.memory_space<vmem>>, vector<16x16x2xf32>
    %118 = vector.shape_cast %117 : vector<16x16x2xf32> to vector<256x2xf32>
    %c2_116 = arith.constant 2 : index
    %c0_117 = arith.constant 0 : index
    %c0_118 = arith.constant 0 : index
    %119 = vector.load %arg19[%c2_116, %c0_117, %c0_118] : memref<22x22x2xf32, #tpu.memory_space<vmem>>, vector<16x16x2xf32>
    %120 = vector.shape_cast %119 : vector<16x16x2xf32> to vector<256x2xf32>
    %c2_119 = arith.constant 2 : index
    %c1_120 = arith.constant 1 : index
    %c0_121 = arith.constant 0 : index
    %121 = vector.load %arg19[%c2_119, %c1_120, %c0_121] : memref<22x22x2xf32, #tpu.memory_space<vmem>>, vector<16x16x2xf32>
    %122 = vector.shape_cast %121 : vector<16x16x2xf32> to vector<256x2xf32>
    %c2_122 = arith.constant 2 : index
    %c2_123 = arith.constant 2 : index
    %c0_124 = arith.constant 0 : index
    %123 = vector.load %arg19[%c2_122, %c2_123, %c0_124] : memref<22x22x2xf32, #tpu.memory_space<vmem>>, vector<16x16x2xf32>
    %124 = vector.shape_cast %123 : vector<16x16x2xf32> to vector<256x2xf32>
    %c2_125 = arith.constant 2 : index
    %c3_126 = arith.constant 3 : index
    %c0_127 = arith.constant 0 : index
    %125 = vector.load %arg19[%c2_125, %c3_126, %c0_127] : memref<22x22x2xf32, #tpu.memory_space<vmem>>, vector<16x16x2xf32>
    %126 = vector.shape_cast %125 : vector<16x16x2xf32> to vector<256x2xf32>
    %c2_128 = arith.constant 2 : index
    %c4_129 = arith.constant 4 : index
    %c0_130 = arith.constant 0 : index
    %127 = vector.load %arg19[%c2_128, %c4_129, %c0_130] : memref<22x22x2xf32, #tpu.memory_space<vmem>>, vector<16x16x2xf32>
    %128 = vector.shape_cast %127 : vector<16x16x2xf32> to vector<256x2xf32>
    %c2_131 = arith.constant 2 : index
    %c5_132 = arith.constant 5 : index
    %c0_133 = arith.constant 0 : index
    %129 = vector.load %arg19[%c2_131, %c5_132, %c0_133] : memref<22x22x2xf32, #tpu.memory_space<vmem>>, vector<16x16x2xf32>
    %130 = vector.shape_cast %129 : vector<16x16x2xf32> to vector<256x2xf32>
    %c2_134 = arith.constant 2 : index
    %c6_135 = arith.constant 6 : index
    %c0_136 = arith.constant 0 : index
    %131 = vector.load %arg19[%c2_134, %c6_135, %c0_136] : memref<22x22x2xf32, #tpu.memory_space<vmem>>, vector<16x16x2xf32>
    %132 = vector.shape_cast %131 : vector<16x16x2xf32> to vector<256x2xf32>
    %c3_137 = arith.constant 3 : index
    %c0_138 = arith.constant 0 : index
    %c0_139 = arith.constant 0 : index
    %133 = vector.load %arg19[%c3_137, %c0_138, %c0_139] : memref<22x22x2xf32, #tpu.memory_space<vmem>>, vector<16x16x2xf32>
    %134 = vector.shape_cast %133 : vector<16x16x2xf32> to vector<256x2xf32>
    %c3_140 = arith.constant 3 : index
    %c1_141 = arith.constant 1 : index
    %c0_142 = arith.constant 0 : index
    %135 = vector.load %arg19[%c3_140, %c1_141, %c0_142] : memref<22x22x2xf32, #tpu.memory_space<vmem>>, vector<16x16x2xf32>
    %136 = vector.shape_cast %135 : vector<16x16x2xf32> to vector<256x2xf32>
    %c3_143 = arith.constant 3 : index
    %c2_144 = arith.constant 2 : index
    %c0_145 = arith.constant 0 : index
    %137 = vector.load %arg19[%c3_143, %c2_144, %c0_145] : memref<22x22x2xf32, #tpu.memory_space<vmem>>, vector<16x16x2xf32>
    %138 = vector.shape_cast %137 : vector<16x16x2xf32> to vector<256x2xf32>
    %c3_146 = arith.constant 3 : index
    %c3_147 = arith.constant 3 : index
    %c0_148 = arith.constant 0 : index
    %139 = vector.load %arg19[%c3_146, %c3_147, %c0_148] : memref<22x22x2xf32, #tpu.memory_space<vmem>>, vector<16x16x2xf32>
    %140 = vector.shape_cast %139 : vector<16x16x2xf32> to vector<256x2xf32>
    %c3_149 = arith.constant 3 : index
    %c4_150 = arith.constant 4 : index
    %c0_151 = arith.constant 0 : index
    %141 = vector.load %arg19[%c3_149, %c4_150, %c0_151] : memref<22x22x2xf32, #tpu.memory_space<vmem>>, vector<16x16x2xf32>
    %142 = vector.shape_cast %141 : vector<16x16x2xf32> to vector<256x2xf32>
    %c3_152 = arith.constant 3 : index
    %c5_153 = arith.constant 5 : index
    %c0_154 = arith.constant 0 : index
    %143 = vector.load %arg19[%c3_152, %c5_153, %c0_154] : memref<22x22x2xf32, #tpu.memory_space<vmem>>, vector<16x16x2xf32>
    %144 = vector.shape_cast %143 : vector<16x16x2xf32> to vector<256x2xf32>
    %c3_155 = arith.constant 3 : index
    %c6_156 = arith.constant 6 : index
    %c0_157 = arith.constant 0 : index
    %145 = vector.load %arg19[%c3_155, %c6_156, %c0_157] : memref<22x22x2xf32, #tpu.memory_space<vmem>>, vector<16x16x2xf32>
    %146 = vector.shape_cast %145 : vector<16x16x2xf32> to vector<256x2xf32>
    %c4_158 = arith.constant 4 : index
    %c0_159 = arith.constant 0 : index
    %c0_160 = arith.constant 0 : index
    %147 = vector.load %arg19[%c4_158, %c0_159, %c0_160] : memref<22x22x2xf32, #tpu.memory_space<vmem>>, vector<16x16x2xf32>
    %148 = vector.shape_cast %147 : vector<16x16x2xf32> to vector<256x2xf32>
    %c4_161 = arith.constant 4 : index
    %c1_162 = arith.constant 1 : index
    %c0_163 = arith.constant 0 : index
    %149 = vector.load %arg19[%c4_161, %c1_162, %c0_163] : memref<22x22x2xf32, #tpu.memory_space<vmem>>, vector<16x16x2xf32>
    %150 = vector.shape_cast %149 : vector<16x16x2xf32> to vector<256x2xf32>
    %c4_164 = arith.constant 4 : index
    %c2_165 = arith.constant 2 : index
    %c0_166 = arith.constant 0 : index
    %151 = vector.load %arg19[%c4_164, %c2_165, %c0_166] : memref<22x22x2xf32, #tpu.memory_space<vmem>>, vector<16x16x2xf32>
    %152 = vector.shape_cast %151 : vector<16x16x2xf32> to vector<256x2xf32>
    %c4_167 = arith.constant 4 : index
    %c3_168 = arith.constant 3 : index
    %c0_169 = arith.constant 0 : index
    %153 = vector.load %arg19[%c4_167, %c3_168, %c0_169] : memref<22x22x2xf32, #tpu.memory_space<vmem>>, vector<16x16x2xf32>
    %154 = vector.shape_cast %153 : vector<16x16x2xf32> to vector<256x2xf32>
    %c4_170 = arith.constant 4 : index
    %c4_171 = arith.constant 4 : index
    %c0_172 = arith.constant 0 : index
    %155 = vector.load %arg19[%c4_170, %c4_171, %c0_172] : memref<22x22x2xf32, #tpu.memory_space<vmem>>, vector<16x16x2xf32>
    %156 = vector.shape_cast %155 : vector<16x16x2xf32> to vector<256x2xf32>
    %c4_173 = arith.constant 4 : index
    %c5_174 = arith.constant 5 : index
    %c0_175 = arith.constant 0 : index
    %157 = vector.load %arg19[%c4_173, %c5_174, %c0_175] : memref<22x22x2xf32, #tpu.memory_space<vmem>>, vector<16x16x2xf32>
    %158 = vector.shape_cast %157 : vector<16x16x2xf32> to vector<256x2xf32>
    %c4_176 = arith.constant 4 : index
    %c6_177 = arith.constant 6 : index
    %c0_178 = arith.constant 0 : index
    %159 = vector.load %arg19[%c4_176, %c6_177, %c0_178] : memref<22x22x2xf32, #tpu.memory_space<vmem>>, vector<16x16x2xf32>
    %160 = vector.shape_cast %159 : vector<16x16x2xf32> to vector<256x2xf32>
    %c5_179 = arith.constant 5 : index
    %c0_180 = arith.constant 0 : index
    %c0_181 = arith.constant 0 : index
    %161 = vector.load %arg19[%c5_179, %c0_180, %c0_181] : memref<22x22x2xf32, #tpu.memory_space<vmem>>, vector<16x16x2xf32>
    %162 = vector.shape_cast %161 : vector<16x16x2xf32> to vector<256x2xf32>
    %c5_182 = arith.constant 5 : index
    %c1_183 = arith.constant 1 : index
    %c0_184 = arith.constant 0 : index
    %163 = vector.load %arg19[%c5_182, %c1_183, %c0_184] : memref<22x22x2xf32, #tpu.memory_space<vmem>>, vector<16x16x2xf32>
    %164 = vector.shape_cast %163 : vector<16x16x2xf32> to vector<256x2xf32>
    %c5_185 = arith.constant 5 : index
    %c2_186 = arith.constant 2 : index
    %c0_187 = arith.constant 0 : index
    %165 = vector.load %arg19[%c5_185, %c2_186, %c0_187] : memref<22x22x2xf32, #tpu.memory_space<vmem>>, vector<16x16x2xf32>
    %166 = vector.shape_cast %165 : vector<16x16x2xf32> to vector<256x2xf32>
    %c5_188 = arith.constant 5 : index
    %c3_189 = arith.constant 3 : index
    %c0_190 = arith.constant 0 : index
    %167 = vector.load %arg19[%c5_188, %c3_189, %c0_190] : memref<22x22x2xf32, #tpu.memory_space<vmem>>, vector<16x16x2xf32>
    %168 = vector.shape_cast %167 : vector<16x16x2xf32> to vector<256x2xf32>
    %c5_191 = arith.constant 5 : index
    %c4_192 = arith.constant 4 : index
    %c0_193 = arith.constant 0 : index
    %169 = vector.load %arg19[%c5_191, %c4_192, %c0_193] : memref<22x22x2xf32, #tpu.memory_space<vmem>>, vector<16x16x2xf32>
    %170 = vector.shape_cast %169 : vector<16x16x2xf32> to vector<256x2xf32>
    %c5_194 = arith.constant 5 : index
    %c5_195 = arith.constant 5 : index
    %c0_196 = arith.constant 0 : index
    %171 = vector.load %arg19[%c5_194, %c5_195, %c0_196] : memref<22x22x2xf32, #tpu.memory_space<vmem>>, vector<16x16x2xf32>
    %172 = vector.shape_cast %171 : vector<16x16x2xf32> to vector<256x2xf32>
    %c5_197 = arith.constant 5 : index
    %c6_198 = arith.constant 6 : index
    %c0_199 = arith.constant 0 : index
    %173 = vector.load %arg19[%c5_197, %c6_198, %c0_199] : memref<22x22x2xf32, #tpu.memory_space<vmem>>, vector<16x16x2xf32>
    %174 = vector.shape_cast %173 : vector<16x16x2xf32> to vector<256x2xf32>
    %c6_200 = arith.constant 6 : index
    %c0_201 = arith.constant 0 : index
    %c0_202 = arith.constant 0 : index
    %175 = vector.load %arg19[%c6_200, %c0_201, %c0_202] : memref<22x22x2xf32, #tpu.memory_space<vmem>>, vector<16x16x2xf32>
    %176 = vector.shape_cast %175 : vector<16x16x2xf32> to vector<256x2xf32>
    %c6_203 = arith.constant 6 : index
    %c1_204 = arith.constant 1 : index
    %c0_205 = arith.constant 0 : index
    %177 = vector.load %arg19[%c6_203, %c1_204, %c0_205] : memref<22x22x2xf32, #tpu.memory_space<vmem>>, vector<16x16x2xf32>
    %178 = vector.shape_cast %177 : vector<16x16x2xf32> to vector<256x2xf32>
    %c6_206 = arith.constant 6 : index
    %c2_207 = arith.constant 2 : index
    %c0_208 = arith.constant 0 : index
    %179 = vector.load %arg19[%c6_206, %c2_207, %c0_208] : memref<22x22x2xf32, #tpu.memory_space<vmem>>, vector<16x16x2xf32>
    %180 = vector.shape_cast %179 : vector<16x16x2xf32> to vector<256x2xf32>
    %c6_209 = arith.constant 6 : index
    %c3_210 = arith.constant 3 : index
    %c0_211 = arith.constant 0 : index
    %181 = vector.load %arg19[%c6_209, %c3_210, %c0_211] : memref<22x22x2xf32, #tpu.memory_space<vmem>>, vector<16x16x2xf32>
    %182 = vector.shape_cast %181 : vector<16x16x2xf32> to vector<256x2xf32>
    %c6_212 = arith.constant 6 : index
    %c4_213 = arith.constant 4 : index
    %c0_214 = arith.constant 0 : index
    %183 = vector.load %arg19[%c6_212, %c4_213, %c0_214] : memref<22x22x2xf32, #tpu.memory_space<vmem>>, vector<16x16x2xf32>
    %184 = vector.shape_cast %183 : vector<16x16x2xf32> to vector<256x2xf32>
    %c6_215 = arith.constant 6 : index
    %c5_216 = arith.constant 5 : index
    %c0_217 = arith.constant 0 : index
    %185 = vector.load %arg19[%c6_215, %c5_216, %c0_217] : memref<22x22x2xf32, #tpu.memory_space<vmem>>, vector<16x16x2xf32>
    %186 = vector.shape_cast %185 : vector<16x16x2xf32> to vector<256x2xf32>
    %c6_218 = arith.constant 6 : index
    %c6_219 = arith.constant 6 : index
    %c0_220 = arith.constant 0 : index
    %187 = vector.load %arg19[%c6_218, %c6_219, %c0_220] : memref<22x22x2xf32, #tpu.memory_space<vmem>>, vector<16x16x2xf32>
    %188 = vector.shape_cast %187 : vector<16x16x2xf32> to vector<256x2xf32>
    %189 = tpu.concatenate %92, %94, %96, %98, %100, %102, %104, %106, %108, %110, %112, %114, %116, %118, %120, %122 in 1 : vector<256x2xf32>, vector<256x2xf32>, vector<256x2xf32>, vector<256x2xf32>, vector<256x2xf32>, vector<256x2xf32>, vector<256x2xf32>, vector<256x2xf32>, vector<256x2xf32>, vector<256x2xf32>, vector<256x2xf32>, vector<256x2xf32>, vector<256x2xf32>, vector<256x2xf32>, vector<256x2xf32>, vector<256x2xf32> -> vector<256x32xf32>
    %190 = tpu.concatenate %124, %126, %128, %130, %132, %134, %136, %138, %140, %142, %144, %146, %148, %150, %152, %154 in 1 : vector<256x2xf32>, vector<256x2xf32>, vector<256x2xf32>, vector<256x2xf32>, vector<256x2xf32>, vector<256x2xf32>, vector<256x2xf32>, vector<256x2xf32>, vector<256x2xf32>, vector<256x2xf32>, vector<256x2xf32>, vector<256x2xf32>, vector<256x2xf32>, vector<256x2xf32>, vector<256x2xf32>, vector<256x2xf32> -> vector<256x32xf32>
    %191 = tpu.concatenate %156, %158, %160, %162, %164, %166, %168, %170, %172, %174, %176, %178, %180, %182, %184, %186 in 1 : vector<256x2xf32>, vector<256x2xf32>, vector<256x2xf32>, vector<256x2xf32>, vector<256x2xf32>, vector<256x2xf32>, vector<256x2xf32>, vector<256x2xf32>, vector<256x2xf32>, vector<256x2xf32>, vector<256x2xf32>, vector<256x2xf32>, vector<256x2xf32>, vector<256x2xf32>, vector<256x2xf32>, vector<256x2xf32> -> vector<256x32xf32>
    %192 = tpu.concatenate %189, %190, %191, %188 in 1 : vector<256x32xf32>, vector<256x32xf32>, vector<256x32xf32>, vector<256x2xf32> -> vector<256x98xf32>
    %c0_221 = arith.constant 0 : index
    %c0_222 = arith.constant 0 : index
    %193 = vector.load %arg16[%c0_221, %c0_222] : memref<98x1xf32, #tpu.memory_space<vmem>>, vector<98x1xf32>
    %cst_223 = arith.constant dense<0.000000e+00> : vector<256x1xf32>
    %194 = tpu.matmul %192, %193, %cst_223 {dimension_numbers = #tpu.dot_dimension_numbers<[1], [0], [0], [1], [0, 0, 1, 1], [], []>} : vector<256x98xf32>, vector<98x1xf32>, vector<256x1xf32> -> vector<256x1xf32>
    %cst_224 = arith.constant 0.000000e+00 : f32
    %195 = vector.broadcast %cst_224 : f32 to vector<256x1xf32>
    %196 = arith.subf %195, %194 : vector<256x1xf32>
    %197 = math.exp %196 : vector<256x1xf32>
    %cst_225 = arith.constant 1.000000e+00 : f32
    %198 = vector.broadcast %cst_225 : f32 to vector<256x1xf32>
    %199 = arith.addf %198, %197 : vector<256x1xf32>
    %200 = tpu.reciprocal %199 {approx = true} : vector<256x1xf32> -> vector<256x1xf32>
    %201 = vector.shape_cast %200 : vector<256x1xf32> to vector<256x1xf32>
    %202 = vector.broadcast %201 : vector<256x1xf32> to vector<256x16xf32>
    %203 = tpu.transpose %202, [1, 0] : vector<256x16xf32> -> vector<16x256xf32>
    %204 = arith.mulf %78, %203 : vector<16x256xf32>
    %c0_226 = arith.constant 0 : index
    %c0_227 = arith.constant 0 : index
    %205 = vector.load %arg11[%c0_226, %c0_227] : memref<16x4xf32, #tpu.memory_space<vmem>>, vector<16x4xf32>
    %cst_228 = arith.constant dense<0.000000e+00> : vector<16x256xf32>
    %206 = tpu.matmul %205, %1, %cst_228 {dimension_numbers = #tpu.dot_dimension_numbers<[1], [0], [0], [1], [0, 0, 1, 1], [], []>} : vector<16x4xf32>, vector<4x256xf32>, vector<16x256xf32> -> vector<16x256xf32>
    %c0_229 = arith.constant 0 : index
    %c0_230 = arith.constant 0 : index
    %207 = vector.load %arg12[%c0_229, %c0_230] : memref<16x1xf32, #tpu.memory_space<vmem>>, vector<16x1xf32>
    %208 = vector.broadcast %207 : vector<16x1xf32> to vector<16x256xf32>
    %209 = arith.mulf %206, %208 : vector<16x256xf32>
    %c0_231 = arith.constant 0 : index
    %c0_232 = arith.constant 0 : index
    %210 = vector.load %arg13[%c0_231, %c0_232] : memref<16x1xf32, #tpu.memory_space<vmem>>, vector<16x1xf32>
    %211 = vector.broadcast %210 : vector<16x1xf32> to vector<16x256xf32>
    %212 = arith.addf %209, %211 : vector<16x256xf32>
    %213 = arith.addf %204, %212 : vector<16x256xf32>
    %cst_233 = arith.constant 0.000000e+00 : f32
    %214 = vector.broadcast %cst_233 : f32 to vector<16x256xf32>
    %215 = arith.maximumf %213, %214 : vector<16x256xf32>
    %c0_234 = arith.constant 0 : index
    %c0_235 = arith.constant 0 : index
    %c0_236 = arith.constant 0 : index
    %216 = vector.load %arg17[%c0_234, %c0_235, %c0_236] : memref<1x16x256xf32, #tpu.memory_space<vmem>>, vector<1x16x256xf32>
    %217 = vector.shape_cast %216 : vector<1x16x256xf32> to vector<16x256xf32>
    %218 = vector.shape_cast %215 : vector<16x256xf32> to vector<1x16x256xf32>
    tpu.vector_store %arg17[%c0_234, %c0_235, %c0_236], %218 {strides = array<i32>} : memref<1x16x256xf32, #tpu.memory_space<vmem>>, vector<1x16x256xf32>,
    return
  }
  func.func @transform_0(%arg0: i32) -> (i32, i32, i32) {
    %c0_i32 = arith.constant 0 : i32
    %c0_i32_0 = arith.constant 0 : i32
    %c0_i32_1 = arith.constant 0 : i32
    return %arg0, %c0_i32, %c0_i32_0 : i32, i32, i32
  }
  func.func @transform_1(%arg0: i32) -> (i32, i32) {
    %c0_i32 = arith.constant 0 : i32
    %c0_i32_0 = arith.constant 0 : i32
    %c0_i32_1 = arith.constant 0 : i32
    return %c0_i32, %c0_i32_0 : i32, i32
  }
  func.func @transform_2(%arg0: i32) -> (i32, i32) {
    %c0_i32 = arith.constant 0 : i32
    %c0_i32_0 = arith.constant 0 : i32
    %c0_i32_1 = arith.constant 0 : i32
    return %c0_i32, %c0_i32_0 : i32, i32
  }
  func.func @transform_3(%arg0: i32) -> (i32, i32) {
    %c0_i32 = arith.constant 0 : i32
    %c0_i32_0 = arith.constant 0 : i32
    %c0_i32_1 = arith.constant 0 : i32
    return %c0_i32, %c0_i32_0 : i32, i32
  }
  func.func @transform_4(%arg0: i32) -> (i32, i32) {
    %c0_i32 = arith.constant 0 : i32
    %c0_i32_0 = arith.constant 0 : i32
    %c0_i32_1 = arith.constant 0 : i32
    return %c0_i32, %c0_i32_0 : i32, i32
  }
  func.func @transform_5(%arg0: i32) -> (i32, i32) {
    %c0_i32 = arith.constant 0 : i32
    %c0_i32_0 = arith.constant 0 : i32
    %c0_i32_1 = arith.constant 0 : i32
    return %c0_i32, %c0_i32_0 : i32, i32
  }
  func.func @transform_6(%arg0: i32) -> (i32, i32) {
    %c0_i32 = arith.constant 0 : i32
    %c0_i32_0 = arith.constant 0 : i32
    %c0_i32_1 = arith.constant 0 : i32
    return %c0_i32, %c0_i32_0 : i32, i32
  }
  func.func @transform_7(%arg0: i32) -> (i32, i32) {
    %c0_i32 = arith.constant 0 : i32
    %c0_i32_0 = arith.constant 0 : i32
    %c0_i32_1 = arith.constant 0 : i32
    return %c0_i32, %c0_i32_0 : i32, i32
  }
  func.func @transform_8(%arg0: i32) -> (i32, i32) {
    %c0_i32 = arith.constant 0 : i32
    %c0_i32_0 = arith.constant 0 : i32
    %c0_i32_1 = arith.constant 0 : i32
    return %c0_i32, %c0_i32_0 : i32, i32
  }
  func.func @transform_9(%arg0: i32) -> (i32, i32) {
    %c0_i32 = arith.constant 0 : i32
    %c0_i32_0 = arith.constant 0 : i32
    %c0_i32_1 = arith.constant 0 : i32
    return %c0_i32, %c0_i32_0 : i32, i32
  }
  func.func @transform_10(%arg0: i32) -> (i32, i32) {
    %c0_i32 = arith.constant 0 : i32
    %c0_i32_0 = arith.constant 0 : i32
    %c0_i32_1 = arith.constant 0 : i32
    return %c0_i32, %c0_i32_0 : i32, i32
  }
  func.func @transform_11(%arg0: i32) -> (i32, i32) {
    %c0_i32 = arith.constant 0 : i32
    %c0_i32_0 = arith.constant 0 : i32
    %c0_i32_1 = arith.constant 0 : i32
    return %c0_i32, %c0_i32_0 : i32, i32
  }
  func.func @transform_12(%arg0: i32) -> (i32, i32) {
    %c0_i32 = arith.constant 0 : i32
    %c0_i32_0 = arith.constant 0 : i32
    %c0_i32_1 = arith.constant 0 : i32
    return %c0_i32, %c0_i32_0 : i32, i32
  }
  func.func @transform_13(%arg0: i32) -> (i32, i32) {
    %c0_i32 = arith.constant 0 : i32
    %c0_i32_0 = arith.constant 0 : i32
    %c0_i32_1 = arith.constant 0 : i32
    return %c0_i32, %c0_i32_0 : i32, i32
  }
  func.func @transform_14(%arg0: i32) -> (i32, i32) {
    %c0_i32 = arith.constant 0 : i32
    %c0_i32_0 = arith.constant 0 : i32
    %c0_i32_1 = arith.constant 0 : i32
    return %c0_i32, %c0_i32_0 : i32, i32
  }
  func.func @transform_15(%arg0: i32) -> (i32, i32) {
    %c0_i32 = arith.constant 0 : i32
    %c0_i32_0 = arith.constant 0 : i32
    %c0_i32_1 = arith.constant 0 : i32
    return %c0_i32, %c0_i32_0 : i32, i32
  }
  func.func @transform_16(%arg0: i32) -> (i32, i32, i32) {
    %c0_i32 = arith.constant 0 : i32
    %c0_i32_0 = arith.constant 0 : i32
    %c0_i32_1 = arith.constant 0 : i32
    return %arg0, %c0_i32, %c0_i32_0 : i32, i32, i32
  }
}

</mosaic_0001>

<llo_original>
// kernel: bottleneck_forward.1
$region0: #{bottleneck_forward.1}
  #allocation0 [shape = 'u32[]', space=smem, size = 0x4, offset = 0x4, fixed_abs, tag = 'smem constant byte address 0x4 - core index']
  #allocation1 [shape = 'u32[144,128]{1,0:T(1,128)}', space=vmem, size = 0x12000, scoped, tag = 'internal scratch']
  #allocation2 [shape = 'f32[18,18,4]{2,1,0:T(8,128)}', space=vmem, size = 0x36000, scoped, tag = 'scratch operand']
  #allocation3 [shape = 'f32[22,22,2]{2,1,0:T(8,128)}', space=vmem, size = 0x42000, scoped, tag = 'scratch operand']
  %s0 = inlined_call_operand.vmem [shape: f32[2,4,256], index: 0, kind: input, shape index: {}]
  %s1 = inlined_call_operand.vmem [shape: f32[4,4], index: 1, kind: input, shape index: {}]
  %s2 = inlined_call_operand.vmem [shape: f32[4,1], index: 2, kind: input, shape index: {}]
  %s3 = inlined_call_operand.vmem [shape: f32[4,1], index: 3, kind: input, shape index: {}]
  %s4 = inlined_call_operand.vmem [shape: f32[36,4], index: 4, kind: input, shape index: {}]
  %s5 = inlined_call_operand.vmem [shape: f32[4,1], index: 5, kind: input, shape index: {}]
  %s6 = inlined_call_operand.vmem [shape: f32[4,1], index: 6, kind: input, shape index: {}]
  %s7 = inlined_call_operand.vmem [shape: f32[16,4], index: 7, kind: input, shape index: {}]
  %s8 = inlined_call_operand.vmem [shape: f32[16,1], index: 8, kind: input, shape index: {}]
  %s9 = inlined_call_operand.vmem [shape: f32[16,1], index: 9, kind: input, shape index: {}]
  %s10 = inlined_call_operand.vmem [shape: f32[16,4], index: 10, kind: input, shape index: {}]
  %s11 = inlined_call_operand.vmem [shape: f32[16,1], index: 11, kind: input, shape index: {}]
  %s12 = inlined_call_operand.vmem [shape: f32[16,1], index: 12, kind: input, shape index: {}]
  %s13 = inlined_call_operand.vmem [shape: f32[4,16], index: 13, kind: input, shape index: {}]
  %s14 = inlined_call_operand.vmem [shape: f32[16,4], index: 14, kind: input, shape index: {}]
  %s15 = inlined_call_operand.vmem [shape: f32[98,1], index: 15, kind: input, shape index: {}]
  %s16 = inlined_call_operand.vmem [shape: f32[2,16,256], index: 16, kind: output, shape index: {}]
  %s17 = sld [smem:[#allocation0]]
  $region97: #{bottleneck_forward.1} parent=0
    _
  %s19 = ssub.s32 1, %s17
  %s20 = scalar_select 0, %s19, %s17
  loop: start=0, step=1, limit=4
  $region2: #{bottleneck_forward.1} parent=0 // loop_pre_header
    _
  $region3: #{bottleneck_forward.1} parent=0 // loop_header
    %s22 = sphi 0, %s26
    %p23 = scmp.ge.s32.totalorder %s22, 4
    %s32 = sphi 0, %s34
    %s35 = sphi 0, %s32
    %s36 = sphi 0, %s35
    %s52 = sphi 0, %s36
    %s56 = sphi 0, %s56
    %s58 = sphi 0, %s56
    %s59 = sphi 0, %s58
    %s73 = sphi 0, %s59
    %s77 = sphi 0, %s77
    %s79 = sphi 0, %s77
    %s80 = sphi 0, %s79
    %s94 = sphi 0, %s80
    %s98 = sphi 0, %s98
    %s100 = sphi 0, %s98
    %s101 = sphi 0, %s100
    %s115 = sphi 0, %s101
    %s119 = sphi 0, %s119
    %s121 = sphi 0, %s119
    %s122 = sphi 0, %s121
    %s136 = sphi 0, %s122
    %s140 = sphi 0, %s140
    %s142 = sphi 0, %s140
    %s143 = sphi 0, %s142
    %s157 = sphi 0, %s143
    %s161 = sphi 0, %s161
    %s163 = sphi 0, %s161
    %s164 = sphi 0, %s163
    %s178 = sphi 0, %s164
    %s182 = sphi 0, %s182
    %s184 = sphi 0, %s182
    %s185 = sphi 0, %s184
    %s199 = sphi 0, %s185
    %s203 = sphi 0, %s203
    %s205 = sphi 0, %s203
    %s206 = sphi 0, %s205
    %s220 = sphi 0, %s206
    %s224 = sphi 0, %s224
    %s226 = sphi 0, %s224
    %s227 = sphi 0, %s226
    %s241 = sphi 0, %s227
    %s245 = sphi 0, %s245
    %s247 = sphi 0, %s245
    %s248 = sphi 0, %s247
    %s262 = sphi 0, %s248
    %s266 = sphi 0, %s266
    %s268 = sphi 0, %s266
    %s269 = sphi 0, %s268
    %s283 = sphi 0, %s269
    %s287 = sphi 0, %s287
    %s289 = sphi 0, %s287
    %s290 = sphi 0, %s289
    %s304 = sphi 0, %s290
    %s308 = sphi 0, %s308
    %s310 = sphi 0, %s308
    %s311 = sphi 0, %s310
    %s325 = sphi 0, %s311
    %s329 = sphi 0, %s329
    %s331 = sphi 0, %s329
    %s332 = sphi 0, %s331
    %s346 = sphi 0, %s332
    %s350 = sphi 0, %s350
    %s352 = sphi 0, %s350
    %s353 = sphi 0, %s352
    %s367 = sphi 0, %s353
    %s373 = sphi 0, %s375
    %s376 = sphi 0, %s373
    %s377 = sphi 0, %s376
    %s393 = sphi 0, %s377
  $region4: #{bottleneck_forward.1} parent=0 // loop_header_branch
    %25 = sbr.rel (%p23) target = $region8
  $region5: #{bottleneck_forward.1} parent=0 // loop_body
    %s27 = ssub.s32 %s22, 1
    %s28 = ssub.s32 %s22, 2
    %s29 = sadd.s32 %s22, 1
    %s30 = ssub.s32 %s22, %s29
    %p31 = scmp.eq.s32.totalorder %s30, 0
    %s33 = sadd.s32 %s32, 1
    %s34 = scalar_select %p31, %s32, %s33
    %p37 = pneg %p31
    %p38 = scmp.eq.s32.totalorder %s22, 1
    %p39 = por %p37, %p38
    %p40 = scmp.ne.s32.totalorder %s32, %s35
    %p41 = scmp.eq.s32.totalorder %s22, 0
    %p42 = por %p40, %p41
    %p43 = scmp.ne.s32.totalorder %s32, %s35
    %p44 = scmp.eq.s32.totalorder %s27, 1
    %p45 = por %p43, %p44
    %p46 = scmp.ne.s32.totalorder %s35, %s36
    %p47 = scmp.eq.s32.totalorder %s27, 0
    %p48 = por %p46, %p47
    %p49 = scmp.ne.s32.totalorder %s35, %s36
    %p50 = scmp.eq.s32.totalorder %s28, 1
    %p51 = por %p49, %p50
    %p53 = scmp.ne.s32.totalorder %s36, %s52
    %p54 = scmp.eq.s32.totalorder %s28, 0
    %p55 = por %p53, %p54
    %s57 = sadd.s32 %s56, 1
    %p60 = scmp.eq.s32.totalorder %s22, 1
    %p61 = scmp.ne.s32.totalorder %s56, %s58
    %p62 = scmp.eq.s32.totalorder %s22, 0
    %p63 = por %p61, %p62
    %p64 = scmp.ne.s32.totalorder %s56, %s58
    %p65 = scmp.eq.s32.totalorder %s27, 1
    %p66 = por %p64, %p65
    %p67 = scmp.ne.s32.totalorder %s58, %s59
    %p68 = scmp.eq.s32.totalorder %s27, 0
    %p69 = por %p67, %p68
    %p70 = scmp.ne.s32.totalorder %s58, %s59
    %p71 = scmp.eq.s32.totalorder %s28, 1
    %p72 = por %p70, %p71
    %p74 = scmp.ne.s32.totalorder %s59, %s73
    %p75 = scmp.eq.s32.totalorder %s28, 0
    %p76 = por %p74, %p75
    %s78 = sadd.s32 %s77, 1
    %p81 = scmp.eq.s32.totalorder %s22, 1
    %p82 = scmp.ne.s32.totalorder %s77, %s79
    %p83 = scmp.eq.s32.totalorder %s22, 0
    %p84 = por %p82, %p83
    %p85 = scmp.ne.s32.totalorder %s77, %s79
    %p86 = scmp.eq.s32.totalorder %s27, 1
    %p87 = por %p85, %p86
    %p88 = scmp.ne.s32.totalorder %s79, %s80
    %p89 = scmp.eq.s32.totalorder %s27, 0
    %p90 = por %p88, %p89
    %p91 = scmp.ne.s32.totalorder %s79, %s80
    %p92 = scmp.eq.s32.totalorder %s28, 1
    %p93 = por %p91, %p92
    %p95 = scmp.ne.s32.totalorder %s80, %s94
    %p96 = scmp.eq.s32.totalorder %s28, 0
    %p97 = por %p95, %p96
    %s99 = sadd.s32 %s98, 1
    %p102 = scmp.eq.s32.totalorder %s22, 1
    %p103 = scmp.ne.s32.totalorder %s98, %s100
    %p104 = scmp.eq.s32.totalorder %s22, 0
    %p105 = por %p103, %p104
    %p106 = scmp.ne.s32.totalorder %s98, %s100
    %p107 = scmp.eq.s32.totalorder %s27, 1
    %p108 = por %p106, %p107
    %p109 = scmp.ne.s32.totalorder %s100, %s101
    %p110 = scmp.eq.s32.totalorder %s27, 0
    %p111 = por %p109, %p110
    %p112 = scmp.ne.s32.totalorder %s100, %s101
    %p113 = scmp.eq.s32.totalorder %s28, 1
    %p114 = por %p112, %p113
    %p116 = scmp.ne.s32.totalorder %s101, %s115
    %p117 = scmp.eq.s32.totalorder %s28, 0
    %p118 = por %p116, %p117
    %s120 = sadd.s32 %s119, 1
    %p123 = scmp.eq.s32.totalorder %s22, 1
    %p124 = scmp.ne.s32.totalorder %s119, %s121
    %p125 = scmp.eq.s32.totalorder %s22, 0
    %p126 = por %p124, %p125
    %p127 = scmp.ne.s32.totalorder %s119, %s121
    %p128 = scmp.eq.s32.totalorder %s27, 1
    %p129 = por %p127, %p128
    %p130 = scmp.ne.s32.totalorder %s121, %s122
    %p131 = scmp.eq.s32.totalorder %s27, 0
    %p132 = por %p130, %p131
    %p133 = scmp.ne.s32.totalorder %s121, %s122
    %p134 = scmp.eq.s32.totalorder %s28, 1
    %p135 = por %p133, %p134
    %p137 = scmp.ne.s32.totalorder %s122, %s136
    %p138 = scmp.eq.s32.totalorder %s28, 0
    %p139 = por %p137, %p138
    %s141 = sadd.s32 %s140, 1
    %p144 = scmp.eq.s32.totalorder %s22, 1
    %p145 = scmp.ne.s32.totalorder %s140, %s142
    %p146 = scmp.eq.s32.totalorder %s22, 0
    %p147 = por %p145, %p146
    %p148 = scmp.ne.s32.totalorder %s140, %s142
    %p149 = scmp.eq.s32.totalorder %s27, 1
    %p150 = por %p148, %p149
    %p151 = scmp.ne.s32.totalorder %s142, %s143
    %p152 = scmp.eq.s32.totalorder %s27, 0
    %p153 = por %p151, %p152
    %p154 = scmp.ne.s32.totalorder %s142, %s143
    %p155 = scmp.eq.s32.totalorder %s28, 1
    %p156 = por %p154, %p155
    %p158 = scmp.ne.s32.totalorder %s143, %s157
    %p159 = scmp.eq.s32.totalorder %s28, 0
    %p160 = por %p158, %p159
    %s162 = sadd.s32 %s161, 1
    %p165 = scmp.eq.s32.totalorder %s22, 1
    %p166 = scmp.ne.s32.totalorder %s161, %s163
    %p167 = scmp.eq.s32.totalorder %s22, 0
    %p168 = por %p166, %p167
    %p169 = scmp.ne.s32.totalorder %s161, %s163
    %p170 = scmp.eq.s32.totalorder %s27, 1
    %p171 = por %p169, %p170
    %p172 = scmp.ne.s32.totalorder %s163, %s164
    %p173 = scmp.eq.s32.totalorder %s27, 0
    %p174 = por %p172, %p173
    %p175 = scmp.ne.s32.totalorder %s163, %s164
    %p176 = scmp.eq.s32.totalorder %s28, 1
    %p177 = por %p175, %p176
    %p179 = scmp.ne.s32.totalorder %s164, %s178
    %p180 = scmp.eq.s32.totalorder %s28, 0
    %p181 = por %p179, %p180
    %s183 = sadd.s32 %s182, 1
    %p186 = scmp.eq.s32.totalorder %s22, 1
    %p187 = scmp.ne.s32.totalorder %s182, %s184
    %p188 = scmp.eq.s32.totalorder %s22, 0
    %p189 = por %p187, %p188
    %p190 = scmp.ne.s32.totalorder %s182, %s184
    %p191 = scmp.eq.s32.totalorder %s27, 1
    %p192 = por %p190, %p191
    %p193 = scmp.ne.s32.totalorder %s184, %s185
    %p194 = scmp.eq.s32.totalorder %s27, 0
    %p195 = por %p193, %p194
    %p196 = scmp.ne.s32.totalorder %s184, %s185
    %p197 = scmp.eq.s32.totalorder %s28, 1
    %p198 = por %p196, %p197
    %p200 = scmp.ne.s32.totalorder %s185, %s199
    %p201 = scmp.eq.s32.totalorder %s28, 0
    %p202 = por %p200, %p201
    %s204 = sadd.s32 %s203, 1
    %p207 = scmp.eq.s32.totalorder %s22, 1
    %p208 = scmp.ne.s32.totalorder %s203, %s205
    %p209 = scmp.eq.s32.totalorder %s22, 0
    %p210 = por %p208, %p209
    %p211 = scmp.ne.s32.totalorder %s203, %s205
    %p212 = scmp.eq.s32.totalorder %s27, 1
    %p213 = por %p211, %p212
    %p214 = scmp.ne.s32.totalorder %s205, %s206
    %p215 = scmp.eq.s32.totalorder %s27, 0
    %p216 = por %p214, %p215
    %p217 = scmp.ne.s32.totalorder %s205, %s206
    %p218 = scmp.eq.s32.totalorder %s28, 1
    %p219 = por %p217, %p218
    %p221 = scmp.ne.s32.totalorder %s206, %s220
    %p222 = scmp.eq.s32.totalorder %s28, 0
    %p223 = por %p221, %p222
    %s225 = sadd.s32 %s224, 1
    %p228 = scmp.eq.s32.totalorder %s22, 1
    %p229 = scmp.ne.s32.totalorder %s224, %s226
    %p230 = scmp.eq.s32.totalorder %s22, 0
    %p231 = por %p229, %p230
    %p232 = scmp.ne.s32.totalorder %s224, %s226
    %p233 = scmp.eq.s32.totalorder %s27, 1
    %p234 = por %p232, %p233
    %p235 = scmp.ne.s32.totalorder %s226, %s227
    %p236 = scmp.eq.s32.totalorder %s27, 0
    %p237 = por %p235, %p236
    %p238 = scmp.ne.s32.totalorder %s226, %s227
    %p239 = scmp.eq.s32.totalorder %s28, 1
    %p240 = por %p238, %p239
    %p242 = scmp.ne.s32.totalorder %s227, %s241
    %p243 = scmp.eq.s32.totalorder %s28, 0
    %p244 = por %p242, %p243
    %s246 = sadd.s32 %s245, 1
    %p249 = scmp.eq.s32.totalorder %s22, 1
    %p250 = scmp.ne.s32.totalorder %s245, %s247
    %p251 = scmp.eq.s32.totalorder %s22, 0
    %p252 = por %p250, %p251
    %p253 = scmp.ne.s32.totalorder %s245, %s247
    %p254 = scmp.eq.s32.totalorder %s27, 1
    %p255 = por %p253, %p254
    %p256 = scmp.ne.s32.totalorder %s247, %s248
    %p257 = scmp.eq.s32.totalorder %s27, 0
    %p258 = por %p256, %p257
    %p259 = scmp.ne.s32.totalorder %s247, %s248
    %p260 = scmp.eq.s32.totalorder %s28, 1
    %p261 = por %p259, %p260
    %p263 = scmp.ne.s32.totalorder %s248, %s262
    %p264 = scmp.eq.s32.totalorder %s28, 0
    %p265 = por %p263, %p264
    %s267 = sadd.s32 %s266, 1
    %p270 = scmp.eq.s32.totalorder %s22, 1
    %p271 = scmp.ne.s32.totalorder %s266, %s268
    %p272 = scmp.eq.s32.totalorder %s22, 0
    %p273 = por %p271, %p272
    %p274 = scmp.ne.s32.totalorder %s266, %s268
    %p275 = scmp.eq.s32.totalorder %s27, 1
    %p276 = por %p274, %p275
    %p277 = scmp.ne.s32.totalorder %s268, %s269
    %p278 = scmp.eq.s32.totalorder %s27, 0
    %p279 = por %p277, %p278
    %p280 = scmp.ne.s32.totalorder %s268, %s269
    %p281 = scmp.eq.s32.totalorder %s28, 1
    %p282 = por %p280, %p281
    %p284 = scmp.ne.s32.totalorder %s269, %s283
    %p285 = scmp.eq.s32.totalorder %s28, 0
    %p286 = por %p284, %p285
    %s288 = sadd.s32 %s287, 1
    %p291 = scmp.eq.s32.totalorder %s22, 1
    %p292 = scmp.ne.s32.totalorder %s287, %s289
    %p293 = scmp.eq.s32.totalorder %s22, 0
    %p294 = por %p292, %p293
    %p295 = scmp.ne.s32.totalorder %s287, %s289
    %p296 = scmp.eq.s32.totalorder %s27, 1
    %p297 = por %p295, %p296
    %p298 = scmp.ne.s32.totalorder %s289, %s290
    %p299 = scmp.eq.s32.totalorder %s27, 0
    %p300 = por %p298, %p299
    %p301 = scmp.ne.s32.totalorder %s289, %s290
    %p302 = scmp.eq.s32.totalorder %s28, 1
    %p303 = por %p301, %p302
    %p305 = scmp.ne.s32.totalorder %s290, %s304
    %p306 = scmp.eq.s32.totalorder %s28, 0
    %p307 = por %p305, %p306
    %s309 = sadd.s32 %s308, 1
    %p312 = scmp.eq.s32.totalorder %s22, 1
    %p313 = scmp.ne.s32.totalorder %s308, %s310
    %p314 = scmp.eq.s32.totalorder %s22, 0
    %p315 = por %p313, %p314
    %p316 = scmp.ne.s32.totalorder %s308, %s310
    %p317 = scmp.eq.s32.totalorder %s27, 1
    %p318 = por %p316, %p317
    %p319 = scmp.ne.s32.totalorder %s310, %s311
    %p320 = scmp.eq.s32.totalorder %s27, 0
    %p321 = por %p319, %p320
    %p322 = scmp.ne.s32.totalorder %s310, %s311
    %p323 = scmp.eq.s32.totalorder %s28, 1
    %p324 = por %p322, %p323
    %p326 = scmp.ne.s32.totalorder %s311, %s325
    %p327 = scmp.eq.s32.totalorder %s28, 0
    %p328 = por %p326, %p327
    %s330 = sadd.s32 %s329, 1
    %p333 = scmp.eq.s32.totalorder %s22, 1
    %p334 = scmp.ne.s32.totalorder %s329, %s331
    %p335 = scmp.eq.s32.totalorder %s22, 0
    %p336 = por %p334, %p335
    %p337 = scmp.ne.s32.totalorder %s329, %s331
    %p338 = scmp.eq.s32.totalorder %s27, 1
    %p339 = por %p337, %p338
    %p340 = scmp.ne.s32.totalorder %s331, %s332
    %p341 = scmp.eq.s32.totalorder %s27, 0
    %p342 = por %p340, %p341
    %p343 = scmp.ne.s32.totalorder %s331, %s332
    %p344 = scmp.eq.s32.totalorder %s28, 1
    %p345 = por %p343, %p344
    %p347 = scmp.ne.s32.totalorder %s332, %s346
    %p348 = scmp.eq.s32.totalorder %s28, 0
    %p349 = por %p347, %p348
    %s351 = sadd.s32 %s350, 1
    %p354 = scmp.eq.s32.totalorder %s22, 1
    %p355 = scmp.ne.s32.totalorder %s350, %s352
    %p356 = scmp.eq.s32.totalorder %s22, 0
    %p357 = por %p355, %p356
    %p358 = scmp.ne.s32.totalorder %s350, %s352
    %p359 = scmp.eq.s32.totalorder %s27, 1
    %p360 = por %p358, %p359
    %p361 = scmp.ne.s32.totalorder %s352, %s353
    %p362 = scmp.eq.s32.totalorder %s27, 0
    %p363 = por %p361, %p362
    %p364 = scmp.ne.s32.totalorder %s352, %s353
    %p365 = scmp.eq.s32.totalorder %s28, 1
    %p366 = por %p364, %p365
    %p368 = scmp.ne.s32.totalorder %s353, %s367
    %p369 = scmp.eq.s32.totalorder %s28, 0
    %p370 = por %p368, %p369
    %s371 = ssub.s32 %s22, %s29
    %p372 = scmp.eq.s32.totalorder %s371, 0
    %s374 = sadd.s32 %s373, 1
    %s375 = scalar_select %p372, %s373, %s374
    %p378 = pneg %p372
    %p379 = scmp.eq.s32.totalorder %s22, 1
    %p380 = por %p378, %p379
    %p381 = scmp.ne.s32.totalorder %s373, %s376
    %p382 = scmp.eq.s32.totalorder %s22, 0
    %p383 = por %p381, %p382
    %p384 = scmp.ne.s32.totalorder %s373, %s376
    %p385 = scmp.eq.s32.totalorder %s27, 1
    %p386 = por %p384, %p385
    %p387 = scmp.ne.s32.totalorder %s376, %s377
    %p388 = scmp.eq.s32.totalorder %s27, 0
    %p389 = por %p387, %p388
    %p390 = scmp.ne.s32.totalorder %s376, %s377
    %p391 = scmp.eq.s32.totalorder %s28, 1
    %p392 = por %p390, %p391
    %p394 = scmp.ne.s32.totalorder %s377, %s393
    %p395 = scmp.eq.s32.totalorder %s28, 0
    %p396 = por %p394, %p395
    %p397 = scmp.le.s32.totalorder 1, %s22
    %p398 = scmp.lt.s32.totalorder %s22, 3
    %p399 = pnand %p397, %p398
    %p400 = pneg %p399
    // Predicated region
    $region9: #{bottleneck_forward.1} parent=5 // pred_check
      _
    $region10: #{bottleneck_forward.1} parent=5 // pred_check_branch
      %402 = sbr.rel (%p399) target = $region12
    $region11: #{bottleneck_forward.1} parent=5 // pred_region
      %s403 = ssub.s32 %s22, 1
      // Predicated region
      $region13: #{bottleneck_forward.1} parent=11 // pred_check
        %p404 = pneg %p69
      $region14: #{bottleneck_forward.1} parent=11 // pred_check_branch
        %406 = sbr.rel (%p404) target = $region16
      $region15: #{bottleneck_forward.1} parent=11 // pred_region
        _
      $region16: #{bottleneck_forward.1} parent=11 // pred_fallthru
        _
      // Predicated region
      $region17: #{bottleneck_forward.1} parent=11 // pred_check
        %p407 = pneg %p90
      $region18: #{bottleneck_forward.1} parent=11 // pred_check_branch
        %409 = sbr.rel (%p407) target = $region20
      $region19: #{bottleneck_forward.1} parent=11 // pred_region
        _
      $region20: #{bottleneck_forward.1} parent=11 // pred_fallthru
        _
      // Predicated region
      $region21: #{bottleneck_forward.1} parent=11 // pred_check
        %p410 = pneg %p111
      $region22: #{bottleneck_forward.1} parent=11 // pred_check_branch
        %412 = sbr.rel (%p410) target = $region24
      $region23: #{bottleneck_forward.1} parent=11 // pred_region
        _
      $region24: #{bottleneck_forward.1} parent=11 // pred_fallthru
        _
      // Predicated region
      $region25: #{bottleneck_forward.1} parent=11 // pred_check
        %p413 = pneg %p132
      $region26: #{bottleneck_forward.1} parent=11 // pred_check_branch
        %415 = sbr.rel (%p413) target = $region28
      $region27: #{bottleneck_forward.1} parent=11 // pred_region
        _
      $region28: #{bottleneck_forward.1} parent=11 // pred_fallthru
        _
      // Predicated region
      $region29: #{bottleneck_forward.1} parent=11 // pred_check
        %p416 = pneg %p153
      $region30: #{bottleneck_forward.1} parent=11 // pred_check_branch
        %418 = sbr.rel (%p416) target = $region32
      $region31: #{bottleneck_forward.1} parent=11 // pred_region
        _
      $region32: #{bottleneck_forward.1} parent=11 // pred_fallthru
        _
      // Predicated region
      $region33: #{bottleneck_forward.1} parent=11 // pred_check
        %p419 = pneg %p174
      $region34: #{bottleneck_forward.1} parent=11 // pred_check_branch
        %421 = sbr.rel (%p419) target = $region36
      $region35: #{bottleneck_forward.1} parent=11 // pred_region
        _
      $region36: #{bottleneck_forward.1} parent=11 // pred_fallthru
        _
      // Predicated region
      $region37: #{bottleneck_forward.1} parent=11 // pred_check
        %p422 = pneg %p195
      $region38: #{bottleneck_forward.1} parent=11 // pred_check_branch
        %424 = sbr.rel (%p422) target = $region40
      $region39: #{bottleneck_forward.1} parent=11 // pred_region
        _
      $region40: #{bottleneck_forward.1} parent=11 // pred_fallthru
        _
      // Predicated region
      $region41: #{bottleneck_forward.1} parent=11 // pred_check
        %p425 = pneg %p216
      $region42: #{bottleneck_forward.1} parent=11 // pred_check_branch
        %427 = sbr.rel (%p425) target = $region44
      $region43: #{bottleneck_forward.1} parent=11 // pred_region
        _
      $region44: #{bottleneck_forward.1} parent=11 // pred_fallthru
        _
      // Predicated region
      $region45: #{bottleneck_forward.1} parent=11 // pred_check
        %p428 = pneg %p237
      $region46: #{bottleneck_forward.1} parent=11 // pred_check_branch
        %430 = sbr.rel (%p428) target = $region48
      $region47: #{bottleneck_forward.1} parent=11 // pred_region
        _
      $region48: #{bottleneck_forward.1} parent=11 // pred_fallthru
        _
      // Predicated region
      $region49: #{bottleneck_forward.1} parent=11 // pred_check
        %p431 = pneg %p258
      $region50: #{bottleneck_forward.1} parent=11 // pred_check_branch
        %433 = sbr.rel (%p431) target = $region52
      $region51: #{bottleneck_forward.1} parent=11 // pred_region
        _
      $region52: #{bottleneck_forward.1} parent=11 // pred_fallthru
        _
      // Predicated region
      $region53: #{bottleneck_forward.1} parent=11 // pred_check
        %p434 = pneg %p279
      $region54: #{bottleneck_forward.1} parent=11 // pred_check_branch
        %436 = sbr.rel (%p434) target = $region56
      $region55: #{bottleneck_forward.1} parent=11 // pred_region
        _
      $region56: #{bottleneck_forward.1} parent=11 // pred_fallthru
        _
      // Predicated region
      $region57: #{bottleneck_forward.1} parent=11 // pred_check
        %p437 = pneg %p300
      $region58: #{bottleneck_forward.1} parent=11 // pred_check_branch
        %439 = sbr.rel (%p437) target = $region60
      $region59: #{bottleneck_forward.1} parent=11 // pred_region
        _
      $region60: #{bottleneck_forward.1} parent=11 // pred_fallthru
        _
      // Predicated region
      $region61: #{bottleneck_forward.1} parent=11 // pred_check
        %p440 = pneg %p321
      $region62: #{bottleneck_forward.1} parent=11 // pred_check_branch
        %442 = sbr.rel (%p440) target = $region64
      $region63: #{bottleneck_forward.1} parent=11 // pred_region
        _
      $region64: #{bottleneck_forward.1} parent=11 // pred_fallthru
        _
      // Predicated region
      $region65: #{bottleneck_forward.1} parent=11 // pred_check
        %p443 = pneg %p342
      $region66: #{bottleneck_forward.1} parent=11 // pred_check_branch
        %445 = sbr.rel (%p443) target = $region68
      $region67: #{bottleneck_forward.1} parent=11 // pred_region
        _
      $region68: #{bottleneck_forward.1} parent=11 // pred_fallthru
        _
      // Predicated region
      $region69: #{bottleneck_forward.1} parent=11 // pred_check
        %p446 = pneg %p363
      $region70: #{bottleneck_forward.1} parent=11 // pred_check_branch
        %448 = sbr.rel (%p446) target = $region72
      $region71: #{bottleneck_forward.1} parent=11 // pred_region
        _
      $region72: #{bottleneck_forward.1} parent=11 // pred_fallthru
        _
    $region12: #{bottleneck_forward.1} parent=5 // pred_fallthru
      _
    %p449 = scmp.lt.s32.totalorder %s22, 2
    // Predicated region
    $region73: #{bottleneck_forward.1} parent=5 // pred_check
      %p450 = pneg %p449
    $region74: #{bottleneck_forward.1} parent=5 // pred_check_branch
      %452 = sbr.rel (%p450) target = $region76
    $region75: #{bottleneck_forward.1} parent=5 // pred_region
      // Predicated region
      $region77: #{bottleneck_forward.1} parent=75 // pred_check
        %p453 = pneg %p42
      $region78: #{bottleneck_forward.1} parent=75 // pred_check_branch
        %455 = sbr.rel (%p453) target = $region80
      $region79: #{bottleneck_forward.1} parent=75 // pred_region
        %p456 = scmp.lt.s32.totalorder %s22, 1
        %s457 = scalar_select %p456, %s22, 1
        %s458 = smul.addr %s457, 2
        %s459 = smul.addr %s458, 4
        %s460 = scalar_lea.vmem %s0, %s459
      $region80: #{bottleneck_forward.1} parent=75 // pred_fallthru
        _
    $region76: #{bottleneck_forward.1} parent=5 // pred_fallthru
      _
    %p461 = scmp.le.s32.totalorder 1, %s22
    %p462 = scmp.lt.s32.totalorder %s22, 3
    %p463 = pnand %p461, %p462
    %p464 = pneg %p463
    // Predicated region
    $region81: #{bottleneck_forward.1} parent=5 // pred_check
      _
    $region82: #{bottleneck_forward.1} parent=5 // pred_check_branch
      %466 = sbr.rel (%p463) target = $region84
    $region83: #{bottleneck_forward.1} parent=5 // pred_region
      %s467 = ssub.s32 %s22, 1
      %p468 = scmp.lt.s32.totalorder %s27, 1
      %s469 = scalar_select %p468, %s27, 1
      %s470 = smul.addr %s469, 2
      %s471 = smul.addr %s470, 4
      %s472 = scalar_lea.vmem %s0, %s471
      %p473 = pneg %p48
      %p474 = pneg %p45
      %p475 = pneg %p69
      %p476 = pneg %p66
      %p477 = pneg %p90
      %p478 = pneg %p87
      %p479 = pneg %p111
      %p480 = pneg %p108
      %p481 = pneg %p132
      %p482 = pneg %p129
      %p483 = pneg %p153
      %p484 = pneg %p150
      %p485 = pneg %p174
      %p486 = pneg %p171
      %p487 = pneg %p195
      %p488 = pneg %p192
      %p489 = pneg %p216
      %p490 = pneg %p213
      %p491 = pneg %p237
      %p492 = pneg %p234
      %p493 = pneg %p258
      %p494 = pneg %p255
      %p495 = pneg %p279
      %p496 = pneg %p276
      %p497 = pneg %p300
      %p498 = pneg %p297
      %p499 = pneg %p321
      %p500 = pneg %p318
      %p501 = pneg %p342
      %p502 = pneg %p339
      %p503 = pneg %p363
      %p504 = pneg %p360
      %p505 = pneg %p389
      %p506 = pneg %p386
      %p507 = scmp.lt.s32.totalorder %s27, 1
      %s508 = scalar_select %p507, %s27, 1
      %s509 = smul.addr %s508, 4
      %s510 = smul.addr %s509, 8
      %s511 = scalar_lea.vmem %s16, %s510
      %p512 = scmp.lt.s32.totalorder %s27, 1
      %s513 = scalar_select %p512, %s27, 1
      %s514 = smul.addr %s513, 2
      %s515 = smul.addr %s514, 4
      %s516 = scalar_lea.vmem %s0, %s515
      %p517 = scmp.lt.s32.totalorder %s27, 1
      %s518 = scalar_select %p517, %s27, 1
      %s519 = smul.addr %s518, 4
      %s520 = smul.addr %s519, 8
      %s521 = scalar_lea.vmem %s16, %s520
      %v522 = vld [vmem:[%s516] sm:$0xff]
      %v523 = vld [vmem:[%s1] sm:$0xf]
      %v525 = vcombine.high %v522, %v522
      %vm526 = vcmask 31744
      %v528 = vsel %vm526, %v523, 0
      %vm530 = vcmask 1043456
      %v531 = vsel %vm530, %v522, 0
      %v533 = vsel %vm530, %v525, 0
      %535 = vmatprep.subr.mxu0 %v533
      %536 = vmatpush1.msra.mxu0 %v531
      %537 = vmatprep.subr.mxu0 0.0
      %538 = vmatpush1.msra.mxu0 0.0
      %539 = vmatprep.subr.mxu0 0.0
      %540 = vmatpush1.msra.mxu0 0.0
      %541 = vmatprep.subr.mxu0 0.0
      %542 = vmatpush1.msra.mxu0 0.0
      %543 = vmatprep.subr.mxu0 0.0
      %544 = vmatpush1.msra.mxu0 0.0
      %545 = vmatprep.subr.mxu0 0.0
      %546 = vmatpush1.msra.mxu0 0.0
      %547 = vmatprep.subr.mxu0 0.0
      %548 = vmatpush1.msra.mxu0 0.0
      %549 = vmatprep.subr.mxu0 0.0
      %550 = vmatpush1.msra.mxu0 0.0
      %551 = vmatprep.subr.mxu0 0.0
      %552 = vmatpush1.msra.mxu0 0.0
      %553 = vmatprep.subr.mxu0 0.0
      %554 = vmatpush1.msra.mxu0 0.0
      %555 = vmatprep.subr.mxu0 0.0
      %556 = vmatpush1.msra.mxu0 0.0
      %557 = vmatprep.subr.mxu0 0.0
      %558 = vmatpush1.msra.mxu0 0.0
      %559 = vmatprep.subr.mxu0 0.0
      %560 = vmatpush1.msra.mxu0 0.0
      %561 = vmatprep.subr.mxu0 0.0
      %562 = vmatpush1.msra.mxu0 0.0
      %563 = vmatprep.subr.mxu0 0.0
      %564 = vmatpush1.msra.mxu0 0.0
      %565 = vmatprep.subr.mxu0 0.0
      %566 = vmatpush1.msra.mxu0 0.0
      %567 = vmatprep.subr.mxu0 0.0
      %568 = vmatpush1.msra.mxu0 0.0
      %569 = vmatprep.subr.mxu0 0.0
      %570 = vmatpush1.msra.mxu0 0.0
      %571 = vmatprep.subr.mxu0 0.0
      %572 = vmatpush1.msra.mxu0 0.0
      %573 = vmatprep.subr.mxu0 0.0
      %574 = vmatpush1.msra.mxu0 0.0
      %575 = vmatprep.subr.mxu0 0.0
      %576 = vmatpush1.msra.mxu0 0.0
      %577 = vmatprep.subr.mxu0 0.0
      %578 = vmatpush1.msra.mxu0 0.0
      %579 = vmatprep.subr.mxu0 0.0
      %580 = vmatpush1.msra.mxu0 0.0
      %581 = vmatprep.subr.mxu0 0.0
      %582 = vmatpush1.msra.mxu0 0.0
      %583 = vmatprep.subr.mxu0 0.0
      %584 = vmatpush1.msra.mxu0 0.0
      %585 = vmatprep.subr.mxu0 0.0
      %586 = vmatpush1.msra.mxu0 0.0
      %587 = vmatprep.subr.mxu0 0.0
      %588 = vmatpush1.msra.mxu0 0.0
      %589 = vmatprep.subr.mxu0 0.0
      %590 = vmatpush1.msra.mxu0 0.0
      %591 = vmatprep.subr.mxu0 0.0
      %592 = vmatpush1.msra.mxu0 0.0
      %593 = vmatprep.subr.mxu0 0.0
      %594 = vmatpush1.msra.mxu0 0.0
      %595 = vmatprep.subr.mxu0 0.0
      %596 = vmatpush1.msra.mxu0 0.0
      %597 = vmatprep.subr.mxu0 0.0
      %598 = vmatpush1.msra.mxu0 0.0
      %599 = vmatprep.mubr.f32.mxu0 0.0
      %600 = vmatmul.mubr.f32.gmra.mrb[0].mxu0 %v528
      %v601 = vpop.f32.mrb[0].mxu0
      %v602 = vadd.f32 0.0, %v601
      %v603 = vpop.f32.mrb[0].mxu0
      %v604 = vadd.f32 0.0, %v603
      %605 = vdwg.mxu0
      %v606 = vld [vmem:[%s2] sm:$0xf]
      %608 = vset.pattern.permute.xlu0 0
      %609 = vperm.xlu0 %608, %v606
      %v610 = vpop.permute.xlu0 %609
      %v612 = vmul.f32 %v602, %v610
      %v613 = vmul.f32 %v604, %v610
      %v614 = vld [vmem:[%s3] sm:$0xf]
      %616 = vset.pattern.permute.xlu0 0
      %617 = vperm.xlu0 %616, %v614
      %v618 = vpop.permute.xlu0 %617
      %v620 = vadd.f32 %v612, %v618
      %v621 = vadd.f32 %v613, %v618
      %v622 = vmax.f32 %v620, 0.0
      %v623 = vmax.f32 %v621, 0.0
      %624 = vst.msk [vmem:[#allocation2] sm:$0xff] %vm526, 0.0
      %625 = vst.msk [vmem:[#allocation2 + $0x8] sm:$0xff] %vm526, 0.0
      %vm626 = vcmask 25600
      %627 = vst.msk [vmem:[#allocation2 + $0x10] sm:$0x3] %vm626, 0.0
      %628 = vst.msk [vmem:[#allocation2 + $0x18] sm:$0xff] %vm526, 0.0
      %629 = vst.msk [vmem:[#allocation2 + $0x20] sm:$0xff] %vm526, 0.0
      %630 = vst.msk [vmem:[#allocation2 + $0x28] sm:$0x3] %vm626, 0.0
      %631 = vst.msk [vmem:[#allocation2 + $0x30] sm:$0xff] %vm526, 0.0
      %632 = vst.msk [vmem:[#allocation2 + $0x38] sm:$0xff] %vm526, 0.0
      %633 = vst.msk [vmem:[#allocation2 + $0x40] sm:$0x3] %vm626, 0.0
      %634 = vst.msk [vmem:[#allocation2 + $0x48] sm:$0xff] %vm526, 0.0
      %635 = vst.msk [vmem:[#allocation2 + $0x50] sm:$0xff] %vm526, 0.0
      %636 = vst.msk [vmem:[#allocation2 + $0x58] sm:$0x3] %vm626, 0.0
      %637 = vst.msk [vmem:[#allocation2 + $0x60] sm:$0xff] %vm526, 0.0
      %638 = vst.msk [vmem:[#allocation2 + $0x68] sm:$0xff] %vm526, 0.0
      %639 = vst.msk [vmem:[#allocation2 + $0x70] sm:$0x3] %vm626, 0.0
      %640 = vst.msk [vmem:[#allocation2 + $0x78] sm:$0xff] %vm526, 0.0
      %641 = vst.msk [vmem:[#allocation2 + $0x80] sm:$0xff] %vm526, 0.0
      %642 = vst.msk [vmem:[#allocation2 + $0x88] sm:$0x3] %vm626, 0.0
      %643 = vst.msk [vmem:[#allocation2 + $0x90] sm:$0xff] %vm526, 0.0
      %644 = vst.msk [vmem:[#allocation2 + $0x98] sm:$0xff] %vm526, 0.0
      %645 = vst.msk [vmem:[#allocation2 + $0xa0] sm:$0x3] %vm626, 0.0
      %646 = vst.msk [vmem:[#allocation2 + $0xa8] sm:$0xff] %vm526, 0.0
      %647 = vst.msk [vmem:[#allocation2 + $0xb0] sm:$0xff] %vm526, 0.0
      %648 = vst.msk [vmem:[#allocation2 + $0xb8] sm:$0x3] %vm626, 0.0
      %649 = vst.msk [vmem:[#allocation2 + $0xc0] sm:$0xff] %vm526, 0.0
      %650 = vst.msk [vmem:[#allocation2 + $0xc8] sm:$0xff] %vm526, 0.0
      %651 = vst.msk [vmem:[#allocation2 + $0xd0] sm:$0x3] %vm626, 0.0
      %652 = vst.msk [vmem:[#allocation2 + $0xd8] sm:$0xff] %vm526, 0.0
      %653 = vst.msk [vmem:[#allocation2 + $0xe0] sm:$0xff] %vm526, 0.0
      %654 = vst.msk [vmem:[#allocation2 + $0xe8] sm:$0x3] %vm626, 0.0
      %655 = vst.msk [vmem:[#allocation2 + $0xf0] sm:$0xff] %vm526, 0.0
      %656 = vst.msk [vmem:[#allocation2 + $0xf8] sm:$0xff] %vm526, 0.0
      %657 = vst.msk [vmem:[#allocation2 + $0x100] sm:$0x3] %vm626, 0.0
      %658 = vst.msk [vmem:[#allocation2 + $0x108] sm:$0xff] %vm526, 0.0
      %659 = vst.msk [vmem:[#allocation2 + $0x110] sm:$0xff] %vm526, 0.0
      %660 = vst.msk [vmem:[#allocation2 + $0x118] sm:$0x3] %vm626, 0.0
      %661 = vst.msk [vmem:[#allocation2 + $0x120] sm:$0xff] %vm526, 0.0
      %662 = vst.msk [vmem:[#allocation2 + $0x128] sm:$0xff] %vm526, 0.0
      %663 = vst.msk [vmem:[#allocation2 + $0x130] sm:$0x3] %vm626, 0.0
      %664 = vst.msk [vmem:[#allocation2 + $0x138] sm:$0xff] %vm526, 0.0
      %665 = vst.msk [vmem:[#allocation2 + $0x140] sm:$0xff] %vm526, 0.0
      %666 = vst.msk [vmem:[#allocation2 + $0x148] sm:$0x3] %vm626, 0.0
      %667 = vst.msk [vmem:[#allocation2 + $0x150] sm:$0xff] %vm526, 0.0
      %668 = vst.msk [vmem:[#allocation2 + $0x158] sm:$0xff] %vm526, 0.0
      %669 = vst.msk [vmem:[#allocation2 + $0x160] sm:$0x3] %vm626, 0.0
      %670 = vst.msk [vmem:[#allocation2 + $0x168] sm:$0xff] %vm526, 0.0
      %671 = vst.msk [vmem:[#allocation2 + $0x170] sm:$0xff] %vm526, 0.0
      %672 = vst.msk [vmem:[#allocation2 + $0x178] sm:$0x3] %vm626, 0.0
      %673 = vst.msk [vmem:[#allocation2 + $0x180] sm:$0xff] %vm526, 0.0
      %674 = vst.msk [vmem:[#allocation2 + $0x188] sm:$0xff] %vm526, 0.0
      %675 = vst.msk [vmem:[#allocation2 + $0x190] sm:$0x3] %vm626, 0.0
      %676 = vst.msk [vmem:[#allocation2 + $0x198] sm:$0xff] %vm526, 0.0
      %677 = vst.msk [vmem:[#allocation2 + $0x1a0] sm:$0xff] %vm526, 0.0
      %678 = vst.msk [vmem:[#allocation2 + $0x1a8] sm:$0x3] %vm626, 0.0
      %679 = vxpose.xlu0.b32.start [1/16] %v622, 128
      %680 = vxpose.xlu0.b32.cont [2/16] 0.0, 128
      %681 = vxpose.xlu0.b32.cont [3/16] 0.0, 128
      %682 = vxpose.xlu0.b32.cont [4/16] 0.0, 128
      %683 = vxpose.xlu0.b32.cont [5/16] 0.0, 128
      %684 = vxpose.xlu0.b32.cont [6/16] 0.0, 128
      %685 = vxpose.xlu0.b32.cont [7/16] 0.0, 128
      %686 = vxpose.xlu0.b32.cont [8/16] 0.0, 128
      %687 = vxpose.xlu0.b32.cont [9/16] 0.0, 128
      %688 = vxpose.xlu0.b32.cont [10/16] 0.0, 128
      %689 = vxpose.xlu0.b32.cont [11/16] 0.0, 128
      %690 = vxpose.xlu0.b32.cont [12/16] 0.0, 128
      %691 = vxpose.xlu0.b32.cont [13/16] 0.0, 128
      %692 = vxpose.xlu0.b32.cont [14/16] 0.0, 128
      %693 = vxpose.xlu0.b32.cont [15/16] 0.0, 128
      %694 = vxpose.xlu0.b32.end [16/16] 0.0, 128
      %v695 = vpop.trf.xlu0
      %v696 = vpop.trf.xlu0
      %v697 = vpop.trf.xlu0
      %v698 = vpop.trf.xlu0
      %v699 = vpop.trf.xlu0
      %v700 = vpop.trf.xlu0
      %v701 = vpop.trf.xlu0
      %v702 = vpop.trf.xlu0
      %v703 = vpop.trf.xlu0
      %v704 = vpop.trf.xlu0
      %v705 = vpop.trf.xlu0
      %v706 = vpop.trf.xlu0
      %v707 = vpop.trf.xlu0
      %v708 = vpop.trf.xlu0
      %v709 = vpop.trf.xlu0
      %v710 = vpop.trf.xlu0
      %711 = vxpose.xlu0.b32.start [1/16] %v623, 128
      %712 = vxpose.xlu0.b32.cont [2/16] 0.0, 128
      %713 = vxpose.xlu0.b32.cont [3/16] 0.0, 128
      %714 = vxpose.xlu0.b32.cont [4/16] 0.0, 128
      %715 = vxpose.xlu0.b32.cont [5/16] 0.0, 128
      %716 = vxpose.xlu0.b32.cont [6/16] 0.0, 128
      %717 = vxpose.xlu0.b32.cont [7/16] 0.0, 128
      %718 = vxpose.xlu0.b32.cont [8/16] 0.0, 128
      %719 = vxpose.xlu0.b32.cont [9/16] 0.0, 128
      %720 = vxpose.xlu0.b32.cont [10/16] 0.0, 128
      %721 = vxpose.xlu0.b32.cont [11/16] 0.0, 128
      %722 = vxpose.xlu0.b32.cont [12/16] 0.0, 128
      %723 = vxpose.xlu0.b32.cont [13/16] 0.0, 128
      %724 = vxpose.xlu0.b32.cont [14/16] 0.0, 128
      %725 = vxpose.xlu0.b32.cont [15/16] 0.0, 128
      %726 = vxpose.xlu0.b32.end [16/16] 0.0, 128
      %v727 = vpop.trf.xlu0
      %v728 = vpop.trf.xlu0
      %v729 = vpop.trf.xlu0
      %v730 = vpop.trf.xlu0
      %v731 = vpop.trf.xlu0
      %v732 = vpop.trf.xlu0
      %v733 = vpop.trf.xlu0
      %v734 = vpop.trf.xlu0
      %v735 = vpop.trf.xlu0
      %v736 = vpop.trf.xlu0
      %v737 = vpop.trf.xlu0
      %v738 = vpop.trf.xlu0
      %v739 = vpop.trf.xlu0
      %v740 = vpop.trf.xlu0
      %v741 = vpop.trf.xlu0
      %v742 = vpop.trf.xlu0
      %s743 = scalar_lea.vmem [#allocation2], 24
      %744 = vst.msk [vmem:[%s743 + $0x1] sm:$0xff] %vm526, %v695
      %745 = vst.msk [vmem:[%s743 + $0x9] sm:$0xff] %vm526, %v696
      %746 = vst.msk [vmem:[%s743 + $0x19] sm:$0xff] %vm526, %v697
      %747 = vst.msk [vmem:[%s743 + $0x21] sm:$0xff] %vm526, %v698
      %748 = vst.msk [vmem:[%s743 + $0x31] sm:$0xff] %vm526, %v699
      %749 = vst.msk [vmem:[%s743 + $0x39] sm:$0xff] %vm526, %v700
      %750 = vst.msk [vmem:[%s743 + $0x49] sm:$0xff] %vm526, %v701
      %751 = vst.msk [vmem:[%s743 + $0x51] sm:$0xff] %vm526, %v702
      %752 = vst.msk [vmem:[%s743 + $0x61] sm:$0xff] %vm526, %v703
      %753 = vst.msk [vmem:[%s743 + $0x69] sm:$0xff] %vm526, %v704
      %754 = vst.msk [vmem:[%s743 + $0x79] sm:$0xff] %vm526, %v705
      %755 = vst.msk [vmem:[%s743 + $0x81] sm:$0xff] %vm526, %v706
      %756 = vst.msk [vmem:[%s743 + $0x91] sm:$0xff] %vm526, %v707
      %757 = vst.msk [vmem:[%s743 + $0x99] sm:$0xff] %vm526, %v708
      %758 = vst.msk [vmem:[%s743 + $0xa9] sm:$0xff] %vm526, %v709
      %759 = vst.msk [vmem:[%s743 + $0xb1] sm:$0xff] %vm526, %v710
      %760 = vst.msk [vmem:[%s743 + $0xc1] sm:$0xff] %vm526, %v727
      %761 = vst.msk [vmem:[%s743 + $0xc9] sm:$0xff] %vm526, %v728
      %762 = vst.msk [vmem:[%s743 + $0xd9] sm:$0xff] %vm526, %v729
      %763 = vst.msk [vmem:[%s743 + $0xe1] sm:$0xff] %vm526, %v730
      %764 = vst.msk [vmem:[%s743 + $0xf1] sm:$0xff] %vm526, %v731
      %765 = vst.msk [vmem:[%s743 + $0xf9] sm:$0xff] %vm526, %v732
      %766 = vst.msk [vmem:[%s743 + $0x109] sm:$0xff] %vm526, %v733
      %767 = vst.msk [vmem:[%s743 + $0x111] sm:$0xff] %vm526, %v734
      %768 = vst.msk [vmem:[%s743 + $0x121] sm:$0xff] %vm526, %v735
      %769 = vst.msk [vmem:[%s743 + $0x129] sm:$0xff] %vm526, %v736
      %770 = vst.msk [vmem:[%s743 + $0x139] sm:$0xff] %vm526, %v737
      %771 = vst.msk [vmem:[%s743 + $0x141] sm:$0xff] %vm526, %v738
      %772 = vst.msk [vmem:[%s743 + $0x151] sm:$0xff] %vm526, %v739
      %773 = vst.msk [vmem:[%s743 + $0x159] sm:$0xff] %vm526, %v740
      %774 = vst.msk [vmem:[%s743 + $0x169] sm:$0xff] %vm526, %v741
      %775 = vst.msk [vmem:[%s743 + $0x171] sm:$0xff] %vm526, %v742
      %v776 = vld [vmem:[#allocation2] sm:$0xff]
      %v777 = vld [vmem:[#allocation2 + $0x8] sm:$0xff]
      %v778 = vld [vmem:[#allocation2 + $0x18] sm:$0xff]
      %v779 = vld [vmem:[#allocation2 + $0x20] sm:$0xff]
      %v780 = vld [vmem:[#allocation2 + $0x30] sm:$0xff]
      %v781 = vld [vmem:[#allocation2 + $0x38] sm:$0xff]
      %v782 = vld [vmem:[#allocation2 + $0x48] sm:$0xff]
      %v783 = vld [vmem:[#allocation2 + $0x50] sm:$0xff]
      %v784 = vld [vmem:[#allocation2 + $0x60] sm:$0xff]
      %v785 = vld [vmem:[#allocation2 + $0x68] sm:$0xff]
      %v786 = vld [vmem:[#allocation2 + $0x78] sm:$0xff]
      %v787 = vld [vmem:[#allocation2 + $0x80] sm:$0xff]
      %v788 = vld [vmem:[#allocation2 + $0x90] sm:$0xff]
      %v789 = vld [vmem:[#allocation2 + $0x98] sm:$0xff]
      %v790 = vld [vmem:[#allocation2 + $0xa8] sm:$0xff]
      %v791 = vld [vmem:[#allocation2 + $0xb0] sm:$0xff]
      %v792 = vld [vmem:[#allocation2 + $0xc0] sm:$0xff]
      %v793 = vld [vmem:[#allocation2 + $0xc8] sm:$0xff]
      %v794 = vld [vmem:[#allocation2 + $0xd8] sm:$0xff]
      %v795 = vld [vmem:[#allocation2 + $0xe0] sm:$0xff]
      %v796 = vld [vmem:[#allocation2 + $0xf0] sm:$0xff]
      %v797 = vld [vmem:[#allocation2 + $0xf8] sm:$0xff]
      %v798 = vld [vmem:[#allocation2 + $0x108] sm:$0xff]
      %v799 = vld [vmem:[#allocation2 + $0x110] sm:$0xff]
      %v800 = vld [vmem:[#allocation2 + $0x120] sm:$0xff]
      %v801 = vld [vmem:[#allocation2 + $0x128] sm:$0xff]
      %v802 = vld [vmem:[#allocation2 + $0x138] sm:$0xff]
      %v803 = vld [vmem:[#allocation2 + $0x140] sm:$0xff]
      %v804 = vld [vmem:[#allocation2 + $0x150] sm:$0xff]
      %v805 = vld [vmem:[#allocation2 + $0x158] sm:$0xff]
      %v806 = vld [vmem:[#allocation2 + $0x168] sm:$0xff]
      %v807 = vld [vmem:[#allocation2 + $0x170] sm:$0xff]
      %v808 = vld [vmem:[#allocation2 + $0x1] sm:$0xff]
      %v809 = vld [vmem:[#allocation2 + $0x9] sm:$0xff]
      %v810 = vld [vmem:[#allocation2 + $0x19] sm:$0xff]
      %v811 = vld [vmem:[#allocation2 + $0x21] sm:$0xff]
      %v812 = vld [vmem:[#allocation2 + $0x31] sm:$0xff]
      %v813 = vld [vmem:[#allocation2 + $0x39] sm:$0xff]
      %v814 = vld [vmem:[#allocation2 + $0x49] sm:$0xff]
      %v815 = vld [vmem:[#allocation2 + $0x51] sm:$0xff]
      %v816 = vld [vmem:[#allocation2 + $0x61] sm:$0xff]
      %v817 = vld [vmem:[#allocation2 + $0x69] sm:$0xff]
      %v818 = vld [vmem:[#allocation2 + $0x79] sm:$0xff]
      %v819 = vld [vmem:[#allocation2 + $0x81] sm:$0xff]
      %v820 = vld [vmem:[#allocation2 + $0x91] sm:$0xff]
      %v821 = vld [vmem:[#allocation2 + $0x99] sm:$0xff]
      %v822 = vld [vmem:[#allocation2 + $0xa9] sm:$0xff]
      %v823 = vld [vmem:[#allocation2 + $0xb1] sm:$0xff]
      %v824 = vld [vmem:[#allocation2 + $0xc1] sm:$0xff]
      %v825 = vld [vmem:[#allocation2 + $0xc9] sm:$0xff]
      %v826 = vld [vmem:[#allocation2 + $0xd9] sm:$0xff]
      %v827 = vld [vmem:[#allocation2 + $0xe1] sm:$0xff]
      %v828 = vld [vmem:[#allocation2 + $0xf1] sm:$0xff]
      %v829 = vld [vmem:[#allocation2 + $0xf9] sm:$0xff]
      %v830 = vld [vmem:[#allocation2 + $0x109] sm:$0xff]
      %v831 = vld [vmem:[#allocation2 + $0x111] sm:$0xff]
      %v832 = vld [vmem:[#allocation2 + $0x121] sm:$0xff]
      %v833 = vld [vmem:[#allocation2 + $0x129] sm:$0xff]
      %v834 = vld [vmem:[#allocation2 + $0x139] sm:$0xff]
      %v835 = vld [vmem:[#allocation2 + $0x141] sm:$0xff]
      %v836 = vld [vmem:[#allocation2 + $0x151] sm:$0xff]
      %v837 = vld [vmem:[#allocation2 + $0x159] sm:$0xff]
      %v838 = vld [vmem:[#allocation2 + $0x169] sm:$0xff]
      %v839 = vld [vmem:[#allocation2 + $0x171] sm:$0xff]
      %v840 = vld [vmem:[#allocation2 + $0x2] sm:$0xff]
      %v841 = vld [vmem:[#allocation2 + $0xa] sm:$0xff]
      %v842 = vld [vmem:[#allocation2 + $0x1a] sm:$0xff]
      %v843 = vld [vmem:[#allocation2 + $0x22] sm:$0xff]
      %v844 = vld [vmem:[#allocation2 + $0x32] sm:$0xff]
      %v845 = vld [vmem:[#allocation2 + $0x3a] sm:$0xff]
      %v846 = vld [vmem:[#allocation2 + $0x4a] sm:$0xff]
      %v847 = vld [vmem:[#allocation2 + $0x52] sm:$0xff]
      %v848 = vld [vmem:[#allocation2 + $0x62] sm:$0xff]
      %v849 = vld [vmem:[#allocation2 + $0x6a] sm:$0xff]
      %v850 = vld [vmem:[#allocation2 + $0x7a] sm:$0xff]
      %v851 = vld [vmem:[#allocation2 + $0x82] sm:$0xff]
      %v852 = vld [vmem:[#allocation2 + $0x92] sm:$0xff]
      %v853 = vld [vmem:[#allocation2 + $0x9a] sm:$0xff]
      %v854 = vld [vmem:[#allocation2 + $0xaa] sm:$0xff]
      %v855 = vld [vmem:[#allocation2 + $0xb2] sm:$0xff]
      %v856 = vld [vmem:[#allocation2 + $0xc2] sm:$0xff]
      %v857 = vld [vmem:[#allocation2 + $0xca] sm:$0xff]
      %v858 = vld [vmem:[#allocation2 + $0xda] sm:$0xff]
      %v859 = vld [vmem:[#allocation2 + $0xe2] sm:$0xff]
      %v860 = vld [vmem:[#allocation2 + $0xf2] sm:$0xff]
      %v861 = vld [vmem:[#allocation2 + $0xfa] sm:$0xff]
      %v862 = vld [vmem:[#allocation2 + $0x10a] sm:$0xff]
      %v863 = vld [vmem:[#allocation2 + $0x112] sm:$0xff]
      %v864 = vld [vmem:[#allocation2 + $0x122] sm:$0xff]
      %v865 = vld [vmem:[#allocation2 + $0x12a] sm:$0xff]
      %v866 = vld [vmem:[#allocation2 + $0x13a] sm:$0xff]
      %v867 = vld [vmem:[#allocation2 + $0x142] sm:$0xff]
      %v868 = vld [vmem:[#allocation2 + $0x152] sm:$0xff]
      %v869 = vld [vmem:[#allocation2 + $0x15a] sm:$0xff]
      %v870 = vld [vmem:[#allocation2 + $0x16a] sm:$0xff]
      %v871 = vld [vmem:[#allocation2 + $0x172] sm:$0xff]
      %v872 = vld [vmem:[%s743] sm:$0xff]
      %v873 = vld [vmem:[%s743 + $0x8] sm:$0xff]
      %v874 = vld [vmem:[%s743 + $0x18] sm:$0xff]
      %v875 = vld [vmem:[%s743 + $0x20] sm:$0xff]
      %v876 = vld [vmem:[%s743 + $0x30] sm:$0xff]
      %v877 = vld [vmem:[%s743 + $0x38] sm:$0xff]
      %v878 = vld [vmem:[%s743 + $0x48] sm:$0xff]
      %v879 = vld [vmem:[%s743 + $0x50] sm:$0xff]
      %v880 = vld [vmem:[%s743 + $0x60] sm:$0xff]
      %v881 = vld [vmem:[%s743 + $0x68] sm:$0xff]
      %v882 = vld [vmem:[%s743 + $0x78] sm:$0xff]
      %v883 = vld [vmem:[%s743 + $0x80] sm:$0xff]
      %v884 = vld [vmem:[%s743 + $0x90] sm:$0xff]
      %v885 = vld [vmem:[%s743 + $0x98] sm:$0xff]
      %v886 = vld [vmem:[%s743 + $0xa8] sm:$0xff]
      %v887 = vld [vmem:[%s743 + $0xb0] sm:$0xff]
      %v888 = vld [vmem:[%s743 + $0xc0] sm:$0xff]
      %v889 = vld [vmem:[%s743 + $0xc8] sm:$0xff]
      %v890 = vld [vmem:[%s743 + $0xd8] sm:$0xff]
      %v891 = vld [vmem:[%s743 + $0xe0] sm:$0xff]
      %v892 = vld [vmem:[%s743 + $0xf0] sm:$0xff]
      %v893 = vld [vmem:[%s743 + $0xf8] sm:$0xff]
      %v894 = vld [vmem:[%s743 + $0x108] sm:$0xff]
      %v895 = vld [vmem:[%s743 + $0x110] sm:$0xff]
      %v896 = vld [vmem:[%s743 + $0x120] sm:$0xff]
      %v897 = vld [vmem:[%s743 + $0x128] sm:$0xff]
      %v898 = vld [vmem:[%s743 + $0x138] sm:$0xff]
      %v899 = vld [vmem:[%s743 + $0x140] sm:$0xff]
      %v900 = vld [vmem:[%s743 + $0x150] sm:$0xff]
      %v901 = vld [vmem:[%s743 + $0x158] sm:$0xff]
      %v902 = vld [vmem:[%s743 + $0x168] sm:$0xff]
      %v903 = vld [vmem:[%s743 + $0x170] sm:$0xff]
      %v904 = vld [vmem:[%s743 + $0x1] sm:$0xff]
      %v905 = vld [vmem:[%s743 + $0x9] sm:$0xff]
      %v906 = vld [vmem:[%s743 + $0x19] sm:$0xff]
      %v907 = vld [vmem:[%s743 + $0x21] sm:$0xff]
      %v908 = vld [vmem:[%s743 + $0x31] sm:$0xff]
      %v909 = vld [vmem:[%s743 + $0x39] sm:$0xff]
      %v910 = vld [vmem:[%s743 + $0x49] sm:$0xff]
      %v911 = vld [vmem:[%s743 + $0x51] sm:$0xff]
      %v912 = vld [vmem:[%s743 + $0x61] sm:$0xff]
      %v913 = vld [vmem:[%s743 + $0x69] sm:$0xff]
      %v914 = vld [vmem:[%s743 + $0x79] sm:$0xff]
      %v915 = vld [vmem:[%s743 + $0x81] sm:$0xff]
      %v916 = vld [vmem:[%s743 + $0x91] sm:$0xff]
      %v917 = vld [vmem:[%s743 + $0x99] sm:$0xff]
      %v918 = vld [vmem:[%s743 + $0xa9] sm:$0xff]
      %v919 = vld [vmem:[%s743 + $0xb1] sm:$0xff]
      %v920 = vld [vmem:[%s743 + $0xc1] sm:$0xff]
      %v921 = vld [vmem:[%s743 + $0xc9] sm:$0xff]
      %v922 = vld [vmem:[%s743 + $0xd9] sm:$0xff]
      %v923 = vld [vmem:[%s743 + $0xe1] sm:$0xff]
      %v924 = vld [vmem:[%s743 + $0xf1] sm:$0xff]
      %v925 = vld [vmem:[%s743 + $0xf9] sm:$0xff]
      %v926 = vld [vmem:[%s743 + $0x109] sm:$0xff]
      %v927 = vld [vmem:[%s743 + $0x111] sm:$0xff]
      %v928 = vld [vmem:[%s743 + $0x121] sm:$0xff]
      %v929 = vld [vmem:[%s743 + $0x129] sm:$0xff]
      %v930 = vld [vmem:[%s743 + $0x139] sm:$0xff]
      %v931 = vld [vmem:[%s743 + $0x141] sm:$0xff]
      %v932 = vld [vmem:[%s743 + $0x151] sm:$0xff]
      %v933 = vld [vmem:[%s743 + $0x159] sm:$0xff]
      %v934 = vld [vmem:[%s743 + $0x169] sm:$0xff]
      %v935 = vld [vmem:[%s743 + $0x171] sm:$0xff]
      %v936 = vld [vmem:[%s743 + $0x2] sm:$0xff]
      %v937 = vld [vmem:[%s743 + $0xa] sm:$0xff]
      %v938 = vld [vmem:[%s743 + $0x1a] sm:$0xff]
      %v939 = vld [vmem:[%s743 + $0x22] sm:$0xff]
      %v940 = vld [vmem:[%s743 + $0x32] sm:$0xff]
      %v941 = vld [vmem:[%s743 + $0x3a] sm:$0xff]
      %v942 = vld [vmem:[%s743 + $0x4a] sm:$0xff]
      %v943 = vld [vmem:[%s743 + $0x52] sm:$0xff]
      %v944 = vld [vmem:[%s743 + $0x62] sm:$0xff]
      %v945 = vld [vmem:[%s743 + $0x6a] sm:$0xff]
      %v946 = vld [vmem:[%s743 + $0x7a] sm:$0xff]
      %v947 = vld [vmem:[%s743 + $0x82] sm:$0xff]
      %v948 = vld [vmem:[%s743 + $0x92] sm:$0xff]
      %v949 = vld [vmem:[%s743 + $0x9a] sm:$0xff]
      %v950 = vld [vmem:[%s743 + $0xaa] sm:$0xff]
      %v951 = vld [vmem:[%s743 + $0xb2] sm:$0xff]
      %v952 = vld [vmem:[%s743 + $0xc2] sm:$0xff]
      %v953 = vld [vmem:[%s743 + $0xca] sm:$0xff]
      %v954 = vld [vmem:[%s743 + $0xda] sm:$0xff]
      %v955 = vld [vmem:[%s743 + $0xe2] sm:$0xff]
      %v956 = vld [vmem:[%s743 + $0xf2] sm:$0xff]
      %v957 = vld [vmem:[%s743 + $0xfa] sm:$0xff]
      %v958 = vld [vmem:[%s743 + $0x10a] sm:$0xff]
      %v959 = vld [vmem:[%s743 + $0x112] sm:$0xff]
      %v960 = vld [vmem:[%s743 + $0x122] sm:$0xff]
      %v961 = vld [vmem:[%s743 + $0x12a] sm:$0xff]
      %v962 = vld [vmem:[%s743 + $0x13a] sm:$0xff]
      %v963 = vld [vmem:[%s743 + $0x142] sm:$0xff]
      %v964 = vld [vmem:[%s743 + $0x152] sm:$0xff]
      %v965 = vld [vmem:[%s743 + $0x15a] sm:$0xff]
      %v966 = vld [vmem:[%s743 + $0x16a] sm:$0xff]
      %v967 = vld [vmem:[%s743 + $0x172] sm:$0xff]
      %s968 = scalar_lea.vmem [#allocation2], 48
      %v969 = vld [vmem:[%s968] sm:$0xff]
      %v970 = vld [vmem:[%s968 + $0x8] sm:$0xff]
      %v971 = vld [vmem:[%s968 + $0x18] sm:$0xff]
      %v972 = vld [vmem:[%s968 + $0x20] sm:$0xff]
      %v973 = vld [vmem:[%s968 + $0x30] sm:$0xff]
      %v974 = vld [vmem:[%s968 + $0x38] sm:$0xff]
      %v975 = vld [vmem:[%s968 + $0x48] sm:$0xff]
      %v976 = vld [vmem:[%s968 + $0x50] sm:$0xff]
      %v977 = vld [vmem:[%s968 + $0x60] sm:$0xff]
      %v978 = vld [vmem:[%s968 + $0x68] sm:$0xff]
      %v979 = vld [vmem:[%s968 + $0x78] sm:$0xff]
      %v980 = vld [vmem:[%s968 + $0x80] sm:$0xff]
      %v981 = vld [vmem:[%s968 + $0x90] sm:$0xff]
      %v982 = vld [vmem:[%s968 + $0x98] sm:$0xff]
      %v983 = vld [vmem:[%s968 + $0xa8] sm:$0xff]
      %v984 = vld [vmem:[%s968 + $0xb0] sm:$0xff]
      %v985 = vld [vmem:[%s968 + $0xc0] sm:$0xff]
      %v986 = vld [vmem:[%s968 + $0xc8] sm:$0xff]
      %v987 = vld [vmem:[%s968 + $0xd8] sm:$0xff]
      %v988 = vld [vmem:[%s968 + $0xe0] sm:$0xff]
      %v989 = vld [vmem:[%s968 + $0xf0] sm:$0xff]
      %v990 = vld [vmem:[%s968 + $0xf8] sm:$0xff]
      %v991 = vld [vmem:[%s968 + $0x108] sm:$0xff]
      %v992 = vld [vmem:[%s968 + $0x110] sm:$0xff]
      %v993 = vld [vmem:[%s968 + $0x120] sm:$0xff]
      %v994 = vld [vmem:[%s968 + $0x128] sm:$0xff]
      %v995 = vld [vmem:[%s968 + $0x138] sm:$0xff]
      %v996 = vld [vmem:[%s968 + $0x140] sm:$0xff]
      %v997 = vld [vmem:[%s968 + $0x150] sm:$0xff]
      %v998 = vld [vmem:[%s968 + $0x158] sm:$0xff]
      %v999 = vld [vmem:[%s968 + $0x168] sm:$0xff]
      %v1000 = vld [vmem:[%s968 + $0x170] sm:$0xff]
      %v1001 = vld [vmem:[%s968 + $0x1] sm:$0xff]
      %v1002 = vld [vmem:[%s968 + $0x9] sm:$0xff]
      %v1003 = vld [vmem:[%s968 + $0x19] sm:$0xff]
      %v1004 = vld [vmem:[%s968 + $0x21] sm:$0xff]
      %v1005 = vld [vmem:[%s968 + $0x31] sm:$0xff]
      %v1006 = vld [vmem:[%s968 + $0x39] sm:$0xff]
      %v1007 = vld [vmem:[%s968 + $0x49] sm:$0xff]
      %v1008 = vld [vmem:[%s968 + $0x51] sm:$0xff]
      %v1009 = vld [vmem:[%s968 + $0x61] sm:$0xff]
      %v1010 = vld [vmem:[%s968 + $0x69] sm:$0xff]
      %v1011 = vld [vmem:[%s968 + $0x79] sm:$0xff]
      %v1012 = vld [vmem:[%s968 + $0x81] sm:$0xff]
      %v1013 = vld [vmem:[%s968 + $0x91] sm:$0xff]
      %v1014 = vld [vmem:[%s968 + $0x99] sm:$0xff]
      %v1015 = vld [vmem:[%s968 + $0xa9] sm:$0xff]
      %v1016 = vld [vmem:[%s968 + $0xb1] sm:$0xff]
      %v1017 = vld [vmem:[%s968 + $0xc1] sm:$0xff]
      %v1018 = vld [vmem:[%s968 + $0xc9] sm:$0xff]
      %v1019 = vld [vmem:[%s968 + $0xd9] sm:$0xff]
      %v1020 = vld [vmem:[%s968 + $0xe1] sm:$0xff]
      %v1021 = vld [vmem:[%s968 + $0xf1] sm:$0xff]
      %v1022 = vld [vmem:[%s968 + $0xf9] sm:$0xff]
      %v1023 = vld [vmem:[%s968 + $0x109] sm:$0xff]
      %v1024 = vld [vmem:[%s968 + $0x111] sm:$0xff]
      %v1025 = vld [vmem:[%s968 + $0x121] sm:$0xff]
      %v1026 = vld [vmem:[%s968 + $0x129] sm:$0xff]
      %v1027 = vld [vmem:[%s968 + $0x139] sm:$0xff]
      %v1028 = vld [vmem:[%s968 + $0x141] sm:$0xff]
      %v1029 = vld [vmem:[%s968 + $0x151] sm:$0xff]
      %v1030 = vld [vmem:[%s968 + $0x159] sm:$0xff]
      %v1031 = vld [vmem:[%s968 + $0x169] sm:$0xff]
      %v1032 = vld [vmem:[%s968 + $0x171] sm:$0xff]
      %v1033 = vld [vmem:[%s968 + $0x2] sm:$0xff]
      %v1034 = vld [vmem:[%s968 + $0xa] sm:$0xff]
      %v1035 = vld [vmem:[%s968 + $0x1a] sm:$0xff]
      %v1036 = vld [vmem:[%s968 + $0x22] sm:$0xff]
      %v1037 = vld [vmem:[%s968 + $0x32] sm:$0xff]
      %v1038 = vld [vmem:[%s968 + $0x3a] sm:$0xff]
      %v1039 = vld [vmem:[%s968 + $0x4a] sm:$0xff]
      %v1040 = vld [vmem:[%s968 + $0x52] sm:$0xff]
      %v1041 = vld [vmem:[%s968 + $0x62] sm:$0xff]
      %v1042 = vld [vmem:[%s968 + $0x6a] sm:$0xff]
      %v1043 = vld [vmem:[%s968 + $0x7a] sm:$0xff]
      %v1044 = vld [vmem:[%s968 + $0x82] sm:$0xff]
      %v1045 = vld [vmem:[%s968 + $0x92] sm:$0xff]
      %v1046 = vld [vmem:[%s968 + $0x9a] sm:$0xff]
      %v1047 = vld [vmem:[%s968 + $0xaa] sm:$0xff]
      %v1048 = vld [vmem:[%s968 + $0xb2] sm:$0xff]
      %v1049 = vld [vmem:[%s968 + $0xc2] sm:$0xff]
      %v1050 = vld [vmem:[%s968 + $0xca] sm:$0xff]
      %v1051 = vld [vmem:[%s968 + $0xda] sm:$0xff]
      %v1052 = vld [vmem:[%s968 + $0xe2] sm:$0xff]
      %v1053 = vld [vmem:[%s968 + $0xf2] sm:$0xff]
      %v1054 = vld [vmem:[%s968 + $0xfa] sm:$0xff]
      %v1055 = vld [vmem:[%s968 + $0x10a] sm:$0xff]
      %v1056 = vld [vmem:[%s968 + $0x112] sm:$0xff]
      %v1057 = vld [vmem:[%s968 + $0x122] sm:$0xff]
      %v1058 = vld [vmem:[%s968 + $0x12a] sm:$0xff]
      %v1059 = vld [vmem:[%s968 + $0x13a] sm:$0xff]
      %v1060 = vld [vmem:[%s968 + $0x142] sm:$0xff]
      %v1061 = vld [vmem:[%s968 + $0x152] sm:$0xff]
      %v1062 = vld [vmem:[%s968 + $0x15a] sm:$0xff]
      %v1063 = vld [vmem:[%s968 + $0x16a] sm:$0xff]
      %v1064 = vld [vmem:[%s968 + $0x172] sm:$0xff]
      %1097 = vrot.lane.b32.xlu0 %v808, 4
      %v1098 = vpop.permute.xlu0 %1097
      %1099 = vrot.lane.b32.xlu0 %v809, 4
      %v1100 = vpop.permute.xlu0 %1099
      %1101 = vrot.lane.b32.xlu0 %v810, 4
      %v1102 = vpop.permute.xlu0 %1101
      %1103 = vrot.lane.b32.xlu0 %v811, 4
      %v1104 = vpop.permute.xlu0 %1103
      %1105 = vrot.lane.b32.xlu0 %v812, 4
      %v1106 = vpop.permute.xlu0 %1105
      %1107 = vrot.lane.b32.xlu0 %v813, 4
      %v1108 = vpop.permute.xlu0 %1107
      %1109 = vrot.lane.b32.xlu0 %v814, 4
      %v1110 = vpop.permute.xlu0 %1109
      %1111 = vrot.lane.b32.xlu0 %v815, 4
      %v1112 = vpop.permute.xlu0 %1111
      %1113 = vrot.lane.b32.xlu0 %v816, 4
      %v1114 = vpop.permute.xlu0 %1113
      %1115 = vrot.lane.b32.xlu0 %v817, 4
      %v1116 = vpop.permute.xlu0 %1115
      %1117 = vrot.lane.b32.xlu0 %v818, 4
      %v1118 = vpop.permute.xlu0 %1117
      %1119 = vrot.lane.b32.xlu0 %v819, 4
      %v1120 = vpop.permute.xlu0 %1119
      %1121 = vrot.lane.b32.xlu0 %v820, 4
      %v1122 = vpop.permute.xlu0 %1121
      %1123 = vrot.lane.b32.xlu0 %v821, 4
      %v1124 = vpop.permute.xlu0 %1123
      %1125 = vrot.lane.b32.xlu0 %v822, 4
      %v1126 = vpop.permute.xlu0 %1125
      %1127 = vrot.lane.b32.xlu0 %v823, 4
      %v1128 = vpop.permute.xlu0 %1127
      %1129 = vrot.lane.b32.xlu0 %v824, 4
      %v1130 = vpop.permute.xlu0 %1129
      %1131 = vrot.lane.b32.xlu0 %v825, 4
      %v1132 = vpop.permute.xlu0 %1131
      %1133 = vrot.lane.b32.xlu0 %v826, 4
      %v1134 = vpop.permute.xlu0 %1133
      %1135 = vrot.lane.b32.xlu0 %v827, 4
      %v1136 = vpop.permute.xlu0 %1135
      %1137 = vrot.lane.b32.xlu0 %v828, 4
      %v1138 = vpop.permute.xlu0 %1137
      %1139 = vrot.lane.b32.xlu0 %v829, 4
      %v1140 = vpop.permute.xlu0 %1139
      %1141 = vrot.lane.b32.xlu0 %v830, 4
      %v1142 = vpop.permute.xlu0 %1141
      %1143 = vrot.lane.b32.xlu0 %v831, 4
      %v1144 = vpop.permute.xlu0 %1143
      %1145 = vrot.lane.b32.xlu0 %v832, 4
      %v1146 = vpop.permute.xlu0 %1145
      %1147 = vrot.lane.b32.xlu0 %v833, 4
      %v1148 = vpop.permute.xlu0 %1147
      %1149 = vrot.lane.b32.xlu0 %v834, 4
      %v1150 = vpop.permute.xlu0 %1149
      %1151 = vrot.lane.b32.xlu0 %v835, 4
      %v1152 = vpop.permute.xlu0 %1151
      %1153 = vrot.lane.b32.xlu0 %v836, 4
      %v1154 = vpop.permute.xlu0 %1153
      %1155 = vrot.lane.b32.xlu0 %v837, 4
      %v1156 = vpop.permute.xlu0 %1155
      %1157 = vrot.lane.b32.xlu0 %v838, 4
      %v1158 = vpop.permute.xlu0 %1157
      %1159 = vrot.lane.b32.xlu0 %v839, 4
      %v1160 = vpop.permute.xlu0 %1159
      %1225 = vrot.lane.b32.xlu0 %v840, 8
      %v1226 = vpop.permute.xlu0 %1225
      %1227 = vrot.lane.b32.xlu0 %v841, 8
      %v1228 = vpop.permute.xlu0 %1227
      %1229 = vrot.lane.b32.xlu0 %v842, 8
      %v1230 = vpop.permute.xlu0 %1229
      %1231 = vrot.lane.b32.xlu0 %v843, 8
      %v1232 = vpop.permute.xlu0 %1231
      %1233 = vrot.lane.b32.xlu0 %v844, 8
      %v1234 = vpop.permute.xlu0 %1233
      %1235 = vrot.lane.b32.xlu0 %v845, 8
      %v1236 = vpop.permute.xlu0 %1235
      %1237 = vrot.lane.b32.xlu0 %v846, 8
      %v1238 = vpop.permute.xlu0 %1237
      %1239 = vrot.lane.b32.xlu0 %v847, 8
      %v1240 = vpop.permute.xlu0 %1239
      %1241 = vrot.lane.b32.xlu0 %v848, 8
      %v1242 = vpop.permute.xlu0 %1241
      %1243 = vrot.lane.b32.xlu0 %v849, 8
      %v1244 = vpop.permute.xlu0 %1243
      %1245 = vrot.lane.b32.xlu0 %v850, 8
      %v1246 = vpop.permute.xlu0 %1245
      %1247 = vrot.lane.b32.xlu0 %v851, 8
      %v1248 = vpop.permute.xlu0 %1247
      %1249 = vrot.lane.b32.xlu0 %v852, 8
      %v1250 = vpop.permute.xlu0 %1249
      %1251 = vrot.lane.b32.xlu0 %v853, 8
      %v1252 = vpop.permute.xlu0 %1251
      %1253 = vrot.lane.b32.xlu0 %v854, 8
      %v1254 = vpop.permute.xlu0 %1253
      %1255 = vrot.lane.b32.xlu0 %v855, 8
      %v1256 = vpop.permute.xlu0 %1255
      %1257 = vrot.lane.b32.xlu0 %v856, 8
      %v1258 = vpop.permute.xlu0 %1257
      %1259 = vrot.lane.b32.xlu0 %v857, 8
      %v1260 = vpop.permute.xlu0 %1259
      %1261 = vrot.lane.b32.xlu0 %v858, 8
      %v1262 = vpop.permute.xlu0 %1261
      %1263 = vrot.lane.b32.xlu0 %v859, 8
      %v1264 = vpop.permute.xlu0 %1263
      %1265 = vrot.lane.b32.xlu0 %v860, 8
      %v1266 = vpop.permute.xlu0 %1265
      %1267 = vrot.lane.b32.xlu0 %v861, 8
      %v1268 = vpop.permute.xlu0 %1267
      %1269 = vrot.lane.b32.xlu0 %v862, 8
      %v1270 = vpop.permute.xlu0 %1269
      %1271 = vrot.lane.b32.xlu0 %v863, 8
      %v1272 = vpop.permute.xlu0 %1271
      %1273 = vrot.lane.b32.xlu0 %v864, 8
      %v1274 = vpop.permute.xlu0 %1273
      %1275 = vrot.lane.b32.xlu0 %v865, 8
      %v1276 = vpop.permute.xlu0 %1275
      %1277 = vrot.lane.b32.xlu0 %v866, 8
      %v1278 = vpop.permute.xlu0 %1277
      %1279 = vrot.lane.b32.xlu0 %v867, 8
      %v1280 = vpop.permute.xlu0 %1279
      %1281 = vrot.lane.b32.xlu0 %v868, 8
      %v1282 = vpop.permute.xlu0 %1281
      %1283 = vrot.lane.b32.xlu0 %v869, 8
      %v1284 = vpop.permute.xlu0 %1283
      %1285 = vrot.lane.b32.xlu0 %v870, 8
      %v1286 = vpop.permute.xlu0 %1285
      %1287 = vrot.lane.b32.xlu0 %v871, 8
      %v1288 = vpop.permute.xlu0 %1287
      %1353 = vrot.lane.b32.xlu0 %v872, 12
      %v1354 = vpop.permute.xlu0 %1353
      %1355 = vrot.lane.b32.xlu0 %v873, 12
      %v1356 = vpop.permute.xlu0 %1355
      %1357 = vrot.lane.b32.xlu0 %v874, 12
      %v1358 = vpop.permute.xlu0 %1357
      %1359 = vrot.lane.b32.xlu0 %v875, 12
      %v1360 = vpop.permute.xlu0 %1359
      %1361 = vrot.lane.b32.xlu0 %v876, 12
      %v1362 = vpop.permute.xlu0 %1361
      %1363 = vrot.lane.b32.xlu0 %v877, 12
      %v1364 = vpop.permute.xlu0 %1363
      %1365 = vrot.lane.b32.xlu0 %v878, 12
      %v1366 = vpop.permute.xlu0 %1365
      %1367 = vrot.lane.b32.xlu0 %v879, 12
      %v1368 = vpop.permute.xlu0 %1367
      %1369 = vrot.lane.b32.xlu0 %v880, 12
      %v1370 = vpop.permute.xlu0 %1369
      %1371 = vrot.lane.b32.xlu0 %v881, 12
      %v1372 = vpop.permute.xlu0 %1371
      %1373 = vrot.lane.b32.xlu0 %v882, 12
      %v1374 = vpop.permute.xlu0 %1373
      %1375 = vrot.lane.b32.xlu0 %v883, 12
      %v1376 = vpop.permute.xlu0 %1375
      %1377 = vrot.lane.b32.xlu0 %v884, 12
      %v1378 = vpop.permute.xlu0 %1377
      %1379 = vrot.lane.b32.xlu0 %v885, 12
      %v1380 = vpop.permute.xlu0 %1379
      %1381 = vrot.lane.b32.xlu0 %v886, 12
      %v1382 = vpop.permute.xlu0 %1381
      %1383 = vrot.lane.b32.xlu0 %v887, 12
      %v1384 = vpop.permute.xlu0 %1383
      %1385 = vrot.lane.b32.xlu0 %v888, 12
      %v1386 = vpop.permute.xlu0 %1385
      %1387 = vrot.lane.b32.xlu0 %v889, 12
      %v1388 = vpop.permute.xlu0 %1387
      %1389 = vrot.lane.b32.xlu0 %v890, 12
      %v1390 = vpop.permute.xlu0 %1389
      %1391 = vrot.lane.b32.xlu0 %v891, 12
      %v1392 = vpop.permute.xlu0 %1391
      %1393 = vrot.lane.b32.xlu0 %v892, 12
      %v1394 = vpop.permute.xlu0 %1393
      %1395 = vrot.lane.b32.xlu0 %v893, 12
      %v1396 = vpop.permute.xlu0 %1395
      %1397 = vrot.lane.b32.xlu0 %v894, 12
      %v1398 = vpop.permute.xlu0 %1397
      %1399 = vrot.lane.b32.xlu0 %v895, 12
      %v1400 = vpop.permute.xlu0 %1399
      %1401 = vrot.lane.b32.xlu0 %v896, 12
      %v1402 = vpop.permute.xlu0 %1401
      %1403 = vrot.lane.b32.xlu0 %v897, 12
      %v1404 = vpop.permute.xlu0 %1403
      %1405 = vrot.lane.b32.xlu0 %v898, 12
      %v1406 = vpop.permute.xlu0 %1405
      %1407 = vrot.lane.b32.xlu0 %v899, 12
      %v1408 = vpop.permute.xlu0 %1407
      %1409 = vrot.lane.b32.xlu0 %v900, 12
      %v1410 = vpop.permute.xlu0 %1409
      %1411 = vrot.lane.b32.xlu0 %v901, 12
      %v1412 = vpop.permute.xlu0 %1411
      %1413 = vrot.lane.b32.xlu0 %v902, 12
      %v1414 = vpop.permute.xlu0 %1413
      %1415 = vrot.lane.b32.xlu0 %v903, 12
      %v1416 = vpop.permute.xlu0 %1415
      %1481 = vrot.lane.b32.xlu0 %v904, 16
      %v1482 = vpop.permute.xlu0 %1481
      %1483 = vrot.lane.b32.xlu0 %v905, 16
      %v1484 = vpop.permute.xlu0 %1483
      %1485 = vrot.lane.b32.xlu0 %v906, 16
      %v1486 = vpop.permute.xlu0 %1485
      %1487 = vrot.lane.b32.xlu0 %v907, 16
      %v1488 = vpop.permute.xlu0 %1487
      %1489 = vrot.lane.b32.xlu0 %v908, 16
      %v1490 = vpop.permute.xlu0 %1489
      %1491 = vrot.lane.b32.xlu0 %v909, 16
      %v1492 = vpop.permute.xlu0 %1491
      %1493 = vrot.lane.b32.xlu0 %v910, 16
      %v1494 = vpop.permute.xlu0 %1493
      %1495 = vrot.lane.b32.xlu0 %v911, 16
      %v1496 = vpop.permute.xlu0 %1495
      %1497 = vrot.lane.b32.xlu0 %v912, 16
      %v1498 = vpop.permute.xlu0 %1497
      %1499 = vrot.lane.b32.xlu0 %v913, 16
      %v1500 = vpop.permute.xlu0 %1499
      %1501 = vrot.lane.b32.xlu0 %v914, 16
      %v1502 = vpop.permute.xlu0 %1501
      %1503 = vrot.lane.b32.xlu0 %v915, 16
      %v1504 = vpop.permute.xlu0 %1503
      %1505 = vrot.lane.b32.xlu0 %v916, 16
      %v1506 = vpop.permute.xlu0 %1505
      %1507 = vrot.lane.b32.xlu0 %v917, 16
      %v1508 = vpop.permute.xlu0 %1507
      %1509 = vrot.lane.b32.xlu0 %v918, 16
      %v1510 = vpop.permute.xlu0 %1509
      %1511 = vrot.lane.b32.xlu0 %v919, 16
      %v1512 = vpop.permute.xlu0 %1511
      %1513 = vrot.lane.b32.xlu0 %v920, 16
      %v1514 = vpop.permute.xlu0 %1513
      %1515 = vrot.lane.b32.xlu0 %v921, 16
      %v1516 = vpop.permute.xlu0 %1515
      %1517 = vrot.lane.b32.xlu0 %v922, 16
      %v1518 = vpop.permute.xlu0 %1517
      %1519 = vrot.lane.b32.xlu0 %v923, 16
      %v1520 = vpop.permute.xlu0 %1519
      %1521 = vrot.lane.b32.xlu0 %v924, 16
      %v1522 = vpop.permute.xlu0 %1521
      %1523 = vrot.lane.b32.xlu0 %v925, 16
      %v1524 = vpop.permute.xlu0 %1523
      %1525 = vrot.lane.b32.xlu0 %v926, 16
      %v1526 = vpop.permute.xlu0 %1525
      %1527 = vrot.lane.b32.xlu0 %v927, 16
      %v1528 = vpop.permute.xlu0 %1527
      %1529 = vrot.lane.b32.xlu0 %v928, 16
      %v1530 = vpop.permute.xlu0 %1529
      %1531 = vrot.lane.b32.xlu0 %v929, 16
      %v1532 = vpop.permute.xlu0 %1531
      %1533 = vrot.lane.b32.xlu0 %v930, 16
      %v1534 = vpop.permute.xlu0 %1533
      %1535 = vrot.lane.b32.xlu0 %v931, 16
      %v1536 = vpop.permute.xlu0 %1535
      %1537 = vrot.lane.b32.xlu0 %v932, 16
      %v1538 = vpop.permute.xlu0 %1537
      %1539 = vrot.lane.b32.xlu0 %v933, 16
      %v1540 = vpop.permute.xlu0 %1539
      %1541 = vrot.lane.b32.xlu0 %v934, 16
      %v1542 = vpop.permute.xlu0 %1541
      %1543 = vrot.lane.b32.xlu0 %v935, 16
      %v1544 = vpop.permute.xlu0 %1543
      %1609 = vrot.lane.b32.xlu0 %v936, 20
      %v1610 = vpop.permute.xlu0 %1609
      %1611 = vrot.lane.b32.xlu0 %v937, 20
      %v1612 = vpop.permute.xlu0 %1611
      %1613 = vrot.lane.b32.xlu0 %v938, 20
      %v1614 = vpop.permute.xlu0 %1613
      %1615 = vrot.lane.b32.xlu0 %v939, 20
      %v1616 = vpop.permute.xlu0 %1615
      %1617 = vrot.lane.b32.xlu0 %v940, 20
      %v1618 = vpop.permute.xlu0 %1617
      %1619 = vrot.lane.b32.xlu0 %v941, 20
      %v1620 = vpop.permute.xlu0 %1619
      %1621 = vrot.lane.b32.xlu0 %v942, 20
      %v1622 = vpop.permute.xlu0 %1621
      %1623 = vrot.lane.b32.xlu0 %v943, 20
      %v1624 = vpop.permute.xlu0 %1623
      %1625 = vrot.lane.b32.xlu0 %v944, 20
      %v1626 = vpop.permute.xlu0 %1625
      %1627 = vrot.lane.b32.xlu0 %v945, 20
      %v1628 = vpop.permute.xlu0 %1627
      %1629 = vrot.lane.b32.xlu0 %v946, 20
      %v1630 = vpop.permute.xlu0 %1629
      %1631 = vrot.lane.b32.xlu0 %v947, 20
      %v1632 = vpop.permute.xlu0 %1631
      %1633 = vrot.lane.b32.xlu0 %v948, 20
      %v1634 = vpop.permute.xlu0 %1633
      %1635 = vrot.lane.b32.xlu0 %v949, 20
      %v1636 = vpop.permute.xlu0 %1635
      %1637 = vrot.lane.b32.xlu0 %v950, 20
      %v1638 = vpop.permute.xlu0 %1637
      %1639 = vrot.lane.b32.xlu0 %v951, 20
      %v1640 = vpop.permute.xlu0 %1639
      %1641 = vrot.lane.b32.xlu0 %v952, 20
      %v1642 = vpop.permute.xlu0 %1641
      %1643 = vrot.lane.b32.xlu0 %v953, 20
      %v1644 = vpop.permute.xlu0 %1643
      %1645 = vrot.lane.b32.xlu0 %v954, 20
      %v1646 = vpop.permute.xlu0 %1645
      %1647 = vrot.lane.b32.xlu0 %v955, 20
      %v1648 = vpop.permute.xlu0 %1647
      %1649 = vrot.lane.b32.xlu0 %v956, 20
      %v1650 = vpop.permute.xlu0 %1649
      %1651 = vrot.lane.b32.xlu0 %v957, 20
      %v1652 = vpop.permute.xlu0 %1651
      %1653 = vrot.lane.b32.xlu0 %v958, 20
      %v1654 = vpop.permute.xlu0 %1653
      %1655 = vrot.lane.b32.xlu0 %v959, 20
      %v1656 = vpop.permute.xlu0 %1655
      %1657 = vrot.lane.b32.xlu0 %v960, 20
      %v1658 = vpop.permute.xlu0 %1657
      %1659 = vrot.lane.b32.xlu0 %v961, 20
      %v1660 = vpop.permute.xlu0 %1659
      %1661 = vrot.lane.b32.xlu0 %v962, 20
      %v1662 = vpop.permute.xlu0 %1661
      %1663 = vrot.lane.b32.xlu0 %v963, 20
      %v1664 = vpop.permute.xlu0 %1663
      %1665 = vrot.lane.b32.xlu0 %v964, 20
      %v1666 = vpop.permute.xlu0 %1665
      %1667 = vrot.lane.b32.xlu0 %v965, 20
      %v1668 = vpop.permute.xlu0 %1667
      %1669 = vrot.lane.b32.xlu0 %v966, 20
      %v1670 = vpop.permute.xlu0 %1669
      %1671 = vrot.lane.b32.xlu0 %v967, 20
      %v1672 = vpop.permute.xlu0 %1671
      %1737 = vrot.lane.b32.xlu0 %v969, 24
      %v1738 = vpop.permute.xlu0 %1737
      %1739 = vrot.lane.b32.xlu0 %v970, 24
      %v1740 = vpop.permute.xlu0 %1739
      %1741 = vrot.lane.b32.xlu0 %v971, 24
      %v1742 = vpop.permute.xlu0 %1741
      %1743 = vrot.lane.b32.xlu0 %v972, 24
      %v1744 = vpop.permute.xlu0 %1743
      %1745 = vrot.lane.b32.xlu0 %v973, 24
      %v1746 = vpop.permute.xlu0 %1745
      %1747 = vrot.lane.b32.xlu0 %v974, 24
      %v1748 = vpop.permute.xlu0 %1747
      %1749 = vrot.lane.b32.xlu0 %v975, 24
      %v1750 = vpop.permute.xlu0 %1749
      %1751 = vrot.lane.b32.xlu0 %v976, 24
      %v1752 = vpop.permute.xlu0 %1751
      %1753 = vrot.lane.b32.xlu0 %v977, 24
      %v1754 = vpop.permute.xlu0 %1753
      %1755 = vrot.lane.b32.xlu0 %v978, 24
      %v1756 = vpop.permute.xlu0 %1755
      %1757 = vrot.lane.b32.xlu0 %v979, 24
      %v1758 = vpop.permute.xlu0 %1757
      %1759 = vrot.lane.b32.xlu0 %v980, 24
      %v1760 = vpop.permute.xlu0 %1759
      %1761 = vrot.lane.b32.xlu0 %v981, 24
      %v1762 = vpop.permute.xlu0 %1761
      %1763 = vrot.lane.b32.xlu0 %v982, 24
      %v1764 = vpop.permute.xlu0 %1763
      %1765 = vrot.lane.b32.xlu0 %v983, 24
      %v1766 = vpop.permute.xlu0 %1765
      %1767 = vrot.lane.b32.xlu0 %v984, 24
      %v1768 = vpop.permute.xlu0 %1767
      %1769 = vrot.lane.b32.xlu0 %v985, 24
      %v1770 = vpop.permute.xlu0 %1769
      %1771 = vrot.lane.b32.xlu0 %v986, 24
      %v1772 = vpop.permute.xlu0 %1771
      %1773 = vrot.lane.b32.xlu0 %v987, 24
      %v1774 = vpop.permute.xlu0 %1773
      %1775 = vrot.lane.b32.xlu0 %v988, 24
      %v1776 = vpop.permute.xlu0 %1775
      %1777 = vrot.lane.b32.xlu0 %v989, 24
      %v1778 = vpop.permute.xlu0 %1777
      %1779 = vrot.lane.b32.xlu0 %v990, 24
      %v1780 = vpop.permute.xlu0 %1779
      %1781 = vrot.lane.b32.xlu0 %v991, 24
      %v1782 = vpop.permute.xlu0 %1781
      %1783 = vrot.lane.b32.xlu0 %v992, 24
      %v1784 = vpop.permute.xlu0 %1783
      %1785 = vrot.lane.b32.xlu0 %v993, 24
      %v1786 = vpop.permute.xlu0 %1785
      %1787 = vrot.lane.b32.xlu0 %v994, 24
      %v1788 = vpop.permute.xlu0 %1787
      %1789 = vrot.lane.b32.xlu0 %v995, 24
      %v1790 = vpop.permute.xlu0 %1789
      %1791 = vrot.lane.b32.xlu0 %v996, 24
      %v1792 = vpop.permute.xlu0 %1791
      %1793 = vrot.lane.b32.xlu0 %v997, 24
      %v1794 = vpop.permute.xlu0 %1793
      %1795 = vrot.lane.b32.xlu0 %v998, 24
      %v1796 = vpop.permute.xlu0 %1795
      %1797 = vrot.lane.b32.xlu0 %v999, 24
      %v1798 = vpop.permute.xlu0 %1797
      %1799 = vrot.lane.b32.xlu0 %v1000, 24
      %v1800 = vpop.permute.xlu0 %1799
      %1865 = vrot.lane.b32.xlu0 %v1001, 28
      %v1866 = vpop.permute.xlu0 %1865
      %1867 = vrot.lane.b32.xlu0 %v1002, 28
      %v1868 = vpop.permute.xlu0 %1867
      %1869 = vrot.lane.b32.xlu0 %v1003, 28
      %v1870 = vpop.permute.xlu0 %1869
      %1871 = vrot.lane.b32.xlu0 %v1004, 28
      %v1872 = vpop.permute.xlu0 %1871
      %1873 = vrot.lane.b32.xlu0 %v1005, 28
      %v1874 = vpop.permute.xlu0 %1873
      %1875 = vrot.lane.b32.xlu0 %v1006, 28
      %v1876 = vpop.permute.xlu0 %1875
      %1877 = vrot.lane.b32.xlu0 %v1007, 28
      %v1878 = vpop.permute.xlu0 %1877
      %1879 = vrot.lane.b32.xlu0 %v1008, 28
      %v1880 = vpop.permute.xlu0 %1879
      %1881 = vrot.lane.b32.xlu0 %v1009, 28
      %v1882 = vpop.permute.xlu0 %1881
      %1883 = vrot.lane.b32.xlu0 %v1010, 28
      %v1884 = vpop.permute.xlu0 %1883
      %1885 = vrot.lane.b32.xlu0 %v1011, 28
      %v1886 = vpop.permute.xlu0 %1885
      %1887 = vrot.lane.b32.xlu0 %v1012, 28
      %v1888 = vpop.permute.xlu0 %1887
      %1889 = vrot.lane.b32.xlu0 %v1013, 28
      %v1890 = vpop.permute.xlu0 %1889
      %1891 = vrot.lane.b32.xlu0 %v1014, 28
      %v1892 = vpop.permute.xlu0 %1891
      %1893 = vrot.lane.b32.xlu0 %v1015, 28
      %v1894 = vpop.permute.xlu0 %1893
      %1895 = vrot.lane.b32.xlu0 %v1016, 28
      %v1896 = vpop.permute.xlu0 %1895
      %1897 = vrot.lane.b32.xlu0 %v1017, 28
      %v1898 = vpop.permute.xlu0 %1897
      %1899 = vrot.lane.b32.xlu0 %v1018, 28
      %v1900 = vpop.permute.xlu0 %1899
      %1901 = vrot.lane.b32.xlu0 %v1019, 28
      %v1902 = vpop.permute.xlu0 %1901
      %1903 = vrot.lane.b32.xlu0 %v1020, 28
      %v1904 = vpop.permute.xlu0 %1903
      %1905 = vrot.lane.b32.xlu0 %v1021, 28
      %v1906 = vpop.permute.xlu0 %1905
      %1907 = vrot.lane.b32.xlu0 %v1022, 28
      %v1908 = vpop.permute.xlu0 %1907
      %1909 = vrot.lane.b32.xlu0 %v1023, 28
      %v1910 = vpop.permute.xlu0 %1909
      %1911 = vrot.lane.b32.xlu0 %v1024, 28
      %v1912 = vpop.permute.xlu0 %1911
      %1913 = vrot.lane.b32.xlu0 %v1025, 28
      %v1914 = vpop.permute.xlu0 %1913
      %1915 = vrot.lane.b32.xlu0 %v1026, 28
      %v1916 = vpop.permute.xlu0 %1915
      %1917 = vrot.lane.b32.xlu0 %v1027, 28
      %v1918 = vpop.permute.xlu0 %1917
      %1919 = vrot.lane.b32.xlu0 %v1028, 28
      %v1920 = vpop.permute.xlu0 %1919
      %1921 = vrot.lane.b32.xlu0 %v1029, 28
      %v1922 = vpop.permute.xlu0 %1921
      %1923 = vrot.lane.b32.xlu0 %v1030, 28
      %v1924 = vpop.permute.xlu0 %1923
      %1925 = vrot.lane.b32.xlu0 %v1031, 28
      %v1926 = vpop.permute.xlu0 %1925
      %1927 = vrot.lane.b32.xlu0 %v1032, 28
      %v1928 = vpop.permute.xlu0 %1927
      %1993 = vrot.lane.b32.xlu0 %v1033, 32
      %v1994 = vpop.permute.xlu0 %1993
      %1995 = vrot.lane.b32.xlu0 %v1034, 32
      %v1996 = vpop.permute.xlu0 %1995
      %1997 = vrot.lane.b32.xlu0 %v1035, 32
      %v1998 = vpop.permute.xlu0 %1997
      %1999 = vrot.lane.b32.xlu0 %v1036, 32
      %v2000 = vpop.permute.xlu0 %1999
      %2001 = vrot.lane.b32.xlu0 %v1037, 32
      %v2002 = vpop.permute.xlu0 %2001
      %2003 = vrot.lane.b32.xlu0 %v1038, 32
      %v2004 = vpop.permute.xlu0 %2003
      %2005 = vrot.lane.b32.xlu0 %v1039, 32
      %v2006 = vpop.permute.xlu0 %2005
      %2007 = vrot.lane.b32.xlu0 %v1040, 32
      %v2008 = vpop.permute.xlu0 %2007
      %2009 = vrot.lane.b32.xlu0 %v1041, 32
      %v2010 = vpop.permute.xlu0 %2009
      %2011 = vrot.lane.b32.xlu0 %v1042, 32
      %v2012 = vpop.permute.xlu0 %2011
      %2013 = vrot.lane.b32.xlu0 %v1043, 32
      %v2014 = vpop.permute.xlu0 %2013
      %2015 = vrot.lane.b32.xlu0 %v1044, 32
      %v2016 = vpop.permute.xlu0 %2015
      %2017 = vrot.lane.b32.xlu0 %v1045, 32
      %v2018 = vpop.permute.xlu0 %2017
      %2019 = vrot.lane.b32.xlu0 %v1046, 32
      %v2020 = vpop.permute.xlu0 %2019
      %2021 = vrot.lane.b32.xlu0 %v1047, 32
      %v2022 = vpop.permute.xlu0 %2021
      %2023 = vrot.lane.b32.xlu0 %v1048, 32
      %v2024 = vpop.permute.xlu0 %2023
      %2025 = vrot.lane.b32.xlu0 %v1049, 32
      %v2026 = vpop.permute.xlu0 %2025
      %2027 = vrot.lane.b32.xlu0 %v1050, 32
      %v2028 = vpop.permute.xlu0 %2027
      %2029 = vrot.lane.b32.xlu0 %v1051, 32
      %v2030 = vpop.permute.xlu0 %2029
      %2031 = vrot.lane.b32.xlu0 %v1052, 32
      %v2032 = vpop.permute.xlu0 %2031
      %2033 = vrot.lane.b32.xlu0 %v1053, 32
      %v2034 = vpop.permute.xlu0 %2033
      %2035 = vrot.lane.b32.xlu0 %v1054, 32
      %v2036 = vpop.permute.xlu0 %2035
      %2037 = vrot.lane.b32.xlu0 %v1055, 32
      %v2038 = vpop.permute.xlu0 %2037
      %2039 = vrot.lane.b32.xlu0 %v1056, 32
      %v2040 = vpop.permute.xlu0 %2039
      %2041 = vrot.lane.b32.xlu0 %v1057, 32
      %v2042 = vpop.permute.xlu0 %2041
      %2043 = vrot.lane.b32.xlu0 %v1058, 32
      %v2044 = vpop.permute.xlu0 %2043
      %2045 = vrot.lane.b32.xlu0 %v1059, 32
      %v2046 = vpop.permute.xlu0 %2045
      %2047 = vrot.lane.b32.xlu0 %v1060, 32
      %v2048 = vpop.permute.xlu0 %2047
      %2049 = vrot.lane.b32.xlu0 %v1061, 32
      %v2050 = vpop.permute.xlu0 %2049
      %2051 = vrot.lane.b32.xlu0 %v1062, 32
      %v2052 = vpop.permute.xlu0 %2051
      %2053 = vrot.lane.b32.xlu0 %v1063, 32
      %v2054 = vpop.permute.xlu0 %2053
      %2055 = vrot.lane.b32.xlu0 %v1064, 32
      %v2056 = vpop.permute.xlu0 %2055
      %v2089 = vsel %vm526, %v776, %v1098
      %v2090 = vsel %vm526, %v777, %v1100
      %v2091 = vsel %vm526, %v778, %v1102
      %v2092 = vsel %vm526, %v779, %v1104
      %v2093 = vsel %vm526, %v780, %v1106
      %v2094 = vsel %vm526, %v781, %v1108
      %v2095 = vsel %vm526, %v782, %v1110
      %v2096 = vsel %vm526, %v783, %v1112
      %v2097 = vsel %vm526, %v784, %v1114
      %v2098 = vsel %vm526, %v785, %v1116
      %v2099 = vsel %vm526, %v786, %v1118
      %v2100 = vsel %vm526, %v787, %v1120
      %v2101 = vsel %vm526, %v788, %v1122
      %v2102 = vsel %vm526, %v789, %v1124
      %v2103 = vsel %vm526, %v790, %v1126
      %v2104 = vsel %vm526, %v791, %v1128
      %v2105 = vsel %vm526, %v792, %v1130
      %v2106 = vsel %vm526, %v793, %v1132
      %v2107 = vsel %vm526, %v794, %v1134
      %v2108 = vsel %vm526, %v795, %v1136
      %v2109 = vsel %vm526, %v796, %v1138
      %v2110 = vsel %vm526, %v797, %v1140
      %v2111 = vsel %vm526, %v798, %v1142
      %v2112 = vsel %vm526, %v799, %v1144
      %v2113 = vsel %vm526, %v800, %v1146
      %v2114 = vsel %vm526, %v801, %v1148
      %v2115 = vsel %vm526, %v802, %v1150
      %v2116 = vsel %vm526, %v803, %v1152
      %v2117 = vsel %vm526, %v804, %v1154
      %v2118 = vsel %vm526, %v805, %v1156
      %v2119 = vsel %vm526, %v806, %v1158
      %v2120 = vsel %vm526, %v807, %v1160
      %vm2121 = vcmask 64512
      %v2122 = vsel %vm2121, %v2089, %v1226
      %v2123 = vsel %vm2121, %v2090, %v1228
      %v2124 = vsel %vm2121, %v2091, %v1230
      %v2125 = vsel %vm2121, %v2092, %v1232
      %v2126 = vsel %vm2121, %v2093, %v1234
      %v2127 = vsel %vm2121, %v2094, %v1236
      %v2128 = vsel %vm2121, %v2095, %v1238
      %v2129 = vsel %vm2121, %v2096, %v1240
      %v2130 = vsel %vm2121, %v2097, %v1242
      %v2131 = vsel %vm2121, %v2098, %v1244
      %v2132 = vsel %vm2121, %v2099, %v1246
      %v2133 = vsel %vm2121, %v2100, %v1248
      %v2134 = vsel %vm2121, %v2101, %v1250
      %v2135 = vsel %vm2121, %v2102, %v1252
      %v2136 = vsel %vm2121, %v2103, %v1254
      %v2137 = vsel %vm2121, %v2104, %v1256
      %v2138 = vsel %vm2121, %v2105, %v1258
      %v2139 = vsel %vm2121, %v2106, %v1260
      %v2140 = vsel %vm2121, %v2107, %v1262
      %v2141 = vsel %vm2121, %v2108, %v1264
      %v2142 = vsel %vm2121, %v2109, %v1266
      %v2143 = vsel %vm2121, %v2110, %v1268
      %v2144 = vsel %vm2121, %v2111, %v1270
      %v2145 = vsel %vm2121, %v2112, %v1272
      %v2146 = vsel %vm2121, %v2113, %v1274
      %v2147 = vsel %vm2121, %v2114, %v1276
      %v2148 = vsel %vm2121, %v2115, %v1278
      %v2149 = vsel %vm2121, %v2116, %v1280
      %v2150 = vsel %vm2121, %v2117, %v1282
      %v2151 = vsel %vm2121, %v2118, %v1284
      %v2152 = vsel %vm2121, %v2119, %v1286
      %v2153 = vsel %vm2121, %v2120, %v1288
      %vm2154 = vcmask 97280
      %v2155 = vsel %vm2154, %v2122, %v1354
      %v2156 = vsel %vm2154, %v2123, %v1356
      %v2157 = vsel %vm2154, %v2124, %v1358
      %v2158 = vsel %vm2154, %v2125, %v1360
      %v2159 = vsel %vm2154, %v2126, %v1362
      %v2160 = vsel %vm2154, %v2127, %v1364
      %v2161 = vsel %vm2154, %v2128, %v1366
      %v2162 = vsel %vm2154, %v2129, %v1368
      %v2163 = vsel %vm2154, %v2130, %v1370
      %v2164 = vsel %vm2154, %v2131, %v1372
      %v2165 = vsel %vm2154, %v2132, %v1374
      %v2166 = vsel %vm2154, %v2133, %v1376
      %v2167 = vsel %vm2154, %v2134, %v1378
      %v2168 = vsel %vm2154, %v2135, %v1380
      %v2169 = vsel %vm2154, %v2136, %v1382
      %v2170 = vsel %vm2154, %v2137, %v1384
      %v2171 = vsel %vm2154, %v2138, %v1386
      %v2172 = vsel %vm2154, %v2139, %v1388
      %v2173 = vsel %vm2154, %v2140, %v1390
      %v2174 = vsel %vm2154, %v2141, %v1392
      %v2175 = vsel %vm2154, %v2142, %v1394
      %v2176 = vsel %vm2154, %v2143, %v1396
      %v2177 = vsel %vm2154, %v2144, %v1398
      %v2178 = vsel %vm2154, %v2145, %v1400
      %v2179 = vsel %vm2154, %v2146, %v1402
      %v2180 = vsel %vm2154, %v2147, %v1404
      %v2181 = vsel %vm2154, %v2148, %v1406
      %v2182 = vsel %vm2154, %v2149, %v1408
      %v2183 = vsel %vm2154, %v2150, %v1410
      %v2184 = vsel %vm2154, %v2151, %v1412
      %v2185 = vsel %vm2154, %v2152, %v1414
      %v2186 = vsel %vm2154, %v2153, %v1416
      %vm2187 = vcmask 130048
      %v2188 = vsel %vm2187, %v2155, %v1482
      %v2189 = vsel %vm2187, %v2156, %v1484
      %v2190 = vsel %vm2187, %v2157, %v1486
      %v2191 = vsel %vm2187, %v2158, %v1488
      %v2192 = vsel %vm2187, %v2159, %v1490
      %v2193 = vsel %vm2187, %v2160, %v1492
      %v2194 = vsel %vm2187, %v2161, %v1494
      %v2195 = vsel %vm2187, %v2162, %v1496
      %v2196 = vsel %vm2187, %v2163, %v1498
      %v2197 = vsel %vm2187, %v2164, %v1500
      %v2198 = vsel %vm2187, %v2165, %v1502
      %v2199 = vsel %vm2187, %v2166, %v1504
      %v2200 = vsel %vm2187, %v2167, %v1506
      %v2201 = vsel %vm2187, %v2168, %v1508
      %v2202 = vsel %vm2187, %v2169, %v1510
      %v2203 = vsel %vm2187, %v2170, %v1512
      %v2204 = vsel %vm2187, %v2171, %v1514
      %v2205 = vsel %vm2187, %v2172, %v1516
      %v2206 = vsel %vm2187, %v2173, %v1518
      %v2207 = vsel %vm2187, %v2174, %v1520
      %v2208 = vsel %vm2187, %v2175, %v1522
      %v2209 = vsel %vm2187, %v2176, %v1524
      %v2210 = vsel %vm2187, %v2177, %v1526
      %v2211 = vsel %vm2187, %v2178, %v1528
      %v2212 = vsel %vm2187, %v2179, %v1530
      %v2213 = vsel %vm2187, %v2180, %v1532
      %v2214 = vsel %vm2187, %v2181, %v1534
      %v2215 = vsel %vm2187, %v2182, %v1536
      %v2216 = vsel %vm2187, %v2183, %v1538
      %v2217 = vsel %vm2187, %v2184, %v1540
      %v2218 = vsel %vm2187, %v2185, %v1542
      %v2219 = vsel %vm2187, %v2186, %v1544
      %vm2220 = vcmask 162816
      %v2221 = vsel %vm2220, %v2188, %v1610
      %v2222 = vsel %vm2220, %v2189, %v1612
      %v2223 = vsel %vm2220, %v2190, %v1614
      %v2224 = vsel %vm2220, %v2191, %v1616
      %v2225 = vsel %vm2220, %v2192, %v1618
      %v2226 = vsel %vm2220, %v2193, %v1620
      %v2227 = vsel %vm2220, %v2194, %v1622
      %v2228 = vsel %vm2220, %v2195, %v1624
      %v2229 = vsel %vm2220, %v2196, %v1626
      %v2230 = vsel %vm2220, %v2197, %v1628
      %v2231 = vsel %vm2220, %v2198, %v1630
      %v2232 = vsel %vm2220, %v2199, %v1632
      %v2233 = vsel %vm2220, %v2200, %v1634
      %v2234 = vsel %vm2220, %v2201, %v1636
      %v2235 = vsel %vm2220, %v2202, %v1638
      %v2236 = vsel %vm2220, %v2203, %v1640
      %v2237 = vsel %vm2220, %v2204, %v1642
      %v2238 = vsel %vm2220, %v2205, %v1644
      %v2239 = vsel %vm2220, %v2206, %v1646
      %v2240 = vsel %vm2220, %v2207, %v1648
      %v2241 = vsel %vm2220, %v2208, %v1650
      %v2242 = vsel %vm2220, %v2209, %v1652
      %v2243 = vsel %vm2220, %v2210, %v1654
      %v2244 = vsel %vm2220, %v2211, %v1656
      %v2245 = vsel %vm2220, %v2212, %v1658
      %v2246 = vsel %vm2220, %v2213, %v1660
      %v2247 = vsel %vm2220, %v2214, %v1662
      %v2248 = vsel %vm2220, %v2215, %v1664
      %v2249 = vsel %vm2220, %v2216, %v1666
      %v2250 = vsel %vm2220, %v2217, %v1668
      %v2251 = vsel %vm2220, %v2218, %v1670
      %v2252 = vsel %vm2220, %v2219, %v1672
      %vm2253 = vcmask 195584
      %v2254 = vsel %vm2253, %v2221, %v1738
      %v2255 = vsel %vm2253, %v2222, %v1740
      %v2256 = vsel %vm2253, %v2223, %v1742
      %v2257 = vsel %vm2253, %v2224, %v1744
      %v2258 = vsel %vm2253, %v2225, %v1746
      %v2259 = vsel %vm2253, %v2226, %v1748
      %v2260 = vsel %vm2253, %v2227, %v1750
      %v2261 = vsel %vm2253, %v2228, %v1752
      %v2262 = vsel %vm2253, %v2229, %v1754
      %v2263 = vsel %vm2253, %v2230, %v1756
      %v2264 = vsel %vm2253, %v2231, %v1758
      %v2265 = vsel %vm2253, %v2232, %v1760
      %v2266 = vsel %vm2253, %v2233, %v1762
      %v2267 = vsel %vm2253, %v2234, %v1764
      %v2268 = vsel %vm2253, %v2235, %v1766
      %v2269 = vsel %vm2253, %v2236, %v1768
      %v2270 = vsel %vm2253, %v2237, %v1770
      %v2271 = vsel %vm2253, %v2238, %v1772
      %v2272 = vsel %vm2253, %v2239, %v1774
      %v2273 = vsel %vm2253, %v2240, %v1776
      %v2274 = vsel %vm2253, %v2241, %v1778
      %v2275 = vsel %vm2253, %v2242, %v1780
      %v2276 = vsel %vm2253, %v2243, %v1782
      %v2277 = vsel %vm2253, %v2244, %v1784
      %v2278 = vsel %vm2253, %v2245, %v1786
      %v2279 = vsel %vm2253, %v2246, %v1788
      %v2280 = vsel %vm2253, %v2247, %v1790
      %v2281 = vsel %vm2253, %v2248, %v1792
      %v2282 = vsel %vm2253, %v2249, %v1794
      %v2283 = vsel %vm2253, %v2250, %v1796
      %v2284 = vsel %vm2253, %v2251, %v1798
      %v2285 = vsel %vm2253, %v2252, %v1800
      %vm2286 = vcmask 228352
      %v2287 = vsel %vm2286, %v2254, %v1866
      %v2288 = vsel %vm2286, %v2255, %v1868
      %v2289 = vsel %vm2286, %v2256, %v1870
      %v2290 = vsel %vm2286, %v2257, %v1872
      %v2291 = vsel %vm2286, %v2258, %v1874
      %v2292 = vsel %vm2286, %v2259, %v1876
      %v2293 = vsel %vm2286, %v2260, %v1878
      %v2294 = vsel %vm2286, %v2261, %v1880
      %v2295 = vsel %vm2286, %v2262, %v1882
      %v2296 = vsel %vm2286, %v2263, %v1884
      %v2297 = vsel %vm2286, %v2264, %v1886
      %v2298 = vsel %vm2286, %v2265, %v1888
      %v2299 = vsel %vm2286, %v2266, %v1890
      %v2300 = vsel %vm2286, %v2267, %v1892
      %v2301 = vsel %vm2286, %v2268, %v1894
      %v2302 = vsel %vm2286, %v2269, %v1896
      %v2303 = vsel %vm2286, %v2270, %v1898
      %v2304 = vsel %vm2286, %v2271, %v1900
      %v2305 = vsel %vm2286, %v2272, %v1902
      %v2306 = vsel %vm2286, %v2273, %v1904
      %v2307 = vsel %vm2286, %v2274, %v1906
      %v2308 = vsel %vm2286, %v2275, %v1908
      %v2309 = vsel %vm2286, %v2276, %v1910
      %v2310 = vsel %vm2286, %v2277, %v1912
      %v2311 = vsel %vm2286, %v2278, %v1914
      %v2312 = vsel %vm2286, %v2279, %v1916
      %v2313 = vsel %vm2286, %v2280, %v1918
      %v2314 = vsel %vm2286, %v2281, %v1920
      %v2315 = vsel %vm2286, %v2282, %v1922
      %v2316 = vsel %vm2286, %v2283, %v1924
      %v2317 = vsel %vm2286, %v2284, %v1926
      %v2318 = vsel %vm2286, %v2285, %v1928
      %vm2319 = vcmask 261120
      %v2320 = vsel %vm2319, %v2287, %v1994
      %v2321 = vsel %vm2319, %v2288, %v1996
      %v2322 = vsel %vm2319, %v2289, %v1998
      %v2323 = vsel %vm2319, %v2290, %v2000
      %v2324 = vsel %vm2319, %v2291, %v2002
      %v2325 = vsel %vm2319, %v2292, %v2004
      %v2326 = vsel %vm2319, %v2293, %v2006
      %v2327 = vsel %vm2319, %v2294, %v2008
      %v2328 = vsel %vm2319, %v2295, %v2010
      %v2329 = vsel %vm2319, %v2296, %v2012
      %v2330 = vsel %vm2319, %v2297, %v2014
      %v2331 = vsel %vm2319, %v2298, %v2016
      %v2332 = vsel %vm2319, %v2299, %v2018
      %v2333 = vsel %vm2319, %v2300, %v2020
      %v2334 = vsel %vm2319, %v2301, %v2022
      %v2335 = vsel %vm2319, %v2302, %v2024
      %v2336 = vsel %vm2319, %v2303, %v2026
      %v2337 = vsel %vm2319, %v2304, %v2028
      %v2338 = vsel %vm2319, %v2305, %v2030
      %v2339 = vsel %vm2319, %v2306, %v2032
      %v2340 = vsel %vm2319, %v2307, %v2034
      %v2341 = vsel %vm2319, %v2308, %v2036
      %v2342 = vsel %vm2319, %v2309, %v2038
      %v2343 = vsel %vm2319, %v2310, %v2040
      %v2344 = vsel %vm2319, %v2311, %v2042
      %v2345 = vsel %vm2319, %v2312, %v2044
      %v2346 = vsel %vm2319, %v2313, %v2046
      %v2347 = vsel %vm2319, %v2314, %v2048
      %v2348 = vsel %vm2319, %v2315, %v2050
      %v2349 = vsel %vm2319, %v2316, %v2052
      %v2350 = vsel %vm2319, %v2317, %v2054
      %v2351 = vsel %vm2319, %v2318, %v2056
      %v2352 = vld [vmem:[%s4] sm:$0xff]
      %v2353 = vld [vmem:[%s4 + $0x8] sm:$0xff]
      %v2354 = vld [vmem:[%s4 + $0x10] sm:$0xff]
      %v2355 = vld [vmem:[%s4 + $0x18] sm:$0xff]
      %v2356 = vld [vmem:[%s4 + $0x20] sm:$0xf]
      %vm2357 = vcmask 293888
      %v2359 = vsel %vm2357, %v2320, 0
      %v2362 = vsel %vm2357, %v2321, 0
      %v2365 = vsel %vm2357, %v2322, 0
      %v2368 = vsel %vm2357, %v2323, 0
      %v2371 = vsel %vm2357, %v2324, 0
      %v2374 = vsel %vm2357, %v2325, 0
      %v2377 = vsel %vm2357, %v2326, 0
      %v2380 = vsel %vm2357, %v2327, 0
      %v2383 = vsel %vm2357, %v2328, 0
      %v2386 = vsel %vm2357, %v2329, 0
      %v2389 = vsel %vm2357, %v2330, 0
      %v2392 = vsel %vm2357, %v2331, 0
      %v2395 = vsel %vm2357, %v2332, 0
      %v2398 = vsel %vm2357, %v2333, 0
      %v2401 = vsel %vm2357, %v2334, 0
      %v2404 = vsel %vm2357, %v2335, 0
      %v2407 = vsel %vm2357, %v2336, 0
      %v2410 = vsel %vm2357, %v2337, 0
      %v2413 = vsel %vm2357, %v2338, 0
      %v2416 = vsel %vm2357, %v2339, 0
      %v2419 = vsel %vm2357, %v2340, 0
      %v2422 = vsel %vm2357, %v2341, 0
      %v2425 = vsel %vm2357, %v2342, 0
      %v2428 = vsel %vm2357, %v2343, 0
      %v2431 = vsel %vm2357, %v2344, 0
      %v2434 = vsel %vm2357, %v2345, 0
      %v2437 = vsel %vm2357, %v2346, 0
      %v2440 = vsel %vm2357, %v2347, 0
      %v2443 = vsel %vm2357, %v2348, 0
      %v2446 = vsel %vm2357, %v2349, 0
      %v2449 = vsel %vm2357, %v2350, 0
      %v2452 = vsel %vm2357, %v2351, 0
      %v2455 = vsel %vm530, %v2356, 0
      %2457 = vmatprep.subr.mxu0 0.0
      %2458 = vmatpush1.msra.mxu0 %v2352
      %2459 = vmatprep.subr.mxu0 0.0
      %2460 = vmatpush1.msra.mxu0 %v2353
      %2461 = vmatprep.subr.mxu0 0.0
      %2462 = vmatpush1.msra.mxu0 %v2354
      %2463 = vmatprep.subr.mxu0 0.0
      %2464 = vmatpush1.msra.mxu0 %v2355
      %2465 = vmatprep.subr.mxu0 0.0
      %2466 = vmatpush1.msra.mxu0 %v2455
      %2467 = vmatprep.subr.mxu0 0.0
      %2468 = vmatpush1.msra.mxu0 0.0
      %2469 = vmatprep.subr.mxu0 0.0
      %2470 = vmatpush1.msra.mxu0 0.0
      %2471 = vmatprep.subr.mxu0 0.0
      %2472 = vmatpush1.msra.mxu0 0.0
      %2473 = vmatprep.subr.mxu0 0.0
      %2474 = vmatpush1.msra.mxu0 0.0
      %2475 = vmatprep.subr.mxu0 0.0
      %2476 = vmatpush1.msra.mxu0 0.0
      %2477 = vmatprep.subr.mxu0 0.0
      %2478 = vmatpush1.msra.mxu0 0.0
      %2479 = vmatprep.subr.mxu0 0.0
      %2480 = vmatpush1.msra.mxu0 0.0
      %2481 = vmatprep.subr.mxu0 0.0
      %2482 = vmatpush1.msra.mxu0 0.0
      %2483 = vmatprep.subr.mxu0 0.0
      %2484 = vmatpush1.msra.mxu0 0.0
      %2485 = vmatprep.subr.mxu0 0.0
      %2486 = vmatpush1.msra.mxu0 0.0
      %2487 = vmatprep.subr.mxu0 0.0
      %2488 = vmatpush1.msra.mxu0 0.0
      %2489 = vmatprep.subr.mxu0 0.0
      %2490 = vmatpush1.msra.mxu0 0.0
      %2491 = vmatprep.subr.mxu0 0.0
      %2492 = vmatpush1.msra.mxu0 0.0
      %2493 = vmatprep.subr.mxu0 0.0
      %2494 = vmatpush1.msra.mxu0 0.0
      %2495 = vmatprep.subr.mxu0 0.0
      %2496 = vmatpush1.msra.mxu0 0.0
      %2497 = vmatprep.subr.mxu0 0.0
      %2498 = vmatpush1.msra.mxu0 0.0
      %2499 = vmatprep.subr.mxu0 0.0
      %2500 = vmatpush1.msra.mxu0 0.0
      %2501 = vmatprep.subr.mxu0 0.0
      %2502 = vmatpush1.msra.mxu0 0.0
      %2503 = vmatprep.subr.mxu0 0.0
      %2504 = vmatpush1.msra.mxu0 0.0
      %2505 = vmatprep.subr.mxu0 0.0
      %2506 = vmatpush1.msra.mxu0 0.0
      %2507 = vmatprep.subr.mxu0 0.0
      %2508 = vmatpush1.msra.mxu0 0.0
      %2509 = vmatprep.subr.mxu0 0.0
      %2510 = vmatpush1.msra.mxu0 0.0
      %2511 = vmatprep.subr.mxu0 0.0
      %2512 = vmatpush1.msra.mxu0 0.0
      %2513 = vmatprep.subr.mxu0 0.0
      %2514 = vmatpush1.msra.mxu0 0.0
      %2515 = vmatprep.subr.mxu0 0.0
      %2516 = vmatpush1.msra.mxu0 0.0
      %2517 = vmatprep.subr.mxu0 0.0
      %2518 = vmatpush1.msra.mxu0 0.0
      %2519 = vmatprep.subr.mxu0 0.0
      %2520 = vmatpush1.msra.mxu0 0.0
      %2521 = vmatprep.mubr.f32.mxu0 0.0
      %2522 = vmatmul.mubr.f32.gmra.mrb[0].mxu0 %v2359
      %v2523 = vpop.f32.mrb[0].mxu0
      %v2524 = vadd.f32 0.0, %v2523
      %v2525 = vpop.f32.mrb[0].mxu0
      %2526 = vmatprep.mubr.f32.mxu0 0.0
      %2527 = vmatmul.mubr.f32.gmra.mrb[0].mxu0 %v2362
      %v2528 = vpop.f32.mrb[0].mxu0
      %v2529 = vadd.f32 0.0, %v2528
      %v2530 = vpop.f32.mrb[0].mxu0
      %2531 = vmatprep.mubr.f32.mxu0 0.0
      %2532 = vmatmul.mubr.f32.gmra.mrb[0].mxu0 %v2365
      %v2533 = vpop.f32.mrb[0].mxu0
      %v2534 = vadd.f32 0.0, %v2533
      %v2535 = vpop.f32.mrb[0].mxu0
      %2536 = vmatprep.mubr.f32.mxu0 0.0
      %2537 = vmatmul.mubr.f32.gmra.mrb[0].mxu0 %v2368
      %v2538 = vpop.f32.mrb[0].mxu0
      %v2539 = vadd.f32 0.0, %v2538
      %v2540 = vpop.f32.mrb[0].mxu0
      %2541 = vmatprep.mubr.f32.mxu0 0.0
      %2542 = vmatmul.mubr.f32.gmra.mrb[0].mxu0 %v2371
      %v2543 = vpop.f32.mrb[0].mxu0
      %v2544 = vadd.f32 0.0, %v2543
      %v2545 = vpop.f32.mrb[0].mxu0
      %2546 = vmatprep.mubr.f32.mxu0 0.0
      %2547 = vmatmul.mubr.f32.gmra.mrb[0].mxu0 %v2374
      %v2548 = vpop.f32.mrb[0].mxu0
      %v2549 = vadd.f32 0.0, %v2548
      %v2550 = vpop.f32.mrb[0].mxu0
      %2551 = vmatprep.mubr.f32.mxu0 0.0
      %2552 = vmatmul.mubr.f32.gmra.mrb[0].mxu0 %v2377
      %v2553 = vpop.f32.mrb[0].mxu0
      %v2554 = vadd.f32 0.0, %v2553
      %v2555 = vpop.f32.mrb[0].mxu0
      %2556 = vmatprep.mubr.f32.mxu0 0.0
      %2557 = vmatmul.mubr.f32.gmra.mrb[0].mxu0 %v2380
      %v2558 = vpop.f32.mrb[0].mxu0
      %v2559 = vadd.f32 0.0, %v2558
      %v2560 = vpop.f32.mrb[0].mxu0
      %2561 = vmatprep.mubr.f32.mxu0 0.0
      %2562 = vmatmul.mubr.f32.gmra.mrb[0].mxu0 %v2383
      %v2563 = vpop.f32.mrb[0].mxu0
      %v2564 = vadd.f32 0.0, %v2563
      %v2565 = vpop.f32.mrb[0].mxu0
      %2566 = vmatprep.mubr.f32.mxu0 0.0
      %2567 = vmatmul.mubr.f32.gmra.mrb[0].mxu0 %v2386
      %v2568 = vpop.f32.mrb[0].mxu0
      %v2569 = vadd.f32 0.0, %v2568
      %v2570 = vpop.f32.mrb[0].mxu0
      %2571 = vmatprep.mubr.f32.mxu0 0.0
      %2572 = vmatmul.mubr.f32.gmra.mrb[0].mxu0 %v2389
      %v2573 = vpop.f32.mrb[0].mxu0
      %v2574 = vadd.f32 0.0, %v2573
      %v2575 = vpop.f32.mrb[0].mxu0
      %2576 = vmatprep.mubr.f32.mxu0 0.0
      %2577 = vmatmul.mubr.f32.gmra.mrb[0].mxu0 %v2392
      %v2578 = vpop.f32.mrb[0].mxu0
      %v2579 = vadd.f32 0.0, %v2578
      %v2580 = vpop.f32.mrb[0].mxu0
      %2581 = vmatprep.mubr.f32.mxu0 0.0
      %2582 = vmatmul.mubr.f32.gmra.mrb[0].mxu0 %v2395
      %v2583 = vpop.f32.mrb[0].mxu0
      %v2584 = vadd.f32 0.0, %v2583
      %v2585 = vpop.f32.mrb[0].mxu0
      %2586 = vmatprep.mubr.f32.mxu0 0.0
      %2587 = vmatmul.mubr.f32.gmra.mrb[0].mxu0 %v2398
      %v2588 = vpop.f32.mrb[0].mxu0
      %v2589 = vadd.f32 0.0, %v2588
      %v2590 = vpop.f32.mrb[0].mxu0
      %2591 = vmatprep.mubr.f32.mxu0 0.0
      %2592 = vmatmul.mubr.f32.gmra.mrb[0].mxu0 %v2401
      %v2593 = vpop.f32.mrb[0].mxu0
      %v2594 = vadd.f32 0.0, %v2593
      %v2595 = vpop.f32.mrb[0].mxu0
      %2596 = vmatprep.mubr.f32.mxu0 0.0
      %2597 = vmatmul.mubr.f32.gmra.mrb[0].mxu0 %v2404
      %v2598 = vpop.f32.mrb[0].mxu0
      %v2599 = vadd.f32 0.0, %v2598
      %v2600 = vpop.f32.mrb[0].mxu0
      %2601 = vmatprep.mubr.f32.mxu0 0.0
      %2602 = vmatmul.mubr.f32.gmra.mrb[0].mxu0 %v2407
      %v2603 = vpop.f32.mrb[0].mxu0
      %v2604 = vadd.f32 0.0, %v2603
      %v2605 = vpop.f32.mrb[0].mxu0
      %2606 = vmatprep.mubr.f32.mxu0 0.0
      %2607 = vmatmul.mubr.f32.gmra.mrb[0].mxu0 %v2410
      %v2608 = vpop.f32.mrb[0].mxu0
      %v2609 = vadd.f32 0.0, %v2608
      %v2610 = vpop.f32.mrb[0].mxu0
      %2611 = vmatprep.mubr.f32.mxu0 0.0
      %2612 = vmatmul.mubr.f32.gmra.mrb[0].mxu0 %v2413
      %v2613 = vpop.f32.mrb[0].mxu0
      %v2614 = vadd.f32 0.0, %v2613
      %v2615 = vpop.f32.mrb[0].mxu0
      %2616 = vmatprep.mubr.f32.mxu0 0.0
      %2617 = vmatmul.mubr.f32.gmra.mrb[0].mxu0 %v2416
      %v2618 = vpop.f32.mrb[0].mxu0
      %v2619 = vadd.f32 0.0, %v2618
      %v2620 = vpop.f32.mrb[0].mxu0
      %2621 = vmatprep.mubr.f32.mxu0 0.0
      %2622 = vmatmul.mubr.f32.gmra.mrb[0].mxu0 %v2419
      %v2623 = vpop.f32.mrb[0].mxu0
      %v2624 = vadd.f32 0.0, %v2623
      %v2625 = vpop.f32.mrb[0].mxu0
      %2626 = vmatprep.mubr.f32.mxu0 0.0
      %2627 = vmatmul.mubr.f32.gmra.mrb[0].mxu0 %v2422
      %v2628 = vpop.f32.mrb[0].mxu0
      %v2629 = vadd.f32 0.0, %v2628
      %v2630 = vpop.f32.mrb[0].mxu0
      %2631 = vmatprep.mubr.f32.mxu0 0.0
      %2632 = vmatmul.mubr.f32.gmra.mrb[0].mxu0 %v2425
      %v2633 = vpop.f32.mrb[0].mxu0
      %v2634 = vadd.f32 0.0, %v2633
      %v2635 = vpop.f32.mrb[0].mxu0
      %2636 = vmatprep.mubr.f32.mxu0 0.0
      %2637 = vmatmul.mubr.f32.gmra.mrb[0].mxu0 %v2428
      %v2638 = vpop.f32.mrb[0].mxu0
      %v2639 = vadd.f32 0.0, %v2638
      %v2640 = vpop.f32.mrb[0].mxu0
      %2641 = vmatprep.mubr.f32.mxu0 0.0
      %2642 = vmatmul.mubr.f32.gmra.mrb[0].mxu0 %v2431
      %v2643 = vpop.f32.mrb[0].mxu0
      %v2644 = vadd.f32 0.0, %v2643
      %v2645 = vpop.f32.mrb[0].mxu0
      %2646 = vmatprep.mubr.f32.mxu0 0.0
      %2647 = vmatmul.mubr.f32.gmra.mrb[0].mxu0 %v2434
      %v2648 = vpop.f32.mrb[0].mxu0
      %v2649 = vadd.f32 0.0, %v2648
      %v2650 = vpop.f32.mrb[0].mxu0
      %2651 = vmatprep.mubr.f32.mxu0 0.0
      %2652 = vmatmul.mubr.f32.gmra.mrb[0].mxu0 %v2437
      %v2653 = vpop.f32.mrb[0].mxu0
      %v2654 = vadd.f32 0.0, %v2653
      %v2655 = vpop.f32.mrb[0].mxu0
      %2656 = vmatprep.mubr.f32.mxu0 0.0
      %2657 = vmatmul.mubr.f32.gmra.mrb[0].mxu0 %v2440
      %v2658 = vpop.f32.mrb[0].mxu0
      %v2659 = vadd.f32 0.0, %v2658
      %v2660 = vpop.f32.mrb[0].mxu0
      %2661 = vmatprep.mubr.f32.mxu0 0.0
      %2662 = vmatmul.mubr.f32.gmra.mrb[0].mxu0 %v2443
      %v2663 = vpop.f32.mrb[0].mxu0
      %v2664 = vadd.f32 0.0, %v2663
      %v2665 = vpop.f32.mrb[0].mxu0
      %2666 = vmatprep.mubr.f32.mxu0 0.0
      %2667 = vmatmul.mubr.f32.gmra.mrb[0].mxu0 %v2446
      %v2668 = vpop.f32.mrb[0].mxu0
      %v2669 = vadd.f32 0.0, %v2668
      %v2670 = vpop.f32.mrb[0].mxu0
      %2671 = vmatprep.mubr.f32.mxu0 0.0
      %2672 = vmatmul.mubr.f32.gmra.mrb[0].mxu0 %v2449
      %v2673 = vpop.f32.mrb[0].mxu0
      %v2674 = vadd.f32 0.0, %v2673
      %v2675 = vpop.f32.mrb[0].mxu0
      %2676 = vmatprep.mubr.f32.mxu0 0.0
      %2677 = vmatmul.mubr.f32.gmra.mrb[0].mxu0 %v2452
      %v2678 = vpop.f32.mrb[0].mxu0
      %v2679 = vadd.f32 0.0, %v2678
      %v2680 = vpop.f32.mrb[0].mxu0
      %2681 = vdwg.mxu0
      %2682 = vxpose.xlu0.b32.start [1/16] %v2524, 128
      %2683 = vxpose.xlu0.b32.cont [2/16] %v2529, 128
      %2684 = vxpose.xlu0.b32.cont [3/16] %v2534, 128
      %2685 = vxpose.xlu0.b32.cont [4/16] %v2539, 128
      %2686 = vxpose.xlu0.b32.cont [5/16] %v2544, 128
      %2687 = vxpose.xlu0.b32.cont [6/16] %v2549, 128
      %2688 = vxpose.xlu0.b32.cont [7/16] %v2554, 128
      %2689 = vxpose.xlu0.b32.cont [8/16] %v2559, 128
      %2690 = vxpose.xlu0.b32.cont [9/16] %v2564, 128
      %2691 = vxpose.xlu0.b32.cont [10/16] %v2569, 128
      %2692 = vxpose.xlu0.b32.cont [11/16] %v2574, 128
      %2693 = vxpose.xlu0.b32.cont [12/16] %v2579, 128
      %2694 = vxpose.xlu0.b32.cont [13/16] %v2584, 128
      %2695 = vxpose.xlu0.b32.cont [14/16] %v2589, 128
      %2696 = vxpose.xlu0.b32.cont [15/16] %v2594, 128
      %2697 = vxpose.xlu0.b32.end [16/16] %v2599, 128
      %v2698 = vpop.trf.xlu0
      %v2699 = vpop.trf.xlu0
      %v2700 = vpop.trf.xlu0
      %v2701 = vpop.trf.xlu0
      %v2702 = vpop.trf.xlu0
      %v2703 = vpop.trf.xlu0
      %v2704 = vpop.trf.xlu0
      %v2705 = vpop.trf.xlu0
      %v2706 = vpop.trf.xlu0
      %v2707 = vpop.trf.xlu0
      %v2708 = vpop.trf.xlu0
      %v2709 = vpop.trf.xlu0
      %v2710 = vpop.trf.xlu0
      %v2711 = vpop.trf.xlu0
      %v2712 = vpop.trf.xlu0
      %v2713 = vpop.trf.xlu0
      %2714 = vxpose.xlu0.b32.start [1/16] %v2604, 128
      %2715 = vxpose.xlu0.b32.cont [2/16] %v2609, 128
      %2716 = vxpose.xlu0.b32.cont [3/16] %v2614, 128
      %2717 = vxpose.xlu0.b32.cont [4/16] %v2619, 128
      %2718 = vxpose.xlu0.b32.cont [5/16] %v2624, 128
      %2719 = vxpose.xlu0.b32.cont [6/16] %v2629, 128
      %2720 = vxpose.xlu0.b32.cont [7/16] %v2634, 128
      %2721 = vxpose.xlu0.b32.cont [8/16] %v2639, 128
      %2722 = vxpose.xlu0.b32.cont [9/16] %v2644, 128
      %2723 = vxpose.xlu0.b32.cont [10/16] %v2649, 128
      %2724 = vxpose.xlu0.b32.cont [11/16] %v2654, 128
      %2725 = vxpose.xlu0.b32.cont [12/16] %v2659, 128
      %2726 = vxpose.xlu0.b32.cont [13/16] %v2664, 128
      %2727 = vxpose.xlu0.b32.cont [14/16] %v2669, 128
      %2728 = vxpose.xlu0.b32.cont [15/16] %v2674, 128
      %2729 = vxpose.xlu0.b32.end [16/16] %v2679, 128
      %v2730 = vpop.trf.xlu0
      %v2731 = vpop.trf.xlu0
      %v2732 = vpop.trf.xlu0
      %v2733 = vpop.trf.xlu0
      %v2734 = vpop.trf.xlu0
      %v2735 = vpop.trf.xlu0
      %v2736 = vpop.trf.xlu0
      %v2737 = vpop.trf.xlu0
      %v2738 = vpop.trf.xlu0
      %v2739 = vpop.trf.xlu0
      %v2740 = vpop.trf.xlu0
      %v2741 = vpop.trf.xlu0
      %v2742 = vpop.trf.xlu0
      %v2743 = vpop.trf.xlu0
      %v2744 = vpop.trf.xlu0
      %v2745 = vpop.trf.xlu0
      %v2746 = vld [vmem:[%s5] sm:$0xf]
      %2748 = vset.pattern.permute.xlu0 0
      %2749 = vperm.xlu0 %2748, %v2746
      %v2750 = vpop.permute.xlu0 %2749
      %v2752 = vmul.f32 %v2698, %v2750
      %v2753 = vmul.f32 %v2730, %v2750
      %v2754 = vld [vmem:[%s6] sm:$0xf]
      %2756 = vset.pattern.permute.xlu0 0
      %2757 = vperm.xlu0 %2756, %v2754
      %v2758 = vpop.permute.xlu0 %2757
      %v2760 = vadd.f32 %v2752, %v2758
      %v2761 = vadd.f32 %v2753, %v2758
      %v2762 = vmax.f32 %v2760, 0.0
      %v2763 = vmax.f32 %v2761, 0.0
      %v2764 = vld [vmem:[%s7] sm:$0xff]
      %v2765 = vld [vmem:[%s7 + $0x8] sm:$0xff]
      %v2767 = vsel %vm526, %v2764, 0
      %v2770 = vsel %vm526, %v2765, 0
      %v2773 = vsel %vm530, %v2762, 0
      %v2776 = vsel %vm530, %v2763, 0
      %2778 = vmatprep.subr.mxu0 %v2776
      %2779 = vmatpush1.msra.mxu0 %v2773
      %2780 = vmatprep.subr.mxu0 0.0
      %2781 = vmatpush1.msra.mxu0 0.0
      %2782 = vmatprep.subr.mxu0 0.0
      %2783 = vmatpush1.msra.mxu0 0.0
      %2784 = vmatprep.subr.mxu0 0.0
      %2785 = vmatpush1.msra.mxu0 0.0
      %2786 = vmatprep.subr.mxu0 0.0
      %2787 = vmatpush1.msra.mxu0 0.0
      %2788 = vmatprep.subr.mxu0 0.0
      %2789 = vmatpush1.msra.mxu0 0.0
      %2790 = vmatprep.subr.mxu0 0.0
      %2791 = vmatpush1.msra.mxu0 0.0
      %2792 = vmatprep.subr.mxu0 0.0
      %2793 = vmatpush1.msra.mxu0 0.0
      %2794 = vmatprep.subr.mxu0 0.0
      %2795 = vmatpush1.msra.mxu0 0.0
      %2796 = vmatprep.subr.mxu0 0.0
      %2797 = vmatpush1.msra.mxu0 0.0
      %2798 = vmatprep.subr.mxu0 0.0
      %2799 = vmatpush1.msra.mxu0 0.0
      %2800 = vmatprep.subr.mxu0 0.0
      %2801 = vmatpush1.msra.mxu0 0.0
      %2802 = vmatprep.subr.mxu0 0.0
      %2803 = vmatpush1.msra.mxu0 0.0
      %2804 = vmatprep.subr.mxu0 0.0
      %2805 = vmatpush1.msra.mxu0 0.0
      %2806 = vmatprep.subr.mxu0 0.0
      %2807 = vmatpush1.msra.mxu0 0.0
      %2808 = vmatprep.subr.mxu0 0.0
      %2809 = vmatpush1.msra.mxu0 0.0
      %2810 = vmatprep.subr.mxu0 0.0
      %2811 = vmatpush1.msra.mxu0 0.0
      %2812 = vmatprep.subr.mxu0 0.0
      %2813 = vmatpush1.msra.mxu0 0.0
      %2814 = vmatprep.subr.mxu0 0.0
      %2815 = vmatpush1.msra.mxu0 0.0
      %2816 = vmatprep.subr.mxu0 0.0
      %2817 = vmatpush1.msra.mxu0 0.0
      %2818 = vmatprep.subr.mxu0 0.0
      %2819 = vmatpush1.msra.mxu0 0.0
      %2820 = vmatprep.subr.mxu0 0.0
      %2821 = vmatpush1.msra.mxu0 0.0
      %2822 = vmatprep.subr.mxu0 0.0
      %2823 = vmatpush1.msra.mxu0 0.0
      %2824 = vmatprep.subr.mxu0 0.0
      %2825 = vmatpush1.msra.mxu0 0.0
      %2826 = vmatprep.subr.mxu0 0.0
      %2827 = vmatpush1.msra.mxu0 0.0
      %2828 = vmatprep.subr.mxu0 0.0
      %2829 = vmatpush1.msra.mxu0 0.0
      %2830 = vmatprep.subr.mxu0 0.0
      %2831 = vmatpush1.msra.mxu0 0.0
      %2832 = vmatprep.subr.mxu0 0.0
      %2833 = vmatpush1.msra.mxu0 0.0
      %2834 = vmatprep.subr.mxu0 0.0
      %2835 = vmatpush1.msra.mxu0 0.0
      %2836 = vmatprep.subr.mxu0 0.0
      %2837 = vmatpush1.msra.mxu0 0.0
      %2838 = vmatprep.subr.mxu0 0.0
      %2839 = vmatpush1.msra.mxu0 0.0
      %2840 = vmatprep.subr.mxu0 0.0
      %2841 = vmatpush1.msra.mxu0 0.0
      %2842 = vmatprep.mubr.f32.mxu0 0.0
      %2843 = vmatmul.mubr.f32.gmra.mrb[0].mxu0 %v2767
      %v2844 = vpop.f32.mrb[0].mxu0
      %v2845 = vadd.f32 0.0, %v2844
      %v2846 = vpop.f32.mrb[0].mxu0
      %v2847 = vadd.f32 0.0, %v2846
      %2848 = vmatprep.mubr.f32.mxu0 0.0
      %2849 = vmatmul.mubr.f32.gmra.mrb[0].mxu0 %v2770
      %v2850 = vpop.f32.mrb[0].mxu0
      %v2851 = vadd.f32 0.0, %v2850
      %v2852 = vpop.f32.mrb[0].mxu0
      %v2853 = vadd.f32 0.0, %v2852
      %2854 = vdwg.mxu0
      %v2855 = vld [vmem:[%s8] sm:$0xff]
      %v2856 = vld [vmem:[%s8 + $0x8] sm:$0xff]
      %2858 = vset.pattern.permute.xlu0 0
      %2859 = vperm.xlu0 %2858, %v2855
      %v2860 = vpop.permute.xlu0 %2859
      %2863 = vset.pattern.permute.xlu0 0
      %2864 = vperm.xlu0 %2863, %v2856
      %v2865 = vpop.permute.xlu0 %2864
      %v2867 = vmul.f32 %v2845, %v2860
      %v2868 = vmul.f32 %v2847, %v2860
      %v2869 = vmul.f32 %v2851, %v2865
      %v2870 = vmul.f32 %v2853, %v2865
      %v2871 = vld [vmem:[%s9] sm:$0xff]
      %v2872 = vld [vmem:[%s9 + $0x8] sm:$0xff]
      %2874 = vset.pattern.permute.xlu0 0
      %2875 = vperm.xlu0 %2874, %v2871
      %v2876 = vpop.permute.xlu0 %2875
      %2879 = vset.pattern.permute.xlu0 0
      %2880 = vperm.xlu0 %2879, %v2872
      %v2881 = vpop.permute.xlu0 %2880
      %v2883 = vadd.f32 %v2867, %v2876
      %v2884 = vadd.f32 %v2868, %v2876
      %v2885 = vadd.f32 %v2869, %v2881
      %v2886 = vadd.f32 %v2870, %v2881
      %v2887 = vadd.f32 %v2883, %v2884
      %2888 = vadd.xlane.f32.xlu0 %v2887
      %v2889 = vpop.xlane.xlu0 %2888
      %v2890 = vadd.f32 %v2885, %v2886
      %2891 = vadd.xlane.f32.xlu0 %v2890
      %v2892 = vpop.xlane.xlu0 %2891
      %v2893 = vrcp.pop 256.0
      %v2894 = vmul.f32 %v2889, %v2893
      %v2895 = vmul.f32 %v2892, %v2893
      %v2896 = vmax.f32 %v2883, %v2884
      %2897 = vmax.xlane.f32.xlu0 %v2896
      %v2898 = vpop.xlane.xlu0 %2897
      %v2899 = vmax.f32 %v2885, %v2886
      %2900 = vmax.xlane.f32.xlu0 %v2899
      %v2901 = vpop.xlane.xlu0 %2900
      %vm2902 = vcmask 7168
      %v2903 = vsel %vm2902, %v2894, %v2898
      %v2904 = vsel %vm2902, %v2895, %v2901
      %v2905 = vld [vmem:[%s13] sm:$0xf]
      %v2907 = vsel %vm2187, %v2905, 0
      %2909 = vmatprep.subr.mxu0 0.0
      %2910 = vmatpush1.msra.mxu0 %v2903
      %2911 = vmatprep.subr.mxu0 0.0
      %2912 = vmatpush1.msra.mxu0 %v2904
      %2913 = vmatprep.subr.mxu0 0.0
      %2914 = vmatpush1.msra.mxu0 0.0
      %2915 = vmatprep.subr.mxu0 0.0
      %2916 = vmatpush1.msra.mxu0 0.0
      %2917 = vmatprep.subr.mxu0 0.0
      %2918 = vmatpush1.msra.mxu0 0.0
      %2919 = vmatprep.subr.mxu0 0.0
      %2920 = vmatpush1.msra.mxu0 0.0
      %2921 = vmatprep.subr.mxu0 0.0
      %2922 = vmatpush1.msra.mxu0 0.0
      %2923 = vmatprep.subr.mxu0 0.0
      %2924 = vmatpush1.msra.mxu0 0.0
      %2925 = vmatprep.subr.mxu0 0.0
      %2926 = vmatpush1.msra.mxu0 0.0
      %2927 = vmatprep.subr.mxu0 0.0
      %2928 = vmatpush1.msra.mxu0 0.0
      %2929 = vmatprep.subr.mxu0 0.0
      %2930 = vmatpush1.msra.mxu0 0.0
      %2931 = vmatprep.subr.mxu0 0.0
      %2932 = vmatpush1.msra.mxu0 0.0
      %2933 = vmatprep.subr.mxu0 0.0
      %2934 = vmatpush1.msra.mxu0 0.0
      %2935 = vmatprep.subr.mxu0 0.0
      %2936 = vmatpush1.msra.mxu0 0.0
      %2937 = vmatprep.subr.mxu0 0.0
      %2938 = vmatpush1.msra.mxu0 0.0
      %2939 = vmatprep.subr.mxu0 0.0
      %2940 = vmatpush1.msra.mxu0 0.0
      %2941 = vmatprep.subr.mxu0 0.0
      %2942 = vmatpush1.msra.mxu0 0.0
      %2943 = vmatprep.subr.mxu0 0.0
      %2944 = vmatpush1.msra.mxu0 0.0
      %2945 = vmatprep.subr.mxu0 0.0
      %2946 = vmatpush1.msra.mxu0 0.0
      %2947 = vmatprep.subr.mxu0 0.0
      %2948 = vmatpush1.msra.mxu0 0.0
      %2949 = vmatprep.subr.mxu0 0.0
      %2950 = vmatpush1.msra.mxu0 0.0
      %2951 = vmatprep.subr.mxu0 0.0
      %2952 = vmatpush1.msra.mxu0 0.0
      %2953 = vmatprep.subr.mxu0 0.0
      %2954 = vmatpush1.msra.mxu0 0.0
      %2955 = vmatprep.subr.mxu0 0.0
      %2956 = vmatpush1.msra.mxu0 0.0
      %2957 = vmatprep.subr.mxu0 0.0
      %2958 = vmatpush1.msra.mxu0 0.0
      %2959 = vmatprep.subr.mxu0 0.0
      %2960 = vmatpush1.msra.mxu0 0.0
      %2961 = vmatprep.subr.mxu0 0.0
      %2962 = vmatpush1.msra.mxu0 0.0
      %2963 = vmatprep.subr.mxu0 0.0
      %2964 = vmatpush1.msra.mxu0 0.0
      %2965 = vmatprep.subr.mxu0 0.0
      %2966 = vmatpush1.msra.mxu0 0.0
      %2967 = vmatprep.subr.mxu0 0.0
      %2968 = vmatpush1.msra.mxu0 0.0
      %2969 = vmatprep.subr.mxu0 0.0
      %2970 = vmatpush1.msra.mxu0 0.0
      %2971 = vmatprep.subr.mxu0 0.0
      %2972 = vmatpush1.msra.mxu0 0.0
      %2973 = vmatprep.mubr.f32.mxu0 0.0
      %2974 = vmatmul.mubr.f32.gmra.mrb[0].mxu0 %v2907
      %v2975 = vpop.f32.mrb[0].mxu0
      %v2976 = vadd.f32 0.0, %v2975
      %v2977 = vpop.f32.mrb[0].mxu0
      %2978 = vdwg.mxu0
      %v2979 = vmax.f32 %v2976, 0.0
      %v2980 = vld [vmem:[%s14] sm:$0xff]
      %v2981 = vld [vmem:[%s14 + $0x8] sm:$0xff]
      %v2983 = vsel %vm526, %v2980, 0
      %v2986 = vsel %vm526, %v2981, 0
      %v2989 = vsel %vm530, %v2979, 0
      %2991 = vmatprep.subr.mxu0 0.0
      %2992 = vmatpush1.msra.mxu0 %v2989
      %2993 = vmatprep.subr.mxu0 0.0
      %2994 = vmatpush1.msra.mxu0 0.0
      %2995 = vmatprep.subr.mxu0 0.0
      %2996 = vmatpush1.msra.mxu0 0.0
      %2997 = vmatprep.subr.mxu0 0.0
      %2998 = vmatpush1.msra.mxu0 0.0
      %2999 = vmatprep.subr.mxu0 0.0
      %3000 = vmatpush1.msra.mxu0 0.0
      %3001 = vmatprep.subr.mxu0 0.0
      %3002 = vmatpush1.msra.mxu0 0.0
      %3003 = vmatprep.subr.mxu0 0.0
      %3004 = vmatpush1.msra.mxu0 0.0
      %3005 = vmatprep.subr.mxu0 0.0
      %3006 = vmatpush1.msra.mxu0 0.0
      %3007 = vmatprep.subr.mxu0 0.0
      %3008 = vmatpush1.msra.mxu0 0.0
      %3009 = vmatprep.subr.mxu0 0.0
      %3010 = vmatpush1.msra.mxu0 0.0
      %3011 = vmatprep.subr.mxu0 0.0
      %3012 = vmatpush1.msra.mxu0 0.0
      %3013 = vmatprep.subr.mxu0 0.0
      %3014 = vmatpush1.msra.mxu0 0.0
      %3015 = vmatprep.subr.mxu0 0.0
      %3016 = vmatpush1.msra.mxu0 0.0
      %3017 = vmatprep.subr.mxu0 0.0
      %3018 = vmatpush1.msra.mxu0 0.0
      %3019 = vmatprep.subr.mxu0 0.0
      %3020 = vmatpush1.msra.mxu0 0.0
      %3021 = vmatprep.subr.mxu0 0.0
      %3022 = vmatpush1.msra.mxu0 0.0
      %3023 = vmatprep.subr.mxu0 0.0
      %3024 = vmatpush1.msra.mxu0 0.0
      %3025 = vmatprep.subr.mxu0 0.0
      %3026 = vmatpush1.msra.mxu0 0.0
      %3027 = vmatprep.subr.mxu0 0.0
      %3028 = vmatpush1.msra.mxu0 0.0
      %3029 = vmatprep.subr.mxu0 0.0
      %3030 = vmatpush1.msra.mxu0 0.0
      %3031 = vmatprep.subr.mxu0 0.0
      %3032 = vmatpush1.msra.mxu0 0.0
      %3033 = vmatprep.subr.mxu0 0.0
      %3034 = vmatpush1.msra.mxu0 0.0
      %3035 = vmatprep.subr.mxu0 0.0
      %3036 = vmatpush1.msra.mxu0 0.0
      %3037 = vmatprep.subr.mxu0 0.0
      %3038 = vmatpush1.msra.mxu0 0.0
      %3039 = vmatprep.subr.mxu0 0.0
      %3040 = vmatpush1.msra.mxu0 0.0
      %3041 = vmatprep.subr.mxu0 0.0
      %3042 = vmatpush1.msra.mxu0 0.0
      %3043 = vmatprep.subr.mxu0 0.0
      %3044 = vmatpush1.msra.mxu0 0.0
      %3045 = vmatprep.subr.mxu0 0.0
      %3046 = vmatpush1.msra.mxu0 0.0
      %3047 = vmatprep.subr.mxu0 0.0
      %3048 = vmatpush1.msra.mxu0 0.0
      %3049 = vmatprep.subr.mxu0 0.0
      %3050 = vmatpush1.msra.mxu0 0.0
      %3051 = vmatprep.subr.mxu0 0.0
      %3052 = vmatpush1.msra.mxu0 0.0
      %3053 = vmatprep.subr.mxu0 0.0
      %3054 = vmatpush1.msra.mxu0 0.0
      %3055 = vmatprep.mubr.f32.mxu0 0.0
      %3056 = vmatmul.mubr.f32.gmra.mrb[0].mxu0 %v2983
      %v3057 = vpop.f32.mrb[0].mxu0
      %v3058 = vadd.f32 0.0, %v3057
      %v3059 = vpop.f32.mrb[0].mxu0
      %3060 = vmatprep.mubr.f32.mxu0 0.0
      %3061 = vmatmul.mubr.f32.gmra.mrb[0].mxu0 %v2986
      %v3062 = vpop.f32.mrb[0].mxu0
      %v3063 = vadd.f32 0.0, %v3062
      %v3064 = vpop.f32.mrb[0].mxu0
      %3065 = vdwg.mxu0
      %3068 = vrot.lane.b32.xlu0 %v3058, 127
      %v3069 = vpop.permute.xlu0 %3068
      %3070 = vrot.lane.b32.xlu0 %v3063, 127
      %v3071 = vpop.permute.xlu0 %3070
      %v3074 = vadd.f32 %v3058, %v3069
      %v3075 = vadd.f32 %v3063, %v3071
      %v3076 = vsub.f32 0.0, %v3074
      %v3077 = vsub.f32 0.0, %v3075
      %v3078 = vmul.f32 %v3076, 1.442695
      %v3079 = vpow.pop %v3078
      %v3080 = vmul.f32 %v3077, 1.442695
      %v3081 = vpow.pop %v3080
      %v3082 = vadd.f32 %v3079, 1.0
      %v3083 = vadd.f32 %v3081, 1.0
      %v3084 = vrcp.pop %v3082
      %v3085 = vrcp.pop %v3083
      %3087 = vset.pattern.permute.xlu0 0
      %3088 = vperm.xlu0 %3087, %v3084
      %v3089 = vpop.permute.xlu0 %3088
      %3092 = vset.pattern.permute.xlu0 0
      %3093 = vperm.xlu0 %3092, %v3085
      %v3094 = vpop.permute.xlu0 %3093
      %v3096 = vmul.f32 %v2883, %v3089
      %v3097 = vmul.f32 %v2884, %v3089
      %v3098 = vmul.f32 %v2885, %v3094
      %v3099 = vmul.f32 %v2886, %v3094
      %v3100 = vadd.f32 %v3096, %v3098
      %v3101 = vrot.slane %v3100, 4
      %v3102 = vadd.f32 %v3100, %v3101
      %v3103 = vrot.slane %v3102, 2
      %v3104 = vadd.f32 %v3102, %v3103
      %v3105 = vrot.slane %v3104, 1
      %v3106 = vadd.f32 %v3104, %v3105
      %v3107 = vadd.f32 %v3097, %v3099
      %v3108 = vrot.slane %v3107, 4
      %v3109 = vadd.f32 %v3107, %v3108
      %v3110 = vrot.slane %v3109, 2
      %v3111 = vadd.f32 %v3109, %v3110
      %v3112 = vrot.slane %v3111, 1
      %v3113 = vadd.f32 %v3111, %v3112
      %v3114 = vrcp.pop 16.0
      %v3115 = vmul.f32 %v3106, %v3114
      %v3116 = vmul.f32 %v3113, %v3114
      %v3117 = vmax.f32 %v3096, %v3098
      %v3118 = vrot.slane %v3117, 4
      %v3119 = vmax.f32 %v3117, %v3118
      %v3120 = vrot.slane %v3119, 2
      %v3121 = vmax.f32 %v3119, %v3120
      %v3122 = vrot.slane %v3121, 1
      %v3123 = vmax.f32 %v3121, %v3122
      %v3124 = vmax.f32 %v3097, %v3099
      %v3125 = vrot.slane %v3124, 4
      %v3126 = vmax.f32 %v3124, %v3125
      %v3127 = vrot.slane %v3126, 2
      %v3128 = vmax.f32 %v3126, %v3127
      %v3129 = vrot.slane %v3128, 1
      %v3130 = vmax.f32 %v3128, %v3129
      %vm3131 = vcmask 1040384
      %v3132 = vsel %vm3131, %v3115, %v3123
      %v3133 = vsel %vm3131, %v3116, %v3130
      %3134 = vxpose.xlu0.b32.start [1/16] %v3132, 128
      %3135 = vxpose.xlu0.b32.cont [2/16] 0.0, 128
      %3136 = vxpose.xlu0.b32.cont [3/16] 0.0, 128
      %3137 = vxpose.xlu0.b32.cont [4/16] 0.0, 128
      %3138 = vxpose.xlu0.b32.cont [5/16] 0.0, 128
      %3139 = vxpose.xlu0.b32.cont [6/16] 0.0, 128
      %3140 = vxpose.xlu0.b32.cont [7/16] 0.0, 128
      %3141 = vxpose.xlu0.b32.cont [8/16] 0.0, 128
      %3142 = vxpose.xlu0.b32.cont [9/16] 0.0, 128
      %3143 = vxpose.xlu0.b32.cont [10/16] 0.0, 128
      %3144 = vxpose.xlu0.b32.cont [11/16] 0.0, 128
      %3145 = vxpose.xlu0.b32.cont [12/16] 0.0, 128
      %3146 = vxpose.xlu0.b32.cont [13/16] 0.0, 128
      %3147 = vxpose.xlu0.b32.cont [14/16] 0.0, 128
      %3148 = vxpose.xlu0.b32.cont [15/16] 0.0, 128
      %3149 = vxpose.xlu0.b32.end [16/16] 0.0, 128
      %v3150 = vpop.trf.xlu0
      %v3151 = vpop.trf.xlu0
      %v3152 = vpop.trf.xlu0
      %v3153 = vpop.trf.xlu0
      %v3154 = vpop.trf.xlu0
      %v3155 = vpop.trf.xlu0
      %v3156 = vpop.trf.xlu0
      %v3157 = vpop.trf.xlu0
      %v3158 = vpop.trf.xlu0
      %v3159 = vpop.trf.xlu0
      %v3160 = vpop.trf.xlu0
      %v3161 = vpop.trf.xlu0
      %v3162 = vpop.trf.xlu0
      %v3163 = vpop.trf.xlu0
      %v3164 = vpop.trf.xlu0
      %v3165 = vpop.trf.xlu0
      %3166 = vxpose.xlu0.b32.start [1/16] %v3133, 128
      %3167 = vxpose.xlu0.b32.cont [2/16] 0.0, 128
      %3168 = vxpose.xlu0.b32.cont [3/16] 0.0, 128
      %3169 = vxpose.xlu0.b32.cont [4/16] 0.0, 128
      %3170 = vxpose.xlu0.b32.cont [5/16] 0.0, 128
      %3171 = vxpose.xlu0.b32.cont [6/16] 0.0, 128
      %3172 = vxpose.xlu0.b32.cont [7/16] 0.0, 128
      %3173 = vxpose.xlu0.b32.cont [8/16] 0.0, 128
      %3174 = vxpose.xlu0.b32.cont [9/16] 0.0, 128
      %3175 = vxpose.xlu0.b32.cont [10/16] 0.0, 128
      %3176 = vxpose.xlu0.b32.cont [11/16] 0.0, 128
      %3177 = vxpose.xlu0.b32.cont [12/16] 0.0, 128
      %3178 = vxpose.xlu0.b32.cont [13/16] 0.0, 128
      %3179 = vxpose.xlu0.b32.cont [14/16] 0.0, 128
      %3180 = vxpose.xlu0.b32.cont [15/16] 0.0, 128
      %3181 = vxpose.xlu0.b32.end [16/16] 0.0, 128
      %v3182 = vpop.trf.xlu0
      %v3183 = vpop.trf.xlu0
      %v3184 = vpop.trf.xlu0
      %v3185 = vpop.trf.xlu0
      %v3186 = vpop.trf.xlu0
      %v3187 = vpop.trf.xlu0
      %v3188 = vpop.trf.xlu0
      %v3189 = vpop.trf.xlu0
      %v3190 = vpop.trf.xlu0
      %v3191 = vpop.trf.xlu0
      %v3192 = vpop.trf.xlu0
      %v3193 = vpop.trf.xlu0
      %v3194 = vpop.trf.xlu0
      %v3195 = vpop.trf.xlu0
      %v3196 = vpop.trf.xlu0
      %v3197 = vpop.trf.xlu0
      %vm3198 = vcmask 15360
      %3199 = vst.msk [vmem:[#allocation3] sm:$0xff] %vm3198, 0.0
      %3200 = vst.msk [vmem:[#allocation3 + $0x8] sm:$0xff] %vm3198, 0.0
      %vm3201 = vcmask 13312
      %3202 = vst.msk [vmem:[#allocation3 + $0x10] sm:$0x3f] %vm3201, 0.0
      %3203 = vst.msk [vmem:[#allocation3 + $0x18] sm:$0xff] %vm3198, 0.0
      %3204 = vst.msk [vmem:[#allocation3 + $0x20] sm:$0xff] %vm3198, 0.0
      %3205 = vst.msk [vmem:[#allocation3 + $0x28] sm:$0x3f] %vm3201, 0.0
      %3206 = vst.msk [vmem:[#allocation3 + $0x30] sm:$0xff] %vm3198, 0.0
      %3207 = vst.msk [vmem:[#allocation3 + $0x38] sm:$0xff] %vm3198, 0.0
      %3208 = vst.msk [vmem:[#allocation3 + $0x40] sm:$0x3f] %vm3201, 0.0
      %3209 = vst.msk [vmem:[#allocation3 + $0x48] sm:$0xff] %vm3198, 0.0
      %3210 = vst.msk [vmem:[#allocation3 + $0x50] sm:$0xff] %vm3198, 0.0
      %3211 = vst.msk [vmem:[#allocation3 + $0x58] sm:$0x3f] %vm3201, 0.0
      %3212 = vst.msk [vmem:[#allocation3 + $0x60] sm:$0xff] %vm3198, 0.0
      %3213 = vst.msk [vmem:[#allocation3 + $0x68] sm:$0xff] %vm3198, 0.0
      %3214 = vst.msk [vmem:[#allocation3 + $0x70] sm:$0x3f] %vm3201, 0.0
      %3215 = vst.msk [vmem:[#allocation3 + $0x78] sm:$0xff] %vm3198, 0.0
      %3216 = vst.msk [vmem:[#allocation3 + $0x80] sm:$0xff] %vm3198, 0.0
      %3217 = vst.msk [vmem:[#allocation3 + $0x88] sm:$0x3f] %vm3201, 0.0
      %3218 = vst.msk [vmem:[#allocation3 + $0x90] sm:$0xff] %vm3198, 0.0
      %3219 = vst.msk [vmem:[#allocation3 + $0x98] sm:$0xff] %vm3198, 0.0
      %3220 = vst.msk [vmem:[#allocation3 + $0xa0] sm:$0x3f] %vm3201, 0.0
      %3221 = vst.msk [vmem:[#allocation3 + $0xa8] sm:$0xff] %vm3198, 0.0
      %3222 = vst.msk [vmem:[#allocation3 + $0xb0] sm:$0xff] %vm3198, 0.0
      %3223 = vst.msk [vmem:[#allocation3 + $0xb8] sm:$0x3f] %vm3201, 0.0
      %3224 = vst.msk [vmem:[#allocation3 + $0xc0] sm:$0xff] %vm3198, 0.0
      %3225 = vst.msk [vmem:[#allocation3 + $0xc8] sm:$0xff] %vm3198, 0.0
      %3226 = vst.msk [vmem:[#allocation3 + $0xd0] sm:$0x3f] %vm3201, 0.0
      %3227 = vst.msk [vmem:[#allocation3 + $0xd8] sm:$0xff] %vm3198, 0.0
      %3228 = vst.msk [vmem:[#allocation3 + $0xe0] sm:$0xff] %vm3198, 0.0
      %3229 = vst.msk [vmem:[#allocation3 + $0xe8] sm:$0x3f] %vm3201, 0.0
      %3230 = vst.msk [vmem:[#allocation3 + $0xf0] sm:$0xff] %vm3198, 0.0
      %3231 = vst.msk [vmem:[#allocation3 + $0xf8] sm:$0xff] %vm3198, 0.0
      %3232 = vst.msk [vmem:[#allocation3 + $0x100] sm:$0x3f] %vm3201, 0.0
      %3233 = vst.msk [vmem:[#allocation3 + $0x108] sm:$0xff] %vm3198, 0.0
      %3234 = vst.msk [vmem:[#allocation3 + $0x110] sm:$0xff] %vm3198, 0.0
      %3235 = vst.msk [vmem:[#allocation3 + $0x118] sm:$0x3f] %vm3201, 0.0
      %3236 = vst.msk [vmem:[#allocation3 + $0x120] sm:$0xff] %vm3198, 0.0
      %3237 = vst.msk [vmem:[#allocation3 + $0x128] sm:$0xff] %vm3198, 0.0
      %3238 = vst.msk [vmem:[#allocation3 + $0x130] sm:$0x3f] %vm3201, 0.0
      %3239 = vst.msk [vmem:[#allocation3 + $0x138] sm:$0xff] %vm3198, 0.0
      %3240 = vst.msk [vmem:[#allocation3 + $0x140] sm:$0xff] %vm3198, 0.0
      %3241 = vst.msk [vmem:[#allocation3 + $0x148] sm:$0x3f] %vm3201, 0.0
      %3242 = vst.msk [vmem:[#allocation3 + $0x150] sm:$0xff] %vm3198, 0.0
      %3243 = vst.msk [vmem:[#allocation3 + $0x158] sm:$0xff] %vm3198, 0.0
      %3244 = vst.msk [vmem:[#allocation3 + $0x160] sm:$0x3f] %vm3201, 0.0
      %3245 = vst.msk [vmem:[#allocation3 + $0x168] sm:$0xff] %vm3198, 0.0
      %3246 = vst.msk [vmem:[#allocation3 + $0x170] sm:$0xff] %vm3198, 0.0
      %3247 = vst.msk [vmem:[#allocation3 + $0x178] sm:$0x3f] %vm3201, 0.0
      %3248 = vst.msk [vmem:[#allocation3 + $0x180] sm:$0xff] %vm3198, 0.0
      %3249 = vst.msk [vmem:[#allocation3 + $0x188] sm:$0xff] %vm3198, 0.0
      %3250 = vst.msk [vmem:[#allocation3 + $0x190] sm:$0x3f] %vm3201, 0.0
      %3251 = vst.msk [vmem:[#allocation3 + $0x198] sm:$0xff] %vm3198, 0.0
      %3252 = vst.msk [vmem:[#allocation3 + $0x1a0] sm:$0xff] %vm3198, 0.0
      %3253 = vst.msk [vmem:[#allocation3 + $0x1a8] sm:$0x3f] %vm3201, 0.0
      %3254 = vst.msk [vmem:[#allocation3 + $0x1b0] sm:$0xff] %vm3198, 0.0
      %3255 = vst.msk [vmem:[#allocation3 + $0x1b8] sm:$0xff] %vm3198, 0.0
      %3256 = vst.msk [vmem:[#allocation3 + $0x1c0] sm:$0x3f] %vm3201, 0.0
      %3257 = vst.msk [vmem:[#allocation3 + $0x1c8] sm:$0xff] %vm3198, 0.0
      %3258 = vst.msk [vmem:[#allocation3 + $0x1d0] sm:$0xff] %vm3198, 0.0
      %3259 = vst.msk [vmem:[#allocation3 + $0x1d8] sm:$0x3f] %vm3201, 0.0
      %3260 = vst.msk [vmem:[#allocation3 + $0x1e0] sm:$0xff] %vm3198, 0.0
      %3261 = vst.msk [vmem:[#allocation3 + $0x1e8] sm:$0xff] %vm3198, 0.0
      %3262 = vst.msk [vmem:[#allocation3 + $0x1f0] sm:$0x3f] %vm3201, 0.0
      %3263 = vst.msk [vmem:[#allocation3 + $0x1f8] sm:$0xff] %vm3198, 0.0
      %3264 = vst.msk [vmem:[#allocation3 + $0x200] sm:$0xff] %vm3198, 0.0
      %3265 = vst.msk [vmem:[#allocation3 + $0x208] sm:$0x3f] %vm3201, 0.0
      %s3266 = scalar_lea.vmem [#allocation3], 72
      %3267 = vst.msk [vmem:[%s3266 + $0x3] sm:$0xff] %vm3198, %v3150
      %3268 = vst.msk [vmem:[%s3266 + $0xb] sm:$0xff] %vm3198, %v3151
      %3269 = vst.msk [vmem:[%s3266 + $0x1b] sm:$0xff] %vm3198, %v3152
      %3270 = vst.msk [vmem:[%s3266 + $0x23] sm:$0xff] %vm3198, %v3153
      %3271 = vst.msk [vmem:[%s3266 + $0x33] sm:$0xff] %vm3198, %v3154
      %3272 = vst.msk [vmem:[%s3266 + $0x3b] sm:$0xff] %vm3198, %v3155
      %3273 = vst.msk [vmem:[%s3266 + $0x4b] sm:$0xff] %vm3198, %v3156
      %3274 = vst.msk [vmem:[%s3266 + $0x53] sm:$0xff] %vm3198, %v3157
      %3275 = vst.msk [vmem:[%s3266 + $0x63] sm:$0xff] %vm3198, %v3158
      %3276 = vst.msk [vmem:[%s3266 + $0x6b] sm:$0xff] %vm3198, %v3159
      %3277 = vst.msk [vmem:[%s3266 + $0x7b] sm:$0xff] %vm3198, %v3160
      %3278 = vst.msk [vmem:[%s3266 + $0x83] sm:$0xff] %vm3198, %v3161
      %3279 = vst.msk [vmem:[%s3266 + $0x93] sm:$0xff] %vm3198, %v3162
      %3280 = vst.msk [vmem:[%s3266 + $0x9b] sm:$0xff] %vm3198, %v3163
      %3281 = vst.msk [vmem:[%s3266 + $0xab] sm:$0xff] %vm3198, %v3164
      %3282 = vst.msk [vmem:[%s3266 + $0xb3] sm:$0xff] %vm3198, %v3165
      %3283 = vst.msk [vmem:[%s3266 + $0xc3] sm:$0xff] %vm3198, %v3182
      %3284 = vst.msk [vmem:[%s3266 + $0xcb] sm:$0xff] %vm3198, %v3183
      %3285 = vst.msk [vmem:[%s3266 + $0xdb] sm:$0xff] %vm3198, %v3184
      %3286 = vst.msk [vmem:[%s3266 + $0xe3] sm:$0xff] %vm3198, %v3185
      %3287 = vst.msk [vmem:[%s3266 + $0xf3] sm:$0xff] %vm3198, %v3186
      %3288 = vst.msk [vmem:[%s3266 + $0xfb] sm:$0xff] %vm3198, %v3187
      %3289 = vst.msk [vmem:[%s3266 + $0x10b] sm:$0xff] %vm3198, %v3188
      %3290 = vst.msk [vmem:[%s3266 + $0x113] sm:$0xff] %vm3198, %v3189
      %3291 = vst.msk [vmem:[%s3266 + $0x123] sm:$0xff] %vm3198, %v3190
      %3292 = vst.msk [vmem:[%s3266 + $0x12b] sm:$0xff] %vm3198, %v3191
      %3293 = vst.msk [vmem:[%s3266 + $0x13b] sm:$0xff] %vm3198, %v3192
      %3294 = vst.msk [vmem:[%s3266 + $0x143] sm:$0xff] %vm3198, %v3193
      %3295 = vst.msk [vmem:[%s3266 + $0x153] sm:$0xff] %vm3198, %v3194
      %3296 = vst.msk [vmem:[%s3266 + $0x15b] sm:$0xff] %vm3198, %v3195
      %3297 = vst.msk [vmem:[%s3266 + $0x16b] sm:$0xff] %vm3198, %v3196
      %3298 = vst.msk [vmem:[%s3266 + $0x173] sm:$0xff] %vm3198, %v3197
      %v3299 = vld [vmem:[#allocation3] sm:$0xff]
      %v3300 = vld [vmem:[#allocation3 + $0x8] sm:$0xff]
      %v3301 = vld [vmem:[#allocation3 + $0x18] sm:$0xff]
      %v3302 = vld [vmem:[#allocation3 + $0x20] sm:$0xff]
      %v3303 = vld [vmem:[#allocation3 + $0x30] sm:$0xff]
      %v3304 = vld [vmem:[#allocation3 + $0x38] sm:$0xff]
      %v3305 = vld [vmem:[#allocation3 + $0x48] sm:$0xff]
      %v3306 = vld [vmem:[#allocation3 + $0x50] sm:$0xff]
      %v3307 = vld [vmem:[#allocation3 + $0x60] sm:$0xff]
      %v3308 = vld [vmem:[#allocation3 + $0x68] sm:$0xff]
      %v3309 = vld [vmem:[#allocation3 + $0x78] sm:$0xff]
      %v3310 = vld [vmem:[#allocation3 + $0x80] sm:$0xff]
      %v3311 = vld [vmem:[#allocation3 + $0x90] sm:$0xff]
      %v3312 = vld [vmem:[#allocation3 + $0x98] sm:$0xff]
      %v3313 = vld [vmem:[#allocation3 + $0xa8] sm:$0xff]
      %v3314 = vld [vmem:[#allocation3 + $0xb0] sm:$0xff]
      %v3315 = vld [vmem:[#allocation3 + $0xc0] sm:$0xff]
      %v3316 = vld [vmem:[#allocation3 + $0xc8] sm:$0xff]
      %v3317 = vld [vmem:[#allocation3 + $0xd8] sm:$0xff]
      %v3318 = vld [vmem:[#allocation3 + $0xe0] sm:$0xff]
      %v3319 = vld [vmem:[#allocation3 + $0xf0] sm:$0xff]
      %v3320 = vld [vmem:[#allocation3 + $0xf8] sm:$0xff]
      %v3321 = vld [vmem:[#allocation3 + $0x108] sm:$0xff]
      %v3322 = vld [vmem:[#allocation3 + $0x110] sm:$0xff]
      %v3323 = vld [vmem:[#allocation3 + $0x120] sm:$0xff]
      %v3324 = vld [vmem:[#allocation3 + $0x128] sm:$0xff]
      %v3325 = vld [vmem:[#allocation3 + $0x138] sm:$0xff]
      %v3326 = vld [vmem:[#allocation3 + $0x140] sm:$0xff]
      %v3327 = vld [vmem:[#allocation3 + $0x150] sm:$0xff]
      %v3328 = vld [vmem:[#allocation3 + $0x158] sm:$0xff]
      %v3329 = vld [vmem:[#allocation3 + $0x168] sm:$0xff]
      %v3330 = vld [vmem:[#allocation3 + $0x170] sm:$0xff]
      %v3331 = vld [vmem:[#allocation3 + $0x1] sm:$0xff]
      %v3332 = vld [vmem:[#allocation3 + $0x9] sm:$0xff]
      %v3333 = vld [vmem:[#allocation3 + $0x19] sm:$0xff]
      %v3334 = vld [vmem:[#allocation3 + $0x21] sm:$0xff]
      %v3335 = vld [vmem:[#allocation3 + $0x31] sm:$0xff]
      %v3336 = vld [vmem:[#allocation3 + $0x39] sm:$0xff]
      %v3337 = vld [vmem:[#allocation3 + $0x49] sm:$0xff]
      %v3338 = vld [vmem:[#allocation3 + $0x51] sm:$0xff]
      %v3339 = vld [vmem:[#allocation3 + $0x61] sm:$0xff]
      %v3340 = vld [vmem:[#allocation3 + $0x69] sm:$0xff]
      %v3341 = vld [vmem:[#allocation3 + $0x79] sm:$0xff]
      %v3342 = vld [vmem:[#allocation3 + $0x81] sm:$0xff]
      %v3343 = vld [vmem:[#allocation3 + $0x91] sm:$0xff]
      %v3344 = vld [vmem:[#allocation3 + $0x99] sm:$0xff]
      %v3345 = vld [vmem:[#allocation3 + $0xa9] sm:$0xff]
      %v3346 = vld [vmem:[#allocation3 + $0xb1] sm:$0xff]
      %v3347 = vld [vmem:[#allocation3 + $0xc1] sm:$0xff]
      %v3348 = vld [vmem:[#allocation3 + $0xc9] sm:$0xff]
      %v3349 = vld [vmem:[#allocation3 + $0xd9] sm:$0xff]
      %v3350 = vld [vmem:[#allocation3 + $0xe1] sm:$0xff]
      %v3351 = vld [vmem:[#allocation3 + $0xf1] sm:$0xff]
      %v3352 = vld [vmem:[#allocation3 + $0xf9] sm:$0xff]
      %v3353 = vld [vmem:[#allocation3 + $0x109] sm:$0xff]
      %v3354 = vld [vmem:[#allocation3 + $0x111] sm:$0xff]
      %v3355 = vld [vmem:[#allocation3 + $0x121] sm:$0xff]
      %v3356 = vld [vmem:[#allocation3 + $0x129] sm:$0xff]
      %v3357 = vld [vmem:[#allocation3 + $0x139] sm:$0xff]
      %v3358 = vld [vmem:[#allocation3 + $0x141] sm:$0xff]
      %v3359 = vld [vmem:[#allocation3 + $0x151] sm:$0xff]
      %v3360 = vld [vmem:[#allocation3 + $0x159] sm:$0xff]
      %v3361 = vld [vmem:[#allocation3 + $0x169] sm:$0xff]
      %v3362 = vld [vmem:[#allocation3 + $0x171] sm:$0xff]
      %v3363 = vld [vmem:[#allocation3 + $0x2] sm:$0xff]
      %v3364 = vld [vmem:[#allocation3 + $0xa] sm:$0xff]
      %v3365 = vld [vmem:[#allocation3 + $0x1a] sm:$0xff]
      %v3366 = vld [vmem:[#allocation3 + $0x22] sm:$0xff]
      %v3367 = vld [vmem:[#allocation3 + $0x32] sm:$0xff]
      %v3368 = vld [vmem:[#allocation3 + $0x3a] sm:$0xff]
      %v3369 = vld [vmem:[#allocation3 + $0x4a] sm:$0xff]
      %v3370 = vld [vmem:[#allocation3 + $0x52] sm:$0xff]
      %v3371 = vld [vmem:[#allocation3 + $0x62] sm:$0xff]
      %v3372 = vld [vmem:[#allocation3 + $0x6a] sm:$0xff]
      %v3373 = vld [vmem:[#allocation3 + $0x7a] sm:$0xff]
      %v3374 = vld [vmem:[#allocation3 + $0x82] sm:$0xff]
      %v3375 = vld [vmem:[#allocation3 + $0x92] sm:$0xff]
      %v3376 = vld [vmem:[#allocation3 + $0x9a] sm:$0xff]
      %v3377 = vld [vmem:[#allocation3 + $0xaa] sm:$0xff]
      %v3378 = vld [vmem:[#allocation3 + $0xb2] sm:$0xff]
      %v3379 = vld [vmem:[#allocation3 + $0xc2] sm:$0xff]
      %v3380 = vld [vmem:[#allocation3 + $0xca] sm:$0xff]
      %v3381 = vld [vmem:[#allocation3 + $0xda] sm:$0xff]
      %v3382 = vld [vmem:[#allocation3 + $0xe2] sm:$0xff]
      %v3383 = vld [vmem:[#allocation3 + $0xf2] sm:$0xff]
      %v3384 = vld [vmem:[#allocation3 + $0xfa] sm:$0xff]
      %v3385 = vld [vmem:[#allocation3 + $0x10a] sm:$0xff]
      %v3386 = vld [vmem:[#allocation3 + $0x112] sm:$0xff]
      %v3387 = vld [vmem:[#allocation3 + $0x122] sm:$0xff]
      %v3388 = vld [vmem:[#allocation3 + $0x12a] sm:$0xff]
      %v3389 = vld [vmem:[#allocation3 + $0x13a] sm:$0xff]
      %v3390 = vld [vmem:[#allocation3 + $0x142] sm:$0xff]
      %v3391 = vld [vmem:[#allocation3 + $0x152] sm:$0xff]
      %v3392 = vld [vmem:[#allocation3 + $0x15a] sm:$0xff]
      %v3393 = vld [vmem:[#allocation3 + $0x16a] sm:$0xff]
      %v3394 = vld [vmem:[#allocation3 + $0x172] sm:$0xff]
      %v3395 = vld [vmem:[#allocation3 + $0x3] sm:$0xff]
      %v3396 = vld [vmem:[#allocation3 + $0xb] sm:$0xff]
      %v3397 = vld [vmem:[#allocation3 + $0x1b] sm:$0xff]
      %v3398 = vld [vmem:[#allocation3 + $0x23] sm:$0xff]
      %v3399 = vld [vmem:[#allocation3 + $0x33] sm:$0xff]
      %v3400 = vld [vmem:[#allocation3 + $0x3b] sm:$0xff]
      %v3401 = vld [vmem:[#allocation3 + $0x4b] sm:$0xff]
      %v3402 = vld [vmem:[#allocation3 + $0x53] sm:$0xff]
      %v3403 = vld [vmem:[#allocation3 + $0x63] sm:$0xff]
      %v3404 = vld [vmem:[#allocation3 + $0x6b] sm:$0xff]
      %v3405 = vld [vmem:[#allocation3 + $0x7b] sm:$0xff]
      %v3406 = vld [vmem:[#allocation3 + $0x83] sm:$0xff]
      %v3407 = vld [vmem:[#allocation3 + $0x93] sm:$0xff]
      %v3408 = vld [vmem:[#allocation3 + $0x9b] sm:$0xff]
      %v3409 = vld [vmem:[#allocation3 + $0xab] sm:$0xff]
      %v3410 = vld [vmem:[#allocation3 + $0xb3] sm:$0xff]
      %v3411 = vld [vmem:[#allocation3 + $0xc3] sm:$0xff]
      %v3412 = vld [vmem:[#allocation3 + $0xcb] sm:$0xff]
      %v3413 = vld [vmem:[#allocation3 + $0xdb] sm:$0xff]
      %v3414 = vld [vmem:[#allocation3 + $0xe3] sm:$0xff]
      %v3415 = vld [vmem:[#allocation3 + $0xf3] sm:$0xff]
      %v3416 = vld [vmem:[#allocation3 + $0xfb] sm:$0xff]
      %v3417 = vld [vmem:[#allocation3 + $0x10b] sm:$0xff]
      %v3418 = vld [vmem:[#allocation3 + $0x113] sm:$0xff]
      %v3419 = vld [vmem:[#allocation3 + $0x123] sm:$0xff]
      %v3420 = vld [vmem:[#allocation3 + $0x12b] sm:$0xff]
      %v3421 = vld [vmem:[#allocation3 + $0x13b] sm:$0xff]
      %v3422 = vld [vmem:[#allocation3 + $0x143] sm:$0xff]
      %v3423 = vld [vmem:[#allocation3 + $0x153] sm:$0xff]
      %v3424 = vld [vmem:[#allocation3 + $0x15b] sm:$0xff]
      %v3425 = vld [vmem:[#allocation3 + $0x16b] sm:$0xff]
      %v3426 = vld [vmem:[#allocation3 + $0x173] sm:$0xff]
      %v3427 = vld [vmem:[#allocation3 + $0x4] sm:$0xff]
      %v3428 = vld [vmem:[#allocation3 + $0xc] sm:$0xff]
      %v3429 = vld [vmem:[#allocation3 + $0x1c] sm:$0xff]
      %v3430 = vld [vmem:[#allocation3 + $0x24] sm:$0xff]
      %v3431 = vld [vmem:[#allocation3 + $0x34] sm:$0xff]
      %v3432 = vld [vmem:[#allocation3 + $0x3c] sm:$0xff]
      %v3433 = vld [vmem:[#allocation3 + $0x4c] sm:$0xff]
      %v3434 = vld [vmem:[#allocation3 + $0x54] sm:$0xff]
      %v3435 = vld [vmem:[#allocation3 + $0x64] sm:$0xff]
      %v3436 = vld [vmem:[#allocation3 + $0x6c] sm:$0xff]
      %v3437 = vld [vmem:[#allocation3 + $0x7c] sm:$0xff]
      %v3438 = vld [vmem:[#allocation3 + $0x84] sm:$0xff]
      %v3439 = vld [vmem:[#allocation3 + $0x94] sm:$0xff]
      %v3440 = vld [vmem:[#allocation3 + $0x9c] sm:$0xff]
      %v3441 = vld [vmem:[#allocation3 + $0xac] sm:$0xff]
      %v3442 = vld [vmem:[#allocation3 + $0xb4] sm:$0xff]
      %v3443 = vld [vmem:[#allocation3 + $0xc4] sm:$0xff]
      %v3444 = vld [vmem:[#allocation3 + $0xcc] sm:$0xff]
      %v3445 = vld [vmem:[#allocation3 + $0xdc] sm:$0xff]
      %v3446 = vld [vmem:[#allocation3 + $0xe4] sm:$0xff]
      %v3447 = vld [vmem:[#allocation3 + $0xf4] sm:$0xff]
      %v3448 = vld [vmem:[#allocation3 + $0xfc] sm:$0xff]
      %v3449 = vld [vmem:[#allocation3 + $0x10c] sm:$0xff]
      %v3450 = vld [vmem:[#allocation3 + $0x114] sm:$0xff]
      %v3451 = vld [vmem:[#allocation3 + $0x124] sm:$0xff]
      %v3452 = vld [vmem:[#allocation3 + $0x12c] sm:$0xff]
      %v3453 = vld [vmem:[#allocation3 + $0x13c] sm:$0xff]
      %v3454 = vld [vmem:[#allocation3 + $0x144] sm:$0xff]
      %v3455 = vld [vmem:[#allocation3 + $0x154] sm:$0xff]
      %v3456 = vld [vmem:[#allocation3 + $0x15c] sm:$0xff]
      %v3457 = vld [vmem:[#allocation3 + $0x16c] sm:$0xff]
      %v3458 = vld [vmem:[#allocation3 + $0x174] sm:$0xff]
      %v3459 = vld [vmem:[#allocation3 + $0x5] sm:$0xff]
      %v3460 = vld [vmem:[#allocation3 + $0xd] sm:$0xff]
      %v3461 = vld [vmem:[#allocation3 + $0x1d] sm:$0xff]
      %v3462 = vld [vmem:[#allocation3 + $0x25] sm:$0xff]
      %v3463 = vld [vmem:[#allocation3 + $0x35] sm:$0xff]
      %v3464 = vld [vmem:[#allocation3 + $0x3d] sm:$0xff]
      %v3465 = vld [vmem:[#allocation3 + $0x4d] sm:$0xff]
      %v3466 = vld [vmem:[#allocation3 + $0x55] sm:$0xff]
      %v3467 = vld [vmem:[#allocation3 + $0x65] sm:$0xff]
      %v3468 = vld [vmem:[#allocation3 + $0x6d] sm:$0xff]
      %v3469 = vld [vmem:[#allocation3 + $0x7d] sm:$0xff]
      %v3470 = vld [vmem:[#allocation3 + $0x85] sm:$0xff]
      %v3471 = vld [vmem:[#allocation3 + $0x95] sm:$0xff]
      %v3472 = vld [vmem:[#allocation3 + $0x9d] sm:$0xff]
      %v3473 = vld [vmem:[#allocation3 + $0xad] sm:$0xff]
      %v3474 = vld [vmem:[#allocation3 + $0xb5] sm:$0xff]
      %v3475 = vld [vmem:[#allocation3 + $0xc5] sm:$0xff]
      %v3476 = vld [vmem:[#allocation3 + $0xcd] sm:$0xff]
      %v3477 = vld [vmem:[#allocation3 + $0xdd] sm:$0xff]
      %v3478 = vld [vmem:[#allocation3 + $0xe5] sm:$0xff]
      %v3479 = vld [vmem:[#allocation3 + $0xf5] sm:$0xff]
      %v3480 = vld [vmem:[#allocation3 + $0xfd] sm:$0xff]
      %v3481 = vld [vmem:[#allocation3 + $0x10d] sm:$0xff]
      %v3482 = vld [vmem:[#allocation3 + $0x115] sm:$0xff]
      %v3483 = vld [vmem:[#allocation3 + $0x125] sm:$0xff]
      %v3484 = vld [vmem:[#allocation3 + $0x12d] sm:$0xff]
      %v3485 = vld [vmem:[#allocation3 + $0x13d] sm:$0xff]
      %v3486 = vld [vmem:[#allocation3 + $0x145] sm:$0xff]
      %v3487 = vld [vmem:[#allocation3 + $0x155] sm:$0xff]
      %v3488 = vld [vmem:[#allocation3 + $0x15d] sm:$0xff]
      %v3489 = vld [vmem:[#allocation3 + $0x16d] sm:$0xff]
      %v3490 = vld [vmem:[#allocation3 + $0x175] sm:$0xff]
      %v3491 = vld [vmem:[#allocation3 + $0x6] sm:$0xff]
      %v3492 = vld [vmem:[#allocation3 + $0xe] sm:$0xff]
      %v3493 = vld [vmem:[#allocation3 + $0x1e] sm:$0xff]
      %v3494 = vld [vmem:[#allocation3 + $0x26] sm:$0xff]
      %v3495 = vld [vmem:[#allocation3 + $0x36] sm:$0xff]
      %v3496 = vld [vmem:[#allocation3 + $0x3e] sm:$0xff]
      %v3497 = vld [vmem:[#allocation3 + $0x4e] sm:$0xff]
      %v3498 = vld [vmem:[#allocation3 + $0x56] sm:$0xff]
      %v3499 = vld [vmem:[#allocation3 + $0x66] sm:$0xff]
      %v3500 = vld [vmem:[#allocation3 + $0x6e] sm:$0xff]
      %v3501 = vld [vmem:[#allocation3 + $0x7e] sm:$0xff]
      %v3502 = vld [vmem:[#allocation3 + $0x86] sm:$0xff]
      %v3503 = vld [vmem:[#allocation3 + $0x96] sm:$0xff]
      %v3504 = vld [vmem:[#allocation3 + $0x9e] sm:$0xff]
      %v3505 = vld [vmem:[#allocation3 + $0xae] sm:$0xff]
      %v3506 = vld [vmem:[#allocation3 + $0xb6] sm:$0xff]
      %v3507 = vld [vmem:[#allocation3 + $0xc6] sm:$0xff]
      %v3508 = vld [vmem:[#allocation3 + $0xce] sm:$0xff]
      %v3509 = vld [vmem:[#allocation3 + $0xde] sm:$0xff]
      %v3510 = vld [vmem:[#allocation3 + $0xe6] sm:$0xff]
      %v3511 = vld [vmem:[#allocation3 + $0xf6] sm:$0xff]
      %v3512 = vld [vmem:[#allocation3 + $0xfe] sm:$0xff]
      %v3513 = vld [vmem:[#allocation3 + $0x10e] sm:$0xff]
      %v3514 = vld [vmem:[#allocation3 + $0x116] sm:$0xff]
      %v3515 = vld [vmem:[#allocation3 + $0x126] sm:$0xff]
      %v3516 = vld [vmem:[#allocation3 + $0x12e] sm:$0xff]
      %v3517 = vld [vmem:[#allocation3 + $0x13e] sm:$0xff]
      %v3518 = vld [vmem:[#allocation3 + $0x146] sm:$0xff]
      %v3519 = vld [vmem:[#allocation3 + $0x156] sm:$0xff]
      %v3520 = vld [vmem:[#allocation3 + $0x15e] sm:$0xff]
      %v3521 = vld [vmem:[#allocation3 + $0x16e] sm:$0xff]
      %v3522 = vld [vmem:[#allocation3 + $0x176] sm:$0xff]
      %s3523 = scalar_lea.vmem [#allocation3], 24
      %v3524 = vld [vmem:[%s3523] sm:$0xff]
      %v3525 = vld [vmem:[%s3523 + $0x8] sm:$0xff]
      %v3526 = vld [vmem:[%s3523 + $0x18] sm:$0xff]
      %v3527 = vld [vmem:[%s3523 + $0x20] sm:$0xff]
      %v3528 = vld [vmem:[%s3523 + $0x30] sm:$0xff]
      %v3529 = vld [vmem:[%s3523 + $0x38] sm:$0xff]
      %v3530 = vld [vmem:[%s3523 + $0x48] sm:$0xff]
      %v3531 = vld [vmem:[%s3523 + $0x50] sm:$0xff]
      %v3532 = vld [vmem:[%s3523 + $0x60] sm:$0xff]
      %v3533 = vld [vmem:[%s3523 + $0x68] sm:$0xff]
      %v3534 = vld [vmem:[%s3523 + $0x78] sm:$0xff]
      %v3535 = vld [vmem:[%s3523 + $0x80] sm:$0xff]
      %v3536 = vld [vmem:[%s3523 + $0x90] sm:$0xff]
      %v3537 = vld [vmem:[%s3523 + $0x98] sm:$0xff]
      %v3538 = vld [vmem:[%s3523 + $0xa8] sm:$0xff]
      %v3539 = vld [vmem:[%s3523 + $0xb0] sm:$0xff]
      %v3540 = vld [vmem:[%s3523 + $0xc0] sm:$0xff]
      %v3541 = vld [vmem:[%s3523 + $0xc8] sm:$0xff]
      %v3542 = vld [vmem:[%s3523 + $0xd8] sm:$0xff]
      %v3543 = vld [vmem:[%s3523 + $0xe0] sm:$0xff]
      %v3544 = vld [vmem:[%s3523 + $0xf0] sm:$0xff]
      %v3545 = vld [vmem:[%s3523 + $0xf8] sm:$0xff]
      %v3546 = vld [vmem:[%s3523 + $0x108] sm:$0xff]
      %v3547 = vld [vmem:[%s3523 + $0x110] sm:$0xff]
      %v3548 = vld [vmem:[%s3523 + $0x120] sm:$0xff]
      %v3549 = vld [vmem:[%s3523 + $0x128] sm:$0xff]
      %v3550 = vld [vmem:[%s3523 + $0x138] sm:$0xff]
      %v3551 = vld [vmem:[%s3523 + $0x140] sm:$0xff]
      %v3552 = vld [vmem:[%s3523 + $0x150] sm:$0xff]
      %v3553 = vld [vmem:[%s3523 + $0x158] sm:$0xff]
      %v3554 = vld [vmem:[%s3523 + $0x168] sm:$0xff]
      %v3555 = vld [vmem:[%s3523 + $0x170] sm:$0xff]
      %v3556 = vld [vmem:[%s3523 + $0x1] sm:$0xff]
      %v3557 = vld [vmem:[%s3523 + $0x9] sm:$0xff]
      %v3558 = vld [vmem:[%s3523 + $0x19] sm:$0xff]
      %v3559 = vld [vmem:[%s3523 + $0x21] sm:$0xff]
      %v3560 = vld [vmem:[%s3523 + $0x31] sm:$0xff]
      %v3561 = vld [vmem:[%s3523 + $0x39] sm:$0xff]
      %v3562 = vld [vmem:[%s3523 + $0x49] sm:$0xff]
      %v3563 = vld [vmem:[%s3523 + $0x51] sm:$0xff]
      %v3564 = vld [vmem:[%s3523 + $0x61] sm:$0xff]
      %v3565 = vld [vmem:[%s3523 + $0x69] sm:$0xff]
      %v3566 = vld [vmem:[%s3523 + $0x79] sm:$0xff]
      %v3567 = vld [vmem:[%s3523 + $0x81] sm:$0xff]
      %v3568 = vld [vmem:[%s3523 + $0x91] sm:$0xff]
      %v3569 = vld [vmem:[%s3523 + $0x99] sm:$0xff]
      %v3570 = vld [vmem:[%s3523 + $0xa9] sm:$0xff]
      %v3571 = vld [vmem:[%s3523 + $0xb1] sm:$0xff]
      %v3572 = vld [vmem:[%s3523 + $0xc1] sm:$0xff]
      %v3573 = vld [vmem:[%s3523 + $0xc9] sm:$0xff]
      %v3574 = vld [vmem:[%s3523 + $0xd9] sm:$0xff]
      %v3575 = vld [vmem:[%s3523 + $0xe1] sm:$0xff]
      %v3576 = vld [vmem:[%s3523 + $0xf1] sm:$0xff]
      %v3577 = vld [vmem:[%s3523 + $0xf9] sm:$0xff]
      %v3578 = vld [vmem:[%s3523 + $0x109] sm:$0xff]
      %v3579 = vld [vmem:[%s3523 + $0x111] sm:$0xff]
      %v3580 = vld [vmem:[%s3523 + $0x121] sm:$0xff]
      %v3581 = vld [vmem:[%s3523 + $0x129] sm:$0xff]
      %v3582 = vld [vmem:[%s3523 + $0x139] sm:$0xff]
      %v3583 = vld [vmem:[%s3523 + $0x141] sm:$0xff]
      %v3584 = vld [vmem:[%s3523 + $0x151] sm:$0xff]
      %v3585 = vld [vmem:[%s3523 + $0x159] sm:$0xff]
      %v3586 = vld [vmem:[%s3523 + $0x169] sm:$0xff]
      %v3587 = vld [vmem:[%s3523 + $0x171] sm:$0xff]
      %v3588 = vld [vmem:[%s3523 + $0x2] sm:$0xff]
      %v3589 = vld [vmem:[%s3523 + $0xa] sm:$0xff]
      %v3590 = vld [vmem:[%s3523 + $0x1a] sm:$0xff]
      %v3591 = vld [vmem:[%s3523 + $0x22] sm:$0xff]
      %v3592 = vld [vmem:[%s3523 + $0x32] sm:$0xff]
      %v3593 = vld [vmem:[%s3523 + $0x3a] sm:$0xff]
      %v3594 = vld [vmem:[%s3523 + $0x4a] sm:$0xff]
      %v3595 = vld [vmem:[%s3523 + $0x52] sm:$0xff]
      %v3596 = vld [vmem:[%s3523 + $0x62] sm:$0xff]
      %v3597 = vld [vmem:[%s3523 + $0x6a] sm:$0xff]
      %v3598 = vld [vmem:[%s3523 + $0x7a] sm:$0xff]
      %v3599 = vld [vmem:[%s3523 + $0x82] sm:$0xff]
      %v3600 = vld [vmem:[%s3523 + $0x92] sm:$0xff]
      %v3601 = vld [vmem:[%s3523 + $0x9a] sm:$0xff]
      %v3602 = vld [vmem:[%s3523 + $0xaa] sm:$0xff]
      %v3603 = vld [vmem:[%s3523 + $0xb2] sm:$0xff]
      %v3604 = vld [vmem:[%s3523 + $0xc2] sm:$0xff]
      %v3605 = vld [vmem:[%s3523 + $0xca] sm:$0xff]
      %v3606 = vld [vmem:[%s3523 + $0xda] sm:$0xff]
      %v3607 = vld [vmem:[%s3523 + $0xe2] sm:$0xff]
      %v3608 = vld [vmem:[%s3523 + $0xf2] sm:$0xff]
      %v3609 = vld [vmem:[%s3523 + $0xfa] sm:$0xff]
      %v3610 = vld [vmem:[%s3523 + $0x10a] sm:$0xff]
      %v3611 = vld [vmem:[%s3523 + $0x112] sm:$0xff]
      %v3612 = vld [vmem:[%s3523 + $0x122] sm:$0xff]
      %v3613 = vld [vmem:[%s3523 + $0x12a] sm:$0xff]
      %v3614 = vld [vmem:[%s3523 + $0x13a] sm:$0xff]
      %v3615 = vld [vmem:[%s3523 + $0x142] sm:$0xff]
      %v3616 = vld [vmem:[%s3523 + $0x152] sm:$0xff]
      %v3617 = vld [vmem:[%s3523 + $0x15a] sm:$0xff]
      %v3618 = vld [vmem:[%s3523 + $0x16a] sm:$0xff]
      %v3619 = vld [vmem:[%s3523 + $0x172] sm:$0xff]
      %v3620 = vld [vmem:[%s3523 + $0x3] sm:$0xff]
      %v3621 = vld [vmem:[%s3523 + $0xb] sm:$0xff]
      %v3622 = vld [vmem:[%s3523 + $0x1b] sm:$0xff]
      %v3623 = vld [vmem:[%s3523 + $0x23] sm:$0xff]
      %v3624 = vld [vmem:[%s3523 + $0x33] sm:$0xff]
      %v3625 = vld [vmem:[%s3523 + $0x3b] sm:$0xff]
      %v3626 = vld [vmem:[%s3523 + $0x4b] sm:$0xff]
      %v3627 = vld [vmem:[%s3523 + $0x53] sm:$0xff]
      %v3628 = vld [vmem:[%s3523 + $0x63] sm:$0xff]
      %v3629 = vld [vmem:[%s3523 + $0x6b] sm:$0xff]
      %v3630 = vld [vmem:[%s3523 + $0x7b] sm:$0xff]
      %v3631 = vld [vmem:[%s3523 + $0x83] sm:$0xff]
      %v3632 = vld [vmem:[%s3523 + $0x93] sm:$0xff]
      %v3633 = vld [vmem:[%s3523 + $0x9b] sm:$0xff]
      %v3634 = vld [vmem:[%s3523 + $0xab] sm:$0xff]
      %v3635 = vld [vmem:[%s3523 + $0xb3] sm:$0xff]
      %v3636 = vld [vmem:[%s3523 + $0xc3] sm:$0xff]
      %v3637 = vld [vmem:[%s3523 + $0xcb] sm:$0xff]
      %v3638 = vld [vmem:[%s3523 + $0xdb] sm:$0xff]
      %v3639 = vld [vmem:[%s3523 + $0xe3] sm:$0xff]
      %v3640 = vld [vmem:[%s3523 + $0xf3] sm:$0xff]
      %v3641 = vld [vmem:[%s3523 + $0xfb] sm:$0xff]
      %v3642 = vld [vmem:[%s3523 + $0x10b] sm:$0xff]
      %v3643 = vld [vmem:[%s3523 + $0x113] sm:$0xff]
      %v3644 = vld [vmem:[%s3523 + $0x123] sm:$0xff]
      %v3645 = vld [vmem:[%s3523 + $0x12b] sm:$0xff]
      %v3646 = vld [vmem:[%s3523 + $0x13b] sm:$0xff]
      %v3647 = vld [vmem:[%s3523 + $0x143] sm:$0xff]
      %v3648 = vld [vmem:[%s3523 + $0x153] sm:$0xff]
      %v3649 = vld [vmem:[%s3523 + $0x15b] sm:$0xff]
      %v3650 = vld [vmem:[%s3523 + $0x16b] sm:$0xff]
      %v3651 = vld [vmem:[%s3523 + $0x173] sm:$0xff]
      %v3652 = vld [vmem:[%s3523 + $0x4] sm:$0xff]
      %v3653 = vld [vmem:[%s3523 + $0xc] sm:$0xff]
      %v3654 = vld [vmem:[%s3523 + $0x1c] sm:$0xff]
      %v3655 = vld [vmem:[%s3523 + $0x24] sm:$0xff]
      %v3656 = vld [vmem:[%s3523 + $0x34] sm:$0xff]
      %v3657 = vld [vmem:[%s3523 + $0x3c] sm:$0xff]
      %v3658 = vld [vmem:[%s3523 + $0x4c] sm:$0xff]
      %v3659 = vld [vmem:[%s3523 + $0x54] sm:$0xff]
      %v3660 = vld [vmem:[%s3523 + $0x64] sm:$0xff]
      %v3661 = vld [vmem:[%s3523 + $0x6c] sm:$0xff]
      %v3662 = vld [vmem:[%s3523 + $0x7c] sm:$0xff]
      %v3663 = vld [vmem:[%s3523 + $0x84] sm:$0xff]
      %v3664 = vld [vmem:[%s3523 + $0x94] sm:$0xff]
      %v3665 = vld [vmem:[%s3523 + $0x9c] sm:$0xff]
      %v3666 = vld [vmem:[%s3523 + $0xac] sm:$0xff]
      %v3667 = vld [vmem:[%s3523 + $0xb4] sm:$0xff]
      %v3668 = vld [vmem:[%s3523 + $0xc4] sm:$0xff]
      %v3669 = vld [vmem:[%s3523 + $0xcc] sm:$0xff]
      %v3670 = vld [vmem:[%s3523 + $0xdc] sm:$0xff]
      %v3671 = vld [vmem:[%s3523 + $0xe4] sm:$0xff]
      %v3672 = vld [vmem:[%s3523 + $0xf4] sm:$0xff]
      %v3673 = vld [vmem:[%s3523 + $0xfc] sm:$0xff]
      %v3674 = vld [vmem:[%s3523 + $0x10c] sm:$0xff]
      %v3675 = vld [vmem:[%s3523 + $0x114] sm:$0xff]
      %v3676 = vld [vmem:[%s3523 + $0x124] sm:$0xff]
      %v3677 = vld [vmem:[%s3523 + $0x12c] sm:$0xff]
      %v3678 = vld [vmem:[%s3523 + $0x13c] sm:$0xff]
      %v3679 = vld [vmem:[%s3523 + $0x144] sm:$0xff]
      %v3680 = vld [vmem:[%s3523 + $0x154] sm:$0xff]
      %v3681 = vld [vmem:[%s3523 + $0x15c] sm:$0xff]
      %v3682 = vld [vmem:[%s3523 + $0x16c] sm:$0xff]
      %v3683 = vld [vmem:[%s3523 + $0x174] sm:$0xff]
      %v3684 = vld [vmem:[%s3523 + $0x5] sm:$0xff]
      %v3685 = vld [vmem:[%s3523 + $0xd] sm:$0xff]
      %v3686 = vld [vmem:[%s3523 + $0x1d] sm:$0xff]
      %v3687 = vld [vmem:[%s3523 + $0x25] sm:$0xff]
      %v3688 = vld [vmem:[%s3523 + $0x35] sm:$0xff]
      %v3689 = vld [vmem:[%s3523 + $0x3d] sm:$0xff]
      %v3690 = vld [vmem:[%s3523 + $0x4d] sm:$0xff]
      %v3691 = vld [vmem:[%s3523 + $0x55] sm:$0xff]
      %v3692 = vld [vmem:[%s3523 + $0x65] sm:$0xff]
      %v3693 = vld [vmem:[%s3523 + $0x6d] sm:$0xff]
      %v3694 = vld [vmem:[%s3523 + $0x7d] sm:$0xff]
      %v3695 = vld [vmem:[%s3523 + $0x85] sm:$0xff]
      %v3696 = vld [vmem:[%s3523 + $0x95] sm:$0xff]
      %v3697 = vld [vmem:[%s3523 + $0x9d] sm:$0xff]
      %v3698 = vld [vmem:[%s3523 + $0xad] sm:$0xff]
      %v3699 = vld [vmem:[%s3523 + $0xb5] sm:$0xff]
      %v3700 = vld [vmem:[%s3523 + $0xc5] sm:$0xff]
      %v3701 = vld [vmem:[%s3523 + $0xcd] sm:$0xff]
      %v3702 = vld [vmem:[%s3523 + $0xdd] sm:$0xff]
      %v3703 = vld [vmem:[%s3523 + $0xe5] sm:$0xff]
      %v3704 = vld [vmem:[%s3523 + $0xf5] sm:$0xff]
      %v3705 = vld [vmem:[%s3523 + $0xfd] sm:$0xff]
      %v3706 = vld [vmem:[%s3523 + $0x10d] sm:$0xff]
      %v3707 = vld [vmem:[%s3523 + $0x115] sm:$0xff]
      %v3708 = vld [vmem:[%s3523 + $0x125] sm:$0xff]
      %v3709 = vld [vmem:[%s3523 + $0x12d] sm:$0xff]
      %v3710 = vld [vmem:[%s3523 + $0x13d] sm:$0xff]
      %v3711 = vld [vmem:[%s3523 + $0x145] sm:$0xff]
      %v3712 = vld [vmem:[%s3523 + $0x155] sm:$0xff]
      %v3713 = vld [vmem:[%s3523 + $0x15d] sm:$0xff]
      %v3714 = vld [vmem:[%s3523 + $0x16d] sm:$0xff]
      %v3715 = vld [vmem:[%s3523 + $0x175] sm:$0xff]
      %v3716 = vld [vmem:[%s3523 + $0x6] sm:$0xff]
      %v3717 = vld [vmem:[%s3523 + $0xe] sm:$0xff]
      %v3718 = vld [vmem:[%s3523 + $0x1e] sm:$0xff]
      %v3719 = vld [vmem:[%s3523 + $0x26] sm:$0xff]
      %v3720 = vld [vmem:[%s3523 + $0x36] sm:$0xff]
      %v3721 = vld [vmem:[%s3523 + $0x3e] sm:$0xff]
      %v3722 = vld [vmem:[%s3523 + $0x4e] sm:$0xff]
      %v3723 = vld [vmem:[%s3523 + $0x56] sm:$0xff]
      %v3724 = vld [vmem:[%s3523 + $0x66] sm:$0xff]
      %v3725 = vld [vmem:[%s3523 + $0x6e] sm:$0xff]
      %v3726 = vld [vmem:[%s3523 + $0x7e] sm:$0xff]
      %v3727 = vld [vmem:[%s3523 + $0x86] sm:$0xff]
      %v3728 = vld [vmem:[%s3523 + $0x96] sm:$0xff]
      %v3729 = vld [vmem:[%s3523 + $0x9e] sm:$0xff]
      %v3730 = vld [vmem:[%s3523 + $0xae] sm:$0xff]
      %v3731 = vld [vmem:[%s3523 + $0xb6] sm:$0xff]
      %v3732 = vld [vmem:[%s3523 + $0xc6] sm:$0xff]
      %v3733 = vld [vmem:[%s3523 + $0xce] sm:$0xff]
      %v3734 = vld [vmem:[%s3523 + $0xde] sm:$0xff]
      %v3735 = vld [vmem:[%s3523 + $0xe6] sm:$0xff]
      %v3736 = vld [vmem:[%s3523 + $0xf6] sm:$0xff]
      %v3737 = vld [vmem:[%s3523 + $0xfe] sm:$0xff]
      %v3738 = vld [vmem:[%s3523 + $0x10e] sm:$0xff]
      %v3739 = vld [vmem:[%s3523 + $0x116] sm:$0xff]
      %v3740 = vld [vmem:[%s3523 + $0x126] sm:$0xff]
      %v3741 = vld [vmem:[%s3523 + $0x12e] sm:$0xff]
      %v3742 = vld [vmem:[%s3523 + $0x13e] sm:$0xff]
      %v3743 = vld [vmem:[%s3523 + $0x146] sm:$0xff]
      %v3744 = vld [vmem:[%s3523 + $0x156] sm:$0xff]
      %v3745 = vld [vmem:[%s3523 + $0x15e] sm:$0xff]
      %v3746 = vld [vmem:[%s3523 + $0x16e] sm:$0xff]
      %v3747 = vld [vmem:[%s3523 + $0x176] sm:$0xff]
      %s3748 = scalar_lea.vmem [#allocation3], 48
      %v3749 = vld [vmem:[%s3748] sm:$0xff]
      %v3750 = vld [vmem:[%s3748 + $0x8] sm:$0xff]
      %v3751 = vld [vmem:[%s3748 + $0x18] sm:$0xff]
      %v3752 = vld [vmem:[%s3748 + $0x20] sm:$0xff]
      %v3753 = vld [vmem:[%s3748 + $0x30] sm:$0xff]
      %v3754 = vld [vmem:[%s3748 + $0x38] sm:$0xff]
      %v3755 = vld [vmem:[%s3748 + $0x48] sm:$0xff]
      %v3756 = vld [vmem:[%s3748 + $0x50] sm:$0xff]
      %v3757 = vld [vmem:[%s3748 + $0x60] sm:$0xff]
      %v3758 = vld [vmem:[%s3748 + $0x68] sm:$0xff]
      %v3759 = vld [vmem:[%s3748 + $0x78] sm:$0xff]
      %v3760 = vld [vmem:[%s3748 + $0x80] sm:$0xff]
      %v3761 = vld [vmem:[%s3748 + $0x90] sm:$0xff]
      %v3762 = vld [vmem:[%s3748 + $0x98] sm:$0xff]
      %v3763 = vld [vmem:[%s3748 + $0xa8] sm:$0xff]
      %v3764 = vld [vmem:[%s3748 + $0xb0] sm:$0xff]
      %v3765 = vld [vmem:[%s3748 + $0xc0] sm:$0xff]
      %v3766 = vld [vmem:[%s3748 + $0xc8] sm:$0xff]
      %v3767 = vld [vmem:[%s3748 + $0xd8] sm:$0xff]
      %v3768 = vld [vmem:[%s3748 + $0xe0] sm:$0xff]
      %v3769 = vld [vmem:[%s3748 + $0xf0] sm:$0xff]
      %v3770 = vld [vmem:[%s3748 + $0xf8] sm:$0xff]
      %v3771 = vld [vmem:[%s3748 + $0x108] sm:$0xff]
      %v3772 = vld [vmem:[%s3748 + $0x110] sm:$0xff]
      %v3773 = vld [vmem:[%s3748 + $0x120] sm:$0xff]
      %v3774 = vld [vmem:[%s3748 + $0x128] sm:$0xff]
      %v3775 = vld [vmem:[%s3748 + $0x138] sm:$0xff]
      %v3776 = vld [vmem:[%s3748 + $0x140] sm:$0xff]
      %v3777 = vld [vmem:[%s3748 + $0x150] sm:$0xff]
      %v3778 = vld [vmem:[%s3748 + $0x158] sm:$0xff]
      %v3779 = vld [vmem:[%s3748 + $0x168] sm:$0xff]
      %v3780 = vld [vmem:[%s3748 + $0x170] sm:$0xff]
      %v3781 = vld [vmem:[%s3748 + $0x1] sm:$0xff]
      %v3782 = vld [vmem:[%s3748 + $0x9] sm:$0xff]
      %v3783 = vld [vmem:[%s3748 + $0x19] sm:$0xff]
      %v3784 = vld [vmem:[%s3748 + $0x21] sm:$0xff]
      %v3785 = vld [vmem:[%s3748 + $0x31] sm:$0xff]
      %v3786 = vld [vmem:[%s3748 + $0x39] sm:$0xff]
      %v3787 = vld [vmem:[%s3748 + $0x49] sm:$0xff]
      %v3788 = vld [vmem:[%s3748 + $0x51] sm:$0xff]
      %v3789 = vld [vmem:[%s3748 + $0x61] sm:$0xff]
      %v3790 = vld [vmem:[%s3748 + $0x69] sm:$0xff]
      %v3791 = vld [vmem:[%s3748 + $0x79] sm:$0xff]
      %v3792 = vld [vmem:[%s3748 + $0x81] sm:$0xff]
      %v3793 = vld [vmem:[%s3748 + $0x91] sm:$0xff]
      %v3794 = vld [vmem:[%s3748 + $0x99] sm:$0xff]
      %v3795 = vld [vmem:[%s3748 + $0xa9] sm:$0xff]
      %v3796 = vld [vmem:[%s3748 + $0xb1] sm:$0xff]
      %v3797 = vld [vmem:[%s3748 + $0xc1] sm:$0xff]
      %v3798 = vld [vmem:[%s3748 + $0xc9] sm:$0xff]
      %v3799 = vld [vmem:[%s3748 + $0xd9] sm:$0xff]
      %v3800 = vld [vmem:[%s3748 + $0xe1] sm:$0xff]
      %v3801 = vld [vmem:[%s3748 + $0xf1] sm:$0xff]
      %v3802 = vld [vmem:[%s3748 + $0xf9] sm:$0xff]
      %v3803 = vld [vmem:[%s3748 + $0x109] sm:$0xff]
      %v3804 = vld [vmem:[%s3748 + $0x111] sm:$0xff]
      %v3805 = vld [vmem:[%s3748 + $0x121] sm:$0xff]
      %v3806 = vld [vmem:[%s3748 + $0x129] sm:$0xff]
      %v3807 = vld [vmem:[%s3748 + $0x139] sm:$0xff]
      %v3808 = vld [vmem:[%s3748 + $0x141] sm:$0xff]
      %v3809 = vld [vmem:[%s3748 + $0x151] sm:$0xff]
      %v3810 = vld [vmem:[%s3748 + $0x159] sm:$0xff]
      %v3811 = vld [vmem:[%s3748 + $0x169] sm:$0xff]
      %v3812 = vld [vmem:[%s3748 + $0x171] sm:$0xff]
      %v3813 = vld [vmem:[%s3748 + $0x2] sm:$0xff]
      %v3814 = vld [vmem:[%s3748 + $0xa] sm:$0xff]
      %v3815 = vld [vmem:[%s3748 + $0x1a] sm:$0xff]
      %v3816 = vld [vmem:[%s3748 + $0x22] sm:$0xff]
      %v3817 = vld [vmem:[%s3748 + $0x32] sm:$0xff]
      %v3818 = vld [vmem:[%s3748 + $0x3a] sm:$0xff]
      %v3819 = vld [vmem:[%s3748 + $0x4a] sm:$0xff]
      %v3820 = vld [vmem:[%s3748 + $0x52] sm:$0xff]
      %v3821 = vld [vmem:[%s3748 + $0x62] sm:$0xff]
      %v3822 = vld [vmem:[%s3748 + $0x6a] sm:$0xff]
      %v3823 = vld [vmem:[%s3748 + $0x7a] sm:$0xff]
      %v3824 = vld [vmem:[%s3748 + $0x82] sm:$0xff]
      %v3825 = vld [vmem:[%s3748 + $0x92] sm:$0xff]
      %v3826 = vld [vmem:[%s3748 + $0x9a] sm:$0xff]
      %v3827 = vld [vmem:[%s3748 + $0xaa] sm:$0xff]
      %v3828 = vld [vmem:[%s3748 + $0xb2] sm:$0xff]
      %v3829 = vld [vmem:[%s3748 + $0xc2] sm:$0xff]
      %v3830 = vld [vmem:[%s3748 + $0xca] sm:$0xff]
      %v3831 = vld [vmem:[%s3748 + $0xda] sm:$0xff]
      %v3832 = vld [vmem:[%s3748 + $0xe2] sm:$0xff]
      %v3833 = vld [vmem:[%s3748 + $0xf2] sm:$0xff]
      %v3834 = vld [vmem:[%s3748 + $0xfa] sm:$0xff]
      %v3835 = vld [vmem:[%s3748 + $0x10a] sm:$0xff]
      %v3836 = vld [vmem:[%s3748 + $0x112] sm:$0xff]
      %v3837 = vld [vmem:[%s3748 + $0x122] sm:$0xff]
      %v3838 = vld [vmem:[%s3748 + $0x12a] sm:$0xff]
      %v3839 = vld [vmem:[%s3748 + $0x13a] sm:$0xff]
      %v3840 = vld [vmem:[%s3748 + $0x142] sm:$0xff]
      %v3841 = vld [vmem:[%s3748 + $0x152] sm:$0xff]
      %v3842 = vld [vmem:[%s3748 + $0x15a] sm:$0xff]
      %v3843 = vld [vmem:[%s3748 + $0x16a] sm:$0xff]
      %v3844 = vld [vmem:[%s3748 + $0x172] sm:$0xff]
      %v3845 = vld [vmem:[%s3748 + $0x3] sm:$0xff]
      %v3846 = vld [vmem:[%s3748 + $0xb] sm:$0xff]
      %v3847 = vld [vmem:[%s3748 + $0x1b] sm:$0xff]
      %v3848 = vld [vmem:[%s3748 + $0x23] sm:$0xff]
      %v3849 = vld [vmem:[%s3748 + $0x33] sm:$0xff]
      %v3850 = vld [vmem:[%s3748 + $0x3b] sm:$0xff]
      %v3851 = vld [vmem:[%s3748 + $0x4b] sm:$0xff]
      %v3852 = vld [vmem:[%s3748 + $0x53] sm:$0xff]
      %v3853 = vld [vmem:[%s3748 + $0x63] sm:$0xff]
      %v3854 = vld [vmem:[%s3748 + $0x6b] sm:$0xff]
      %v3855 = vld [vmem:[%s3748 + $0x7b] sm:$0xff]
      %v3856 = vld [vmem:[%s3748 + $0x83] sm:$0xff]
      %v3857 = vld [vmem:[%s3748 + $0x93] sm:$0xff]
      %v3858 = vld [vmem:[%s3748 + $0x9b] sm:$0xff]
      %v3859 = vld [vmem:[%s3748 + $0xab] sm:$0xff]
      %v3860 = vld [vmem:[%s3748 + $0xb3] sm:$0xff]
      %v3861 = vld [vmem:[%s3748 + $0xc3] sm:$0xff]
      %v3862 = vld [vmem:[%s3748 + $0xcb] sm:$0xff]
      %v3863 = vld [vmem:[%s3748 + $0xdb] sm:$0xff]
      %v3864 = vld [vmem:[%s3748 + $0xe3] sm:$0xff]
      %v3865 = vld [vmem:[%s3748 + $0xf3] sm:$0xff]
      %v3866 = vld [vmem:[%s3748 + $0xfb] sm:$0xff]
      %v3867 = vld [vmem:[%s3748 + $0x10b] sm:$0xff]
      %v3868 = vld [vmem:[%s3748 + $0x113] sm:$0xff]
      %v3869 = vld [vmem:[%s3748 + $0x123] sm:$0xff]
      %v3870 = vld [vmem:[%s3748 + $0x12b] sm:$0xff]
      %v3871 = vld [vmem:[%s3748 + $0x13b] sm:$0xff]
      %v3872 = vld [vmem:[%s3748 + $0x143] sm:$0xff]
      %v3873 = vld [vmem:[%s3748 + $0x153] sm:$0xff]
      %v3874 = vld [vmem:[%s3748 + $0x15b] sm:$0xff]
      %v3875 = vld [vmem:[%s3748 + $0x16b] sm:$0xff]
      %v3876 = vld [vmem:[%s3748 + $0x173] sm:$0xff]
      %v3877 = vld [vmem:[%s3748 + $0x4] sm:$0xff]
      %v3878 = vld [vmem:[%s3748 + $0xc] sm:$0xff]
      %v3879 = vld [vmem:[%s3748 + $0x1c] sm:$0xff]
      %v3880 = vld [vmem:[%s3748 + $0x24] sm:$0xff]
      %v3881 = vld [vmem:[%s3748 + $0x34] sm:$0xff]
      %v3882 = vld [vmem:[%s3748 + $0x3c] sm:$0xff]
      %v3883 = vld [vmem:[%s3748 + $0x4c] sm:$0xff]
      %v3884 = vld [vmem:[%s3748 + $0x54] sm:$0xff]
      %v3885 = vld [vmem:[%s3748 + $0x64] sm:$0xff]
      %v3886 = vld [vmem:[%s3748 + $0x6c] sm:$0xff]
      %v3887 = vld [vmem:[%s3748 + $0x7c] sm:$0xff]
      %v3888 = vld [vmem:[%s3748 + $0x84] sm:$0xff]
      %v3889 = vld [vmem:[%s3748 + $0x94] sm:$0xff]
      %v3890 = vld [vmem:[%s3748 + $0x9c] sm:$0xff]
      %v3891 = vld [vmem:[%s3748 + $0xac] sm:$0xff]
      %v3892 = vld [vmem:[%s3748 + $0xb4] sm:$0xff]
      %v3893 = vld [vmem:[%s3748 + $0xc4] sm:$0xff]
      %v3894 = vld [vmem:[%s3748 + $0xcc] sm:$0xff]
      %v3895 = vld [vmem:[%s3748 + $0xdc] sm:$0xff]
      %v3896 = vld [vmem:[%s3748 + $0xe4] sm:$0xff]
      %v3897 = vld [vmem:[%s3748 + $0xf4] sm:$0xff]
      %v3898 = vld [vmem:[%s3748 + $0xfc] sm:$0xff]
      %v3899 = vld [vmem:[%s3748 + $0x10c] sm:$0xff]
      %v3900 = vld [vmem:[%s3748 + $0x114] sm:$0xff]
      %v3901 = vld [vmem:[%s3748 + $0x124] sm:$0xff]
      %v3902 = vld [vmem:[%s3748 + $0x12c] sm:$0xff]
      %v3903 = vld [vmem:[%s3748 + $0x13c] sm:$0xff]
      %v3904 = vld [vmem:[%s3748 + $0x144] sm:$0xff]
      %v3905 = vld [vmem:[%s3748 + $0x154] sm:$0xff]
      %v3906 = vld [vmem:[%s3748 + $0x15c] sm:$0xff]
      %v3907 = vld [vmem:[%s3748 + $0x16c] sm:$0xff]
      %v3908 = vld [vmem:[%s3748 + $0x174] sm:$0xff]
      %v3909 = vld [vmem:[%s3748 + $0x5] sm:$0xff]
      %v3910 = vld [vmem:[%s3748 + $0xd] sm:$0xff]
      %v3911 = vld [vmem:[%s3748 + $0x1d] sm:$0xff]
      %v3912 = vld [vmem:[%s3748 + $0x25] sm:$0xff]
      %v3913 = vld [vmem:[%s3748 + $0x35] sm:$0xff]
      %v3914 = vld [vmem:[%s3748 + $0x3d] sm:$0xff]
      %v3915 = vld [vmem:[%s3748 + $0x4d] sm:$0xff]
      %v3916 = vld [vmem:[%s3748 + $0x55] sm:$0xff]
      %v3917 = vld [vmem:[%s3748 + $0x65] sm:$0xff]
      %v3918 = vld [vmem:[%s3748 + $0x6d] sm:$0xff]
      %v3919 = vld [vmem:[%s3748 + $0x7d] sm:$0xff]
      %v3920 = vld [vmem:[%s3748 + $0x85] sm:$0xff]
      %v3921 = vld [vmem:[%s3748 + $0x95] sm:$0xff]
      %v3922 = vld [vmem:[%s3748 + $0x9d] sm:$0xff]
      %v3923 = vld [vmem:[%s3748 + $0xad] sm:$0xff]
      %v3924 = vld [vmem:[%s3748 + $0xb5] sm:$0xff]
      %v3925 = vld [vmem:[%s3748 + $0xc5] sm:$0xff]
      %v3926 = vld [vmem:[%s3748 + $0xcd] sm:$0xff]
      %v3927 = vld [vmem:[%s3748 + $0xdd] sm:$0xff]
      %v3928 = vld [vmem:[%s3748 + $0xe5] sm:$0xff]
      %v3929 = vld [vmem:[%s3748 + $0xf5] sm:$0xff]
      %v3930 = vld [vmem:[%s3748 + $0xfd] sm:$0xff]
      %v3931 = vld [vmem:[%s3748 + $0x10d] sm:$0xff]
      %v3932 = vld [vmem:[%s3748 + $0x115] sm:$0xff]
      %v3933 = vld [vmem:[%s3748 + $0x125] sm:$0xff]
      %v3934 = vld [vmem:[%s3748 + $0x12d] sm:$0xff]
      %v3935 = vld [vmem:[%s3748 + $0x13d] sm:$0xff]
      %v3936 = vld [vmem:[%s3748 + $0x145] sm:$0xff]
      %v3937 = vld [vmem:[%s3748 + $0x155] sm:$0xff]
      %v3938 = vld [vmem:[%s3748 + $0x15d] sm:$0xff]
      %v3939 = vld [vmem:[%s3748 + $0x16d] sm:$0xff]
      %v3940 = vld [vmem:[%s3748 + $0x175] sm:$0xff]
      %v3941 = vld [vmem:[%s3748 + $0x6] sm:$0xff]
      %v3942 = vld [vmem:[%s3748 + $0xe] sm:$0xff]
      %v3943 = vld [vmem:[%s3748 + $0x1e] sm:$0xff]
      %v3944 = vld [vmem:[%s3748 + $0x26] sm:$0xff]
      %v3945 = vld [vmem:[%s3748 + $0x36] sm:$0xff]
      %v3946 = vld [vmem:[%s3748 + $0x3e] sm:$0xff]
      %v3947 = vld [vmem:[%s3748 + $0x4e] sm:$0xff]
      %v3948 = vld [vmem:[%s3748 + $0x56] sm:$0xff]
      %v3949 = vld [vmem:[%s3748 + $0x66] sm:$0xff]
      %v3950 = vld [vmem:[%s3748 + $0x6e] sm:$0xff]
      %v3951 = vld [vmem:[%s3748 + $0x7e] sm:$0xff]
      %v3952 = vld [vmem:[%s3748 + $0x86] sm:$0xff]
      %v3953 = vld [vmem:[%s3748 + $0x96] sm:$0xff]
      %v3954 = vld [vmem:[%s3748 + $0x9e] sm:$0xff]
      %v3955 = vld [vmem:[%s3748 + $0xae] sm:$0xff]
      %v3956 = vld [vmem:[%s3748 + $0xb6] sm:$0xff]
      %v3957 = vld [vmem:[%s3748 + $0xc6] sm:$0xff]
      %v3958 = vld [vmem:[%s3748 + $0xce] sm:$0xff]
      %v3959 = vld [vmem:[%s3748 + $0xde] sm:$0xff]
      %v3960 = vld [vmem:[%s3748 + $0xe6] sm:$0xff]
      %v3961 = vld [vmem:[%s3748 + $0xf6] sm:$0xff]
      %v3962 = vld [vmem:[%s3748 + $0xfe] sm:$0xff]
      %v3963 = vld [vmem:[%s3748 + $0x10e] sm:$0xff]
      %v3964 = vld [vmem:[%s3748 + $0x116] sm:$0xff]
      %v3965 = vld [vmem:[%s3748 + $0x126] sm:$0xff]
      %v3966 = vld [vmem:[%s3748 + $0x12e] sm:$0xff]
      %v3967 = vld [vmem:[%s3748 + $0x13e] sm:$0xff]
      %v3968 = vld [vmem:[%s3748 + $0x146] sm:$0xff]
      %v3969 = vld [vmem:[%s3748 + $0x156] sm:$0xff]
      %v3970 = vld [vmem:[%s3748 + $0x15e] sm:$0xff]
      %v3971 = vld [vmem:[%s3748 + $0x16e] sm:$0xff]
      %v3972 = vld [vmem:[%s3748 + $0x176] sm:$0xff]
      %v3973 = vld [vmem:[%s3266] sm:$0xff]
      %v3974 = vld [vmem:[%s3266 + $0x8] sm:$0xff]
      %v3975 = vld [vmem:[%s3266 + $0x18] sm:$0xff]
      %v3976 = vld [vmem:[%s3266 + $0x20] sm:$0xff]
      %v3977 = vld [vmem:[%s3266 + $0x30] sm:$0xff]
      %v3978 = vld [vmem:[%s3266 + $0x38] sm:$0xff]
      %v3979 = vld [vmem:[%s3266 + $0x48] sm:$0xff]
      %v3980 = vld [vmem:[%s3266 + $0x50] sm:$0xff]
      %v3981 = vld [vmem:[%s3266 + $0x60] sm:$0xff]
      %v3982 = vld [vmem:[%s3266 + $0x68] sm:$0xff]
      %v3983 = vld [vmem:[%s3266 + $0x78] sm:$0xff]
      %v3984 = vld [vmem:[%s3266 + $0x80] sm:$0xff]
      %v3985 = vld [vmem:[%s3266 + $0x90] sm:$0xff]
      %v3986 = vld [vmem:[%s3266 + $0x98] sm:$0xff]
      %v3987 = vld [vmem:[%s3266 + $0xa8] sm:$0xff]
      %v3988 = vld [vmem:[%s3266 + $0xb0] sm:$0xff]
      %v3989 = vld [vmem:[%s3266 + $0xc0] sm:$0xff]
      %v3990 = vld [vmem:[%s3266 + $0xc8] sm:$0xff]
      %v3991 = vld [vmem:[%s3266 + $0xd8] sm:$0xff]
      %v3992 = vld [vmem:[%s3266 + $0xe0] sm:$0xff]
      %v3993 = vld [vmem:[%s3266 + $0xf0] sm:$0xff]
      %v3994 = vld [vmem:[%s3266 + $0xf8] sm:$0xff]
      %v3995 = vld [vmem:[%s3266 + $0x108] sm:$0xff]
      %v3996 = vld [vmem:[%s3266 + $0x110] sm:$0xff]
      %v3997 = vld [vmem:[%s3266 + $0x120] sm:$0xff]
      %v3998 = vld [vmem:[%s3266 + $0x128] sm:$0xff]
      %v3999 = vld [vmem:[%s3266 + $0x138] sm:$0xff]
      %v4000 = vld [vmem:[%s3266 + $0x140] sm:$0xff]
      %v4001 = vld [vmem:[%s3266 + $0x150] sm:$0xff]
      %v4002 = vld [vmem:[%s3266 + $0x158] sm:$0xff]
      %v4003 = vld [vmem:[%s3266 + $0x168] sm:$0xff]
      %v4004 = vld [vmem:[%s3266 + $0x170] sm:$0xff]
      %v4005 = vld [vmem:[%s3266 + $0x1] sm:$0xff]
      %v4006 = vld [vmem:[%s3266 + $0x9] sm:$0xff]
      %v4007 = vld [vmem:[%s3266 + $0x19] sm:$0xff]
      %v4008 = vld [vmem:[%s3266 + $0x21] sm:$0xff]
      %v4009 = vld [vmem:[%s3266 + $0x31] sm:$0xff]
      %v4010 = vld [vmem:[%s3266 + $0x39] sm:$0xff]
      %v4011 = vld [vmem:[%s3266 + $0x49] sm:$0xff]
      %v4012 = vld [vmem:[%s3266 + $0x51] sm:$0xff]
      %v4013 = vld [vmem:[%s3266 + $0x61] sm:$0xff]
      %v4014 = vld [vmem:[%s3266 + $0x69] sm:$0xff]
      %v4015 = vld [vmem:[%s3266 + $0x79] sm:$0xff]
      %v4016 = vld [vmem:[%s3266 + $0x81] sm:$0xff]
      %v4017 = vld [vmem:[%s3266 + $0x91] sm:$0xff]
      %v4018 = vld [vmem:[%s3266 + $0x99] sm:$0xff]
      %v4019 = vld [vmem:[%s3266 + $0xa9] sm:$0xff]
      %v4020 = vld [vmem:[%s3266 + $0xb1] sm:$0xff]
      %v4021 = vld [vmem:[%s3266 + $0xc1] sm:$0xff]
      %v4022 = vld [vmem:[%s3266 + $0xc9] sm:$0xff]
      %v4023 = vld [vmem:[%s3266 + $0xd9] sm:$0xff]
      %v4024 = vld [vmem:[%s3266 + $0xe1] sm:$0xff]
      %v4025 = vld [vmem:[%s3266 + $0xf1] sm:$0xff]
      %v4026 = vld [vmem:[%s3266 + $0xf9] sm:$0xff]
      %v4027 = vld [vmem:[%s3266 + $0x109] sm:$0xff]
      %v4028 = vld [vmem:[%s3266 + $0x111] sm:$0xff]
      %v4029 = vld [vmem:[%s3266 + $0x121] sm:$0xff]
      %v4030 = vld [vmem:[%s3266 + $0x129] sm:$0xff]
      %v4031 = vld [vmem:[%s3266 + $0x139] sm:$0xff]
      %v4032 = vld [vmem:[%s3266 + $0x141] sm:$0xff]
      %v4033 = vld [vmem:[%s3266 + $0x151] sm:$0xff]
      %v4034 = vld [vmem:[%s3266 + $0x159] sm:$0xff]
      %v4035 = vld [vmem:[%s3266 + $0x169] sm:$0xff]
      %v4036 = vld [vmem:[%s3266 + $0x171] sm:$0xff]
      %v4037 = vld [vmem:[%s3266 + $0x2] sm:$0xff]
      %v4038 = vld [vmem:[%s3266 + $0xa] sm:$0xff]
      %v4039 = vld [vmem:[%s3266 + $0x1a] sm:$0xff]
      %v4040 = vld [vmem:[%s3266 + $0x22] sm:$0xff]
      %v4041 = vld [vmem:[%s3266 + $0x32] sm:$0xff]
      %v4042 = vld [vmem:[%s3266 + $0x3a] sm:$0xff]
      %v4043 = vld [vmem:[%s3266 + $0x4a] sm:$0xff]
      %v4044 = vld [vmem:[%s3266 + $0x52] sm:$0xff]
      %v4045 = vld [vmem:[%s3266 + $0x62] sm:$0xff]
      %v4046 = vld [vmem:[%s3266 + $0x6a] sm:$0xff]
      %v4047 = vld [vmem:[%s3266 + $0x7a] sm:$0xff]
      %v4048 = vld [vmem:[%s3266 + $0x82] sm:$0xff]
      %v4049 = vld [vmem:[%s3266 + $0x92] sm:$0xff]
      %v4050 = vld [vmem:[%s3266 + $0x9a] sm:$0xff]
      %v4051 = vld [vmem:[%s3266 + $0xaa] sm:$0xff]
      %v4052 = vld [vmem:[%s3266 + $0xb2] sm:$0xff]
      %v4053 = vld [vmem:[%s3266 + $0xc2] sm:$0xff]
      %v4054 = vld [vmem:[%s3266 + $0xca] sm:$0xff]
      %v4055 = vld [vmem:[%s3266 + $0xda] sm:$0xff]
      %v4056 = vld [vmem:[%s3266 + $0xe2] sm:$0xff]
      %v4057 = vld [vmem:[%s3266 + $0xf2] sm:$0xff]
      %v4058 = vld [vmem:[%s3266 + $0xfa] sm:$0xff]
      %v4059 = vld [vmem:[%s3266 + $0x10a] sm:$0xff]
      %v4060 = vld [vmem:[%s3266 + $0x112] sm:$0xff]
      %v4061 = vld [vmem:[%s3266 + $0x122] sm:$0xff]
      %v4062 = vld [vmem:[%s3266 + $0x12a] sm:$0xff]
      %v4063 = vld [vmem:[%s3266 + $0x13a] sm:$0xff]
      %v4064 = vld [vmem:[%s3266 + $0x142] sm:$0xff]
      %v4065 = vld [vmem:[%s3266 + $0x152] sm:$0xff]
      %v4066 = vld [vmem:[%s3266 + $0x15a] sm:$0xff]
      %v4067 = vld [vmem:[%s3266 + $0x16a] sm:$0xff]
      %v4068 = vld [vmem:[%s3266 + $0x172] sm:$0xff]
      %v4069 = vld [vmem:[%s3266 + $0x3] sm:$0xff]
      %v4070 = vld [vmem:[%s3266 + $0xb] sm:$0xff]
      %v4071 = vld [vmem:[%s3266 + $0x1b] sm:$0xff]
      %v4072 = vld [vmem:[%s3266 + $0x23] sm:$0xff]
      %v4073 = vld [vmem:[%s3266 + $0x33] sm:$0xff]
      %v4074 = vld [vmem:[%s3266 + $0x3b] sm:$0xff]
      %v4075 = vld [vmem:[%s3266 + $0x4b] sm:$0xff]
      %v4076 = vld [vmem:[%s3266 + $0x53] sm:$0xff]
      %v4077 = vld [vmem:[%s3266 + $0x63] sm:$0xff]
      %v4078 = vld [vmem:[%s3266 + $0x6b] sm:$0xff]
      %v4079 = vld [vmem:[%s3266 + $0x7b] sm:$0xff]
      %v4080 = vld [vmem:[%s3266 + $0x83] sm:$0xff]
      %v4081 = vld [vmem:[%s3266 + $0x93] sm:$0xff]
      %v4082 = vld [vmem:[%s3266 + $0x9b] sm:$0xff]
      %v4083 = vld [vmem:[%s3266 + $0xab] sm:$0xff]
      %v4084 = vld [vmem:[%s3266 + $0xb3] sm:$0xff]
      %v4085 = vld [vmem:[%s3266 + $0xc3] sm:$0xff]
      %v4086 = vld [vmem:[%s3266 + $0xcb] sm:$0xff]
      %v4087 = vld [vmem:[%s3266 + $0xdb] sm:$0xff]
      %v4088 = vld [vmem:[%s3266 + $0xe3] sm:$0xff]
      %v4089 = vld [vmem:[%s3266 + $0xf3] sm:$0xff]
      %v4090 = vld [vmem:[%s3266 + $0xfb] sm:$0xff]
      %v4091 = vld [vmem:[%s3266 + $0x10b] sm:$0xff]
      %v4092 = vld [vmem:[%s3266 + $0x113] sm:$0xff]
      %v4093 = vld [vmem:[%s3266 + $0x123] sm:$0xff]
      %v4094 = vld [vmem:[%s3266 + $0x12b] sm:$0xff]
      %v4095 = vld [vmem:[%s3266 + $0x13b] sm:$0xff]
      %v4096 = vld [vmem:[%s3266 + $0x143] sm:$0xff]
      %v4097 = vld [vmem:[%s3266 + $0x153] sm:$0xff]
      %v4098 = vld [vmem:[%s3266 + $0x15b] sm:$0xff]
      %v4099 = vld [vmem:[%s3266 + $0x16b] sm:$0xff]
      %v4100 = vld [vmem:[%s3266 + $0x173] sm:$0xff]
      %v4101 = vld [vmem:[%s3266 + $0x4] sm:$0xff]
      %v4102 = vld [vmem:[%s3266 + $0xc] sm:$0xff]
      %v4103 = vld [vmem:[%s3266 + $0x1c] sm:$0xff]
      %v4104 = vld [vmem:[%s3266 + $0x24] sm:$0xff]
      %v4105 = vld [vmem:[%s3266 + $0x34] sm:$0xff]
      %v4106 = vld [vmem:[%s3266 + $0x3c] sm:$0xff]
      %v4107 = vld [vmem:[%s3266 + $0x4c] sm:$0xff]
      %v4108 = vld [vmem:[%s3266 + $0x54] sm:$0xff]
      %v4109 = vld [vmem:[%s3266 + $0x64] sm:$0xff]
      %v4110 = vld [vmem:[%s3266 + $0x6c] sm:$0xff]
      %v4111 = vld [vmem:[%s3266 + $0x7c] sm:$0xff]
      %v4112 = vld [vmem:[%s3266 + $0x84] sm:$0xff]
      %v4113 = vld [vmem:[%s3266 + $0x94] sm:$0xff]
      %v4114 = vld [vmem:[%s3266 + $0x9c] sm:$0xff]
      %v4115 = vld [vmem:[%s3266 + $0xac] sm:$0xff]
      %v4116 = vld [vmem:[%s3266 + $0xb4] sm:$0xff]
      %v4117 = vld [vmem:[%s3266 + $0xc4] sm:$0xff]
      %v4118 = vld [vmem:[%s3266 + $0xcc] sm:$0xff]
      %v4119 = vld [vmem:[%s3266 + $0xdc] sm:$0xff]
      %v4120 = vld [vmem:[%s3266 + $0xe4] sm:$0xff]
      %v4121 = vld [vmem:[%s3266 + $0xf4] sm:$0xff]
      %v4122 = vld [vmem:[%s3266 + $0xfc] sm:$0xff]
      %v4123 = vld [vmem:[%s3266 + $0x10c] sm:$0xff]
      %v4124 = vld [vmem:[%s3266 + $0x114] sm:$0xff]
      %v4125 = vld [vmem:[%s3266 + $0x124] sm:$0xff]
      %v4126 = vld [vmem:[%s3266 + $0x12c] sm:$0xff]
      %v4127 = vld [vmem:[%s3266 + $0x13c] sm:$0xff]
      %v4128 = vld [vmem:[%s3266 + $0x144] sm:$0xff]
      %v4129 = vld [vmem:[%s3266 + $0x154] sm:$0xff]
      %v4130 = vld [vmem:[%s3266 + $0x15c] sm:$0xff]
      %v4131 = vld [vmem:[%s3266 + $0x16c] sm:$0xff]
      %v4132 = vld [vmem:[%s3266 + $0x174] sm:$0xff]
      %v4133 = vld [vmem:[%s3266 + $0x5] sm:$0xff]
      %v4134 = vld [vmem:[%s3266 + $0xd] sm:$0xff]
      %v4135 = vld [vmem:[%s3266 + $0x1d] sm:$0xff]
      %v4136 = vld [vmem:[%s3266 + $0x25] sm:$0xff]
      %v4137 = vld [vmem:[%s3266 + $0x35] sm:$0xff]
      %v4138 = vld [vmem:[%s3266 + $0x3d] sm:$0xff]
      %v4139 = vld [vmem:[%s3266 + $0x4d] sm:$0xff]
      %v4140 = vld [vmem:[%s3266 + $0x55] sm:$0xff]
      %v4141 = vld [vmem:[%s3266 + $0x65] sm:$0xff]
      %v4142 = vld [vmem:[%s3266 + $0x6d] sm:$0xff]
      %v4143 = vld [vmem:[%s3266 + $0x7d] sm:$0xff]
      %v4144 = vld [vmem:[%s3266 + $0x85] sm:$0xff]
      %v4145 = vld [vmem:[%s3266 + $0x95] sm:$0xff]
      %v4146 = vld [vmem:[%s3266 + $0x9d] sm:$0xff]
      %v4147 = vld [vmem:[%s3266 + $0xad] sm:$0xff]
      %v4148 = vld [vmem:[%s3266 + $0xb5] sm:$0xff]
      %v4149 = vld [vmem:[%s3266 + $0xc5] sm:$0xff]
      %v4150 = vld [vmem:[%s3266 + $0xcd] sm:$0xff]
      %v4151 = vld [vmem:[%s3266 + $0xdd] sm:$0xff]
      %v4152 = vld [vmem:[%s3266 + $0xe5] sm:$0xff]
      %v4153 = vld [vmem:[%s3266 + $0xf5] sm:$0xff]
      %v4154 = vld [vmem:[%s3266 + $0xfd] sm:$0xff]
      %v4155 = vld [vmem:[%s3266 + $0x10d] sm:$0xff]
      %v4156 = vld [vmem:[%s3266 + $0x115] sm:$0xff]
      %v4157 = vld [vmem:[%s3266 + $0x125] sm:$0xff]
      %v4158 = vld [vmem:[%s3266 + $0x12d] sm:$0xff]
      %v4159 = vld [vmem:[%s3266 + $0x13d] sm:$0xff]
      %v4160 = vld [vmem:[%s3266 + $0x145] sm:$0xff]
      %v4161 = vld [vmem:[%s3266 + $0x155] sm:$0xff]
      %v4162 = vld [vmem:[%s3266 + $0x15d] sm:$0xff]
      %v4163 = vld [vmem:[%s3266 + $0x16d] sm:$0xff]
      %v4164 = vld [vmem:[%s3266 + $0x175] sm:$0xff]
      %v4165 = vld [vmem:[%s3266 + $0x6] sm:$0xff]
      %v4166 = vld [vmem:[%s3266 + $0xe] sm:$0xff]
      %v4167 = vld [vmem:[%s3266 + $0x1e] sm:$0xff]
      %v4168 = vld [vmem:[%s3266 + $0x26] sm:$0xff]
      %v4169 = vld [vmem:[%s3266 + $0x36] sm:$0xff]
      %v4170 = vld [vmem:[%s3266 + $0x3e] sm:$0xff]
      %v4171 = vld [vmem:[%s3266 + $0x4e] sm:$0xff]
      %v4172 = vld [vmem:[%s3266 + $0x56] sm:$0xff]
      %v4173 = vld [vmem:[%s3266 + $0x66] sm:$0xff]
      %v4174 = vld [vmem:[%s3266 + $0x6e] sm:$0xff]
      %v4175 = vld [vmem:[%s3266 + $0x7e] sm:$0xff]
      %v4176 = vld [vmem:[%s3266 + $0x86] sm:$0xff]
      %v4177 = vld [vmem:[%s3266 + $0x96] sm:$0xff]
      %v4178 = vld [vmem:[%s3266 + $0x9e] sm:$0xff]
      %v4179 = vld [vmem:[%s3266 + $0xae] sm:$0xff]
      %v4180 = vld [vmem:[%s3266 + $0xb6] sm:$0xff]
      %v4181 = vld [vmem:[%s3266 + $0xc6] sm:$0xff]
      %v4182 = vld [vmem:[%s3266 + $0xce] sm:$0xff]
      %v4183 = vld [vmem:[%s3266 + $0xde] sm:$0xff]
      %v4184 = vld [vmem:[%s3266 + $0xe6] sm:$0xff]
      %v4185 = vld [vmem:[%s3266 + $0xf6] sm:$0xff]
      %v4186 = vld [vmem:[%s3266 + $0xfe] sm:$0xff]
      %v4187 = vld [vmem:[%s3266 + $0x10e] sm:$0xff]
      %v4188 = vld [vmem:[%s3266 + $0x116] sm:$0xff]
      %v4189 = vld [vmem:[%s3266 + $0x126] sm:$0xff]
      %v4190 = vld [vmem:[%s3266 + $0x12e] sm:$0xff]
      %v4191 = vld [vmem:[%s3266 + $0x13e] sm:$0xff]
      %v4192 = vld [vmem:[%s3266 + $0x146] sm:$0xff]
      %v4193 = vld [vmem:[%s3266 + $0x156] sm:$0xff]
      %v4194 = vld [vmem:[%s3266 + $0x15e] sm:$0xff]
      %v4195 = vld [vmem:[%s3266 + $0x16e] sm:$0xff]
      %v4196 = vld [vmem:[%s3266 + $0x176] sm:$0xff]
      %s4197 = scalar_lea.vmem [#allocation3], 96
      %v4198 = vld [vmem:[%s4197] sm:$0xff]
      %v4199 = vld [vmem:[%s4197 + $0x8] sm:$0xff]
      %v4200 = vld [vmem:[%s4197 + $0x18] sm:$0xff]
      %v4201 = vld [vmem:[%s4197 + $0x20] sm:$0xff]
      %v4202 = vld [vmem:[%s4197 + $0x30] sm:$0xff]
      %v4203 = vld [vmem:[%s4197 + $0x38] sm:$0xff]
      %v4204 = vld [vmem:[%s4197 + $0x48] sm:$0xff]
      %v4205 = vld [vmem:[%s4197 + $0x50] sm:$0xff]
      %v4206 = vld [vmem:[%s4197 + $0x60] sm:$0xff]
      %v4207 = vld [vmem:[%s4197 + $0x68] sm:$0xff]
      %v4208 = vld [vmem:[%s4197 + $0x78] sm:$0xff]
      %v4209 = vld [vmem:[%s4197 + $0x80] sm:$0xff]
      %v4210 = vld [vmem:[%s4197 + $0x90] sm:$0xff]
      %v4211 = vld [vmem:[%s4197 + $0x98] sm:$0xff]
      %v4212 = vld [vmem:[%s4197 + $0xa8] sm:$0xff]
      %v4213 = vld [vmem:[%s4197 + $0xb0] sm:$0xff]
      %v4214 = vld [vmem:[%s4197 + $0xc0] sm:$0xff]
      %v4215 = vld [vmem:[%s4197 + $0xc8] sm:$0xff]
      %v4216 = vld [vmem:[%s4197 + $0xd8] sm:$0xff]
      %v4217 = vld [vmem:[%s4197 + $0xe0] sm:$0xff]
      %v4218 = vld [vmem:[%s4197 + $0xf0] sm:$0xff]
      %v4219 = vld [vmem:[%s4197 + $0xf8] sm:$0xff]
      %v4220 = vld [vmem:[%s4197 + $0x108] sm:$0xff]
      %v4221 = vld [vmem:[%s4197 + $0x110] sm:$0xff]
      %v4222 = vld [vmem:[%s4197 + $0x120] sm:$0xff]
      %v4223 = vld [vmem:[%s4197 + $0x128] sm:$0xff]
      %v4224 = vld [vmem:[%s4197 + $0x138] sm:$0xff]
      %v4225 = vld [vmem:[%s4197 + $0x140] sm:$0xff]
      %v4226 = vld [vmem:[%s4197 + $0x150] sm:$0xff]
      %v4227 = vld [vmem:[%s4197 + $0x158] sm:$0xff]
      %v4228 = vld [vmem:[%s4197 + $0x168] sm:$0xff]
      %v4229 = vld [vmem:[%s4197 + $0x170] sm:$0xff]
      %v4230 = vld [vmem:[%s4197 + $0x1] sm:$0xff]
      %v4231 = vld [vmem:[%s4197 + $0x9] sm:$0xff]
      %v4232 = vld [vmem:[%s4197 + $0x19] sm:$0xff]
      %v4233 = vld [vmem:[%s4197 + $0x21] sm:$0xff]
      %v4234 = vld [vmem:[%s4197 + $0x31] sm:$0xff]
      %v4235 = vld [vmem:[%s4197 + $0x39] sm:$0xff]
      %v4236 = vld [vmem:[%s4197 + $0x49] sm:$0xff]
      %v4237 = vld [vmem:[%s4197 + $0x51] sm:$0xff]
      %v4238 = vld [vmem:[%s4197 + $0x61] sm:$0xff]
      %v4239 = vld [vmem:[%s4197 + $0x69] sm:$0xff]
      %v4240 = vld [vmem:[%s4197 + $0x79] sm:$0xff]
      %v4241 = vld [vmem:[%s4197 + $0x81] sm:$0xff]
      %v4242 = vld [vmem:[%s4197 + $0x91] sm:$0xff]
      %v4243 = vld [vmem:[%s4197 + $0x99] sm:$0xff]
      %v4244 = vld [vmem:[%s4197 + $0xa9] sm:$0xff]
      %v4245 = vld [vmem:[%s4197 + $0xb1] sm:$0xff]
      %v4246 = vld [vmem:[%s4197 + $0xc1] sm:$0xff]
      %v4247 = vld [vmem:[%s4197 + $0xc9] sm:$0xff]
      %v4248 = vld [vmem:[%s4197 + $0xd9] sm:$0xff]
      %v4249 = vld [vmem:[%s4197 + $0xe1] sm:$0xff]
      %v4250 = vld [vmem:[%s4197 + $0xf1] sm:$0xff]
      %v4251 = vld [vmem:[%s4197 + $0xf9] sm:$0xff]
      %v4252 = vld [vmem:[%s4197 + $0x109] sm:$0xff]
      %v4253 = vld [vmem:[%s4197 + $0x111] sm:$0xff]
      %v4254 = vld [vmem:[%s4197 + $0x121] sm:$0xff]
      %v4255 = vld [vmem:[%s4197 + $0x129] sm:$0xff]
      %v4256 = vld [vmem:[%s4197 + $0x139] sm:$0xff]
      %v4257 = vld [vmem:[%s4197 + $0x141] sm:$0xff]
      %v4258 = vld [vmem:[%s4197 + $0x151] sm:$0xff]
      %v4259 = vld [vmem:[%s4197 + $0x159] sm:$0xff]
      %v4260 = vld [vmem:[%s4197 + $0x169] sm:$0xff]
      %v4261 = vld [vmem:[%s4197 + $0x171] sm:$0xff]
      %v4262 = vld [vmem:[%s4197 + $0x2] sm:$0xff]
      %v4263 = vld [vmem:[%s4197 + $0xa] sm:$0xff]
      %v4264 = vld [vmem:[%s4197 + $0x1a] sm:$0xff]
      %v4265 = vld [vmem:[%s4197 + $0x22] sm:$0xff]
      %v4266 = vld [vmem:[%s4197 + $0x32] sm:$0xff]
      %v4267 = vld [vmem:[%s4197 + $0x3a] sm:$0xff]
      %v4268 = vld [vmem:[%s4197 + $0x4a] sm:$0xff]
      %v4269 = vld [vmem:[%s4197 + $0x52] sm:$0xff]
      %v4270 = vld [vmem:[%s4197 + $0x62] sm:$0xff]
      %v4271 = vld [vmem:[%s4197 + $0x6a] sm:$0xff]
      %v4272 = vld [vmem:[%s4197 + $0x7a] sm:$0xff]
      %v4273 = vld [vmem:[%s4197 + $0x82] sm:$0xff]
      %v4274 = vld [vmem:[%s4197 + $0x92] sm:$0xff]
      %v4275 = vld [vmem:[%s4197 + $0x9a] sm:$0xff]
      %v4276 = vld [vmem:[%s4197 + $0xaa] sm:$0xff]
      %v4277 = vld [vmem:[%s4197 + $0xb2] sm:$0xff]
      %v4278 = vld [vmem:[%s4197 + $0xc2] sm:$0xff]
      %v4279 = vld [vmem:[%s4197 + $0xca] sm:$0xff]
      %v4280 = vld [vmem:[%s4197 + $0xda] sm:$0xff]
      %v4281 = vld [vmem:[%s4197 + $0xe2] sm:$0xff]
      %v4282 = vld [vmem:[%s4197 + $0xf2] sm:$0xff]
      %v4283 = vld [vmem:[%s4197 + $0xfa] sm:$0xff]
      %v4284 = vld [vmem:[%s4197 + $0x10a] sm:$0xff]
      %v4285 = vld [vmem:[%s4197 + $0x112] sm:$0xff]
      %v4286 = vld [vmem:[%s4197 + $0x122] sm:$0xff]
      %v4287 = vld [vmem:[%s4197 + $0x12a] sm:$0xff]
      %v4288 = vld [vmem:[%s4197 + $0x13a] sm:$0xff]
      %v4289 = vld [vmem:[%s4197 + $0x142] sm:$0xff]
      %v4290 = vld [vmem:[%s4197 + $0x152] sm:$0xff]
      %v4291 = vld [vmem:[%s4197 + $0x15a] sm:$0xff]
      %v4292 = vld [vmem:[%s4197 + $0x16a] sm:$0xff]
      %v4293 = vld [vmem:[%s4197 + $0x172] sm:$0xff]
      %v4294 = vld [vmem:[%s4197 + $0x3] sm:$0xff]
      %v4295 = vld [vmem:[%s4197 + $0xb] sm:$0xff]
      %v4296 = vld [vmem:[%s4197 + $0x1b] sm:$0xff]
      %v4297 = vld [vmem:[%s4197 + $0x23] sm:$0xff]
      %v4298 = vld [vmem:[%s4197 + $0x33] sm:$0xff]
      %v4299 = vld [vmem:[%s4197 + $0x3b] sm:$0xff]
      %v4300 = vld [vmem:[%s4197 + $0x4b] sm:$0xff]
      %v4301 = vld [vmem:[%s4197 + $0x53] sm:$0xff]
      %v4302 = vld [vmem:[%s4197 + $0x63] sm:$0xff]
      %v4303 = vld [vmem:[%s4197 + $0x6b] sm:$0xff]
      %v4304 = vld [vmem:[%s4197 + $0x7b] sm:$0xff]
      %v4305 = vld [vmem:[%s4197 + $0x83] sm:$0xff]
      %v4306 = vld [vmem:[%s4197 + $0x93] sm:$0xff]
      %v4307 = vld [vmem:[%s4197 + $0x9b] sm:$0xff]
      %v4308 = vld [vmem:[%s4197 + $0xab] sm:$0xff]
      %v4309 = vld [vmem:[%s4197 + $0xb3] sm:$0xff]
      %v4310 = vld [vmem:[%s4197 + $0xc3] sm:$0xff]
      %v4311 = vld [vmem:[%s4197 + $0xcb] sm:$0xff]
      %v4312 = vld [vmem:[%s4197 + $0xdb] sm:$0xff]
      %v4313 = vld [vmem:[%s4197 + $0xe3] sm:$0xff]
      %v4314 = vld [vmem:[%s4197 + $0xf3] sm:$0xff]
      %v4315 = vld [vmem:[%s4197 + $0xfb] sm:$0xff]
      %v4316 = vld [vmem:[%s4197 + $0x10b] sm:$0xff]
      %v4317 = vld [vmem:[%s4197 + $0x113] sm:$0xff]
      %v4318 = vld [vmem:[%s4197 + $0x123] sm:$0xff]
      %v4319 = vld [vmem:[%s4197 + $0x12b] sm:$0xff]
      %v4320 = vld [vmem:[%s4197 + $0x13b] sm:$0xff]
      %v4321 = vld [vmem:[%s4197 + $0x143] sm:$0xff]
      %v4322 = vld [vmem:[%s4197 + $0x153] sm:$0xff]
      %v4323 = vld [vmem:[%s4197 + $0x15b] sm:$0xff]
      %v4324 = vld [vmem:[%s4197 + $0x16b] sm:$0xff]
      %v4325 = vld [vmem:[%s4197 + $0x173] sm:$0xff]
      %v4326 = vld [vmem:[%s4197 + $0x4] sm:$0xff]
      %v4327 = vld [vmem:[%s4197 + $0xc] sm:$0xff]
      %v4328 = vld [vmem:[%s4197 + $0x1c] sm:$0xff]
      %v4329 = vld [vmem:[%s4197 + $0x24] sm:$0xff]
      %v4330 = vld [vmem:[%s4197 + $0x34] sm:$0xff]
      %v4331 = vld [vmem:[%s4197 + $0x3c] sm:$0xff]
      %v4332 = vld [vmem:[%s4197 + $0x4c] sm:$0xff]
      %v4333 = vld [vmem:[%s4197 + $0x54] sm:$0xff]
      %v4334 = vld [vmem:[%s4197 + $0x64] sm:$0xff]
      %v4335 = vld [vmem:[%s4197 + $0x6c] sm:$0xff]
      %v4336 = vld [vmem:[%s4197 + $0x7c] sm:$0xff]
      %v4337 = vld [vmem:[%s4197 + $0x84] sm:$0xff]
      %v4338 = vld [vmem:[%s4197 + $0x94] sm:$0xff]
      %v4339 = vld [vmem:[%s4197 + $0x9c] sm:$0xff]
      %v4340 = vld [vmem:[%s4197 + $0xac] sm:$0xff]
      %v4341 = vld [vmem:[%s4197 + $0xb4] sm:$0xff]
      %v4342 = vld [vmem:[%s4197 + $0xc4] sm:$0xff]
      %v4343 = vld [vmem:[%s4197 + $0xcc] sm:$0xff]
      %v4344 = vld [vmem:[%s4197 + $0xdc] sm:$0xff]
      %v4345 = vld [vmem:[%s4197 + $0xe4] sm:$0xff]
      %v4346 = vld [vmem:[%s4197 + $0xf4] sm:$0xff]
      %v4347 = vld [vmem:[%s4197 + $0xfc] sm:$0xff]
      %v4348 = vld [vmem:[%s4197 + $0x10c] sm:$0xff]
      %v4349 = vld [vmem:[%s4197 + $0x114] sm:$0xff]
      %v4350 = vld [vmem:[%s4197 + $0x124] sm:$0xff]
      %v4351 = vld [vmem:[%s4197 + $0x12c] sm:$0xff]
      %v4352 = vld [vmem:[%s4197 + $0x13c] sm:$0xff]
      %v4353 = vld [vmem:[%s4197 + $0x144] sm:$0xff]
      %v4354 = vld [vmem:[%s4197 + $0x154] sm:$0xff]
      %v4355 = vld [vmem:[%s4197 + $0x15c] sm:$0xff]
      %v4356 = vld [vmem:[%s4197 + $0x16c] sm:$0xff]
      %v4357 = vld [vmem:[%s4197 + $0x174] sm:$0xff]
      %v4358 = vld [vmem:[%s4197 + $0x5] sm:$0xff]
      %v4359 = vld [vmem:[%s4197 + $0xd] sm:$0xff]
      %v4360 = vld [vmem:[%s4197 + $0x1d] sm:$0xff]
      %v4361 = vld [vmem:[%s4197 + $0x25] sm:$0xff]
      %v4362 = vld [vmem:[%s4197 + $0x35] sm:$0xff]
      %v4363 = vld [vmem:[%s4197 + $0x3d] sm:$0xff]
      %v4364 = vld [vmem:[%s4197 + $0x4d] sm:$0xff]
      %v4365 = vld [vmem:[%s4197 + $0x55] sm:$0xff]
      %v4366 = vld [vmem:[%s4197 + $0x65] sm:$0xff]
      %v4367 = vld [vmem:[%s4197 + $0x6d] sm:$0xff]
      %v4368 = vld [vmem:[%s4197 + $0x7d] sm:$0xff]
      %v4369 = vld [vmem:[%s4197 + $0x85] sm:$0xff]
      %v4370 = vld [vmem:[%s4197 + $0x95] sm:$0xff]
      %v4371 = vld [vmem:[%s4197 + $0x9d] sm:$0xff]
      %v4372 = vld [vmem:[%s4197 + $0xad] sm:$0xff]
      %v4373 = vld [vmem:[%s4197 + $0xb5] sm:$0xff]
      %v4374 = vld [vmem:[%s4197 + $0xc5] sm:$0xff]
      %v4375 = vld [vmem:[%s4197 + $0xcd] sm:$0xff]
      %v4376 = vld [vmem:[%s4197 + $0xdd] sm:$0xff]
      %v4377 = vld [vmem:[%s4197 + $0xe5] sm:$0xff]
      %v4378 = vld [vmem:[%s4197 + $0xf5] sm:$0xff]
      %v4379 = vld [vmem:[%s4197 + $0xfd] sm:$0xff]
      %v4380 = vld [vmem:[%s4197 + $0x10d] sm:$0xff]
      %v4381 = vld [vmem:[%s4197 + $0x115] sm:$0xff]
      %v4382 = vld [vmem:[%s4197 + $0x125] sm:$0xff]
      %v4383 = vld [vmem:[%s4197 + $0x12d] sm:$0xff]
      %v4384 = vld [vmem:[%s4197 + $0x13d] sm:$0xff]
      %v4385 = vld [vmem:[%s4197 + $0x145] sm:$0xff]
      %v4386 = vld [vmem:[%s4197 + $0x155] sm:$0xff]
      %v4387 = vld [vmem:[%s4197 + $0x15d] sm:$0xff]
      %v4388 = vld [vmem:[%s4197 + $0x16d] sm:$0xff]
      %v4389 = vld [vmem:[%s4197 + $0x175] sm:$0xff]
      %v4390 = vld [vmem:[%s4197 + $0x6] sm:$0xff]
      %v4391 = vld [vmem:[%s4197 + $0xe] sm:$0xff]
      %v4392 = vld [vmem:[%s4197 + $0x1e] sm:$0xff]
      %v4393 = vld [vmem:[%s4197 + $0x26] sm:$0xff]
      %v4394 = vld [vmem:[%s4197 + $0x36] sm:$0xff]
      %v4395 = vld [vmem:[%s4197 + $0x3e] sm:$0xff]
      %v4396 = vld [vmem:[%s4197 + $0x4e] sm:$0xff]
      %v4397 = vld [vmem:[%s4197 + $0x56] sm:$0xff]
      %v4398 = vld [vmem:[%s4197 + $0x66] sm:$0xff]
      %v4399 = vld [vmem:[%s4197 + $0x6e] sm:$0xff]
      %v4400 = vld [vmem:[%s4197 + $0x7e] sm:$0xff]
      %v4401 = vld [vmem:[%s4197 + $0x86] sm:$0xff]
      %v4402 = vld [vmem:[%s4197 + $0x96] sm:$0xff]
      %v4403 = vld [vmem:[%s4197 + $0x9e] sm:$0xff]
      %v4404 = vld [vmem:[%s4197 + $0xae] sm:$0xff]
      %v4405 = vld [vmem:[%s4197 + $0xb6] sm:$0xff]
      %v4406 = vld [vmem:[%s4197 + $0xc6] sm:$0xff]
      %v4407 = vld [vmem:[%s4197 + $0xce] sm:$0xff]
      %v4408 = vld [vmem:[%s4197 + $0xde] sm:$0xff]
      %v4409 = vld [vmem:[%s4197 + $0xe6] sm:$0xff]
      %v4410 = vld [vmem:[%s4197 + $0xf6] sm:$0xff]
      %v4411 = vld [vmem:[%s4197 + $0xfe] sm:$0xff]
      %v4412 = vld [vmem:[%s4197 + $0x10e] sm:$0xff]
      %v4413 = vld [vmem:[%s4197 + $0x116] sm:$0xff]
      %v4414 = vld [vmem:[%s4197 + $0x126] sm:$0xff]
      %v4415 = vld [vmem:[%s4197 + $0x12e] sm:$0xff]
      %v4416 = vld [vmem:[%s4197 + $0x13e] sm:$0xff]
      %v4417 = vld [vmem:[%s4197 + $0x146] sm:$0xff]
      %v4418 = vld [vmem:[%s4197 + $0x156] sm:$0xff]
      %v4419 = vld [vmem:[%s4197 + $0x15e] sm:$0xff]
      %v4420 = vld [vmem:[%s4197 + $0x16e] sm:$0xff]
      %v4421 = vld [vmem:[%s4197 + $0x176] sm:$0xff]
      %s4422 = scalar_lea.vmem [#allocation3], 120
      %v4423 = vld [vmem:[%s4422] sm:$0xff]
      %v4424 = vld [vmem:[%s4422 + $0x8] sm:$0xff]
      %v4425 = vld [vmem:[%s4422 + $0x18] sm:$0xff]
      %v4426 = vld [vmem:[%s4422 + $0x20] sm:$0xff]
      %v4427 = vld [vmem:[%s4422 + $0x30] sm:$0xff]
      %v4428 = vld [vmem:[%s4422 + $0x38] sm:$0xff]
      %v4429 = vld [vmem:[%s4422 + $0x48] sm:$0xff]
      %v4430 = vld [vmem:[%s4422 + $0x50] sm:$0xff]
      %v4431 = vld [vmem:[%s4422 + $0x60] sm:$0xff]
      %v4432 = vld [vmem:[%s4422 + $0x68] sm:$0xff]
      %v4433 = vld [vmem:[%s4422 + $0x78] sm:$0xff]
      %v4434 = vld [vmem:[%s4422 + $0x80] sm:$0xff]
      %v4435 = vld [vmem:[%s4422 + $0x90] sm:$0xff]
      %v4436 = vld [vmem:[%s4422 + $0x98] sm:$0xff]
      %v4437 = vld [vmem:[%s4422 + $0xa8] sm:$0xff]
      %v4438 = vld [vmem:[%s4422 + $0xb0] sm:$0xff]
      %v4439 = vld [vmem:[%s4422 + $0xc0] sm:$0xff]
      %v4440 = vld [vmem:[%s4422 + $0xc8] sm:$0xff]
      %v4441 = vld [vmem:[%s4422 + $0xd8] sm:$0xff]
      %v4442 = vld [vmem:[%s4422 + $0xe0] sm:$0xff]
      %v4443 = vld [vmem:[%s4422 + $0xf0] sm:$0xff]
      %v4444 = vld [vmem:[%s4422 + $0xf8] sm:$0xff]
      %v4445 = vld [vmem:[%s4422 + $0x108] sm:$0xff]
      %v4446 = vld [vmem:[%s4422 + $0x110] sm:$0xff]
      %v4447 = vld [vmem:[%s4422 + $0x120] sm:$0xff]
      %v4448 = vld [vmem:[%s4422 + $0x128] sm:$0xff]
      %v4449 = vld [vmem:[%s4422 + $0x138] sm:$0xff]
      %v4450 = vld [vmem:[%s4422 + $0x140] sm:$0xff]
      %v4451 = vld [vmem:[%s4422 + $0x150] sm:$0xff]
      %v4452 = vld [vmem:[%s4422 + $0x158] sm:$0xff]
      %v4453 = vld [vmem:[%s4422 + $0x168] sm:$0xff]
      %v4454 = vld [vmem:[%s4422 + $0x170] sm:$0xff]
      %v4455 = vld [vmem:[%s4422 + $0x1] sm:$0xff]
      %v4456 = vld [vmem:[%s4422 + $0x9] sm:$0xff]
      %v4457 = vld [vmem:[%s4422 + $0x19] sm:$0xff]
      %v4458 = vld [vmem:[%s4422 + $0x21] sm:$0xff]
      %v4459 = vld [vmem:[%s4422 + $0x31] sm:$0xff]
      %v4460 = vld [vmem:[%s4422 + $0x39] sm:$0xff]
      %v4461 = vld [vmem:[%s4422 + $0x49] sm:$0xff]
      %v4462 = vld [vmem:[%s4422 + $0x51] sm:$0xff]
      %v4463 = vld [vmem:[%s4422 + $0x61] sm:$0xff]
      %v4464 = vld [vmem:[%s4422 + $0x69] sm:$0xff]
      %v4465 = vld [vmem:[%s4422 + $0x79] sm:$0xff]
      %v4466 = vld [vmem:[%s4422 + $0x81] sm:$0xff]
      %v4467 = vld [vmem:[%s4422 + $0x91] sm:$0xff]
      %v4468 = vld [vmem:[%s4422 + $0x99] sm:$0xff]
      %v4469 = vld [vmem:[%s4422 + $0xa9] sm:$0xff]
      %v4470 = vld [vmem:[%s4422 + $0xb1] sm:$0xff]
      %v4471 = vld [vmem:[%s4422 + $0xc1] sm:$0xff]
      %v4472 = vld [vmem:[%s4422 + $0xc9] sm:$0xff]
      %v4473 = vld [vmem:[%s4422 + $0xd9] sm:$0xff]
      %v4474 = vld [vmem:[%s4422 + $0xe1] sm:$0xff]
      %v4475 = vld [vmem:[%s4422 + $0xf1] sm:$0xff]
      %v4476 = vld [vmem:[%s4422 + $0xf9] sm:$0xff]
      %v4477 = vld [vmem:[%s4422 + $0x109] sm:$0xff]
      %v4478 = vld [vmem:[%s4422 + $0x111] sm:$0xff]
      %v4479 = vld [vmem:[%s4422 + $0x121] sm:$0xff]
      %v4480 = vld [vmem:[%s4422 + $0x129] sm:$0xff]
      %v4481 = vld [vmem:[%s4422 + $0x139] sm:$0xff]
      %v4482 = vld [vmem:[%s4422 + $0x141] sm:$0xff]
      %v4483 = vld [vmem:[%s4422 + $0x151] sm:$0xff]
      %v4484 = vld [vmem:[%s4422 + $0x159] sm:$0xff]
      %v4485 = vld [vmem:[%s4422 + $0x169] sm:$0xff]
      %v4486 = vld [vmem:[%s4422 + $0x171] sm:$0xff]
      %v4487 = vld [vmem:[%s4422 + $0x2] sm:$0xff]
      %v4488 = vld [vmem:[%s4422 + $0xa] sm:$0xff]
      %v4489 = vld [vmem:[%s4422 + $0x1a] sm:$0xff]
      %v4490 = vld [vmem:[%s4422 + $0x22] sm:$0xff]
      %v4491 = vld [vmem:[%s4422 + $0x32] sm:$0xff]
      %v4492 = vld [vmem:[%s4422 + $0x3a] sm:$0xff]
      %v4493 = vld [vmem:[%s4422 + $0x4a] sm:$0xff]
      %v4494 = vld [vmem:[%s4422 + $0x52] sm:$0xff]
      %v4495 = vld [vmem:[%s4422 + $0x62] sm:$0xff]
      %v4496 = vld [vmem:[%s4422 + $0x6a] sm:$0xff]
      %v4497 = vld [vmem:[%s4422 + $0x7a] sm:$0xff]
      %v4498 = vld [vmem:[%s4422 + $0x82] sm:$0xff]
      %v4499 = vld [vmem:[%s4422 + $0x92] sm:$0xff]
      %v4500 = vld [vmem:[%s4422 + $0x9a] sm:$0xff]
      %v4501 = vld [vmem:[%s4422 + $0xaa] sm:$0xff]
      %v4502 = vld [vmem:[%s4422 + $0xb2] sm:$0xff]
      %v4503 = vld [vmem:[%s4422 + $0xc2] sm:$0xff]
      %v4504 = vld [vmem:[%s4422 + $0xca] sm:$0xff]
      %v4505 = vld [vmem:[%s4422 + $0xda] sm:$0xff]
      %v4506 = vld [vmem:[%s4422 + $0xe2] sm:$0xff]
      %v4507 = vld [vmem:[%s4422 + $0xf2] sm:$0xff]
      %v4508 = vld [vmem:[%s4422 + $0xfa] sm:$0xff]
      %v4509 = vld [vmem:[%s4422 + $0x10a] sm:$0xff]
      %v4510 = vld [vmem:[%s4422 + $0x112] sm:$0xff]
      %v4511 = vld [vmem:[%s4422 + $0x122] sm:$0xff]
      %v4512 = vld [vmem:[%s4422 + $0x12a] sm:$0xff]
      %v4513 = vld [vmem:[%s4422 + $0x13a] sm:$0xff]
      %v4514 = vld [vmem:[%s4422 + $0x142] sm:$0xff]
      %v4515 = vld [vmem:[%s4422 + $0x152] sm:$0xff]
      %v4516 = vld [vmem:[%s4422 + $0x15a] sm:$0xff]
      %v4517 = vld [vmem:[%s4422 + $0x16a] sm:$0xff]
      %v4518 = vld [vmem:[%s4422 + $0x172] sm:$0xff]
      %v4519 = vld [vmem:[%s4422 + $0x3] sm:$0xff]
      %v4520 = vld [vmem:[%s4422 + $0xb] sm:$0xff]
      %v4521 = vld [vmem:[%s4422 + $0x1b] sm:$0xff]
      %v4522 = vld [vmem:[%s4422 + $0x23] sm:$0xff]
      %v4523 = vld [vmem:[%s4422 + $0x33] sm:$0xff]
      %v4524 = vld [vmem:[%s4422 + $0x3b] sm:$0xff]
      %v4525 = vld [vmem:[%s4422 + $0x4b] sm:$0xff]
      %v4526 = vld [vmem:[%s4422 + $0x53] sm:$0xff]
      %v4527 = vld [vmem:[%s4422 + $0x63] sm:$0xff]
      %v4528 = vld [vmem:[%s4422 + $0x6b] sm:$0xff]
      %v4529 = vld [vmem:[%s4422 + $0x7b] sm:$0xff]
      %v4530 = vld [vmem:[%s4422 + $0x83] sm:$0xff]
      %v4531 = vld [vmem:[%s4422 + $0x93] sm:$0xff]
      %v4532 = vld [vmem:[%s4422 + $0x9b] sm:$0xff]
      %v4533 = vld [vmem:[%s4422 + $0xab] sm:$0xff]
      %v4534 = vld [vmem:[%s4422 + $0xb3] sm:$0xff]
      %v4535 = vld [vmem:[%s4422 + $0xc3] sm:$0xff]
      %v4536 = vld [vmem:[%s4422 + $0xcb] sm:$0xff]
      %v4537 = vld [vmem:[%s4422 + $0xdb] sm:$0xff]
      %v4538 = vld [vmem:[%s4422 + $0xe3] sm:$0xff]
      %v4539 = vld [vmem:[%s4422 + $0xf3] sm:$0xff]
      %v4540 = vld [vmem:[%s4422 + $0xfb] sm:$0xff]
      %v4541 = vld [vmem:[%s4422 + $0x10b] sm:$0xff]
      %v4542 = vld [vmem:[%s4422 + $0x113] sm:$0xff]
      %v4543 = vld [vmem:[%s4422 + $0x123] sm:$0xff]
      %v4544 = vld [vmem:[%s4422 + $0x12b] sm:$0xff]
      %v4545 = vld [vmem:[%s4422 + $0x13b] sm:$0xff]
      %v4546 = vld [vmem:[%s4422 + $0x143] sm:$0xff]
      %v4547 = vld [vmem:[%s4422 + $0x153] sm:$0xff]
      %v4548 = vld [vmem:[%s4422 + $0x15b] sm:$0xff]
      %v4549 = vld [vmem:[%s4422 + $0x16b] sm:$0xff]
      %v4550 = vld [vmem:[%s4422 + $0x173] sm:$0xff]
      %v4551 = vld [vmem:[%s4422 + $0x4] sm:$0xff]
      %v4552 = vld [vmem:[%s4422 + $0xc] sm:$0xff]
      %v4553 = vld [vmem:[%s4422 + $0x1c] sm:$0xff]
      %v4554 = vld [vmem:[%s4422 + $0x24] sm:$0xff]
      %v4555 = vld [vmem:[%s4422 + $0x34] sm:$0xff]
      %v4556 = vld [vmem:[%s4422 + $0x3c] sm:$0xff]
      %v4557 = vld [vmem:[%s4422 + $0x4c] sm:$0xff]
      %v4558 = vld [vmem:[%s4422 + $0x54] sm:$0xff]
      %v4559 = vld [vmem:[%s4422 + $0x64] sm:$0xff]
      %v4560 = vld [vmem:[%s4422 + $0x6c] sm:$0xff]
      %v4561 = vld [vmem:[%s4422 + $0x7c] sm:$0xff]
      %v4562 = vld [vmem:[%s4422 + $0x84] sm:$0xff]
      %v4563 = vld [vmem:[%s4422 + $0x94] sm:$0xff]
      %v4564 = vld [vmem:[%s4422 + $0x9c] sm:$0xff]
      %v4565 = vld [vmem:[%s4422 + $0xac] sm:$0xff]
      %v4566 = vld [vmem:[%s4422 + $0xb4] sm:$0xff]
      %v4567 = vld [vmem:[%s4422 + $0xc4] sm:$0xff]
      %v4568 = vld [vmem:[%s4422 + $0xcc] sm:$0xff]
      %v4569 = vld [vmem:[%s4422 + $0xdc] sm:$0xff]
      %v4570 = vld [vmem:[%s4422 + $0xe4] sm:$0xff]
      %v4571 = vld [vmem:[%s4422 + $0xf4] sm:$0xff]
      %v4572 = vld [vmem:[%s4422 + $0xfc] sm:$0xff]
      %v4573 = vld [vmem:[%s4422 + $0x10c] sm:$0xff]
      %v4574 = vld [vmem:[%s4422 + $0x114] sm:$0xff]
      %v4575 = vld [vmem:[%s4422 + $0x124] sm:$0xff]
      %v4576 = vld [vmem:[%s4422 + $0x12c] sm:$0xff]
      %v4577 = vld [vmem:[%s4422 + $0x13c] sm:$0xff]
      %v4578 = vld [vmem:[%s4422 + $0x144] sm:$0xff]
      %v4579 = vld [vmem:[%s4422 + $0x154] sm:$0xff]
      %v4580 = vld [vmem:[%s4422 + $0x15c] sm:$0xff]
      %v4581 = vld [vmem:[%s4422 + $0x16c] sm:$0xff]
      %v4582 = vld [vmem:[%s4422 + $0x174] sm:$0xff]
      %v4583 = vld [vmem:[%s4422 + $0x5] sm:$0xff]
      %v4584 = vld [vmem:[%s4422 + $0xd] sm:$0xff]
      %v4585 = vld [vmem:[%s4422 + $0x1d] sm:$0xff]
      %v4586 = vld [vmem:[%s4422 + $0x25] sm:$0xff]
      %v4587 = vld [vmem:[%s4422 + $0x35] sm:$0xff]
      %v4588 = vld [vmem:[%s4422 + $0x3d] sm:$0xff]
      %v4589 = vld [vmem:[%s4422 + $0x4d] sm:$0xff]
      %v4590 = vld [vmem:[%s4422 + $0x55] sm:$0xff]
      %v4591 = vld [vmem:[%s4422 + $0x65] sm:$0xff]
      %v4592 = vld [vmem:[%s4422 + $0x6d] sm:$0xff]
      %v4593 = vld [vmem:[%s4422 + $0x7d] sm:$0xff]
      %v4594 = vld [vmem:[%s4422 + $0x85] sm:$0xff]
      %v4595 = vld [vmem:[%s4422 + $0x95] sm:$0xff]
      %v4596 = vld [vmem:[%s4422 + $0x9d] sm:$0xff]
      %v4597 = vld [vmem:[%s4422 + $0xad] sm:$0xff]
      %v4598 = vld [vmem:[%s4422 + $0xb5] sm:$0xff]
      %v4599 = vld [vmem:[%s4422 + $0xc5] sm:$0xff]
      %v4600 = vld [vmem:[%s4422 + $0xcd] sm:$0xff]
      %v4601 = vld [vmem:[%s4422 + $0xdd] sm:$0xff]
      %v4602 = vld [vmem:[%s4422 + $0xe5] sm:$0xff]
      %v4603 = vld [vmem:[%s4422 + $0xf5] sm:$0xff]
      %v4604 = vld [vmem:[%s4422 + $0xfd] sm:$0xff]
      %v4605 = vld [vmem:[%s4422 + $0x10d] sm:$0xff]
      %v4606 = vld [vmem:[%s4422 + $0x115] sm:$0xff]
      %v4607 = vld [vmem:[%s4422 + $0x125] sm:$0xff]
      %v4608 = vld [vmem:[%s4422 + $0x12d] sm:$0xff]
      %v4609 = vld [vmem:[%s4422 + $0x13d] sm:$0xff]
      %v4610 = vld [vmem:[%s4422 + $0x145] sm:$0xff]
      %v4611 = vld [vmem:[%s4422 + $0x155] sm:$0xff]
      %v4612 = vld [vmem:[%s4422 + $0x15d] sm:$0xff]
      %v4613 = vld [vmem:[%s4422 + $0x16d] sm:$0xff]
      %v4614 = vld [vmem:[%s4422 + $0x175] sm:$0xff]
      %v4615 = vld [vmem:[%s4422 + $0x6] sm:$0xff]
      %v4616 = vld [vmem:[%s4422 + $0xe] sm:$0xff]
      %v4617 = vld [vmem:[%s4422 + $0x1e] sm:$0xff]
      %v4618 = vld [vmem:[%s4422 + $0x26] sm:$0xff]
      %v4619 = vld [vmem:[%s4422 + $0x36] sm:$0xff]
      %v4620 = vld [vmem:[%s4422 + $0x3e] sm:$0xff]
      %v4621 = vld [vmem:[%s4422 + $0x4e] sm:$0xff]
      %v4622 = vld [vmem:[%s4422 + $0x56] sm:$0xff]
      %v4623 = vld [vmem:[%s4422 + $0x66] sm:$0xff]
      %v4624 = vld [vmem:[%s4422 + $0x6e] sm:$0xff]
      %v4625 = vld [vmem:[%s4422 + $0x7e] sm:$0xff]
      %v4626 = vld [vmem:[%s4422 + $0x86] sm:$0xff]
      %v4627 = vld [vmem:[%s4422 + $0x96] sm:$0xff]
      %v4628 = vld [vmem:[%s4422 + $0x9e] sm:$0xff]
      %v4629 = vld [vmem:[%s4422 + $0xae] sm:$0xff]
      %v4630 = vld [vmem:[%s4422 + $0xb6] sm:$0xff]
      %v4631 = vld [vmem:[%s4422 + $0xc6] sm:$0xff]
      %v4632 = vld [vmem:[%s4422 + $0xce] sm:$0xff]
      %v4633 = vld [vmem:[%s4422 + $0xde] sm:$0xff]
      %v4634 = vld [vmem:[%s4422 + $0xe6] sm:$0xff]
      %v4635 = vld [vmem:[%s4422 + $0xf6] sm:$0xff]
      %v4636 = vld [vmem:[%s4422 + $0xfe] sm:$0xff]
      %v4637 = vld [vmem:[%s4422 + $0x10e] sm:$0xff]
      %v4638 = vld [vmem:[%s4422 + $0x116] sm:$0xff]
      %v4639 = vld [vmem:[%s4422 + $0x126] sm:$0xff]
      %v4640 = vld [vmem:[%s4422 + $0x12e] sm:$0xff]
      %v4641 = vld [vmem:[%s4422 + $0x13e] sm:$0xff]
      %v4642 = vld [vmem:[%s4422 + $0x146] sm:$0xff]
      %v4643 = vld [vmem:[%s4422 + $0x156] sm:$0xff]
      %v4644 = vld [vmem:[%s4422 + $0x15e] sm:$0xff]
      %v4645 = vld [vmem:[%s4422 + $0x16e] sm:$0xff]
      %v4646 = vld [vmem:[%s4422 + $0x176] sm:$0xff]
      %s4647 = scalar_lea.vmem [#allocation3], 144
      %v4648 = vld [vmem:[%s4647] sm:$0xff]
      %v4649 = vld [vmem:[%s4647 + $0x8] sm:$0xff]
      %v4650 = vld [vmem:[%s4647 + $0x18] sm:$0xff]
      %v4651 = vld [vmem:[%s4647 + $0x20] sm:$0xff]
      %v4652 = vld [vmem:[%s4647 + $0x30] sm:$0xff]
      %v4653 = vld [vmem:[%s4647 + $0x38] sm:$0xff]
      %v4654 = vld [vmem:[%s4647 + $0x48] sm:$0xff]
      %v4655 = vld [vmem:[%s4647 + $0x50] sm:$0xff]
      %v4656 = vld [vmem:[%s4647 + $0x60] sm:$0xff]
      %v4657 = vld [vmem:[%s4647 + $0x68] sm:$0xff]
      %v4658 = vld [vmem:[%s4647 + $0x78] sm:$0xff]
      %v4659 = vld [vmem:[%s4647 + $0x80] sm:$0xff]
      %v4660 = vld [vmem:[%s4647 + $0x90] sm:$0xff]
      %v4661 = vld [vmem:[%s4647 + $0x98] sm:$0xff]
      %v4662 = vld [vmem:[%s4647 + $0xa8] sm:$0xff]
      %v4663 = vld [vmem:[%s4647 + $0xb0] sm:$0xff]
      %v4664 = vld [vmem:[%s4647 + $0xc0] sm:$0xff]
      %v4665 = vld [vmem:[%s4647 + $0xc8] sm:$0xff]
      %v4666 = vld [vmem:[%s4647 + $0xd8] sm:$0xff]
      %v4667 = vld [vmem:[%s4647 + $0xe0] sm:$0xff]
      %v4668 = vld [vmem:[%s4647 + $0xf0] sm:$0xff]
      %v4669 = vld [vmem:[%s4647 + $0xf8] sm:$0xff]
      %v4670 = vld [vmem:[%s4647 + $0x108] sm:$0xff]
      %v4671 = vld [vmem:[%s4647 + $0x110] sm:$0xff]
      %v4672 = vld [vmem:[%s4647 + $0x120] sm:$0xff]
      %v4673 = vld [vmem:[%s4647 + $0x128] sm:$0xff]
      %v4674 = vld [vmem:[%s4647 + $0x138] sm:$0xff]
      %v4675 = vld [vmem:[%s4647 + $0x140] sm:$0xff]
      %v4676 = vld [vmem:[%s4647 + $0x150] sm:$0xff]
      %v4677 = vld [vmem:[%s4647 + $0x158] sm:$0xff]
      %v4678 = vld [vmem:[%s4647 + $0x168] sm:$0xff]
      %v4679 = vld [vmem:[%s4647 + $0x170] sm:$0xff]
      %v4680 = vld [vmem:[%s4647 + $0x1] sm:$0xff]
      %v4681 = vld [vmem:[%s4647 + $0x9] sm:$0xff]
      %v4682 = vld [vmem:[%s4647 + $0x19] sm:$0xff]
      %v4683 = vld [vmem:[%s4647 + $0x21] sm:$0xff]
      %v4684 = vld [vmem:[%s4647 + $0x31] sm:$0xff]
      %v4685 = vld [vmem:[%s4647 + $0x39] sm:$0xff]
      %v4686 = vld [vmem:[%s4647 + $0x49] sm:$0xff]
      %v4687 = vld [vmem:[%s4647 + $0x51] sm:$0xff]
      %v4688 = vld [vmem:[%s4647 + $0x61] sm:$0xff]
      %v4689 = vld [vmem:[%s4647 + $0x69] sm:$0xff]
      %v4690 = vld [vmem:[%s4647 + $0x79] sm:$0xff]
      %v4691 = vld [vmem:[%s4647 + $0x81] sm:$0xff]
      %v4692 = vld [vmem:[%s4647 + $0x91] sm:$0xff]
      %v4693 = vld [vmem:[%s4647 + $0x99] sm:$0xff]
      %v4694 = vld [vmem:[%s4647 + $0xa9] sm:$0xff]
      %v4695 = vld [vmem:[%s4647 + $0xb1] sm:$0xff]
      %v4696 = vld [vmem:[%s4647 + $0xc1] sm:$0xff]
      %v4697 = vld [vmem:[%s4647 + $0xc9] sm:$0xff]
      %v4698 = vld [vmem:[%s4647 + $0xd9] sm:$0xff]
      %v4699 = vld [vmem:[%s4647 + $0xe1] sm:$0xff]
      %v4700 = vld [vmem:[%s4647 + $0xf1] sm:$0xff]
      %v4701 = vld [vmem:[%s4647 + $0xf9] sm:$0xff]
      %v4702 = vld [vmem:[%s4647 + $0x109] sm:$0xff]
      %v4703 = vld [vmem:[%s4647 + $0x111] sm:$0xff]
      %v4704 = vld [vmem:[%s4647 + $0x121] sm:$0xff]
      %v4705 = vld [vmem:[%s4647 + $0x129] sm:$0xff]
      %v4706 = vld [vmem:[%s4647 + $0x139] sm:$0xff]
      %v4707 = vld [vmem:[%s4647 + $0x141] sm:$0xff]
      %v4708 = vld [vmem:[%s4647 + $0x151] sm:$0xff]
      %v4709 = vld [vmem:[%s4647 + $0x159] sm:$0xff]
      %v4710 = vld [vmem:[%s4647 + $0x169] sm:$0xff]
      %v4711 = vld [vmem:[%s4647 + $0x171] sm:$0xff]
      %v4712 = vld [vmem:[%s4647 + $0x2] sm:$0xff]
      %v4713 = vld [vmem:[%s4647 + $0xa] sm:$0xff]
      %v4714 = vld [vmem:[%s4647 + $0x1a] sm:$0xff]
      %v4715 = vld [vmem:[%s4647 + $0x22] sm:$0xff]
      %v4716 = vld [vmem:[%s4647 + $0x32] sm:$0xff]
      %v4717 = vld [vmem:[%s4647 + $0x3a] sm:$0xff]
      %v4718 = vld [vmem:[%s4647 + $0x4a] sm:$0xff]
      %v4719 = vld [vmem:[%s4647 + $0x52] sm:$0xff]
      %v4720 = vld [vmem:[%s4647 + $0x62] sm:$0xff]
      %v4721 = vld [vmem:[%s4647 + $0x6a] sm:$0xff]
      %v4722 = vld [vmem:[%s4647 + $0x7a] sm:$0xff]
      %v4723 = vld [vmem:[%s4647 + $0x82] sm:$0xff]
      %v4724 = vld [vmem:[%s4647 + $0x92] sm:$0xff]
      %v4725 = vld [vmem:[%s4647 + $0x9a] sm:$0xff]
      %v4726 = vld [vmem:[%s4647 + $0xaa] sm:$0xff]
      %v4727 = vld [vmem:[%s4647 + $0xb2] sm:$0xff]
      %v4728 = vld [vmem:[%s4647 + $0xc2] sm:$0xff]
      %v4729 = vld [vmem:[%s4647 + $0xca] sm:$0xff]
      %v4730 = vld [vmem:[%s4647 + $0xda] sm:$0xff]
      %v4731 = vld [vmem:[%s4647 + $0xe2] sm:$0xff]
      %v4732 = vld [vmem:[%s4647 + $0xf2] sm:$0xff]
      %v4733 = vld [vmem:[%s4647 + $0xfa] sm:$0xff]
      %v4734 = vld [vmem:[%s4647 + $0x10a] sm:$0xff]
      %v4735 = vld [vmem:[%s4647 + $0x112] sm:$0xff]
      %v4736 = vld [vmem:[%s4647 + $0x122] sm:$0xff]
      %v4737 = vld [vmem:[%s4647 + $0x12a] sm:$0xff]
      %v4738 = vld [vmem:[%s4647 + $0x13a] sm:$0xff]
      %v4739 = vld [vmem:[%s4647 + $0x142] sm:$0xff]
      %v4740 = vld [vmem:[%s4647 + $0x152] sm:$0xff]
      %v4741 = vld [vmem:[%s4647 + $0x15a] sm:$0xff]
      %v4742 = vld [vmem:[%s4647 + $0x16a] sm:$0xff]
      %v4743 = vld [vmem:[%s4647 + $0x172] sm:$0xff]
      %v4744 = vld [vmem:[%s4647 + $0x3] sm:$0xff]
      %v4745 = vld [vmem:[%s4647 + $0xb] sm:$0xff]
      %v4746 = vld [vmem:[%s4647 + $0x1b] sm:$0xff]
      %v4747 = vld [vmem:[%s4647 + $0x23] sm:$0xff]
      %v4748 = vld [vmem:[%s4647 + $0x33] sm:$0xff]
      %v4749 = vld [vmem:[%s4647 + $0x3b] sm:$0xff]
      %v4750 = vld [vmem:[%s4647 + $0x4b] sm:$0xff]
      %v4751 = vld [vmem:[%s4647 + $0x53] sm:$0xff]
      %v4752 = vld [vmem:[%s4647 + $0x63] sm:$0xff]
      %v4753 = vld [vmem:[%s4647 + $0x6b] sm:$0xff]
      %v4754 = vld [vmem:[%s4647 + $0x7b] sm:$0xff]
      %v4755 = vld [vmem:[%s4647 + $0x83] sm:$0xff]
      %v4756 = vld [vmem:[%s4647 + $0x93] sm:$0xff]
      %v4757 = vld [vmem:[%s4647 + $0x9b] sm:$0xff]
      %v4758 = vld [vmem:[%s4647 + $0xab] sm:$0xff]
      %v4759 = vld [vmem:[%s4647 + $0xb3] sm:$0xff]
      %v4760 = vld [vmem:[%s4647 + $0xc3] sm:$0xff]
      %v4761 = vld [vmem:[%s4647 + $0xcb] sm:$0xff]
      %v4762 = vld [vmem:[%s4647 + $0xdb] sm:$0xff]
      %v4763 = vld [vmem:[%s4647 + $0xe3] sm:$0xff]
      %v4764 = vld [vmem:[%s4647 + $0xf3] sm:$0xff]
      %v4765 = vld [vmem:[%s4647 + $0xfb] sm:$0xff]
      %v4766 = vld [vmem:[%s4647 + $0x10b] sm:$0xff]
      %v4767 = vld [vmem:[%s4647 + $0x113] sm:$0xff]
      %v4768 = vld [vmem:[%s4647 + $0x123] sm:$0xff]
      %v4769 = vld [vmem:[%s4647 + $0x12b] sm:$0xff]
      %v4770 = vld [vmem:[%s4647 + $0x13b] sm:$0xff]
      %v4771 = vld [vmem:[%s4647 + $0x143] sm:$0xff]
      %v4772 = vld [vmem:[%s4647 + $0x153] sm:$0xff]
      %v4773 = vld [vmem:[%s4647 + $0x15b] sm:$0xff]
      %v4774 = vld [vmem:[%s4647 + $0x16b] sm:$0xff]
      %v4775 = vld [vmem:[%s4647 + $0x173] sm:$0xff]
      %v4776 = vld [vmem:[%s4647 + $0x4] sm:$0xff]
      %v4777 = vld [vmem:[%s4647 + $0xc] sm:$0xff]
      %v4778 = vld [vmem:[%s4647 + $0x1c] sm:$0xff]
      %v4779 = vld [vmem:[%s4647 + $0x24] sm:$0xff]
      %v4780 = vld [vmem:[%s4647 + $0x34] sm:$0xff]
      %v4781 = vld [vmem:[%s4647 + $0x3c] sm:$0xff]
      %v4782 = vld [vmem:[%s4647 + $0x4c] sm:$0xff]
      %v4783 = vld [vmem:[%s4647 + $0x54] sm:$0xff]
      %v4784 = vld [vmem:[%s4647 + $0x64] sm:$0xff]
      %v4785 = vld [vmem:[%s4647 + $0x6c] sm:$0xff]
      %v4786 = vld [vmem:[%s4647 + $0x7c] sm:$0xff]
      %v4787 = vld [vmem:[%s4647 + $0x84] sm:$0xff]
      %v4788 = vld [vmem:[%s4647 + $0x94] sm:$0xff]
      %v4789 = vld [vmem:[%s4647 + $0x9c] sm:$0xff]
      %v4790 = vld [vmem:[%s4647 + $0xac] sm:$0xff]
      %v4791 = vld [vmem:[%s4647 + $0xb4] sm:$0xff]
      %v4792 = vld [vmem:[%s4647 + $0xc4] sm:$0xff]
      %v4793 = vld [vmem:[%s4647 + $0xcc] sm:$0xff]
      %v4794 = vld [vmem:[%s4647 + $0xdc] sm:$0xff]
      %v4795 = vld [vmem:[%s4647 + $0xe4] sm:$0xff]
      %v4796 = vld [vmem:[%s4647 + $0xf4] sm:$0xff]
      %v4797 = vld [vmem:[%s4647 + $0xfc] sm:$0xff]
      %v4798 = vld [vmem:[%s4647 + $0x10c] sm:$0xff]
      %v4799 = vld [vmem:[%s4647 + $0x114] sm:$0xff]
      %v4800 = vld [vmem:[%s4647 + $0x124] sm:$0xff]
      %v4801 = vld [vmem:[%s4647 + $0x12c] sm:$0xff]
      %v4802 = vld [vmem:[%s4647 + $0x13c] sm:$0xff]
      %v4803 = vld [vmem:[%s4647 + $0x144] sm:$0xff]
      %v4804 = vld [vmem:[%s4647 + $0x154] sm:$0xff]
      %v4805 = vld [vmem:[%s4647 + $0x15c] sm:$0xff]
      %v4806 = vld [vmem:[%s4647 + $0x16c] sm:$0xff]
      %v4807 = vld [vmem:[%s4647 + $0x174] sm:$0xff]
      %v4808 = vld [vmem:[%s4647 + $0x5] sm:$0xff]
      %v4809 = vld [vmem:[%s4647 + $0xd] sm:$0xff]
      %v4810 = vld [vmem:[%s4647 + $0x1d] sm:$0xff]
      %v4811 = vld [vmem:[%s4647 + $0x25] sm:$0xff]
      %v4812 = vld [vmem:[%s4647 + $0x35] sm:$0xff]
      %v4813 = vld [vmem:[%s4647 + $0x3d] sm:$0xff]
      %v4814 = vld [vmem:[%s4647 + $0x4d] sm:$0xff]
      %v4815 = vld [vmem:[%s4647 + $0x55] sm:$0xff]
      %v4816 = vld [vmem:[%s4647 + $0x65] sm:$0xff]
      %v4817 = vld [vmem:[%s4647 + $0x6d] sm:$0xff]
      %v4818 = vld [vmem:[%s4647 + $0x7d] sm:$0xff]
      %v4819 = vld [vmem:[%s4647 + $0x85] sm:$0xff]
      %v4820 = vld [vmem:[%s4647 + $0x95] sm:$0xff]
      %v4821 = vld [vmem:[%s4647 + $0x9d] sm:$0xff]
      %v4822 = vld [vmem:[%s4647 + $0xad] sm:$0xff]
      %v4823 = vld [vmem:[%s4647 + $0xb5] sm:$0xff]
      %v4824 = vld [vmem:[%s4647 + $0xc5] sm:$0xff]
      %v4825 = vld [vmem:[%s4647 + $0xcd] sm:$0xff]
      %v4826 = vld [vmem:[%s4647 + $0xdd] sm:$0xff]
      %v4827 = vld [vmem:[%s4647 + $0xe5] sm:$0xff]
      %v4828 = vld [vmem:[%s4647 + $0xf5] sm:$0xff]
      %v4829 = vld [vmem:[%s4647 + $0xfd] sm:$0xff]
      %v4830 = vld [vmem:[%s4647 + $0x10d] sm:$0xff]
      %v4831 = vld [vmem:[%s4647 + $0x115] sm:$0xff]
      %v4832 = vld [vmem:[%s4647 + $0x125] sm:$0xff]
      %v4833 = vld [vmem:[%s4647 + $0x12d] sm:$0xff]
      %v4834 = vld [vmem:[%s4647 + $0x13d] sm:$0xff]
      %v4835 = vld [vmem:[%s4647 + $0x145] sm:$0xff]
      %v4836 = vld [vmem:[%s4647 + $0x155] sm:$0xff]
      %v4837 = vld [vmem:[%s4647 + $0x15d] sm:$0xff]
      %v4838 = vld [vmem:[%s4647 + $0x16d] sm:$0xff]
      %v4839 = vld [vmem:[%s4647 + $0x175] sm:$0xff]
      %v4840 = vld [vmem:[%s4647 + $0x6] sm:$0xff]
      %v4841 = vld [vmem:[%s4647 + $0xe] sm:$0xff]
      %v4842 = vld [vmem:[%s4647 + $0x1e] sm:$0xff]
      %v4843 = vld [vmem:[%s4647 + $0x26] sm:$0xff]
      %v4844 = vld [vmem:[%s4647 + $0x36] sm:$0xff]
      %v4845 = vld [vmem:[%s4647 + $0x3e] sm:$0xff]
      %v4846 = vld [vmem:[%s4647 + $0x4e] sm:$0xff]
      %v4847 = vld [vmem:[%s4647 + $0x56] sm:$0xff]
      %v4848 = vld [vmem:[%s4647 + $0x66] sm:$0xff]
      %v4849 = vld [vmem:[%s4647 + $0x6e] sm:$0xff]
      %v4850 = vld [vmem:[%s4647 + $0x7e] sm:$0xff]
      %v4851 = vld [vmem:[%s4647 + $0x86] sm:$0xff]
      %v4852 = vld [vmem:[%s4647 + $0x96] sm:$0xff]
      %v4853 = vld [vmem:[%s4647 + $0x9e] sm:$0xff]
      %v4854 = vld [vmem:[%s4647 + $0xae] sm:$0xff]
      %v4855 = vld [vmem:[%s4647 + $0xb6] sm:$0xff]
      %v4856 = vld [vmem:[%s4647 + $0xc6] sm:$0xff]
      %v4857 = vld [vmem:[%s4647 + $0xce] sm:$0xff]
      %v4858 = vld [vmem:[%s4647 + $0xde] sm:$0xff]
      %v4859 = vld [vmem:[%s4647 + $0xe6] sm:$0xff]
      %v4860 = vld [vmem:[%s4647 + $0xf6] sm:$0xff]
      %v4861 = vld [vmem:[%s4647 + $0xfe] sm:$0xff]
      %v4862 = vld [vmem:[%s4647 + $0x10e] sm:$0xff]
      %v4863 = vld [vmem:[%s4647 + $0x116] sm:$0xff]
      %v4864 = vld [vmem:[%s4647 + $0x126] sm:$0xff]
      %v4865 = vld [vmem:[%s4647 + $0x12e] sm:$0xff]
      %v4866 = vld [vmem:[%s4647 + $0x13e] sm:$0xff]
      %v4867 = vld [vmem:[%s4647 + $0x146] sm:$0xff]
      %v4868 = vld [vmem:[%s4647 + $0x156] sm:$0xff]
      %v4869 = vld [vmem:[%s4647 + $0x15e] sm:$0xff]
      %v4870 = vld [vmem:[%s4647 + $0x16e] sm:$0xff]
      %v4871 = vld [vmem:[%s4647 + $0x176] sm:$0xff]
      %4904 = vrot.lane.b32.xlu0 %v3331, 2
      %v4905 = vpop.permute.xlu0 %4904
      %4906 = vrot.lane.b32.xlu0 %v3332, 2
      %v4907 = vpop.permute.xlu0 %4906
      %4908 = vrot.lane.b32.xlu0 %v3333, 2
      %v4909 = vpop.permute.xlu0 %4908
      %4910 = vrot.lane.b32.xlu0 %v3334, 2
      %v4911 = vpop.permute.xlu0 %4910
      %4912 = vrot.lane.b32.xlu0 %v3335, 2
      %v4913 = vpop.permute.xlu0 %4912
      %4914 = vrot.lane.b32.xlu0 %v3336, 2
      %v4915 = vpop.permute.xlu0 %4914
      %4916 = vrot.lane.b32.xlu0 %v3337, 2
      %v4917 = vpop.permute.xlu0 %4916
      %4918 = vrot.lane.b32.xlu0 %v3338, 2
      %v4919 = vpop.permute.xlu0 %4918
      %4920 = vrot.lane.b32.xlu0 %v3339, 2
      %v4921 = vpop.permute.xlu0 %4920
      %4922 = vrot.lane.b32.xlu0 %v3340, 2
      %v4923 = vpop.permute.xlu0 %4922
      %4924 = vrot.lane.b32.xlu0 %v3341, 2
      %v4925 = vpop.permute.xlu0 %4924
      %4926 = vrot.lane.b32.xlu0 %v3342, 2
      %v4927 = vpop.permute.xlu0 %4926
      %4928 = vrot.lane.b32.xlu0 %v3343, 2
      %v4929 = vpop.permute.xlu0 %4928
      %4930 = vrot.lane.b32.xlu0 %v3344, 2
      %v4931 = vpop.permute.xlu0 %4930
      %4932 = vrot.lane.b32.xlu0 %v3345, 2
      %v4933 = vpop.permute.xlu0 %4932
      %4934 = vrot.lane.b32.xlu0 %v3346, 2
      %v4935 = vpop.permute.xlu0 %4934
      %4936 = vrot.lane.b32.xlu0 %v3347, 2
      %v4937 = vpop.permute.xlu0 %4936
      %4938 = vrot.lane.b32.xlu0 %v3348, 2
      %v4939 = vpop.permute.xlu0 %4938
      %4940 = vrot.lane.b32.xlu0 %v3349, 2
      %v4941 = vpop.permute.xlu0 %4940
      %4942 = vrot.lane.b32.xlu0 %v3350, 2
      %v4943 = vpop.permute.xlu0 %4942
      %4944 = vrot.lane.b32.xlu0 %v3351, 2
      %v4945 = vpop.permute.xlu0 %4944
      %4946 = vrot.lane.b32.xlu0 %v3352, 2
      %v4947 = vpop.permute.xlu0 %4946
      %4948 = vrot.lane.b32.xlu0 %v3353, 2
      %v4949 = vpop.permute.xlu0 %4948
      %4950 = vrot.lane.b32.xlu0 %v3354, 2
      %v4951 = vpop.permute.xlu0 %4950
      %4952 = vrot.lane.b32.xlu0 %v3355, 2
      %v4953 = vpop.permute.xlu0 %4952
      %4954 = vrot.lane.b32.xlu0 %v3356, 2
      %v4955 = vpop.permute.xlu0 %4954
      %4956 = vrot.lane.b32.xlu0 %v3357, 2
      %v4957 = vpop.permute.xlu0 %4956
      %4958 = vrot.lane.b32.xlu0 %v3358, 2
      %v4959 = vpop.permute.xlu0 %4958
      %4960 = vrot.lane.b32.xlu0 %v3359, 2
      %v4961 = vpop.permute.xlu0 %4960
      %4962 = vrot.lane.b32.xlu0 %v3360, 2
      %v4963 = vpop.permute.xlu0 %4962
      %4964 = vrot.lane.b32.xlu0 %v3361, 2
      %v4965 = vpop.permute.xlu0 %4964
      %4966 = vrot.lane.b32.xlu0 %v3362, 2
      %v4967 = vpop.permute.xlu0 %4966
      %5032 = vrot.lane.b32.xlu0 %v3363, 4
      %v5033 = vpop.permute.xlu0 %5032
      %5034 = vrot.lane.b32.xlu0 %v3364, 4
      %v5035 = vpop.permute.xlu0 %5034
      %5036 = vrot.lane.b32.xlu0 %v3365, 4
      %v5037 = vpop.permute.xlu0 %5036
      %5038 = vrot.lane.b32.xlu0 %v3366, 4
      %v5039 = vpop.permute.xlu0 %5038
      %5040 = vrot.lane.b32.xlu0 %v3367, 4
      %v5041 = vpop.permute.xlu0 %5040
      %5042 = vrot.lane.b32.xlu0 %v3368, 4
      %v5043 = vpop.permute.xlu0 %5042
      %5044 = vrot.lane.b32.xlu0 %v3369, 4
      %v5045 = vpop.permute.xlu0 %5044
      %5046 = vrot.lane.b32.xlu0 %v3370, 4
      %v5047 = vpop.permute.xlu0 %5046
      %5048 = vrot.lane.b32.xlu0 %v3371, 4
      %v5049 = vpop.permute.xlu0 %5048
      %5050 = vrot.lane.b32.xlu0 %v3372, 4
      %v5051 = vpop.permute.xlu0 %5050
      %5052 = vrot.lane.b32.xlu0 %v3373, 4
      %v5053 = vpop.permute.xlu0 %5052
      %5054 = vrot.lane.b32.xlu0 %v3374, 4
      %v5055 = vpop.permute.xlu0 %5054
      %5056 = vrot.lane.b32.xlu0 %v3375, 4
      %v5057 = vpop.permute.xlu0 %5056
      %5058 = vrot.lane.b32.xlu0 %v3376, 4
      %v5059 = vpop.permute.xlu0 %5058
      %5060 = vrot.lane.b32.xlu0 %v3377, 4
      %v5061 = vpop.permute.xlu0 %5060
      %5062 = vrot.lane.b32.xlu0 %v3378, 4
      %v5063 = vpop.permute.xlu0 %5062
      %5064 = vrot.lane.b32.xlu0 %v3379, 4
      %v5065 = vpop.permute.xlu0 %5064
      %5066 = vrot.lane.b32.xlu0 %v3380, 4
      %v5067 = vpop.permute.xlu0 %5066
      %5068 = vrot.lane.b32.xlu0 %v3381, 4
      %v5069 = vpop.permute.xlu0 %5068
      %5070 = vrot.lane.b32.xlu0 %v3382, 4
      %v5071 = vpop.permute.xlu0 %5070
      %5072 = vrot.lane.b32.xlu0 %v3383, 4
      %v5073 = vpop.permute.xlu0 %5072
      %5074 = vrot.lane.b32.xlu0 %v3384, 4
      %v5075 = vpop.permute.xlu0 %5074
      %5076 = vrot.lane.b32.xlu0 %v3385, 4
      %v5077 = vpop.permute.xlu0 %5076
      %5078 = vrot.lane.b32.xlu0 %v3386, 4
      %v5079 = vpop.permute.xlu0 %5078
      %5080 = vrot.lane.b32.xlu0 %v3387, 4
      %v5081 = vpop.permute.xlu0 %5080
      %5082 = vrot.lane.b32.xlu0 %v3388, 4
      %v5083 = vpop.permute.xlu0 %5082
      %5084 = vrot.lane.b32.xlu0 %v3389, 4
      %v5085 = vpop.permute.xlu0 %5084
      %5086 = vrot.lane.b32.xlu0 %v3390, 4
      %v5087 = vpop.permute.xlu0 %5086
      %5088 = vrot.lane.b32.xlu0 %v3391, 4
      %v5089 = vpop.permute.xlu0 %5088
      %5090 = vrot.lane.b32.xlu0 %v3392, 4
      %v5091 = vpop.permute.xlu0 %5090
      %5092 = vrot.lane.b32.xlu0 %v3393, 4
      %v5093 = vpop.permute.xlu0 %5092
      %5094 = vrot.lane.b32.xlu0 %v3394, 4
      %v5095 = vpop.permute.xlu0 %5094
      %5160 = vrot.lane.b32.xlu0 %v3395, 6
      %v5161 = vpop.permute.xlu0 %5160
      %5162 = vrot.lane.b32.xlu0 %v3396, 6
      %v5163 = vpop.permute.xlu0 %5162
      %5164 = vrot.lane.b32.xlu0 %v3397, 6
      %v5165 = vpop.permute.xlu0 %5164
      %5166 = vrot.lane.b32.xlu0 %v3398, 6
      %v5167 = vpop.permute.xlu0 %5166
      %5168 = vrot.lane.b32.xlu0 %v3399, 6
      %v5169 = vpop.permute.xlu0 %5168
      %5170 = vrot.lane.b32.xlu0 %v3400, 6
      %v5171 = vpop.permute.xlu0 %5170
      %5172 = vrot.lane.b32.xlu0 %v3401, 6
      %v5173 = vpop.permute.xlu0 %5172
      %5174 = vrot.lane.b32.xlu0 %v3402, 6
      %v5175 = vpop.permute.xlu0 %5174
      %5176 = vrot.lane.b32.xlu0 %v3403, 6
      %v5177 = vpop.permute.xlu0 %5176
      %5178 = vrot.lane.b32.xlu0 %v3404, 6
      %v5179 = vpop.permute.xlu0 %5178
      %5180 = vrot.lane.b32.xlu0 %v3405, 6
      %v5181 = vpop.permute.xlu0 %5180
      %5182 = vrot.lane.b32.xlu0 %v3406, 6
      %v5183 = vpop.permute.xlu0 %5182
      %5184 = vrot.lane.b32.xlu0 %v3407, 6
      %v5185 = vpop.permute.xlu0 %5184
      %5186 = vrot.lane.b32.xlu0 %v3408, 6
      %v5187 = vpop.permute.xlu0 %5186
      %5188 = vrot.lane.b32.xlu0 %v3409, 6
      %v5189 = vpop.permute.xlu0 %5188
      %5190 = vrot.lane.b32.xlu0 %v3410, 6
      %v5191 = vpop.permute.xlu0 %5190
      %5192 = vrot.lane.b32.xlu0 %v3411, 6
      %v5193 = vpop.permute.xlu0 %5192
      %5194 = vrot.lane.b32.xlu0 %v3412, 6
      %v5195 = vpop.permute.xlu0 %5194
      %5196 = vrot.lane.b32.xlu0 %v3413, 6
      %v5197 = vpop.permute.xlu0 %5196
      %5198 = vrot.lane.b32.xlu0 %v3414, 6
      %v5199 = vpop.permute.xlu0 %5198
      %5200 = vrot.lane.b32.xlu0 %v3415, 6
      %v5201 = vpop.permute.xlu0 %5200
      %5202 = vrot.lane.b32.xlu0 %v3416, 6
      %v5203 = vpop.permute.xlu0 %5202
      %5204 = vrot.lane.b32.xlu0 %v3417, 6
      %v5205 = vpop.permute.xlu0 %5204
      %5206 = vrot.lane.b32.xlu0 %v3418, 6
      %v5207 = vpop.permute.xlu0 %5206
      %5208 = vrot.lane.b32.xlu0 %v3419, 6
      %v5209 = vpop.permute.xlu0 %5208
      %5210 = vrot.lane.b32.xlu0 %v3420, 6
      %v5211 = vpop.permute.xlu0 %5210
      %5212 = vrot.lane.b32.xlu0 %v3421, 6
      %v5213 = vpop.permute.xlu0 %5212
      %5214 = vrot.lane.b32.xlu0 %v3422, 6
      %v5215 = vpop.permute.xlu0 %5214
      %5216 = vrot.lane.b32.xlu0 %v3423, 6
      %v5217 = vpop.permute.xlu0 %5216
      %5218 = vrot.lane.b32.xlu0 %v3424, 6
      %v5219 = vpop.permute.xlu0 %5218
      %5220 = vrot.lane.b32.xlu0 %v3425, 6
      %v5221 = vpop.permute.xlu0 %5220
      %5222 = vrot.lane.b32.xlu0 %v3426, 6
      %v5223 = vpop.permute.xlu0 %5222
      %5288 = vrot.lane.b32.xlu0 %v3427, 8
      %v5289 = vpop.permute.xlu0 %5288
      %5290 = vrot.lane.b32.xlu0 %v3428, 8
      %v5291 = vpop.permute.xlu0 %5290
      %5292 = vrot.lane.b32.xlu0 %v3429, 8
      %v5293 = vpop.permute.xlu0 %5292
      %5294 = vrot.lane.b32.xlu0 %v3430, 8
      %v5295 = vpop.permute.xlu0 %5294
      %5296 = vrot.lane.b32.xlu0 %v3431, 8
      %v5297 = vpop.permute.xlu0 %5296
      %5298 = vrot.lane.b32.xlu0 %v3432, 8
      %v5299 = vpop.permute.xlu0 %5298
      %5300 = vrot.lane.b32.xlu0 %v3433, 8
      %v5301 = vpop.permute.xlu0 %5300
      %5302 = vrot.lane.b32.xlu0 %v3434, 8
      %v5303 = vpop.permute.xlu0 %5302
      %5304 = vrot.lane.b32.xlu0 %v3435, 8
      %v5305 = vpop.permute.xlu0 %5304
      %5306 = vrot.lane.b32.xlu0 %v3436, 8
      %v5307 = vpop.permute.xlu0 %5306
      %5308 = vrot.lane.b32.xlu0 %v3437, 8
      %v5309 = vpop.permute.xlu0 %5308
      %5310 = vrot.lane.b32.xlu0 %v3438, 8
      %v5311 = vpop.permute.xlu0 %5310
      %5312 = vrot.lane.b32.xlu0 %v3439, 8
      %v5313 = vpop.permute.xlu0 %5312
      %5314 = vrot.lane.b32.xlu0 %v3440, 8
      %v5315 = vpop.permute.xlu0 %5314
      %5316 = vrot.lane.b32.xlu0 %v3441, 8
      %v5317 = vpop.permute.xlu0 %5316
      %5318 = vrot.lane.b32.xlu0 %v3442, 8
      %v5319 = vpop.permute.xlu0 %5318
      %5320 = vrot.lane.b32.xlu0 %v3443, 8
      %v5321 = vpop.permute.xlu0 %5320
      %5322 = vrot.lane.b32.xlu0 %v3444, 8
      %v5323 = vpop.permute.xlu0 %5322
      %5324 = vrot.lane.b32.xlu0 %v3445, 8
      %v5325 = vpop.permute.xlu0 %5324
      %5326 = vrot.lane.b32.xlu0 %v3446, 8
      %v5327 = vpop.permute.xlu0 %5326
      %5328 = vrot.lane.b32.xlu0 %v3447, 8
      %v5329 = vpop.permute.xlu0 %5328
      %5330 = vrot.lane.b32.xlu0 %v3448, 8
      %v5331 = vpop.permute.xlu0 %5330
      %5332 = vrot.lane.b32.xlu0 %v3449, 8
      %v5333 = vpop.permute.xlu0 %5332
      %5334 = vrot.lane.b32.xlu0 %v3450, 8
      %v5335 = vpop.permute.xlu0 %5334
      %5336 = vrot.lane.b32.xlu0 %v3451, 8
      %v5337 = vpop.permute.xlu0 %5336
      %5338 = vrot.lane.b32.xlu0 %v3452, 8
      %v5339 = vpop.permute.xlu0 %5338
      %5340 = vrot.lane.b32.xlu0 %v3453, 8
      %v5341 = vpop.permute.xlu0 %5340
      %5342 = vrot.lane.b32.xlu0 %v3454, 8
      %v5343 = vpop.permute.xlu0 %5342
      %5344 = vrot.lane.b32.xlu0 %v3455, 8
      %v5345 = vpop.permute.xlu0 %5344
      %5346 = vrot.lane.b32.xlu0 %v3456, 8
      %v5347 = vpop.permute.xlu0 %5346
      %5348 = vrot.lane.b32.xlu0 %v3457, 8
      %v5349 = vpop.permute.xlu0 %5348
      %5350 = vrot.lane.b32.xlu0 %v3458, 8
      %v5351 = vpop.permute.xlu0 %5350
      %5416 = vrot.lane.b32.xlu0 %v3459, 10
      %v5417 = vpop.permute.xlu0 %5416
      %5418 = vrot.lane.b32.xlu0 %v3460, 10
      %v5419 = vpop.permute.xlu0 %5418
      %5420 = vrot.lane.b32.xlu0 %v3461, 10
      %v5421 = vpop.permute.xlu0 %5420
      %5422 = vrot.lane.b32.xlu0 %v3462, 10
      %v5423 = vpop.permute.xlu0 %5422
      %5424 = vrot.lane.b32.xlu0 %v3463, 10
      %v5425 = vpop.permute.xlu0 %5424
      %5426 = vrot.lane.b32.xlu0 %v3464, 10
      %v5427 = vpop.permute.xlu0 %5426
      %5428 = vrot.lane.b32.xlu0 %v3465, 10
      %v5429 = vpop.permute.xlu0 %5428
      %5430 = vrot.lane.b32.xlu0 %v3466, 10
      %v5431 = vpop.permute.xlu0 %5430
      %5432 = vrot.lane.b32.xlu0 %v3467, 10
      %v5433 = vpop.permute.xlu0 %5432
      %5434 = vrot.lane.b32.xlu0 %v3468, 10
      %v5435 = vpop.permute.xlu0 %5434
      %5436 = vrot.lane.b32.xlu0 %v3469, 10
      %v5437 = vpop.permute.xlu0 %5436
      %5438 = vrot.lane.b32.xlu0 %v3470, 10
      %v5439 = vpop.permute.xlu0 %5438
      %5440 = vrot.lane.b32.xlu0 %v3471, 10
      %v5441 = vpop.permute.xlu0 %5440
      %5442 = vrot.lane.b32.xlu0 %v3472, 10
      %v5443 = vpop.permute.xlu0 %5442
      %5444 = vrot.lane.b32.xlu0 %v3473, 10
      %v5445 = vpop.permute.xlu0 %5444
      %5446 = vrot.lane.b32.xlu0 %v3474, 10
      %v5447 = vpop.permute.xlu0 %5446
      %5448 = vrot.lane.b32.xlu0 %v3475, 10
      %v5449 = vpop.permute.xlu0 %5448
      %5450 = vrot.lane.b32.xlu0 %v3476, 10
      %v5451 = vpop.permute.xlu0 %5450
      %5452 = vrot.lane.b32.xlu0 %v3477, 10
      %v5453 = vpop.permute.xlu0 %5452
      %5454 = vrot.lane.b32.xlu0 %v3478, 10
      %v5455 = vpop.permute.xlu0 %5454
      %5456 = vrot.lane.b32.xlu0 %v3479, 10
      %v5457 = vpop.permute.xlu0 %5456
      %5458 = vrot.lane.b32.xlu0 %v3480, 10
      %v5459 = vpop.permute.xlu0 %5458
      %5460 = vrot.lane.b32.xlu0 %v3481, 10
      %v5461 = vpop.permute.xlu0 %5460
      %5462 = vrot.lane.b32.xlu0 %v3482, 10
      %v5463 = vpop.permute.xlu0 %5462
      %5464 = vrot.lane.b32.xlu0 %v3483, 10
      %v5465 = vpop.permute.xlu0 %5464
      %5466 = vrot.lane.b32.xlu0 %v3484, 10
      %v5467 = vpop.permute.xlu0 %5466
      %5468 = vrot.lane.b32.xlu0 %v3485, 10
      %v5469 = vpop.permute.xlu0 %5468
      %5470 = vrot.lane.b32.xlu0 %v3486, 10
      %v5471 = vpop.permute.xlu0 %5470
      %5472 = vrot.lane.b32.xlu0 %v3487, 10
      %v5473 = vpop.permute.xlu0 %5472
      %5474 = vrot.lane.b32.xlu0 %v3488, 10
      %v5475 = vpop.permute.xlu0 %5474
      %5476 = vrot.lane.b32.xlu0 %v3489, 10
      %v5477 = vpop.permute.xlu0 %5476
      %5478 = vrot.lane.b32.xlu0 %v3490, 10
      %v5479 = vpop.permute.xlu0 %5478
      %5544 = vrot.lane.b32.xlu0 %v3491, 12
      %v5545 = vpop.permute.xlu0 %5544
      %5546 = vrot.lane.b32.xlu0 %v3492, 12
      %v5547 = vpop.permute.xlu0 %5546
      %5548 = vrot.lane.b32.xlu0 %v3493, 12
      %v5549 = vpop.permute.xlu0 %5548
      %5550 = vrot.lane.b32.xlu0 %v3494, 12
      %v5551 = vpop.permute.xlu0 %5550
      %5552 = vrot.lane.b32.xlu0 %v3495, 12
      %v5553 = vpop.permute.xlu0 %5552
      %5554 = vrot.lane.b32.xlu0 %v3496, 12
      %v5555 = vpop.permute.xlu0 %5554
      %5556 = vrot.lane.b32.xlu0 %v3497, 12
      %v5557 = vpop.permute.xlu0 %5556
      %5558 = vrot.lane.b32.xlu0 %v3498, 12
      %v5559 = vpop.permute.xlu0 %5558
      %5560 = vrot.lane.b32.xlu0 %v3499, 12
      %v5561 = vpop.permute.xlu0 %5560
      %5562 = vrot.lane.b32.xlu0 %v3500, 12
      %v5563 = vpop.permute.xlu0 %5562
      %5564 = vrot.lane.b32.xlu0 %v3501, 12
      %v5565 = vpop.permute.xlu0 %5564
      %5566 = vrot.lane.b32.xlu0 %v3502, 12
      %v5567 = vpop.permute.xlu0 %5566
      %5568 = vrot.lane.b32.xlu0 %v3503, 12
      %v5569 = vpop.permute.xlu0 %5568
      %5570 = vrot.lane.b32.xlu0 %v3504, 12
      %v5571 = vpop.permute.xlu0 %5570
      %5572 = vrot.lane.b32.xlu0 %v3505, 12
      %v5573 = vpop.permute.xlu0 %5572
      %5574 = vrot.lane.b32.xlu0 %v3506, 12
      %v5575 = vpop.permute.xlu0 %5574
      %5576 = vrot.lane.b32.xlu0 %v3507, 12
      %v5577 = vpop.permute.xlu0 %5576
      %5578 = vrot.lane.b32.xlu0 %v3508, 12
      %v5579 = vpop.permute.xlu0 %5578
      %5580 = vrot.lane.b32.xlu0 %v3509, 12
      %v5581 = vpop.permute.xlu0 %5580
      %5582 = vrot.lane.b32.xlu0 %v3510, 12
      %v5583 = vpop.permute.xlu0 %5582
      %5584 = vrot.lane.b32.xlu0 %v3511, 12
      %v5585 = vpop.permute.xlu0 %5584
      %5586 = vrot.lane.b32.xlu0 %v3512, 12
      %v5587 = vpop.permute.xlu0 %5586
      %5588 = vrot.lane.b32.xlu0 %v3513, 12
      %v5589 = vpop.permute.xlu0 %5588
      %5590 = vrot.lane.b32.xlu0 %v3514, 12
      %v5591 = vpop.permute.xlu0 %5590
      %5592 = vrot.lane.b32.xlu0 %v3515, 12
      %v5593 = vpop.permute.xlu0 %5592
      %5594 = vrot.lane.b32.xlu0 %v3516, 12
      %v5595 = vpop.permute.xlu0 %5594
      %5596 = vrot.lane.b32.xlu0 %v3517, 12
      %v5597 = vpop.permute.xlu0 %5596
      %5598 = vrot.lane.b32.xlu0 %v3518, 12
      %v5599 = vpop.permute.xlu0 %5598
      %5600 = vrot.lane.b32.xlu0 %v3519, 12
      %v5601 = vpop.permute.xlu0 %5600
      %5602 = vrot.lane.b32.xlu0 %v3520, 12
      %v5603 = vpop.permute.xlu0 %5602
      %5604 = vrot.lane.b32.xlu0 %v3521, 12
      %v5605 = vpop.permute.xlu0 %5604
      %5606 = vrot.lane.b32.xlu0 %v3522, 12
      %v5607 = vpop.permute.xlu0 %5606
      %5672 = vrot.lane.b32.xlu0 %v3524, 14
      %v5673 = vpop.permute.xlu0 %5672
      %5674 = vrot.lane.b32.xlu0 %v3525, 14
      %v5675 = vpop.permute.xlu0 %5674
      %5676 = vrot.lane.b32.xlu0 %v3526, 14
      %v5677 = vpop.permute.xlu0 %5676
      %5678 = vrot.lane.b32.xlu0 %v3527, 14
      %v5679 = vpop.permute.xlu0 %5678
      %5680 = vrot.lane.b32.xlu0 %v3528, 14
      %v5681 = vpop.permute.xlu0 %5680
      %5682 = vrot.lane.b32.xlu0 %v3529, 14
      %v5683 = vpop.permute.xlu0 %5682
      %5684 = vrot.lane.b32.xlu0 %v3530, 14
      %v5685 = vpop.permute.xlu0 %5684
      %5686 = vrot.lane.b32.xlu0 %v3531, 14
      %v5687 = vpop.permute.xlu0 %5686
      %5688 = vrot.lane.b32.xlu0 %v3532, 14
      %v5689 = vpop.permute.xlu0 %5688
      %5690 = vrot.lane.b32.xlu0 %v3533, 14
      %v5691 = vpop.permute.xlu0 %5690
      %5692 = vrot.lane.b32.xlu0 %v3534, 14
      %v5693 = vpop.permute.xlu0 %5692
      %5694 = vrot.lane.b32.xlu0 %v3535, 14
      %v5695 = vpop.permute.xlu0 %5694
      %5696 = vrot.lane.b32.xlu0 %v3536, 14
      %v5697 = vpop.permute.xlu0 %5696
      %5698 = vrot.lane.b32.xlu0 %v3537, 14
      %v5699 = vpop.permute.xlu0 %5698
      %5700 = vrot.lane.b32.xlu0 %v3538, 14
      %v5701 = vpop.permute.xlu0 %5700
      %5702 = vrot.lane.b32.xlu0 %v3539, 14
      %v5703 = vpop.permute.xlu0 %5702
      %5704 = vrot.lane.b32.xlu0 %v3540, 14
      %v5705 = vpop.permute.xlu0 %5704
      %5706 = vrot.lane.b32.xlu0 %v3541, 14
      %v5707 = vpop.permute.xlu0 %5706
      %5708 = vrot.lane.b32.xlu0 %v3542, 14
      %v5709 = vpop.permute.xlu0 %5708
      %5710 = vrot.lane.b32.xlu0 %v3543, 14
      %v5711 = vpop.permute.xlu0 %5710
      %5712 = vrot.lane.b32.xlu0 %v3544, 14
      %v5713 = vpop.permute.xlu0 %5712
      %5714 = vrot.lane.b32.xlu0 %v3545, 14
      %v5715 = vpop.permute.xlu0 %5714
      %5716 = vrot.lane.b32.xlu0 %v3546, 14
      %v5717 = vpop.permute.xlu0 %5716
      %5718 = vrot.lane.b32.xlu0 %v3547, 14
      %v5719 = vpop.permute.xlu0 %5718
      %5720 = vrot.lane.b32.xlu0 %v3548, 14
      %v5721 = vpop.permute.xlu0 %5720
      %5722 = vrot.lane.b32.xlu0 %v3549, 14
      %v5723 = vpop.permute.xlu0 %5722
      %5724 = vrot.lane.b32.xlu0 %v3550, 14
      %v5725 = vpop.permute.xlu0 %5724
      %5726 = vrot.lane.b32.xlu0 %v3551, 14
      %v5727 = vpop.permute.xlu0 %5726
      %5728 = vrot.lane.b32.xlu0 %v3552, 14
      %v5729 = vpop.permute.xlu0 %5728
      %5730 = vrot.lane.b32.xlu0 %v3553, 14
      %v5731 = vpop.permute.xlu0 %5730
      %5732 = vrot.lane.b32.xlu0 %v3554, 14
      %v5733 = vpop.permute.xlu0 %5732
      %5734 = vrot.lane.b32.xlu0 %v3555, 14
      %v5735 = vpop.permute.xlu0 %5734
      %5800 = vrot.lane.b32.xlu0 %v3556, 16
      %v5801 = vpop.permute.xlu0 %5800
      %5802 = vrot.lane.b32.xlu0 %v3557, 16
      %v5803 = vpop.permute.xlu0 %5802
      %5804 = vrot.lane.b32.xlu0 %v3558, 16
      %v5805 = vpop.permute.xlu0 %5804
      %5806 = vrot.lane.b32.xlu0 %v3559, 16
      %v5807 = vpop.permute.xlu0 %5806
      %5808 = vrot.lane.b32.xlu0 %v3560, 16
      %v5809 = vpop.permute.xlu0 %5808
      %5810 = vrot.lane.b32.xlu0 %v3561, 16
      %v5811 = vpop.permute.xlu0 %5810
      %5812 = vrot.lane.b32.xlu0 %v3562, 16
      %v5813 = vpop.permute.xlu0 %5812
      %5814 = vrot.lane.b32.xlu0 %v3563, 16
      %v5815 = vpop.permute.xlu0 %5814
      %5816 = vrot.lane.b32.xlu0 %v3564, 16
      %v5817 = vpop.permute.xlu0 %5816
      %5818 = vrot.lane.b32.xlu0 %v3565, 16
      %v5819 = vpop.permute.xlu0 %5818
      %5820 = vrot.lane.b32.xlu0 %v3566, 16
      %v5821 = vpop.permute.xlu0 %5820
      %5822 = vrot.lane.b32.xlu0 %v3567, 16
      %v5823 = vpop.permute.xlu0 %5822
      %5824 = vrot.lane.b32.xlu0 %v3568, 16
      %v5825 = vpop.permute.xlu0 %5824
      %5826 = vrot.lane.b32.xlu0 %v3569, 16
      %v5827 = vpop.permute.xlu0 %5826
      %5828 = vrot.lane.b32.xlu0 %v3570, 16
      %v5829 = vpop.permute.xlu0 %5828
      %5830 = vrot.lane.b32.xlu0 %v3571, 16
      %v5831 = vpop.permute.xlu0 %5830
      %5832 = vrot.lane.b32.xlu0 %v3572, 16
      %v5833 = vpop.permute.xlu0 %5832
      %5834 = vrot.lane.b32.xlu0 %v3573, 16
      %v5835 = vpop.permute.xlu0 %5834
      %5836 = vrot.lane.b32.xlu0 %v3574, 16
      %v5837 = vpop.permute.xlu0 %5836
      %5838 = vrot.lane.b32.xlu0 %v3575, 16
      %v5839 = vpop.permute.xlu0 %5838
      %5840 = vrot.lane.b32.xlu0 %v3576, 16
      %v5841 = vpop.permute.xlu0 %5840
      %5842 = vrot.lane.b32.xlu0 %v3577, 16
      %v5843 = vpop.permute.xlu0 %5842
      %5844 = vrot.lane.b32.xlu0 %v3578, 16
      %v5845 = vpop.permute.xlu0 %5844
      %5846 = vrot.lane.b32.xlu0 %v3579, 16
      %v5847 = vpop.permute.xlu0 %5846
      %5848 = vrot.lane.b32.xlu0 %v3580, 16
      %v5849 = vpop.permute.xlu0 %5848
      %5850 = vrot.lane.b32.xlu0 %v3581, 16
      %v5851 = vpop.permute.xlu0 %5850
      %5852 = vrot.lane.b32.xlu0 %v3582, 16
      %v5853 = vpop.permute.xlu0 %5852
      %5854 = vrot.lane.b32.xlu0 %v3583, 16
      %v5855 = vpop.permute.xlu0 %5854
      %5856 = vrot.lane.b32.xlu0 %v3584, 16
      %v5857 = vpop.permute.xlu0 %5856
      %5858 = vrot.lane.b32.xlu0 %v3585, 16
      %v5859 = vpop.permute.xlu0 %5858
      %5860 = vrot.lane.b32.xlu0 %v3586, 16
      %v5861 = vpop.permute.xlu0 %5860
      %5862 = vrot.lane.b32.xlu0 %v3587, 16
      %v5863 = vpop.permute.xlu0 %5862
      %5928 = vrot.lane.b32.xlu0 %v3588, 18
      %v5929 = vpop.permute.xlu0 %5928
      %5930 = vrot.lane.b32.xlu0 %v3589, 18
      %v5931 = vpop.permute.xlu0 %5930
      %5932 = vrot.lane.b32.xlu0 %v3590, 18
      %v5933 = vpop.permute.xlu0 %5932
      %5934 = vrot.lane.b32.xlu0 %v3591, 18
      %v5935 = vpop.permute.xlu0 %5934
      %5936 = vrot.lane.b32.xlu0 %v3592, 18
      %v5937 = vpop.permute.xlu0 %5936
      %5938 = vrot.lane.b32.xlu0 %v3593, 18
      %v5939 = vpop.permute.xlu0 %5938
      %5940 = vrot.lane.b32.xlu0 %v3594, 18
      %v5941 = vpop.permute.xlu0 %5940
      %5942 = vrot.lane.b32.xlu0 %v3595, 18
      %v5943 = vpop.permute.xlu0 %5942
      %5944 = vrot.lane.b32.xlu0 %v3596, 18
      %v5945 = vpop.permute.xlu0 %5944
      %5946 = vrot.lane.b32.xlu0 %v3597, 18
      %v5947 = vpop.permute.xlu0 %5946
      %5948 = vrot.lane.b32.xlu0 %v3598, 18
      %v5949 = vpop.permute.xlu0 %5948
      %5950 = vrot.lane.b32.xlu0 %v3599, 18
      %v5951 = vpop.permute.xlu0 %5950
      %5952 = vrot.lane.b32.xlu0 %v3600, 18
      %v5953 = vpop.permute.xlu0 %5952
      %5954 = vrot.lane.b32.xlu0 %v3601, 18
      %v5955 = vpop.permute.xlu0 %5954
      %5956 = vrot.lane.b32.xlu0 %v3602, 18
      %v5957 = vpop.permute.xlu0 %5956
      %5958 = vrot.lane.b32.xlu0 %v3603, 18
      %v5959 = vpop.permute.xlu0 %5958
      %5960 = vrot.lane.b32.xlu0 %v3604, 18
      %v5961 = vpop.permute.xlu0 %5960
      %5962 = vrot.lane.b32.xlu0 %v3605, 18
      %v5963 = vpop.permute.xlu0 %5962
      %5964 = vrot.lane.b32.xlu0 %v3606, 18
      %v5965 = vpop.permute.xlu0 %5964
      %5966 = vrot.lane.b32.xlu0 %v3607, 18
      %v5967 = vpop.permute.xlu0 %5966
      %5968 = vrot.lane.b32.xlu0 %v3608, 18
      %v5969 = vpop.permute.xlu0 %5968
      %5970 = vrot.lane.b32.xlu0 %v3609, 18
      %v5971 = vpop.permute.xlu0 %5970
      %5972 = vrot.lane.b32.xlu0 %v3610, 18
      %v5973 = vpop.permute.xlu0 %5972
      %5974 = vrot.lane.b32.xlu0 %v3611, 18
      %v5975 = vpop.permute.xlu0 %5974
      %5976 = vrot.lane.b32.xlu0 %v3612, 18
      %v5977 = vpop.permute.xlu0 %5976
      %5978 = vrot.lane.b32.xlu0 %v3613, 18
      %v5979 = vpop.permute.xlu0 %5978
      %5980 = vrot.lane.b32.xlu0 %v3614, 18
      %v5981 = vpop.permute.xlu0 %5980
      %5982 = vrot.lane.b32.xlu0 %v3615, 18
      %v5983 = vpop.permute.xlu0 %5982
      %5984 = vrot.lane.b32.xlu0 %v3616, 18
      %v5985 = vpop.permute.xlu0 %5984
      %5986 = vrot.lane.b32.xlu0 %v3617, 18
      %v5987 = vpop.permute.xlu0 %5986
      %5988 = vrot.lane.b32.xlu0 %v3618, 18
      %v5989 = vpop.permute.xlu0 %5988
      %5990 = vrot.lane.b32.xlu0 %v3619, 18
      %v5991 = vpop.permute.xlu0 %5990
      %6056 = vrot.lane.b32.xlu0 %v3620, 20
      %v6057 = vpop.permute.xlu0 %6056
      %6058 = vrot.lane.b32.xlu0 %v3621, 20
      %v6059 = vpop.permute.xlu0 %6058
      %6060 = vrot.lane.b32.xlu0 %v3622, 20
      %v6061 = vpop.permute.xlu0 %6060
      %6062 = vrot.lane.b32.xlu0 %v3623, 20
      %v6063 = vpop.permute.xlu0 %6062
      %6064 = vrot.lane.b32.xlu0 %v3624, 20
      %v6065 = vpop.permute.xlu0 %6064
      %6066 = vrot.lane.b32.xlu0 %v3625, 20
      %v6067 = vpop.permute.xlu0 %6066
      %6068 = vrot.lane.b32.xlu0 %v3626, 20
      %v6069 = vpop.permute.xlu0 %6068
      %6070 = vrot.lane.b32.xlu0 %v3627, 20
      %v6071 = vpop.permute.xlu0 %6070
      %6072 = vrot.lane.b32.xlu0 %v3628, 20
      %v6073 = vpop.permute.xlu0 %6072
      %6074 = vrot.lane.b32.xlu0 %v3629, 20
      %v6075 = vpop.permute.xlu0 %6074
      %6076 = vrot.lane.b32.xlu0 %v3630, 20
      %v6077 = vpop.permute.xlu0 %6076
      %6078 = vrot.lane.b32.xlu0 %v3631, 20
      %v6079 = vpop.permute.xlu0 %6078
      %6080 = vrot.lane.b32.xlu0 %v3632, 20
      %v6081 = vpop.permute.xlu0 %6080
      %6082 = vrot.lane.b32.xlu0 %v3633, 20
      %v6083 = vpop.permute.xlu0 %6082
      %6084 = vrot.lane.b32.xlu0 %v3634, 20
      %v6085 = vpop.permute.xlu0 %6084
      %6086 = vrot.lane.b32.xlu0 %v3635, 20
      %v6087 = vpop.permute.xlu0 %6086
      %6088 = vrot.lane.b32.xlu0 %v3636, 20
      %v6089 = vpop.permute.xlu0 %6088
      %6090 = vrot.lane.b32.xlu0 %v3637, 20
      %v6091 = vpop.permute.xlu0 %6090
      %6092 = vrot.lane.b32.xlu0 %v3638, 20
      %v6093 = vpop.permute.xlu0 %6092
      %6094 = vrot.lane.b32.xlu0 %v3639, 20
      %v6095 = vpop.permute.xlu0 %6094
      %6096 = vrot.lane.b32.xlu0 %v3640, 20
      %v6097 = vpop.permute.xlu0 %6096
      %6098 = vrot.lane.b32.xlu0 %v3641, 20
      %v6099 = vpop.permute.xlu0 %6098
      %6100 = vrot.lane.b32.xlu0 %v3642, 20
      %v6101 = vpop.permute.xlu0 %6100
      %6102 = vrot.lane.b32.xlu0 %v3643, 20
      %v6103 = vpop.permute.xlu0 %6102
      %6104 = vrot.lane.b32.xlu0 %v3644, 20
      %v6105 = vpop.permute.xlu0 %6104
      %6106 = vrot.lane.b32.xlu0 %v3645, 20
      %v6107 = vpop.permute.xlu0 %6106
      %6108 = vrot.lane.b32.xlu0 %v3646, 20
      %v6109 = vpop.permute.xlu0 %6108
      %6110 = vrot.lane.b32.xlu0 %v3647, 20
      %v6111 = vpop.permute.xlu0 %6110
      %6112 = vrot.lane.b32.xlu0 %v3648, 20
      %v6113 = vpop.permute.xlu0 %6112
      %6114 = vrot.lane.b32.xlu0 %v3649, 20
      %v6115 = vpop.permute.xlu0 %6114
      %6116 = vrot.lane.b32.xlu0 %v3650, 20
      %v6117 = vpop.permute.xlu0 %6116
      %6118 = vrot.lane.b32.xlu0 %v3651, 20
      %v6119 = vpop.permute.xlu0 %6118
      %6184 = vrot.lane.b32.xlu0 %v3652, 22
      %v6185 = vpop.permute.xlu0 %6184
      %6186 = vrot.lane.b32.xlu0 %v3653, 22
      %v6187 = vpop.permute.xlu0 %6186
      %6188 = vrot.lane.b32.xlu0 %v3654, 22
      %v6189 = vpop.permute.xlu0 %6188
      %6190 = vrot.lane.b32.xlu0 %v3655, 22
      %v6191 = vpop.permute.xlu0 %6190
      %6192 = vrot.lane.b32.xlu0 %v3656, 22
      %v6193 = vpop.permute.xlu0 %6192
      %6194 = vrot.lane.b32.xlu0 %v3657, 22
      %v6195 = vpop.permute.xlu0 %6194
      %6196 = vrot.lane.b32.xlu0 %v3658, 22
      %v6197 = vpop.permute.xlu0 %6196
      %6198 = vrot.lane.b32.xlu0 %v3659, 22
      %v6199 = vpop.permute.xlu0 %6198
      %6200 = vrot.lane.b32.xlu0 %v3660, 22
      %v6201 = vpop.permute.xlu0 %6200
      %6202 = vrot.lane.b32.xlu0 %v3661, 22
      %v6203 = vpop.permute.xlu0 %6202
      %6204 = vrot.lane.b32.xlu0 %v3662, 22
      %v6205 = vpop.permute.xlu0 %6204
      %6206 = vrot.lane.b32.xlu0 %v3663, 22
      %v6207 = vpop.permute.xlu0 %6206
      %6208 = vrot.lane.b32.xlu0 %v3664, 22
      %v6209 = vpop.permute.xlu0 %6208
      %6210 = vrot.lane.b32.xlu0 %v3665, 22
      %v6211 = vpop.permute.xlu0 %6210
      %6212 = vrot.lane.b32.xlu0 %v3666, 22
      %v6213 = vpop.permute.xlu0 %6212
      %6214 = vrot.lane.b32.xlu0 %v3667, 22
      %v6215 = vpop.permute.xlu0 %6214
      %6216 = vrot.lane.b32.xlu0 %v3668, 22
      %v6217 = vpop.permute.xlu0 %6216
      %6218 = vrot.lane.b32.xlu0 %v3669, 22
      %v6219 = vpop.permute.xlu0 %6218
      %6220 = vrot.lane.b32.xlu0 %v3670, 22
      %v6221 = vpop.permute.xlu0 %6220
      %6222 = vrot.lane.b32.xlu0 %v3671, 22
      %v6223 = vpop.permute.xlu0 %6222
      %6224 = vrot.lane.b32.xlu0 %v3672, 22
      %v6225 = vpop.permute.xlu0 %6224
      %6226 = vrot.lane.b32.xlu0 %v3673, 22
      %v6227 = vpop.permute.xlu0 %6226
      %6228 = vrot.lane.b32.xlu0 %v3674, 22
      %v6229 = vpop.permute.xlu0 %6228
      %6230 = vrot.lane.b32.xlu0 %v3675, 22
      %v6231 = vpop.permute.xlu0 %6230
      %6232 = vrot.lane.b32.xlu0 %v3676, 22
      %v6233 = vpop.permute.xlu0 %6232
      %6234 = vrot.lane.b32.xlu0 %v3677, 22
      %v6235 = vpop.permute.xlu0 %6234
      %6236 = vrot.lane.b32.xlu0 %v3678, 22
      %v6237 = vpop.permute.xlu0 %6236
      %6238 = vrot.lane.b32.xlu0 %v3679, 22
      %v6239 = vpop.permute.xlu0 %6238
      %6240 = vrot.lane.b32.xlu0 %v3680, 22
      %v6241 = vpop.permute.xlu0 %6240
      %6242 = vrot.lane.b32.xlu0 %v3681, 22
      %v6243 = vpop.permute.xlu0 %6242
      %6244 = vrot.lane.b32.xlu0 %v3682, 22
      %v6245 = vpop.permute.xlu0 %6244
      %6246 = vrot.lane.b32.xlu0 %v3683, 22
      %v6247 = vpop.permute.xlu0 %6246
      %6312 = vrot.lane.b32.xlu0 %v3684, 24
      %v6313 = vpop.permute.xlu0 %6312
      %6314 = vrot.lane.b32.xlu0 %v3685, 24
      %v6315 = vpop.permute.xlu0 %6314
      %6316 = vrot.lane.b32.xlu0 %v3686, 24
      %v6317 = vpop.permute.xlu0 %6316
      %6318 = vrot.lane.b32.xlu0 %v3687, 24
      %v6319 = vpop.permute.xlu0 %6318
      %6320 = vrot.lane.b32.xlu0 %v3688, 24
      %v6321 = vpop.permute.xlu0 %6320
      %6322 = vrot.lane.b32.xlu0 %v3689, 24
      %v6323 = vpop.permute.xlu0 %6322
      %6324 = vrot.lane.b32.xlu0 %v3690, 24
      %v6325 = vpop.permute.xlu0 %6324
      %6326 = vrot.lane.b32.xlu0 %v3691, 24
      %v6327 = vpop.permute.xlu0 %6326
      %6328 = vrot.lane.b32.xlu0 %v3692, 24
      %v6329 = vpop.permute.xlu0 %6328
      %6330 = vrot.lane.b32.xlu0 %v3693, 24
      %v6331 = vpop.permute.xlu0 %6330
      %6332 = vrot.lane.b32.xlu0 %v3694, 24
      %v6333 = vpop.permute.xlu0 %6332
      %6334 = vrot.lane.b32.xlu0 %v3695, 24
      %v6335 = vpop.permute.xlu0 %6334
      %6336 = vrot.lane.b32.xlu0 %v3696, 24
      %v6337 = vpop.permute.xlu0 %6336
      %6338 = vrot.lane.b32.xlu0 %v3697, 24
      %v6339 = vpop.permute.xlu0 %6338
      %6340 = vrot.lane.b32.xlu0 %v3698, 24
      %v6341 = vpop.permute.xlu0 %6340
      %6342 = vrot.lane.b32.xlu0 %v3699, 24
      %v6343 = vpop.permute.xlu0 %6342
      %6344 = vrot.lane.b32.xlu0 %v3700, 24
      %v6345 = vpop.permute.xlu0 %6344
      %6346 = vrot.lane.b32.xlu0 %v3701, 24
      %v6347 = vpop.permute.xlu0 %6346
      %6348 = vrot.lane.b32.xlu0 %v3702, 24
      %v6349 = vpop.permute.xlu0 %6348
      %6350 = vrot.lane.b32.xlu0 %v3703, 24
      %v6351 = vpop.permute.xlu0 %6350
      %6352 = vrot.lane.b32.xlu0 %v3704, 24
      %v6353 = vpop.permute.xlu0 %6352
      %6354 = vrot.lane.b32.xlu0 %v3705, 24
      %v6355 = vpop.permute.xlu0 %6354
      %6356 = vrot.lane.b32.xlu0 %v3706, 24
      %v6357 = vpop.permute.xlu0 %6356
      %6358 = vrot.lane.b32.xlu0 %v3707, 24
      %v6359 = vpop.permute.xlu0 %6358
      %6360 = vrot.lane.b32.xlu0 %v3708, 24
      %v6361 = vpop.permute.xlu0 %6360
      %6362 = vrot.lane.b32.xlu0 %v3709, 24
      %v6363 = vpop.permute.xlu0 %6362
      %6364 = vrot.lane.b32.xlu0 %v3710, 24
      %v6365 = vpop.permute.xlu0 %6364
      %6366 = vrot.lane.b32.xlu0 %v3711, 24
      %v6367 = vpop.permute.xlu0 %6366
      %6368 = vrot.lane.b32.xlu0 %v3712, 24
      %v6369 = vpop.permute.xlu0 %6368
      %6370 = vrot.lane.b32.xlu0 %v3713, 24
      %v6371 = vpop.permute.xlu0 %6370
      %6372 = vrot.lane.b32.xlu0 %v3714, 24
      %v6373 = vpop.permute.xlu0 %6372
      %6374 = vrot.lane.b32.xlu0 %v3715, 24
      %v6375 = vpop.permute.xlu0 %6374
      %6440 = vrot.lane.b32.xlu0 %v3716, 26
      %v6441 = vpop.permute.xlu0 %6440
      %6442 = vrot.lane.b32.xlu0 %v3717, 26
      %v6443 = vpop.permute.xlu0 %6442
      %6444 = vrot.lane.b32.xlu0 %v3718, 26
      %v6445 = vpop.permute.xlu0 %6444
      %6446 = vrot.lane.b32.xlu0 %v3719, 26
      %v6447 = vpop.permute.xlu0 %6446
      %6448 = vrot.lane.b32.xlu0 %v3720, 26
      %v6449 = vpop.permute.xlu0 %6448
      %6450 = vrot.lane.b32.xlu0 %v3721, 26
      %v6451 = vpop.permute.xlu0 %6450
      %6452 = vrot.lane.b32.xlu0 %v3722, 26
      %v6453 = vpop.permute.xlu0 %6452
      %6454 = vrot.lane.b32.xlu0 %v3723, 26
      %v6455 = vpop.permute.xlu0 %6454
      %6456 = vrot.lane.b32.xlu0 %v3724, 26
      %v6457 = vpop.permute.xlu0 %6456
      %6458 = vrot.lane.b32.xlu0 %v3725, 26
      %v6459 = vpop.permute.xlu0 %6458
      %6460 = vrot.lane.b32.xlu0 %v3726, 26
      %v6461 = vpop.permute.xlu0 %6460
      %6462 = vrot.lane.b32.xlu0 %v3727, 26
      %v6463 = vpop.permute.xlu0 %6462
      %6464 = vrot.lane.b32.xlu0 %v3728, 26
      %v6465 = vpop.permute.xlu0 %6464
      %6466 = vrot.lane.b32.xlu0 %v3729, 26
      %v6467 = vpop.permute.xlu0 %6466
      %6468 = vrot.lane.b32.xlu0 %v3730, 26
      %v6469 = vpop.permute.xlu0 %6468
      %6470 = vrot.lane.b32.xlu0 %v3731, 26
      %v6471 = vpop.permute.xlu0 %6470
      %6472 = vrot.lane.b32.xlu0 %v3732, 26
      %v6473 = vpop.permute.xlu0 %6472
      %6474 = vrot.lane.b32.xlu0 %v3733, 26
      %v6475 = vpop.permute.xlu0 %6474
      %6476 = vrot.lane.b32.xlu0 %v3734, 26
      %v6477 = vpop.permute.xlu0 %6476
      %6478 = vrot.lane.b32.xlu0 %v3735, 26
      %v6479 = vpop.permute.xlu0 %6478
      %6480 = vrot.lane.b32.xlu0 %v3736, 26
      %v6481 = vpop.permute.xlu0 %6480
      %6482 = vrot.lane.b32.xlu0 %v3737, 26
      %v6483 = vpop.permute.xlu0 %6482
      %6484 = vrot.lane.b32.xlu0 %v3738, 26
      %v6485 = vpop.permute.xlu0 %6484
      %6486 = vrot.lane.b32.xlu0 %v3739, 26
      %v6487 = vpop.permute.xlu0 %6486
      %6488 = vrot.lane.b32.xlu0 %v3740, 26
      %v6489 = vpop.permute.xlu0 %6488
      %6490 = vrot.lane.b32.xlu0 %v3741, 26
      %v6491 = vpop.permute.xlu0 %6490
      %6492 = vrot.lane.b32.xlu0 %v3742, 26
      %v6493 = vpop.permute.xlu0 %6492
      %6494 = vrot.lane.b32.xlu0 %v3743, 26
      %v6495 = vpop.permute.xlu0 %6494
      %6496 = vrot.lane.b32.xlu0 %v3744, 26
      %v6497 = vpop.permute.xlu0 %6496
      %6498 = vrot.lane.b32.xlu0 %v3745, 26
      %v6499 = vpop.permute.xlu0 %6498
      %6500 = vrot.lane.b32.xlu0 %v3746, 26
      %v6501 = vpop.permute.xlu0 %6500
      %6502 = vrot.lane.b32.xlu0 %v3747, 26
      %v6503 = vpop.permute.xlu0 %6502
      %6568 = vrot.lane.b32.xlu0 %v3749, 28
      %v6569 = vpop.permute.xlu0 %6568
      %6570 = vrot.lane.b32.xlu0 %v3750, 28
      %v6571 = vpop.permute.xlu0 %6570
      %6572 = vrot.lane.b32.xlu0 %v3751, 28
      %v6573 = vpop.permute.xlu0 %6572
      %6574 = vrot.lane.b32.xlu0 %v3752, 28
      %v6575 = vpop.permute.xlu0 %6574
      %6576 = vrot.lane.b32.xlu0 %v3753, 28
      %v6577 = vpop.permute.xlu0 %6576
      %6578 = vrot.lane.b32.xlu0 %v3754, 28
      %v6579 = vpop.permute.xlu0 %6578
      %6580 = vrot.lane.b32.xlu0 %v3755, 28
      %v6581 = vpop.permute.xlu0 %6580
      %6582 = vrot.lane.b32.xlu0 %v3756, 28
      %v6583 = vpop.permute.xlu0 %6582
      %6584 = vrot.lane.b32.xlu0 %v3757, 28
      %v6585 = vpop.permute.xlu0 %6584
      %6586 = vrot.lane.b32.xlu0 %v3758, 28
      %v6587 = vpop.permute.xlu0 %6586
      %6588 = vrot.lane.b32.xlu0 %v3759, 28
      %v6589 = vpop.permute.xlu0 %6588
      %6590 = vrot.lane.b32.xlu0 %v3760, 28
      %v6591 = vpop.permute.xlu0 %6590
      %6592 = vrot.lane.b32.xlu0 %v3761, 28
      %v6593 = vpop.permute.xlu0 %6592
      %6594 = vrot.lane.b32.xlu0 %v3762, 28
      %v6595 = vpop.permute.xlu0 %6594
      %6596 = vrot.lane.b32.xlu0 %v3763, 28
      %v6597 = vpop.permute.xlu0 %6596
      %6598 = vrot.lane.b32.xlu0 %v3764, 28
      %v6599 = vpop.permute.xlu0 %6598
      %6600 = vrot.lane.b32.xlu0 %v3765, 28
      %v6601 = vpop.permute.xlu0 %6600
      %6602 = vrot.lane.b32.xlu0 %v3766, 28
      %v6603 = vpop.permute.xlu0 %6602
      %6604 = vrot.lane.b32.xlu0 %v3767, 28
      %v6605 = vpop.permute.xlu0 %6604
      %6606 = vrot.lane.b32.xlu0 %v3768, 28
      %v6607 = vpop.permute.xlu0 %6606
      %6608 = vrot.lane.b32.xlu0 %v3769, 28
      %v6609 = vpop.permute.xlu0 %6608
      %6610 = vrot.lane.b32.xlu0 %v3770, 28
      %v6611 = vpop.permute.xlu0 %6610
      %6612 = vrot.lane.b32.xlu0 %v3771, 28
      %v6613 = vpop.permute.xlu0 %6612
      %6614 = vrot.lane.b32.xlu0 %v3772, 28
      %v6615 = vpop.permute.xlu0 %6614
      %6616 = vrot.lane.b32.xlu0 %v3773, 28
      %v6617 = vpop.permute.xlu0 %6616
      %6618 = vrot.lane.b32.xlu0 %v3774, 28
      %v6619 = vpop.permute.xlu0 %6618
      %6620 = vrot.lane.b32.xlu0 %v3775, 28
      %v6621 = vpop.permute.xlu0 %6620
      %6622 = vrot.lane.b32.xlu0 %v3776, 28
      %v6623 = vpop.permute.xlu0 %6622
      %6624 = vrot.lane.b32.xlu0 %v3777, 28
      %v6625 = vpop.permute.xlu0 %6624
      %6626 = vrot.lane.b32.xlu0 %v3778, 28
      %v6627 = vpop.permute.xlu0 %6626
      %6628 = vrot.lane.b32.xlu0 %v3779, 28
      %v6629 = vpop.permute.xlu0 %6628
      %6630 = vrot.lane.b32.xlu0 %v3780, 28
      %v6631 = vpop.permute.xlu0 %6630
      %6696 = vrot.lane.b32.xlu0 %v3781, 30
      %v6697 = vpop.permute.xlu0 %6696
      %6698 = vrot.lane.b32.xlu0 %v3782, 30
      %v6699 = vpop.permute.xlu0 %6698
      %6700 = vrot.lane.b32.xlu0 %v3783, 30
      %v6701 = vpop.permute.xlu0 %6700
      %6702 = vrot.lane.b32.xlu0 %v3784, 30
      %v6703 = vpop.permute.xlu0 %6702
      %6704 = vrot.lane.b32.xlu0 %v3785, 30
      %v6705 = vpop.permute.xlu0 %6704
      %6706 = vrot.lane.b32.xlu0 %v3786, 30
      %v6707 = vpop.permute.xlu0 %6706
      %6708 = vrot.lane.b32.xlu0 %v3787, 30
      %v6709 = vpop.permute.xlu0 %6708
      %6710 = vrot.lane.b32.xlu0 %v3788, 30
      %v6711 = vpop.permute.xlu0 %6710
      %6712 = vrot.lane.b32.xlu0 %v3789, 30
      %v6713 = vpop.permute.xlu0 %6712
      %6714 = vrot.lane.b32.xlu0 %v3790, 30
      %v6715 = vpop.permute.xlu0 %6714
      %6716 = vrot.lane.b32.xlu0 %v3791, 30
      %v6717 = vpop.permute.xlu0 %6716
      %6718 = vrot.lane.b32.xlu0 %v3792, 30
      %v6719 = vpop.permute.xlu0 %6718
      %6720 = vrot.lane.b32.xlu0 %v3793, 30
      %v6721 = vpop.permute.xlu0 %6720
      %6722 = vrot.lane.b32.xlu0 %v3794, 30
      %v6723 = vpop.permute.xlu0 %6722
      %6724 = vrot.lane.b32.xlu0 %v3795, 30
      %v6725 = vpop.permute.xlu0 %6724
      %6726 = vrot.lane.b32.xlu0 %v3796, 30
      %v6727 = vpop.permute.xlu0 %6726
      %6728 = vrot.lane.b32.xlu0 %v3797, 30
      %v6729 = vpop.permute.xlu0 %6728
      %6730 = vrot.lane.b32.xlu0 %v3798, 30
      %v6731 = vpop.permute.xlu0 %6730
      %6732 = vrot.lane.b32.xlu0 %v3799, 30
      %v6733 = vpop.permute.xlu0 %6732
      %6734 = vrot.lane.b32.xlu0 %v3800, 30
      %v6735 = vpop.permute.xlu0 %6734
      %6736 = vrot.lane.b32.xlu0 %v3801, 30
      %v6737 = vpop.permute.xlu0 %6736
      %6738 = vrot.lane.b32.xlu0 %v3802, 30
      %v6739 = vpop.permute.xlu0 %6738
      %6740 = vrot.lane.b32.xlu0 %v3803, 30
      %v6741 = vpop.permute.xlu0 %6740
      %6742 = vrot.lane.b32.xlu0 %v3804, 30
      %v6743 = vpop.permute.xlu0 %6742
      %6744 = vrot.lane.b32.xlu0 %v3805, 30
      %v6745 = vpop.permute.xlu0 %6744
      %6746 = vrot.lane.b32.xlu0 %v3806, 30
      %v6747 = vpop.permute.xlu0 %6746
      %6748 = vrot.lane.b32.xlu0 %v3807, 30
      %v6749 = vpop.permute.xlu0 %6748
      %6750 = vrot.lane.b32.xlu0 %v3808, 30
      %v6751 = vpop.permute.xlu0 %6750
      %6752 = vrot.lane.b32.xlu0 %v3809, 30
      %v6753 = vpop.permute.xlu0 %6752
      %6754 = vrot.lane.b32.xlu0 %v3810, 30
      %v6755 = vpop.permute.xlu0 %6754
      %6756 = vrot.lane.b32.xlu0 %v3811, 30
      %v6757 = vpop.permute.xlu0 %6756
      %6758 = vrot.lane.b32.xlu0 %v3812, 30
      %v6759 = vpop.permute.xlu0 %6758
      %v6792 = vsel %vm3198, %v3299, %v4905
      %v6793 = vsel %vm3198, %v3300, %v4907
      %v6794 = vsel %vm3198, %v3301, %v4909
      %v6795 = vsel %vm3198, %v3302, %v4911
      %v6796 = vsel %vm3198, %v3303, %v4913
      %v6797 = vsel %vm3198, %v3304, %v4915
      %v6798 = vsel %vm3198, %v3305, %v4917
      %v6799 = vsel %vm3198, %v3306, %v4919
      %v6800 = vsel %vm3198, %v3307, %v4921
      %v6801 = vsel %vm3198, %v3308, %v4923
      %v6802 = vsel %vm3198, %v3309, %v4925
      %v6803 = vsel %vm3198, %v3310, %v4927
      %v6804 = vsel %vm3198, %v3311, %v4929
      %v6805 = vsel %vm3198, %v3312, %v4931
      %v6806 = vsel %vm3198, %v3313, %v4933
      %v6807 = vsel %vm3198, %v3314, %v4935
      %v6808 = vsel %vm3198, %v3315, %v4937
      %v6809 = vsel %vm3198, %v3316, %v4939
      %v6810 = vsel %vm3198, %v3317, %v4941
      %v6811 = vsel %vm3198, %v3318, %v4943
      %v6812 = vsel %vm3198, %v3319, %v4945
      %v6813 = vsel %vm3198, %v3320, %v4947
      %v6814 = vsel %vm3198, %v3321, %v4949
      %v6815 = vsel %vm3198, %v3322, %v4951
      %v6816 = vsel %vm3198, %v3323, %v4953
      %v6817 = vsel %vm3198, %v3324, %v4955
      %v6818 = vsel %vm3198, %v3325, %v4957
      %v6819 = vsel %vm3198, %v3326, %v4959
      %v6820 = vsel %vm3198, %v3327, %v4961
      %v6821 = vsel %vm3198, %v3328, %v4963
      %v6822 = vsel %vm3198, %v3329, %v4965
      %v6823 = vsel %vm3198, %v3330, %v4967
      %v6824 = vsel %vm526, %v6792, %v5033
      %v6825 = vsel %vm526, %v6793, %v5035
      %v6826 = vsel %vm526, %v6794, %v5037
      %v6827 = vsel %vm526, %v6795, %v5039
      %v6828 = vsel %vm526, %v6796, %v5041
      %v6829 = vsel %vm526, %v6797, %v5043
      %v6830 = vsel %vm526, %v6798, %v5045
      %v6831 = vsel %vm526, %v6799, %v5047
      %v6832 = vsel %vm526, %v6800, %v5049
      %v6833 = vsel %vm526, %v6801, %v5051
      %v6834 = vsel %vm526, %v6802, %v5053
      %v6835 = vsel %vm526, %v6803, %v5055
      %v6836 = vsel %vm526, %v6804, %v5057
      %v6837 = vsel %vm526, %v6805, %v5059
      %v6838 = vsel %vm526, %v6806, %v5061
      %v6839 = vsel %vm526, %v6807, %v5063
      %v6840 = vsel %vm526, %v6808, %v5065
      %v6841 = vsel %vm526, %v6809, %v5067
      %v6842 = vsel %vm526, %v6810, %v5069
      %v6843 = vsel %vm526, %v6811, %v5071
      %v6844 = vsel %vm526, %v6812, %v5073
      %v6845 = vsel %vm526, %v6813, %v5075
      %v6846 = vsel %vm526, %v6814, %v5077
      %v6847 = vsel %vm526, %v6815, %v5079
      %v6848 = vsel %vm526, %v6816, %v5081
      %v6849 = vsel %vm526, %v6817, %v5083
      %v6850 = vsel %vm526, %v6818, %v5085
      %v6851 = vsel %vm526, %v6819, %v5087
      %v6852 = vsel %vm526, %v6820, %v5089
      %v6853 = vsel %vm526, %v6821, %v5091
      %v6854 = vsel %vm526, %v6822, %v5093
      %v6855 = vsel %vm526, %v6823, %v5095
      %vm6856 = vcmask 48128
      %v6857 = vsel %vm6856, %v6824, %v5161
      %v6858 = vsel %vm6856, %v6825, %v5163
      %v6859 = vsel %vm6856, %v6826, %v5165
      %v6860 = vsel %vm6856, %v6827, %v5167
      %v6861 = vsel %vm6856, %v6828, %v5169
      %v6862 = vsel %vm6856, %v6829, %v5171
      %v6863 = vsel %vm6856, %v6830, %v5173
      %v6864 = vsel %vm6856, %v6831, %v5175
      %v6865 = vsel %vm6856, %v6832, %v5177
      %v6866 = vsel %vm6856, %v6833, %v5179
      %v6867 = vsel %vm6856, %v6834, %v5181
      %v6868 = vsel %vm6856, %v6835, %v5183
      %v6869 = vsel %vm6856, %v6836, %v5185
      %v6870 = vsel %vm6856, %v6837, %v5187
      %v6871 = vsel %vm6856, %v6838, %v5189
      %v6872 = vsel %vm6856, %v6839, %v5191
      %v6873 = vsel %vm6856, %v6840, %v5193
      %v6874 = vsel %vm6856, %v6841, %v5195
      %v6875 = vsel %vm6856, %v6842, %v5197
      %v6876 = vsel %vm6856, %v6843, %v5199
      %v6877 = vsel %vm6856, %v6844, %v5201
      %v6878 = vsel %vm6856, %v6845, %v5203
      %v6879 = vsel %vm6856, %v6846, %v5205
      %v6880 = vsel %vm6856, %v6847, %v5207
      %v6881 = vsel %vm6856, %v6848, %v5209
      %v6882 = vsel %vm6856, %v6849, %v5211
      %v6883 = vsel %vm6856, %v6850, %v5213
      %v6884 = vsel %vm6856, %v6851, %v5215
      %v6885 = vsel %vm6856, %v6852, %v5217
      %v6886 = vsel %vm6856, %v6853, %v5219
      %v6887 = vsel %vm6856, %v6854, %v5221
      %v6888 = vsel %vm6856, %v6855, %v5223
      %v6889 = vsel %vm2121, %v6857, %v5289
      %v6890 = vsel %vm2121, %v6858, %v5291
      %v6891 = vsel %vm2121, %v6859, %v5293
      %v6892 = vsel %vm2121, %v6860, %v5295
      %v6893 = vsel %vm2121, %v6861, %v5297
      %v6894 = vsel %vm2121, %v6862, %v5299
      %v6895 = vsel %vm2121, %v6863, %v5301
      %v6896 = vsel %vm2121, %v6864, %v5303
      %v6897 = vsel %vm2121, %v6865, %v5305
      %v6898 = vsel %vm2121, %v6866, %v5307
      %v6899 = vsel %vm2121, %v6867, %v5309
      %v6900 = vsel %vm2121, %v6868, %v5311
      %v6901 = vsel %vm2121, %v6869, %v5313
      %v6902 = vsel %vm2121, %v6870, %v5315
      %v6903 = vsel %vm2121, %v6871, %v5317
      %v6904 = vsel %vm2121, %v6872, %v5319
      %v6905 = vsel %vm2121, %v6873, %v5321
      %v6906 = vsel %vm2121, %v6874, %v5323
      %v6907 = vsel %vm2121, %v6875, %v5325
      %v6908 = vsel %vm2121, %v6876, %v5327
      %v6909 = vsel %vm2121, %v6877, %v5329
      %v6910 = vsel %vm2121, %v6878, %v5331
      %v6911 = vsel %vm2121, %v6879, %v5333
      %v6912 = vsel %vm2121, %v6880, %v5335
      %v6913 = vsel %vm2121, %v6881, %v5337
      %v6914 = vsel %vm2121, %v6882, %v5339
      %v6915 = vsel %vm2121, %v6883, %v5341
      %v6916 = vsel %vm2121, %v6884, %v5343
      %v6917 = vsel %vm2121, %v6885, %v5345
      %v6918 = vsel %vm2121, %v6886, %v5347
      %v6919 = vsel %vm2121, %v6887, %v5349
      %v6920 = vsel %vm2121, %v6888, %v5351
      %vm6921 = vcmask 80896
      %v6922 = vsel %vm6921, %v6889, %v5417
      %v6923 = vsel %vm6921, %v6890, %v5419
      %v6924 = vsel %vm6921, %v6891, %v5421
      %v6925 = vsel %vm6921, %v6892, %v5423
      %v6926 = vsel %vm6921, %v6893, %v5425
      %v6927 = vsel %vm6921, %v6894, %v5427
      %v6928 = vsel %vm6921, %v6895, %v5429
      %v6929 = vsel %vm6921, %v6896, %v5431
      %v6930 = vsel %vm6921, %v6897, %v5433
      %v6931 = vsel %vm6921, %v6898, %v5435
      %v6932 = vsel %vm6921, %v6899, %v5437
      %v6933 = vsel %vm6921, %v6900, %v5439
      %v6934 = vsel %vm6921, %v6901, %v5441
      %v6935 = vsel %vm6921, %v6902, %v5443
      %v6936 = vsel %vm6921, %v6903, %v5445
      %v6937 = vsel %vm6921, %v6904, %v5447
      %v6938 = vsel %vm6921, %v6905, %v5449
      %v6939 = vsel %vm6921, %v6906, %v5451
      %v6940 = vsel %vm6921, %v6907, %v5453
      %v6941 = vsel %vm6921, %v6908, %v5455
      %v6942 = vsel %vm6921, %v6909, %v5457
      %v6943 = vsel %vm6921, %v6910, %v5459
      %v6944 = vsel %vm6921, %v6911, %v5461
      %v6945 = vsel %vm6921, %v6912, %v5463
      %v6946 = vsel %vm6921, %v6913, %v5465
      %v6947 = vsel %vm6921, %v6914, %v5467
      %v6948 = vsel %vm6921, %v6915, %v5469
      %v6949 = vsel %vm6921, %v6916, %v5471
      %v6950 = vsel %vm6921, %v6917, %v5473
      %v6951 = vsel %vm6921, %v6918, %v5475
      %v6952 = vsel %vm6921, %v6919, %v5477
      %v6953 = vsel %vm6921, %v6920, %v5479
      %v6954 = vsel %vm2154, %v6922, %v5545
      %v6955 = vsel %vm2154, %v6923, %v5547
      %v6956 = vsel %vm2154, %v6924, %v5549
      %v6957 = vsel %vm2154, %v6925, %v5551
      %v6958 = vsel %vm2154, %v6926, %v5553
      %v6959 = vsel %vm2154, %v6927, %v5555
      %v6960 = vsel %vm2154, %v6928, %v5557
      %v6961 = vsel %vm2154, %v6929, %v5559
      %v6962 = vsel %vm2154, %v6930, %v5561
      %v6963 = vsel %vm2154, %v6931, %v5563
      %v6964 = vsel %vm2154, %v6932, %v5565
      %v6965 = vsel %vm2154, %v6933, %v5567
      %v6966 = vsel %vm2154, %v6934, %v5569
      %v6967 = vsel %vm2154, %v6935, %v5571
      %v6968 = vsel %vm2154, %v6936, %v5573
      %v6969 = vsel %vm2154, %v6937, %v5575
      %v6970 = vsel %vm2154, %v6938, %v5577
      %v6971 = vsel %vm2154, %v6939, %v5579
      %v6972 = vsel %vm2154, %v6940, %v5581
      %v6973 = vsel %vm2154, %v6941, %v5583
      %v6974 = vsel %vm2154, %v6942, %v5585
      %v6975 = vsel %vm2154, %v6943, %v5587
      %v6976 = vsel %vm2154, %v6944, %v5589
      %v6977 = vsel %vm2154, %v6945, %v5591
      %v6978 = vsel %vm2154, %v6946, %v5593
      %v6979 = vsel %vm2154, %v6947, %v5595
      %v6980 = vsel %vm2154, %v6948, %v5597
      %v6981 = vsel %vm2154, %v6949, %v5599
      %v6982 = vsel %vm2154, %v6950, %v5601
      %v6983 = vsel %vm2154, %v6951, %v5603
      %v6984 = vsel %vm2154, %v6952, %v5605
      %v6985 = vsel %vm2154, %v6953, %v5607
      %vm6986 = vcmask 113664
      %v6987 = vsel %vm6986, %v6954, %v5673
      %v6988 = vsel %vm6986, %v6955, %v5675
      %v6989 = vsel %vm6986, %v6956, %v5677
      %v6990 = vsel %vm6986, %v6957, %v5679
      %v6991 = vsel %vm6986, %v6958, %v5681
      %v6992 = vsel %vm6986, %v6959, %v5683
      %v6993 = vsel %vm6986, %v6960, %v5685
      %v6994 = vsel %vm6986, %v6961, %v5687
      %v6995 = vsel %vm6986, %v6962, %v5689
      %v6996 = vsel %vm6986, %v6963, %v5691
      %v6997 = vsel %vm6986, %v6964, %v5693
      %v6998 = vsel %vm6986, %v6965, %v5695
      %v6999 = vsel %vm6986, %v6966, %v5697
      %v7000 = vsel %vm6986, %v6967, %v5699
      %v7001 = vsel %vm6986, %v6968, %v5701
      %v7002 = vsel %vm6986, %v6969, %v5703
      %v7003 = vsel %vm6986, %v6970, %v5705
      %v7004 = vsel %vm6986, %v6971, %v5707
      %v7005 = vsel %vm6986, %v6972, %v5709
      %v7006 = vsel %vm6986, %v6973, %v5711
      %v7007 = vsel %vm6986, %v6974, %v5713
      %v7008 = vsel %vm6986, %v6975, %v5715
      %v7009 = vsel %vm6986, %v6976, %v5717
      %v7010 = vsel %vm6986, %v6977, %v5719
      %v7011 = vsel %vm6986, %v6978, %v5721
      %v7012 = vsel %vm6986, %v6979, %v5723
      %v7013 = vsel %vm6986, %v6980, %v5725
      %v7014 = vsel %vm6986, %v6981, %v5727
      %v7015 = vsel %vm6986, %v6982, %v5729
      %v7016 = vsel %vm6986, %v6983, %v5731
      %v7017 = vsel %vm6986, %v6984, %v5733
      %v7018 = vsel %vm6986, %v6985, %v5735
      %v7019 = vsel %vm2187, %v6987, %v5801
      %v7020 = vsel %vm2187, %v6988, %v5803
      %v7021 = vsel %vm2187, %v6989, %v5805
      %v7022 = vsel %vm2187, %v6990, %v5807
      %v7023 = vsel %vm2187, %v6991, %v5809
      %v7024 = vsel %vm2187, %v6992, %v5811
      %v7025 = vsel %vm2187, %v6993, %v5813
      %v7026 = vsel %vm2187, %v6994, %v5815
      %v7027 = vsel %vm2187, %v6995, %v5817
      %v7028 = vsel %vm2187, %v6996, %v5819
      %v7029 = vsel %vm2187, %v6997, %v5821
      %v7030 = vsel %vm2187, %v6998, %v5823
      %v7031 = vsel %vm2187, %v6999, %v5825
      %v7032 = vsel %vm2187, %v7000, %v5827
      %v7033 = vsel %vm2187, %v7001, %v5829
      %v7034 = vsel %vm2187, %v7002, %v5831
      %v7035 = vsel %vm2187, %v7003, %v5833
      %v7036 = vsel %vm2187, %v7004, %v5835
      %v7037 = vsel %vm2187, %v7005, %v5837
      %v7038 = vsel %vm2187, %v7006, %v5839
      %v7039 = vsel %vm2187, %v7007, %v5841
      %v7040 = vsel %vm2187, %v7008, %v5843
      %v7041 = vsel %vm2187, %v7009, %v5845
      %v7042 = vsel %vm2187, %v7010, %v5847
      %v7043 = vsel %vm2187, %v7011, %v5849
      %v7044 = vsel %vm2187, %v7012, %v5851
      %v7045 = vsel %vm2187, %v7013, %v5853
      %v7046 = vsel %vm2187, %v7014, %v5855
      %v7047 = vsel %vm2187, %v7015, %v5857
      %v7048 = vsel %vm2187, %v7016, %v5859
      %v7049 = vsel %vm2187, %v7017, %v5861
      %v7050 = vsel %vm2187, %v7018, %v5863
      %vm7051 = vcmask 146432
      %v7052 = vsel %vm7051, %v7019, %v5929
      %v7053 = vsel %vm7051, %v7020, %v5931
      %v7054 = vsel %vm7051, %v7021, %v5933
      %v7055 = vsel %vm7051, %v7022, %v5935
      %v7056 = vsel %vm7051, %v7023, %v5937
      %v7057 = vsel %vm7051, %v7024, %v5939
      %v7058 = vsel %vm7051, %v7025, %v5941
      %v7059 = vsel %vm7051, %v7026, %v5943
      %v7060 = vsel %vm7051, %v7027, %v5945
      %v7061 = vsel %vm7051, %v7028, %v5947
      %v7062 = vsel %vm7051, %v7029, %v5949
      %v7063 = vsel %vm7051, %v7030, %v5951
      %v7064 = vsel %vm7051, %v7031, %v5953
      %v7065 = vsel %vm7051, %v7032, %v5955
      %v7066 = vsel %vm7051, %v7033, %v5957
      %v7067 = vsel %vm7051, %v7034, %v5959
      %v7068 = vsel %vm7051, %v7035, %v5961
      %v7069 = vsel %vm7051, %v7036, %v5963
      %v7070 = vsel %vm7051, %v7037, %v5965
      %v7071 = vsel %vm7051, %v7038, %v5967
      %v7072 = vsel %vm7051, %v7039, %v5969
      %v7073 = vsel %vm7051, %v7040, %v5971
      %v7074 = vsel %vm7051, %v7041, %v5973
      %v7075 = vsel %vm7051, %v7042, %v5975
      %v7076 = vsel %vm7051, %v7043, %v5977
      %v7077 = vsel %vm7051, %v7044, %v5979
      %v7078 = vsel %vm7051, %v7045, %v5981
      %v7079 = vsel %vm7051, %v7046, %v5983
      %v7080 = vsel %vm7051, %v7047, %v5985
      %v7081 = vsel %vm7051, %v7048, %v5987
      %v7082 = vsel %vm7051, %v7049, %v5989
      %v7083 = vsel %vm7051, %v7050, %v5991
      %v7084 = vsel %vm2220, %v7052, %v6057
      %v7085 = vsel %vm2220, %v7053, %v6059
      %v7086 = vsel %vm2220, %v7054, %v6061
      %v7087 = vsel %vm2220, %v7055, %v6063
      %v7088 = vsel %vm2220, %v7056, %v6065
      %v7089 = vsel %vm2220, %v7057, %v6067
      %v7090 = vsel %vm2220, %v7058, %v6069
      %v7091 = vsel %vm2220, %v7059, %v6071
      %v7092 = vsel %vm2220, %v7060, %v6073
      %v7093 = vsel %vm2220, %v7061, %v6075
      %v7094 = vsel %vm2220, %v7062, %v6077
      %v7095 = vsel %vm2220, %v7063, %v6079
      %v7096 = vsel %vm2220, %v7064, %v6081
      %v7097 = vsel %vm2220, %v7065, %v6083
      %v7098 = vsel %vm2220, %v7066, %v6085
      %v7099 = vsel %vm2220, %v7067, %v6087
      %v7100 = vsel %vm2220, %v7068, %v6089
      %v7101 = vsel %vm2220, %v7069, %v6091
      %v7102 = vsel %vm2220, %v7070, %v6093
      %v7103 = vsel %vm2220, %v7071, %v6095
      %v7104 = vsel %vm2220, %v7072, %v6097
      %v7105 = vsel %vm2220, %v7073, %v6099
      %v7106 = vsel %vm2220, %v7074, %v6101
      %v7107 = vsel %vm2220, %v7075, %v6103
      %v7108 = vsel %vm2220, %v7076, %v6105
      %v7109 = vsel %vm2220, %v7077, %v6107
      %v7110 = vsel %vm2220, %v7078, %v6109
      %v7111 = vsel %vm2220, %v7079, %v6111
      %v7112 = vsel %vm2220, %v7080, %v6113
      %v7113 = vsel %vm2220, %v7081, %v6115
      %v7114 = vsel %vm2220, %v7082, %v6117
      %v7115 = vsel %vm2220, %v7083, %v6119
      %vm7116 = vcmask 179200
      %v7117 = vsel %vm7116, %v7084, %v6185
      %v7118 = vsel %vm7116, %v7085, %v6187
      %v7119 = vsel %vm7116, %v7086, %v6189
      %v7120 = vsel %vm7116, %v7087, %v6191
      %v7121 = vsel %vm7116, %v7088, %v6193
      %v7122 = vsel %vm7116, %v7089, %v6195
      %v7123 = vsel %vm7116, %v7090, %v6197
      %v7124 = vsel %vm7116, %v7091, %v6199
      %v7125 = vsel %vm7116, %v7092, %v6201
      %v7126 = vsel %vm7116, %v7093, %v6203
      %v7127 = vsel %vm7116, %v7094, %v6205
      %v7128 = vsel %vm7116, %v7095, %v6207
      %v7129 = vsel %vm7116, %v7096, %v6209
      %v7130 = vsel %vm7116, %v7097, %v6211
      %v7131 = vsel %vm7116, %v7098, %v6213
      %v7132 = vsel %vm7116, %v7099, %v6215
      %v7133 = vsel %vm7116, %v7100, %v6217
      %v7134 = vsel %vm7116, %v7101, %v6219
      %v7135 = vsel %vm7116, %v7102, %v6221
      %v7136 = vsel %vm7116, %v7103, %v6223
      %v7137 = vsel %vm7116, %v7104, %v6225
      %v7138 = vsel %vm7116, %v7105, %v6227
      %v7139 = vsel %vm7116, %v7106, %v6229
      %v7140 = vsel %vm7116, %v7107, %v6231
      %v7141 = vsel %vm7116, %v7108, %v6233
      %v7142 = vsel %vm7116, %v7109, %v6235
      %v7143 = vsel %vm7116, %v7110, %v6237
      %v7144 = vsel %vm7116, %v7111, %v6239
      %v7145 = vsel %vm7116, %v7112, %v6241
      %v7146 = vsel %vm7116, %v7113, %v6243
      %v7147 = vsel %vm7116, %v7114, %v6245
      %v7148 = vsel %vm7116, %v7115, %v6247
      %v7149 = vsel %vm2253, %v7117, %v6313
      %v7150 = vsel %vm2253, %v7118, %v6315
      %v7151 = vsel %vm2253, %v7119, %v6317
      %v7152 = vsel %vm2253, %v7120, %v6319
      %v7153 = vsel %vm2253, %v7121, %v6321
      %v7154 = vsel %vm2253, %v7122, %v6323
      %v7155 = vsel %vm2253, %v7123, %v6325
      %v7156 = vsel %vm2253, %v7124, %v6327
      %v7157 = vsel %vm2253, %v7125, %v6329
      %v7158 = vsel %vm2253, %v7126, %v6331
      %v7159 = vsel %vm2253, %v7127, %v6333
      %v7160 = vsel %vm2253, %v7128, %v6335
      %v7161 = vsel %vm2253, %v7129, %v6337
      %v7162 = vsel %vm2253, %v7130, %v6339
      %v7163 = vsel %vm2253, %v7131, %v6341
      %v7164 = vsel %vm2253, %v7132, %v6343
      %v7165 = vsel %vm2253, %v7133, %v6345
      %v7166 = vsel %vm2253, %v7134, %v6347
      %v7167 = vsel %vm2253, %v7135, %v6349
      %v7168 = vsel %vm2253, %v7136, %v6351
      %v7169 = vsel %vm2253, %v7137, %v6353
      %v7170 = vsel %vm2253, %v7138, %v6355
      %v7171 = vsel %vm2253, %v7139, %v6357
      %v7172 = vsel %vm2253, %v7140, %v6359
      %v7173 = vsel %vm2253, %v7141, %v6361
      %v7174 = vsel %vm2253, %v7142, %v6363
      %v7175 = vsel %vm2253, %v7143, %v6365
      %v7176 = vsel %vm2253, %v7144, %v6367
      %v7177 = vsel %vm2253, %v7145, %v6369
      %v7178 = vsel %vm2253, %v7146, %v6371
      %v7179 = vsel %vm2253, %v7147, %v6373
      %v7180 = vsel %vm2253, %v7148, %v6375
      %vm7181 = vcmask 211968
      %v7182 = vsel %vm7181, %v7149, %v6441
      %v7183 = vsel %vm7181, %v7150, %v6443
      %v7184 = vsel %vm7181, %v7151, %v6445
      %v7185 = vsel %vm7181, %v7152, %v6447
      %v7186 = vsel %vm7181, %v7153, %v6449
      %v7187 = vsel %vm7181, %v7154, %v6451
      %v7188 = vsel %vm7181, %v7155, %v6453
      %v7189 = vsel %vm7181, %v7156, %v6455
      %v7190 = vsel %vm7181, %v7157, %v6457
      %v7191 = vsel %vm7181, %v7158, %v6459
      %v7192 = vsel %vm7181, %v7159, %v6461
      %v7193 = vsel %vm7181, %v7160, %v6463
      %v7194 = vsel %vm7181, %v7161, %v6465
      %v7195 = vsel %vm7181, %v7162, %v6467
      %v7196 = vsel %vm7181, %v7163, %v6469
      %v7197 = vsel %vm7181, %v7164, %v6471
      %v7198 = vsel %vm7181, %v7165, %v6473
      %v7199 = vsel %vm7181, %v7166, %v6475
      %v7200 = vsel %vm7181, %v7167, %v6477
      %v7201 = vsel %vm7181, %v7168, %v6479
      %v7202 = vsel %vm7181, %v7169, %v6481
      %v7203 = vsel %vm7181, %v7170, %v6483
      %v7204 = vsel %vm7181, %v7171, %v6485
      %v7205 = vsel %vm7181, %v7172, %v6487
      %v7206 = vsel %vm7181, %v7173, %v6489
      %v7207 = vsel %vm7181, %v7174, %v6491
      %v7208 = vsel %vm7181, %v7175, %v6493
      %v7209 = vsel %vm7181, %v7176, %v6495
      %v7210 = vsel %vm7181, %v7177, %v6497
      %v7211 = vsel %vm7181, %v7178, %v6499
      %v7212 = vsel %vm7181, %v7179, %v6501
      %v7213 = vsel %vm7181, %v7180, %v6503
      %v7214 = vsel %vm2286, %v7182, %v6569
      %v7215 = vsel %vm2286, %v7183, %v6571
      %v7216 = vsel %vm2286, %v7184, %v6573
      %v7217 = vsel %vm2286, %v7185, %v6575
      %v7218 = vsel %vm2286, %v7186, %v6577
      %v7219 = vsel %vm2286, %v7187, %v6579
      %v7220 = vsel %vm2286, %v7188, %v6581
      %v7221 = vsel %vm2286, %v7189, %v6583
      %v7222 = vsel %vm2286, %v7190, %v6585
      %v7223 = vsel %vm2286, %v7191, %v6587
      %v7224 = vsel %vm2286, %v7192, %v6589
      %v7225 = vsel %vm2286, %v7193, %v6591
      %v7226 = vsel %vm2286, %v7194, %v6593
      %v7227 = vsel %vm2286, %v7195, %v6595
      %v7228 = vsel %vm2286, %v7196, %v6597
      %v7229 = vsel %vm2286, %v7197, %v6599
      %v7230 = vsel %vm2286, %v7198, %v6601
      %v7231 = vsel %vm2286, %v7199, %v6603
      %v7232 = vsel %vm2286, %v7200, %v6605
      %v7233 = vsel %vm2286, %v7201, %v6607
      %v7234 = vsel %vm2286, %v7202, %v6609
      %v7235 = vsel %vm2286, %v7203, %v6611
      %v7236 = vsel %vm2286, %v7204, %v6613
      %v7237 = vsel %vm2286, %v7205, %v6615
      %v7238 = vsel %vm2286, %v7206, %v6617
      %v7239 = vsel %vm2286, %v7207, %v6619
      %v7240 = vsel %vm2286, %v7208, %v6621
      %v7241 = vsel %vm2286, %v7209, %v6623
      %v7242 = vsel %vm2286, %v7210, %v6625
      %v7243 = vsel %vm2286, %v7211, %v6627
      %v7244 = vsel %vm2286, %v7212, %v6629
      %v7245 = vsel %vm2286, %v7213, %v6631
      %vm7246 = vcmask 244736
      %v7247 = vsel %vm7246, %v7214, %v6697
      %v7248 = vsel %vm7246, %v7215, %v6699
      %v7249 = vsel %vm7246, %v7216, %v6701
      %v7250 = vsel %vm7246, %v7217, %v6703
      %v7251 = vsel %vm7246, %v7218, %v6705
      %v7252 = vsel %vm7246, %v7219, %v6707
      %v7253 = vsel %vm7246, %v7220, %v6709
      %v7254 = vsel %vm7246, %v7221, %v6711
      %v7255 = vsel %vm7246, %v7222, %v6713
      %v7256 = vsel %vm7246, %v7223, %v6715
      %v7257 = vsel %vm7246, %v7224, %v6717
      %v7258 = vsel %vm7246, %v7225, %v6719
      %v7259 = vsel %vm7246, %v7226, %v6721
      %v7260 = vsel %vm7246, %v7227, %v6723
      %v7261 = vsel %vm7246, %v7228, %v6725
      %v7262 = vsel %vm7246, %v7229, %v6727
      %v7263 = vsel %vm7246, %v7230, %v6729
      %v7264 = vsel %vm7246, %v7231, %v6731
      %v7265 = vsel %vm7246, %v7232, %v6733
      %v7266 = vsel %vm7246, %v7233, %v6735
      %v7267 = vsel %vm7246, %v7234, %v6737
      %v7268 = vsel %vm7246, %v7235, %v6739
      %v7269 = vsel %vm7246, %v7236, %v6741
      %v7270 = vsel %vm7246, %v7237, %v6743
      %v7271 = vsel %vm7246, %v7238, %v6745
      %v7272 = vsel %vm7246, %v7239, %v6747
      %v7273 = vsel %vm7246, %v7240, %v6749
      %v7274 = vsel %vm7246, %v7241, %v6751
      %v7275 = vsel %vm7246, %v7242, %v6753
      %v7276 = vsel %vm7246, %v7243, %v6755
      %v7277 = vsel %vm7246, %v7244, %v6757
      %v7278 = vsel %vm7246, %v7245, %v6759
      %7311 = vrot.lane.b32.xlu0 %v3845, 2
      %v7312 = vpop.permute.xlu0 %7311
      %7313 = vrot.lane.b32.xlu0 %v3846, 2
      %v7314 = vpop.permute.xlu0 %7313
      %7315 = vrot.lane.b32.xlu0 %v3847, 2
      %v7316 = vpop.permute.xlu0 %7315
      %7317 = vrot.lane.b32.xlu0 %v3848, 2
      %v7318 = vpop.permute.xlu0 %7317
      %7319 = vrot.lane.b32.xlu0 %v3849, 2
      %v7320 = vpop.permute.xlu0 %7319
      %7321 = vrot.lane.b32.xlu0 %v3850, 2
      %v7322 = vpop.permute.xlu0 %7321
      %7323 = vrot.lane.b32.xlu0 %v3851, 2
      %v7324 = vpop.permute.xlu0 %7323
      %7325 = vrot.lane.b32.xlu0 %v3852, 2
      %v7326 = vpop.permute.xlu0 %7325
      %7327 = vrot.lane.b32.xlu0 %v3853, 2
      %v7328 = vpop.permute.xlu0 %7327
      %7329 = vrot.lane.b32.xlu0 %v3854, 2
      %v7330 = vpop.permute.xlu0 %7329
      %7331 = vrot.lane.b32.xlu0 %v3855, 2
      %v7332 = vpop.permute.xlu0 %7331
      %7333 = vrot.lane.b32.xlu0 %v3856, 2
      %v7334 = vpop.permute.xlu0 %7333
      %7335 = vrot.lane.b32.xlu0 %v3857, 2
      %v7336 = vpop.permute.xlu0 %7335
      %7337 = vrot.lane.b32.xlu0 %v3858, 2
      %v7338 = vpop.permute.xlu0 %7337
      %7339 = vrot.lane.b32.xlu0 %v3859, 2
      %v7340 = vpop.permute.xlu0 %7339
      %7341 = vrot.lane.b32.xlu0 %v3860, 2
      %v7342 = vpop.permute.xlu0 %7341
      %7343 = vrot.lane.b32.xlu0 %v3861, 2
      %v7344 = vpop.permute.xlu0 %7343
      %7345 = vrot.lane.b32.xlu0 %v3862, 2
      %v7346 = vpop.permute.xlu0 %7345
      %7347 = vrot.lane.b32.xlu0 %v3863, 2
      %v7348 = vpop.permute.xlu0 %7347
      %7349 = vrot.lane.b32.xlu0 %v3864, 2
      %v7350 = vpop.permute.xlu0 %7349
      %7351 = vrot.lane.b32.xlu0 %v3865, 2
      %v7352 = vpop.permute.xlu0 %7351
      %7353 = vrot.lane.b32.xlu0 %v3866, 2
      %v7354 = vpop.permute.xlu0 %7353
      %7355 = vrot.lane.b32.xlu0 %v3867, 2
      %v7356 = vpop.permute.xlu0 %7355
      %7357 = vrot.lane.b32.xlu0 %v3868, 2
      %v7358 = vpop.permute.xlu0 %7357
      %7359 = vrot.lane.b32.xlu0 %v3869, 2
      %v7360 = vpop.permute.xlu0 %7359
      %7361 = vrot.lane.b32.xlu0 %v3870, 2
      %v7362 = vpop.permute.xlu0 %7361
      %7363 = vrot.lane.b32.xlu0 %v3871, 2
      %v7364 = vpop.permute.xlu0 %7363
      %7365 = vrot.lane.b32.xlu0 %v3872, 2
      %v7366 = vpop.permute.xlu0 %7365
      %7367 = vrot.lane.b32.xlu0 %v3873, 2
      %v7368 = vpop.permute.xlu0 %7367
      %7369 = vrot.lane.b32.xlu0 %v3874, 2
      %v7370 = vpop.permute.xlu0 %7369
      %7371 = vrot.lane.b32.xlu0 %v3875, 2
      %v7372 = vpop.permute.xlu0 %7371
      %7373 = vrot.lane.b32.xlu0 %v3876, 2
      %v7374 = vpop.permute.xlu0 %7373
      %7439 = vrot.lane.b32.xlu0 %v3877, 4
      %v7440 = vpop.permute.xlu0 %7439
      %7441 = vrot.lane.b32.xlu0 %v3878, 4
      %v7442 = vpop.permute.xlu0 %7441
      %7443 = vrot.lane.b32.xlu0 %v3879, 4
      %v7444 = vpop.permute.xlu0 %7443
      %7445 = vrot.lane.b32.xlu0 %v3880, 4
      %v7446 = vpop.permute.xlu0 %7445
      %7447 = vrot.lane.b32.xlu0 %v3881, 4
      %v7448 = vpop.permute.xlu0 %7447
      %7449 = vrot.lane.b32.xlu0 %v3882, 4
      %v7450 = vpop.permute.xlu0 %7449
      %7451 = vrot.lane.b32.xlu0 %v3883, 4
      %v7452 = vpop.permute.xlu0 %7451
      %7453 = vrot.lane.b32.xlu0 %v3884, 4
      %v7454 = vpop.permute.xlu0 %7453
      %7455 = vrot.lane.b32.xlu0 %v3885, 4
      %v7456 = vpop.permute.xlu0 %7455
      %7457 = vrot.lane.b32.xlu0 %v3886, 4
      %v7458 = vpop.permute.xlu0 %7457
      %7459 = vrot.lane.b32.xlu0 %v3887, 4
      %v7460 = vpop.permute.xlu0 %7459
      %7461 = vrot.lane.b32.xlu0 %v3888, 4
      %v7462 = vpop.permute.xlu0 %7461
      %7463 = vrot.lane.b32.xlu0 %v3889, 4
      %v7464 = vpop.permute.xlu0 %7463
      %7465 = vrot.lane.b32.xlu0 %v3890, 4
      %v7466 = vpop.permute.xlu0 %7465
      %7467 = vrot.lane.b32.xlu0 %v3891, 4
      %v7468 = vpop.permute.xlu0 %7467
      %7469 = vrot.lane.b32.xlu0 %v3892, 4
      %v7470 = vpop.permute.xlu0 %7469
      %7471 = vrot.lane.b32.xlu0 %v3893, 4
      %v7472 = vpop.permute.xlu0 %7471
      %7473 = vrot.lane.b32.xlu0 %v3894, 4
      %v7474 = vpop.permute.xlu0 %7473
      %7475 = vrot.lane.b32.xlu0 %v3895, 4
      %v7476 = vpop.permute.xlu0 %7475
      %7477 = vrot.lane.b32.xlu0 %v3896, 4
      %v7478 = vpop.permute.xlu0 %7477
      %7479 = vrot.lane.b32.xlu0 %v3897, 4
      %v7480 = vpop.permute.xlu0 %7479
      %7481 = vrot.lane.b32.xlu0 %v3898, 4
      %v7482 = vpop.permute.xlu0 %7481
      %7483 = vrot.lane.b32.xlu0 %v3899, 4
      %v7484 = vpop.permute.xlu0 %7483
      %7485 = vrot.lane.b32.xlu0 %v3900, 4
      %v7486 = vpop.permute.xlu0 %7485
      %7487 = vrot.lane.b32.xlu0 %v3901, 4
      %v7488 = vpop.permute.xlu0 %7487
      %7489 = vrot.lane.b32.xlu0 %v3902, 4
      %v7490 = vpop.permute.xlu0 %7489
      %7491 = vrot.lane.b32.xlu0 %v3903, 4
      %v7492 = vpop.permute.xlu0 %7491
      %7493 = vrot.lane.b32.xlu0 %v3904, 4
      %v7494 = vpop.permute.xlu0 %7493
      %7495 = vrot.lane.b32.xlu0 %v3905, 4
      %v7496 = vpop.permute.xlu0 %7495
      %7497 = vrot.lane.b32.xlu0 %v3906, 4
      %v7498 = vpop.permute.xlu0 %7497
      %7499 = vrot.lane.b32.xlu0 %v3907, 4
      %v7500 = vpop.permute.xlu0 %7499
      %7501 = vrot.lane.b32.xlu0 %v3908, 4
      %v7502 = vpop.permute.xlu0 %7501
      %7567 = vrot.lane.b32.xlu0 %v3909, 6
      %v7568 = vpop.permute.xlu0 %7567
      %7569 = vrot.lane.b32.xlu0 %v3910, 6
      %v7570 = vpop.permute.xlu0 %7569
      %7571 = vrot.lane.b32.xlu0 %v3911, 6
      %v7572 = vpop.permute.xlu0 %7571
      %7573 = vrot.lane.b32.xlu0 %v3912, 6
      %v7574 = vpop.permute.xlu0 %7573
      %7575 = vrot.lane.b32.xlu0 %v3913, 6
      %v7576 = vpop.permute.xlu0 %7575
      %7577 = vrot.lane.b32.xlu0 %v3914, 6
      %v7578 = vpop.permute.xlu0 %7577
      %7579 = vrot.lane.b32.xlu0 %v3915, 6
      %v7580 = vpop.permute.xlu0 %7579
      %7581 = vrot.lane.b32.xlu0 %v3916, 6
      %v7582 = vpop.permute.xlu0 %7581
      %7583 = vrot.lane.b32.xlu0 %v3917, 6
      %v7584 = vpop.permute.xlu0 %7583
      %7585 = vrot.lane.b32.xlu0 %v3918, 6
      %v7586 = vpop.permute.xlu0 %7585
      %7587 = vrot.lane.b32.xlu0 %v3919, 6
      %v7588 = vpop.permute.xlu0 %7587
      %7589 = vrot.lane.b32.xlu0 %v3920, 6
      %v7590 = vpop.permute.xlu0 %7589
      %7591 = vrot.lane.b32.xlu0 %v3921, 6
      %v7592 = vpop.permute.xlu0 %7591
      %7593 = vrot.lane.b32.xlu0 %v3922, 6
      %v7594 = vpop.permute.xlu0 %7593
      %7595 = vrot.lane.b32.xlu0 %v3923, 6
      %v7596 = vpop.permute.xlu0 %7595
      %7597 = vrot.lane.b32.xlu0 %v3924, 6
      %v7598 = vpop.permute.xlu0 %7597
      %7599 = vrot.lane.b32.xlu0 %v3925, 6
      %v7600 = vpop.permute.xlu0 %7599
      %7601 = vrot.lane.b32.xlu0 %v3926, 6
      %v7602 = vpop.permute.xlu0 %7601
      %7603 = vrot.lane.b32.xlu0 %v3927, 6
      %v7604 = vpop.permute.xlu0 %7603
      %7605 = vrot.lane.b32.xlu0 %v3928, 6
      %v7606 = vpop.permute.xlu0 %7605
      %7607 = vrot.lane.b32.xlu0 %v3929, 6
      %v7608 = vpop.permute.xlu0 %7607
      %7609 = vrot.lane.b32.xlu0 %v3930, 6
      %v7610 = vpop.permute.xlu0 %7609
      %7611 = vrot.lane.b32.xlu0 %v3931, 6
      %v7612 = vpop.permute.xlu0 %7611
      %7613 = vrot.lane.b32.xlu0 %v3932, 6
      %v7614 = vpop.permute.xlu0 %7613
      %7615 = vrot.lane.b32.xlu0 %v3933, 6
      %v7616 = vpop.permute.xlu0 %7615
      %7617 = vrot.lane.b32.xlu0 %v3934, 6
      %v7618 = vpop.permute.xlu0 %7617
      %7619 = vrot.lane.b32.xlu0 %v3935, 6
      %v7620 = vpop.permute.xlu0 %7619
      %7621 = vrot.lane.b32.xlu0 %v3936, 6
      %v7622 = vpop.permute.xlu0 %7621
      %7623 = vrot.lane.b32.xlu0 %v3937, 6
      %v7624 = vpop.permute.xlu0 %7623
      %7625 = vrot.lane.b32.xlu0 %v3938, 6
      %v7626 = vpop.permute.xlu0 %7625
      %7627 = vrot.lane.b32.xlu0 %v3939, 6
      %v7628 = vpop.permute.xlu0 %7627
      %7629 = vrot.lane.b32.xlu0 %v3940, 6
      %v7630 = vpop.permute.xlu0 %7629
      %7695 = vrot.lane.b32.xlu0 %v3941, 8
      %v7696 = vpop.permute.xlu0 %7695
      %7697 = vrot.lane.b32.xlu0 %v3942, 8
      %v7698 = vpop.permute.xlu0 %7697
      %7699 = vrot.lane.b32.xlu0 %v3943, 8
      %v7700 = vpop.permute.xlu0 %7699
      %7701 = vrot.lane.b32.xlu0 %v3944, 8
      %v7702 = vpop.permute.xlu0 %7701
      %7703 = vrot.lane.b32.xlu0 %v3945, 8
      %v7704 = vpop.permute.xlu0 %7703
      %7705 = vrot.lane.b32.xlu0 %v3946, 8
      %v7706 = vpop.permute.xlu0 %7705
      %7707 = vrot.lane.b32.xlu0 %v3947, 8
      %v7708 = vpop.permute.xlu0 %7707
      %7709 = vrot.lane.b32.xlu0 %v3948, 8
      %v7710 = vpop.permute.xlu0 %7709
      %7711 = vrot.lane.b32.xlu0 %v3949, 8
      %v7712 = vpop.permute.xlu0 %7711
      %7713 = vrot.lane.b32.xlu0 %v3950, 8
      %v7714 = vpop.permute.xlu0 %7713
      %7715 = vrot.lane.b32.xlu0 %v3951, 8
      %v7716 = vpop.permute.xlu0 %7715
      %7717 = vrot.lane.b32.xlu0 %v3952, 8
      %v7718 = vpop.permute.xlu0 %7717
      %7719 = vrot.lane.b32.xlu0 %v3953, 8
      %v7720 = vpop.permute.xlu0 %7719
      %7721 = vrot.lane.b32.xlu0 %v3954, 8
      %v7722 = vpop.permute.xlu0 %7721
      %7723 = vrot.lane.b32.xlu0 %v3955, 8
      %v7724 = vpop.permute.xlu0 %7723
      %7725 = vrot.lane.b32.xlu0 %v3956, 8
      %v7726 = vpop.permute.xlu0 %7725
      %7727 = vrot.lane.b32.xlu0 %v3957, 8
      %v7728 = vpop.permute.xlu0 %7727
      %7729 = vrot.lane.b32.xlu0 %v3958, 8
      %v7730 = vpop.permute.xlu0 %7729
      %7731 = vrot.lane.b32.xlu0 %v3959, 8
      %v7732 = vpop.permute.xlu0 %7731
      %7733 = vrot.lane.b32.xlu0 %v3960, 8
      %v7734 = vpop.permute.xlu0 %7733
      %7735 = vrot.lane.b32.xlu0 %v3961, 8
      %v7736 = vpop.permute.xlu0 %7735
      %7737 = vrot.lane.b32.xlu0 %v3962, 8
      %v7738 = vpop.permute.xlu0 %7737
      %7739 = vrot.lane.b32.xlu0 %v3963, 8
      %v7740 = vpop.permute.xlu0 %7739
      %7741 = vrot.lane.b32.xlu0 %v3964, 8
      %v7742 = vpop.permute.xlu0 %7741
      %7743 = vrot.lane.b32.xlu0 %v3965, 8
      %v7744 = vpop.permute.xlu0 %7743
      %7745 = vrot.lane.b32.xlu0 %v3966, 8
      %v7746 = vpop.permute.xlu0 %7745
      %7747 = vrot.lane.b32.xlu0 %v3967, 8
      %v7748 = vpop.permute.xlu0 %7747
      %7749 = vrot.lane.b32.xlu0 %v3968, 8
      %v7750 = vpop.permute.xlu0 %7749
      %7751 = vrot.lane.b32.xlu0 %v3969, 8
      %v7752 = vpop.permute.xlu0 %7751
      %7753 = vrot.lane.b32.xlu0 %v3970, 8
      %v7754 = vpop.permute.xlu0 %7753
      %7755 = vrot.lane.b32.xlu0 %v3971, 8
      %v7756 = vpop.permute.xlu0 %7755
      %7757 = vrot.lane.b32.xlu0 %v3972, 8
      %v7758 = vpop.permute.xlu0 %7757
      %7823 = vrot.lane.b32.xlu0 %v3973, 10
      %v7824 = vpop.permute.xlu0 %7823
      %7825 = vrot.lane.b32.xlu0 %v3974, 10
      %v7826 = vpop.permute.xlu0 %7825
      %7827 = vrot.lane.b32.xlu0 %v3975, 10
      %v7828 = vpop.permute.xlu0 %7827
      %7829 = vrot.lane.b32.xlu0 %v3976, 10
      %v7830 = vpop.permute.xlu0 %7829
      %7831 = vrot.lane.b32.xlu0 %v3977, 10
      %v7832 = vpop.permute.xlu0 %7831
      %7833 = vrot.lane.b32.xlu0 %v3978, 10
      %v7834 = vpop.permute.xlu0 %7833
      %7835 = vrot.lane.b32.xlu0 %v3979, 10
      %v7836 = vpop.permute.xlu0 %7835
      %7837 = vrot.lane.b32.xlu0 %v3980, 10
      %v7838 = vpop.permute.xlu0 %7837
      %7839 = vrot.lane.b32.xlu0 %v3981, 10
      %v7840 = vpop.permute.xlu0 %7839
      %7841 = vrot.lane.b32.xlu0 %v3982, 10
      %v7842 = vpop.permute.xlu0 %7841
      %7843 = vrot.lane.b32.xlu0 %v3983, 10
      %v7844 = vpop.permute.xlu0 %7843
      %7845 = vrot.lane.b32.xlu0 %v3984, 10
      %v7846 = vpop.permute.xlu0 %7845
      %7847 = vrot.lane.b32.xlu0 %v3985, 10
      %v7848 = vpop.permute.xlu0 %7847
      %7849 = vrot.lane.b32.xlu0 %v3986, 10
      %v7850 = vpop.permute.xlu0 %7849
      %7851 = vrot.lane.b32.xlu0 %v3987, 10
      %v7852 = vpop.permute.xlu0 %7851
      %7853 = vrot.lane.b32.xlu0 %v3988, 10
      %v7854 = vpop.permute.xlu0 %7853
      %7855 = vrot.lane.b32.xlu0 %v3989, 10
      %v7856 = vpop.permute.xlu0 %7855
      %7857 = vrot.lane.b32.xlu0 %v3990, 10
      %v7858 = vpop.permute.xlu0 %7857
      %7859 = vrot.lane.b32.xlu0 %v3991, 10
      %v7860 = vpop.permute.xlu0 %7859
      %7861 = vrot.lane.b32.xlu0 %v3992, 10
      %v7862 = vpop.permute.xlu0 %7861
      %7863 = vrot.lane.b32.xlu0 %v3993, 10
      %v7864 = vpop.permute.xlu0 %7863
      %7865 = vrot.lane.b32.xlu0 %v3994, 10
      %v7866 = vpop.permute.xlu0 %7865
      %7867 = vrot.lane.b32.xlu0 %v3995, 10
      %v7868 = vpop.permute.xlu0 %7867
      %7869 = vrot.lane.b32.xlu0 %v3996, 10
      %v7870 = vpop.permute.xlu0 %7869
      %7871 = vrot.lane.b32.xlu0 %v3997, 10
      %v7872 = vpop.permute.xlu0 %7871
      %7873 = vrot.lane.b32.xlu0 %v3998, 10
      %v7874 = vpop.permute.xlu0 %7873
      %7875 = vrot.lane.b32.xlu0 %v3999, 10
      %v7876 = vpop.permute.xlu0 %7875
      %7877 = vrot.lane.b32.xlu0 %v4000, 10
      %v7878 = vpop.permute.xlu0 %7877
      %7879 = vrot.lane.b32.xlu0 %v4001, 10
      %v7880 = vpop.permute.xlu0 %7879
      %7881 = vrot.lane.b32.xlu0 %v4002, 10
      %v7882 = vpop.permute.xlu0 %7881
      %7883 = vrot.lane.b32.xlu0 %v4003, 10
      %v7884 = vpop.permute.xlu0 %7883
      %7885 = vrot.lane.b32.xlu0 %v4004, 10
      %v7886 = vpop.permute.xlu0 %7885
      %7951 = vrot.lane.b32.xlu0 %v4005, 12
      %v7952 = vpop.permute.xlu0 %7951
      %7953 = vrot.lane.b32.xlu0 %v4006, 12
      %v7954 = vpop.permute.xlu0 %7953
      %7955 = vrot.lane.b32.xlu0 %v4007, 12
      %v7956 = vpop.permute.xlu0 %7955
      %7957 = vrot.lane.b32.xlu0 %v4008, 12
      %v7958 = vpop.permute.xlu0 %7957
      %7959 = vrot.lane.b32.xlu0 %v4009, 12
      %v7960 = vpop.permute.xlu0 %7959
      %7961 = vrot.lane.b32.xlu0 %v4010, 12
      %v7962 = vpop.permute.xlu0 %7961
      %7963 = vrot.lane.b32.xlu0 %v4011, 12
      %v7964 = vpop.permute.xlu0 %7963
      %7965 = vrot.lane.b32.xlu0 %v4012, 12
      %v7966 = vpop.permute.xlu0 %7965
      %7967 = vrot.lane.b32.xlu0 %v4013, 12
      %v7968 = vpop.permute.xlu0 %7967
      %7969 = vrot.lane.b32.xlu0 %v4014, 12
      %v7970 = vpop.permute.xlu0 %7969
      %7971 = vrot.lane.b32.xlu0 %v4015, 12
      %v7972 = vpop.permute.xlu0 %7971
      %7973 = vrot.lane.b32.xlu0 %v4016, 12
      %v7974 = vpop.permute.xlu0 %7973
      %7975 = vrot.lane.b32.xlu0 %v4017, 12
      %v7976 = vpop.permute.xlu0 %7975
      %7977 = vrot.lane.b32.xlu0 %v4018, 12
      %v7978 = vpop.permute.xlu0 %7977
      %7979 = vrot.lane.b32.xlu0 %v4019, 12
      %v7980 = vpop.permute.xlu0 %7979
      %7981 = vrot.lane.b32.xlu0 %v4020, 12
      %v7982 = vpop.permute.xlu0 %7981
      %7983 = vrot.lane.b32.xlu0 %v4021, 12
      %v7984 = vpop.permute.xlu0 %7983
      %7985 = vrot.lane.b32.xlu0 %v4022, 12
      %v7986 = vpop.permute.xlu0 %7985
      %7987 = vrot.lane.b32.xlu0 %v4023, 12
      %v7988 = vpop.permute.xlu0 %7987
      %7989 = vrot.lane.b32.xlu0 %v4024, 12
      %v7990 = vpop.permute.xlu0 %7989
      %7991 = vrot.lane.b32.xlu0 %v4025, 12
      %v7992 = vpop.permute.xlu0 %7991
      %7993 = vrot.lane.b32.xlu0 %v4026, 12
      %v7994 = vpop.permute.xlu0 %7993
      %7995 = vrot.lane.b32.xlu0 %v4027, 12
      %v7996 = vpop.permute.xlu0 %7995
      %7997 = vrot.lane.b32.xlu0 %v4028, 12
      %v7998 = vpop.permute.xlu0 %7997
      %7999 = vrot.lane.b32.xlu0 %v4029, 12
      %v8000 = vpop.permute.xlu0 %7999
      %8001 = vrot.lane.b32.xlu0 %v4030, 12
      %v8002 = vpop.permute.xlu0 %8001
      %8003 = vrot.lane.b32.xlu0 %v4031, 12
      %v8004 = vpop.permute.xlu0 %8003
      %8005 = vrot.lane.b32.xlu0 %v4032, 12
      %v8006 = vpop.permute.xlu0 %8005
      %8007 = vrot.lane.b32.xlu0 %v4033, 12
      %v8008 = vpop.permute.xlu0 %8007
      %8009 = vrot.lane.b32.xlu0 %v4034, 12
      %v8010 = vpop.permute.xlu0 %8009
      %8011 = vrot.lane.b32.xlu0 %v4035, 12
      %v8012 = vpop.permute.xlu0 %8011
      %8013 = vrot.lane.b32.xlu0 %v4036, 12
      %v8014 = vpop.permute.xlu0 %8013
      %8079 = vrot.lane.b32.xlu0 %v4037, 14
      %v8080 = vpop.permute.xlu0 %8079
      %8081 = vrot.lane.b32.xlu0 %v4038, 14
      %v8082 = vpop.permute.xlu0 %8081
      %8083 = vrot.lane.b32.xlu0 %v4039, 14
      %v8084 = vpop.permute.xlu0 %8083
      %8085 = vrot.lane.b32.xlu0 %v4040, 14
      %v8086 = vpop.permute.xlu0 %8085
      %8087 = vrot.lane.b32.xlu0 %v4041, 14
      %v8088 = vpop.permute.xlu0 %8087
      %8089 = vrot.lane.b32.xlu0 %v4042, 14
      %v8090 = vpop.permute.xlu0 %8089
      %8091 = vrot.lane.b32.xlu0 %v4043, 14
      %v8092 = vpop.permute.xlu0 %8091
      %8093 = vrot.lane.b32.xlu0 %v4044, 14
      %v8094 = vpop.permute.xlu0 %8093
      %8095 = vrot.lane.b32.xlu0 %v4045, 14
      %v8096 = vpop.permute.xlu0 %8095
      %8097 = vrot.lane.b32.xlu0 %v4046, 14
      %v8098 = vpop.permute.xlu0 %8097
      %8099 = vrot.lane.b32.xlu0 %v4047, 14
      %v8100 = vpop.permute.xlu0 %8099
      %8101 = vrot.lane.b32.xlu0 %v4048, 14
      %v8102 = vpop.permute.xlu0 %8101
      %8103 = vrot.lane.b32.xlu0 %v4049, 14
      %v8104 = vpop.permute.xlu0 %8103
      %8105 = vrot.lane.b32.xlu0 %v4050, 14
      %v8106 = vpop.permute.xlu0 %8105
      %8107 = vrot.lane.b32.xlu0 %v4051, 14
      %v8108 = vpop.permute.xlu0 %8107
      %8109 = vrot.lane.b32.xlu0 %v4052, 14
      %v8110 = vpop.permute.xlu0 %8109
      %8111 = vrot.lane.b32.xlu0 %v4053, 14
      %v8112 = vpop.permute.xlu0 %8111
      %8113 = vrot.lane.b32.xlu0 %v4054, 14
      %v8114 = vpop.permute.xlu0 %8113
      %8115 = vrot.lane.b32.xlu0 %v4055, 14
      %v8116 = vpop.permute.xlu0 %8115
      %8117 = vrot.lane.b32.xlu0 %v4056, 14
      %v8118 = vpop.permute.xlu0 %8117
      %8119 = vrot.lane.b32.xlu0 %v4057, 14
      %v8120 = vpop.permute.xlu0 %8119
      %8121 = vrot.lane.b32.xlu0 %v4058, 14
      %v8122 = vpop.permute.xlu0 %8121
      %8123 = vrot.lane.b32.xlu0 %v4059, 14
      %v8124 = vpop.permute.xlu0 %8123
      %8125 = vrot.lane.b32.xlu0 %v4060, 14
      %v8126 = vpop.permute.xlu0 %8125
      %8127 = vrot.lane.b32.xlu0 %v4061, 14
      %v8128 = vpop.permute.xlu0 %8127
      %8129 = vrot.lane.b32.xlu0 %v4062, 14
      %v8130 = vpop.permute.xlu0 %8129
      %8131 = vrot.lane.b32.xlu0 %v4063, 14
      %v8132 = vpop.permute.xlu0 %8131
      %8133 = vrot.lane.b32.xlu0 %v4064, 14
      %v8134 = vpop.permute.xlu0 %8133
      %8135 = vrot.lane.b32.xlu0 %v4065, 14
      %v8136 = vpop.permute.xlu0 %8135
      %8137 = vrot.lane.b32.xlu0 %v4066, 14
      %v8138 = vpop.permute.xlu0 %8137
      %8139 = vrot.lane.b32.xlu0 %v4067, 14
      %v8140 = vpop.permute.xlu0 %8139
      %8141 = vrot.lane.b32.xlu0 %v4068, 14
      %v8142 = vpop.permute.xlu0 %8141
      %8207 = vrot.lane.b32.xlu0 %v4069, 16
      %v8208 = vpop.permute.xlu0 %8207
      %8209 = vrot.lane.b32.xlu0 %v4070, 16
      %v8210 = vpop.permute.xlu0 %8209
      %8211 = vrot.lane.b32.xlu0 %v4071, 16
      %v8212 = vpop.permute.xlu0 %8211
      %8213 = vrot.lane.b32.xlu0 %v4072, 16
      %v8214 = vpop.permute.xlu0 %8213
      %8215 = vrot.lane.b32.xlu0 %v4073, 16
      %v8216 = vpop.permute.xlu0 %8215
      %8217 = vrot.lane.b32.xlu0 %v4074, 16
      %v8218 = vpop.permute.xlu0 %8217
      %8219 = vrot.lane.b32.xlu0 %v4075, 16
      %v8220 = vpop.permute.xlu0 %8219
      %8221 = vrot.lane.b32.xlu0 %v4076, 16
      %v8222 = vpop.permute.xlu0 %8221
      %8223 = vrot.lane.b32.xlu0 %v4077, 16
      %v8224 = vpop.permute.xlu0 %8223
      %8225 = vrot.lane.b32.xlu0 %v4078, 16
      %v8226 = vpop.permute.xlu0 %8225
      %8227 = vrot.lane.b32.xlu0 %v4079, 16
      %v8228 = vpop.permute.xlu0 %8227
      %8229 = vrot.lane.b32.xlu0 %v4080, 16
      %v8230 = vpop.permute.xlu0 %8229
      %8231 = vrot.lane.b32.xlu0 %v4081, 16
      %v8232 = vpop.permute.xlu0 %8231
      %8233 = vrot.lane.b32.xlu0 %v4082, 16
      %v8234 = vpop.permute.xlu0 %8233
      %8235 = vrot.lane.b32.xlu0 %v4083, 16
      %v8236 = vpop.permute.xlu0 %8235
      %8237 = vrot.lane.b32.xlu0 %v4084, 16
      %v8238 = vpop.permute.xlu0 %8237
      %8239 = vrot.lane.b32.xlu0 %v4085, 16
      %v8240 = vpop.permute.xlu0 %8239
      %8241 = vrot.lane.b32.xlu0 %v4086, 16
      %v8242 = vpop.permute.xlu0 %8241
      %8243 = vrot.lane.b32.xlu0 %v4087, 16
      %v8244 = vpop.permute.xlu0 %8243
      %8245 = vrot.lane.b32.xlu0 %v4088, 16
      %v8246 = vpop.permute.xlu0 %8245
      %8247 = vrot.lane.b32.xlu0 %v4089, 16
      %v8248 = vpop.permute.xlu0 %8247
      %8249 = vrot.lane.b32.xlu0 %v4090, 16
      %v8250 = vpop.permute.xlu0 %8249
      %8251 = vrot.lane.b32.xlu0 %v4091, 16
      %v8252 = vpop.permute.xlu0 %8251
      %8253 = vrot.lane.b32.xlu0 %v4092, 16
      %v8254 = vpop.permute.xlu0 %8253
      %8255 = vrot.lane.b32.xlu0 %v4093, 16
      %v8256 = vpop.permute.xlu0 %8255
      %8257 = vrot.lane.b32.xlu0 %v4094, 16
      %v8258 = vpop.permute.xlu0 %8257
      %8259 = vrot.lane.b32.xlu0 %v4095, 16
      %v8260 = vpop.permute.xlu0 %8259
      %8261 = vrot.lane.b32.xlu0 %v4096, 16
      %v8262 = vpop.permute.xlu0 %8261
      %8263 = vrot.lane.b32.xlu0 %v4097, 16
      %v8264 = vpop.permute.xlu0 %8263
      %8265 = vrot.lane.b32.xlu0 %v4098, 16
      %v8266 = vpop.permute.xlu0 %8265
      %8267 = vrot.lane.b32.xlu0 %v4099, 16
      %v8268 = vpop.permute.xlu0 %8267
      %8269 = vrot.lane.b32.xlu0 %v4100, 16
      %v8270 = vpop.permute.xlu0 %8269
      %8335 = vrot.lane.b32.xlu0 %v4101, 18
      %v8336 = vpop.permute.xlu0 %8335
      %8337 = vrot.lane.b32.xlu0 %v4102, 18
      %v8338 = vpop.permute.xlu0 %8337
      %8339 = vrot.lane.b32.xlu0 %v4103, 18
      %v8340 = vpop.permute.xlu0 %8339
      %8341 = vrot.lane.b32.xlu0 %v4104, 18
      %v8342 = vpop.permute.xlu0 %8341
      %8343 = vrot.lane.b32.xlu0 %v4105, 18
      %v8344 = vpop.permute.xlu0 %8343
      %8345 = vrot.lane.b32.xlu0 %v4106, 18
      %v8346 = vpop.permute.xlu0 %8345
      %8347 = vrot.lane.b32.xlu0 %v4107, 18
      %v8348 = vpop.permute.xlu0 %8347
      %8349 = vrot.lane.b32.xlu0 %v4108, 18
      %v8350 = vpop.permute.xlu0 %8349
      %8351 = vrot.lane.b32.xlu0 %v4109, 18
      %v8352 = vpop.permute.xlu0 %8351
      %8353 = vrot.lane.b32.xlu0 %v4110, 18
      %v8354 = vpop.permute.xlu0 %8353
      %8355 = vrot.lane.b32.xlu0 %v4111, 18
      %v8356 = vpop.permute.xlu0 %8355
      %8357 = vrot.lane.b32.xlu0 %v4112, 18
      %v8358 = vpop.permute.xlu0 %8357
      %8359 = vrot.lane.b32.xlu0 %v4113, 18
      %v8360 = vpop.permute.xlu0 %8359
      %8361 = vrot.lane.b32.xlu0 %v4114, 18
      %v8362 = vpop.permute.xlu0 %8361
      %8363 = vrot.lane.b32.xlu0 %v4115, 18
      %v8364 = vpop.permute.xlu0 %8363
      %8365 = vrot.lane.b32.xlu0 %v4116, 18
      %v8366 = vpop.permute.xlu0 %8365
      %8367 = vrot.lane.b32.xlu0 %v4117, 18
      %v8368 = vpop.permute.xlu0 %8367
      %8369 = vrot.lane.b32.xlu0 %v4118, 18
      %v8370 = vpop.permute.xlu0 %8369
      %8371 = vrot.lane.b32.xlu0 %v4119, 18
      %v8372 = vpop.permute.xlu0 %8371
      %8373 = vrot.lane.b32.xlu0 %v4120, 18
      %v8374 = vpop.permute.xlu0 %8373
      %8375 = vrot.lane.b32.xlu0 %v4121, 18
      %v8376 = vpop.permute.xlu0 %8375
      %8377 = vrot.lane.b32.xlu0 %v4122, 18
      %v8378 = vpop.permute.xlu0 %8377
      %8379 = vrot.lane.b32.xlu0 %v4123, 18
      %v8380 = vpop.permute.xlu0 %8379
      %8381 = vrot.lane.b32.xlu0 %v4124, 18
      %v8382 = vpop.permute.xlu0 %8381
      %8383 = vrot.lane.b32.xlu0 %v4125, 18
      %v8384 = vpop.permute.xlu0 %8383
      %8385 = vrot.lane.b32.xlu0 %v4126, 18
      %v8386 = vpop.permute.xlu0 %8385
      %8387 = vrot.lane.b32.xlu0 %v4127, 18
      %v8388 = vpop.permute.xlu0 %8387
      %8389 = vrot.lane.b32.xlu0 %v4128, 18
      %v8390 = vpop.permute.xlu0 %8389
      %8391 = vrot.lane.b32.xlu0 %v4129, 18
      %v8392 = vpop.permute.xlu0 %8391
      %8393 = vrot.lane.b32.xlu0 %v4130, 18
      %v8394 = vpop.permute.xlu0 %8393
      %8395 = vrot.lane.b32.xlu0 %v4131, 18
      %v8396 = vpop.permute.xlu0 %8395
      %8397 = vrot.lane.b32.xlu0 %v4132, 18
      %v8398 = vpop.permute.xlu0 %8397
      %8463 = vrot.lane.b32.xlu0 %v4133, 20
      %v8464 = vpop.permute.xlu0 %8463
      %8465 = vrot.lane.b32.xlu0 %v4134, 20
      %v8466 = vpop.permute.xlu0 %8465
      %8467 = vrot.lane.b32.xlu0 %v4135, 20
      %v8468 = vpop.permute.xlu0 %8467
      %8469 = vrot.lane.b32.xlu0 %v4136, 20
      %v8470 = vpop.permute.xlu0 %8469
      %8471 = vrot.lane.b32.xlu0 %v4137, 20
      %v8472 = vpop.permute.xlu0 %8471
      %8473 = vrot.lane.b32.xlu0 %v4138, 20
      %v8474 = vpop.permute.xlu0 %8473
      %8475 = vrot.lane.b32.xlu0 %v4139, 20
      %v8476 = vpop.permute.xlu0 %8475
      %8477 = vrot.lane.b32.xlu0 %v4140, 20
      %v8478 = vpop.permute.xlu0 %8477
      %8479 = vrot.lane.b32.xlu0 %v4141, 20
      %v8480 = vpop.permute.xlu0 %8479
      %8481 = vrot.lane.b32.xlu0 %v4142, 20
      %v8482 = vpop.permute.xlu0 %8481
      %8483 = vrot.lane.b32.xlu0 %v4143, 20
      %v8484 = vpop.permute.xlu0 %8483
      %8485 = vrot.lane.b32.xlu0 %v4144, 20
      %v8486 = vpop.permute.xlu0 %8485
      %8487 = vrot.lane.b32.xlu0 %v4145, 20
      %v8488 = vpop.permute.xlu0 %8487
      %8489 = vrot.lane.b32.xlu0 %v4146, 20
      %v8490 = vpop.permute.xlu0 %8489
      %8491 = vrot.lane.b32.xlu0 %v4147, 20
      %v8492 = vpop.permute.xlu0 %8491
      %8493 = vrot.lane.b32.xlu0 %v4148, 20
      %v8494 = vpop.permute.xlu0 %8493
      %8495 = vrot.lane.b32.xlu0 %v4149, 20
      %v8496 = vpop.permute.xlu0 %8495
      %8497 = vrot.lane.b32.xlu0 %v4150, 20
      %v8498 = vpop.permute.xlu0 %8497
      %8499 = vrot.lane.b32.xlu0 %v4151, 20
      %v8500 = vpop.permute.xlu0 %8499
      %8501 = vrot.lane.b32.xlu0 %v4152, 20
      %v8502 = vpop.permute.xlu0 %8501
      %8503 = vrot.lane.b32.xlu0 %v4153, 20
      %v8504 = vpop.permute.xlu0 %8503
      %8505 = vrot.lane.b32.xlu0 %v4154, 20
      %v8506 = vpop.permute.xlu0 %8505
      %8507 = vrot.lane.b32.xlu0 %v4155, 20
      %v8508 = vpop.permute.xlu0 %8507
      %8509 = vrot.lane.b32.xlu0 %v4156, 20
      %v8510 = vpop.permute.xlu0 %8509
      %8511 = vrot.lane.b32.xlu0 %v4157, 20
      %v8512 = vpop.permute.xlu0 %8511
      %8513 = vrot.lane.b32.xlu0 %v4158, 20
      %v8514 = vpop.permute.xlu0 %8513
      %8515 = vrot.lane.b32.xlu0 %v4159, 20
      %v8516 = vpop.permute.xlu0 %8515
      %8517 = vrot.lane.b32.xlu0 %v4160, 20
      %v8518 = vpop.permute.xlu0 %8517
      %8519 = vrot.lane.b32.xlu0 %v4161, 20
      %v8520 = vpop.permute.xlu0 %8519
      %8521 = vrot.lane.b32.xlu0 %v4162, 20
      %v8522 = vpop.permute.xlu0 %8521
      %8523 = vrot.lane.b32.xlu0 %v4163, 20
      %v8524 = vpop.permute.xlu0 %8523
      %8525 = vrot.lane.b32.xlu0 %v4164, 20
      %v8526 = vpop.permute.xlu0 %8525
      %8591 = vrot.lane.b32.xlu0 %v4165, 22
      %v8592 = vpop.permute.xlu0 %8591
      %8593 = vrot.lane.b32.xlu0 %v4166, 22
      %v8594 = vpop.permute.xlu0 %8593
      %8595 = vrot.lane.b32.xlu0 %v4167, 22
      %v8596 = vpop.permute.xlu0 %8595
      %8597 = vrot.lane.b32.xlu0 %v4168, 22
      %v8598 = vpop.permute.xlu0 %8597
      %8599 = vrot.lane.b32.xlu0 %v4169, 22
      %v8600 = vpop.permute.xlu0 %8599
      %8601 = vrot.lane.b32.xlu0 %v4170, 22
      %v8602 = vpop.permute.xlu0 %8601
      %8603 = vrot.lane.b32.xlu0 %v4171, 22
      %v8604 = vpop.permute.xlu0 %8603
      %8605 = vrot.lane.b32.xlu0 %v4172, 22
      %v8606 = vpop.permute.xlu0 %8605
      %8607 = vrot.lane.b32.xlu0 %v4173, 22
      %v8608 = vpop.permute.xlu0 %8607
      %8609 = vrot.lane.b32.xlu0 %v4174, 22
      %v8610 = vpop.permute.xlu0 %8609
      %8611 = vrot.lane.b32.xlu0 %v4175, 22
      %v8612 = vpop.permute.xlu0 %8611
      %8613 = vrot.lane.b32.xlu0 %v4176, 22
      %v8614 = vpop.permute.xlu0 %8613
      %8615 = vrot.lane.b32.xlu0 %v4177, 22
      %v8616 = vpop.permute.xlu0 %8615
      %8617 = vrot.lane.b32.xlu0 %v4178, 22
      %v8618 = vpop.permute.xlu0 %8617
      %8619 = vrot.lane.b32.xlu0 %v4179, 22
      %v8620 = vpop.permute.xlu0 %8619
      %8621 = vrot.lane.b32.xlu0 %v4180, 22
      %v8622 = vpop.permute.xlu0 %8621
      %8623 = vrot.lane.b32.xlu0 %v4181, 22
      %v8624 = vpop.permute.xlu0 %8623
      %8625 = vrot.lane.b32.xlu0 %v4182, 22
      %v8626 = vpop.permute.xlu0 %8625
      %8627 = vrot.lane.b32.xlu0 %v4183, 22
      %v8628 = vpop.permute.xlu0 %8627
      %8629 = vrot.lane.b32.xlu0 %v4184, 22
      %v8630 = vpop.permute.xlu0 %8629
      %8631 = vrot.lane.b32.xlu0 %v4185, 22
      %v8632 = vpop.permute.xlu0 %8631
      %8633 = vrot.lane.b32.xlu0 %v4186, 22
      %v8634 = vpop.permute.xlu0 %8633
      %8635 = vrot.lane.b32.xlu0 %v4187, 22
      %v8636 = vpop.permute.xlu0 %8635
      %8637 = vrot.lane.b32.xlu0 %v4188, 22
      %v8638 = vpop.permute.xlu0 %8637
      %8639 = vrot.lane.b32.xlu0 %v4189, 22
      %v8640 = vpop.permute.xlu0 %8639
      %8641 = vrot.lane.b32.xlu0 %v4190, 22
      %v8642 = vpop.permute.xlu0 %8641
      %8643 = vrot.lane.b32.xlu0 %v4191, 22
      %v8644 = vpop.permute.xlu0 %8643
      %8645 = vrot.lane.b32.xlu0 %v4192, 22
      %v8646 = vpop.permute.xlu0 %8645
      %8647 = vrot.lane.b32.xlu0 %v4193, 22
      %v8648 = vpop.permute.xlu0 %8647
      %8649 = vrot.lane.b32.xlu0 %v4194, 22
      %v8650 = vpop.permute.xlu0 %8649
      %8651 = vrot.lane.b32.xlu0 %v4195, 22
      %v8652 = vpop.permute.xlu0 %8651
      %8653 = vrot.lane.b32.xlu0 %v4196, 22
      %v8654 = vpop.permute.xlu0 %8653
      %8719 = vrot.lane.b32.xlu0 %v4198, 24
      %v8720 = vpop.permute.xlu0 %8719
      %8721 = vrot.lane.b32.xlu0 %v4199, 24
      %v8722 = vpop.permute.xlu0 %8721
      %8723 = vrot.lane.b32.xlu0 %v4200, 24
      %v8724 = vpop.permute.xlu0 %8723
      %8725 = vrot.lane.b32.xlu0 %v4201, 24
      %v8726 = vpop.permute.xlu0 %8725
      %8727 = vrot.lane.b32.xlu0 %v4202, 24
      %v8728 = vpop.permute.xlu0 %8727
      %8729 = vrot.lane.b32.xlu0 %v4203, 24
      %v8730 = vpop.permute.xlu0 %8729
      %8731 = vrot.lane.b32.xlu0 %v4204, 24
      %v8732 = vpop.permute.xlu0 %8731
      %8733 = vrot.lane.b32.xlu0 %v4205, 24
      %v8734 = vpop.permute.xlu0 %8733
      %8735 = vrot.lane.b32.xlu0 %v4206, 24
      %v8736 = vpop.permute.xlu0 %8735
      %8737 = vrot.lane.b32.xlu0 %v4207, 24
      %v8738 = vpop.permute.xlu0 %8737
      %8739 = vrot.lane.b32.xlu0 %v4208, 24
      %v8740 = vpop.permute.xlu0 %8739
      %8741 = vrot.lane.b32.xlu0 %v4209, 24
      %v8742 = vpop.permute.xlu0 %8741
      %8743 = vrot.lane.b32.xlu0 %v4210, 24
      %v8744 = vpop.permute.xlu0 %8743
      %8745 = vrot.lane.b32.xlu0 %v4211, 24
      %v8746 = vpop.permute.xlu0 %8745
      %8747 = vrot.lane.b32.xlu0 %v4212, 24
      %v8748 = vpop.permute.xlu0 %8747
      %8749 = vrot.lane.b32.xlu0 %v4213, 24
      %v8750 = vpop.permute.xlu0 %8749
      %8751 = vrot.lane.b32.xlu0 %v4214, 24
      %v8752 = vpop.permute.xlu0 %8751
      %8753 = vrot.lane.b32.xlu0 %v4215, 24
      %v8754 = vpop.permute.xlu0 %8753
      %8755 = vrot.lane.b32.xlu0 %v4216, 24
      %v8756 = vpop.permute.xlu0 %8755
      %8757 = vrot.lane.b32.xlu0 %v4217, 24
      %v8758 = vpop.permute.xlu0 %8757
      %8759 = vrot.lane.b32.xlu0 %v4218, 24
      %v8760 = vpop.permute.xlu0 %8759
      %8761 = vrot.lane.b32.xlu0 %v4219, 24
      %v8762 = vpop.permute.xlu0 %8761
      %8763 = vrot.lane.b32.xlu0 %v4220, 24
      %v8764 = vpop.permute.xlu0 %8763
      %8765 = vrot.lane.b32.xlu0 %v4221, 24
      %v8766 = vpop.permute.xlu0 %8765
      %8767 = vrot.lane.b32.xlu0 %v4222, 24
      %v8768 = vpop.permute.xlu0 %8767
      %8769 = vrot.lane.b32.xlu0 %v4223, 24
      %v8770 = vpop.permute.xlu0 %8769
      %8771 = vrot.lane.b32.xlu0 %v4224, 24
      %v8772 = vpop.permute.xlu0 %8771
      %8773 = vrot.lane.b32.xlu0 %v4225, 24
      %v8774 = vpop.permute.xlu0 %8773
      %8775 = vrot.lane.b32.xlu0 %v4226, 24
      %v8776 = vpop.permute.xlu0 %8775
      %8777 = vrot.lane.b32.xlu0 %v4227, 24
      %v8778 = vpop.permute.xlu0 %8777
      %8779 = vrot.lane.b32.xlu0 %v4228, 24
      %v8780 = vpop.permute.xlu0 %8779
      %8781 = vrot.lane.b32.xlu0 %v4229, 24
      %v8782 = vpop.permute.xlu0 %8781
      %8847 = vrot.lane.b32.xlu0 %v4230, 26
      %v8848 = vpop.permute.xlu0 %8847
      %8849 = vrot.lane.b32.xlu0 %v4231, 26
      %v8850 = vpop.permute.xlu0 %8849
      %8851 = vrot.lane.b32.xlu0 %v4232, 26
      %v8852 = vpop.permute.xlu0 %8851
      %8853 = vrot.lane.b32.xlu0 %v4233, 26
      %v8854 = vpop.permute.xlu0 %8853
      %8855 = vrot.lane.b32.xlu0 %v4234, 26
      %v8856 = vpop.permute.xlu0 %8855
      %8857 = vrot.lane.b32.xlu0 %v4235, 26
      %v8858 = vpop.permute.xlu0 %8857
      %8859 = vrot.lane.b32.xlu0 %v4236, 26
      %v8860 = vpop.permute.xlu0 %8859
      %8861 = vrot.lane.b32.xlu0 %v4237, 26
      %v8862 = vpop.permute.xlu0 %8861
      %8863 = vrot.lane.b32.xlu0 %v4238, 26
      %v8864 = vpop.permute.xlu0 %8863
      %8865 = vrot.lane.b32.xlu0 %v4239, 26
      %v8866 = vpop.permute.xlu0 %8865
      %8867 = vrot.lane.b32.xlu0 %v4240, 26
      %v8868 = vpop.permute.xlu0 %8867
      %8869 = vrot.lane.b32.xlu0 %v4241, 26
      %v8870 = vpop.permute.xlu0 %8869
      %8871 = vrot.lane.b32.xlu0 %v4242, 26
      %v8872 = vpop.permute.xlu0 %8871
      %8873 = vrot.lane.b32.xlu0 %v4243, 26
      %v8874 = vpop.permute.xlu0 %8873
      %8875 = vrot.lane.b32.xlu0 %v4244, 26
      %v8876 = vpop.permute.xlu0 %8875
      %8877 = vrot.lane.b32.xlu0 %v4245, 26
      %v8878 = vpop.permute.xlu0 %8877
      %8879 = vrot.lane.b32.xlu0 %v4246, 26
      %v8880 = vpop.permute.xlu0 %8879
      %8881 = vrot.lane.b32.xlu0 %v4247, 26
      %v8882 = vpop.permute.xlu0 %8881
      %8883 = vrot.lane.b32.xlu0 %v4248, 26
      %v8884 = vpop.permute.xlu0 %8883
      %8885 = vrot.lane.b32.xlu0 %v4249, 26
      %v8886 = vpop.permute.xlu0 %8885
      %8887 = vrot.lane.b32.xlu0 %v4250, 26
      %v8888 = vpop.permute.xlu0 %8887
      %8889 = vrot.lane.b32.xlu0 %v4251, 26
      %v8890 = vpop.permute.xlu0 %8889
      %8891 = vrot.lane.b32.xlu0 %v4252, 26
      %v8892 = vpop.permute.xlu0 %8891
      %8893 = vrot.lane.b32.xlu0 %v4253, 26
      %v8894 = vpop.permute.xlu0 %8893
      %8895 = vrot.lane.b32.xlu0 %v4254, 26
      %v8896 = vpop.permute.xlu0 %8895
      %8897 = vrot.lane.b32.xlu0 %v4255, 26
      %v8898 = vpop.permute.xlu0 %8897
      %8899 = vrot.lane.b32.xlu0 %v4256, 26
      %v8900 = vpop.permute.xlu0 %8899
      %8901 = vrot.lane.b32.xlu0 %v4257, 26
      %v8902 = vpop.permute.xlu0 %8901
      %8903 = vrot.lane.b32.xlu0 %v4258, 26
      %v8904 = vpop.permute.xlu0 %8903
      %8905 = vrot.lane.b32.xlu0 %v4259, 26
      %v8906 = vpop.permute.xlu0 %8905
      %8907 = vrot.lane.b32.xlu0 %v4260, 26
      %v8908 = vpop.permute.xlu0 %8907
      %8909 = vrot.lane.b32.xlu0 %v4261, 26
      %v8910 = vpop.permute.xlu0 %8909
      %8975 = vrot.lane.b32.xlu0 %v4262, 28
      %v8976 = vpop.permute.xlu0 %8975
      %8977 = vrot.lane.b32.xlu0 %v4263, 28
      %v8978 = vpop.permute.xlu0 %8977
      %8979 = vrot.lane.b32.xlu0 %v4264, 28
      %v8980 = vpop.permute.xlu0 %8979
      %8981 = vrot.lane.b32.xlu0 %v4265, 28
      %v8982 = vpop.permute.xlu0 %8981
      %8983 = vrot.lane.b32.xlu0 %v4266, 28
      %v8984 = vpop.permute.xlu0 %8983
      %8985 = vrot.lane.b32.xlu0 %v4267, 28
      %v8986 = vpop.permute.xlu0 %8985
      %8987 = vrot.lane.b32.xlu0 %v4268, 28
      %v8988 = vpop.permute.xlu0 %8987
      %8989 = vrot.lane.b32.xlu0 %v4269, 28
      %v8990 = vpop.permute.xlu0 %8989
      %8991 = vrot.lane.b32.xlu0 %v4270, 28
      %v8992 = vpop.permute.xlu0 %8991
      %8993 = vrot.lane.b32.xlu0 %v4271, 28
      %v8994 = vpop.permute.xlu0 %8993
      %8995 = vrot.lane.b32.xlu0 %v4272, 28
      %v8996 = vpop.permute.xlu0 %8995
      %8997 = vrot.lane.b32.xlu0 %v4273, 28
      %v8998 = vpop.permute.xlu0 %8997
      %8999 = vrot.lane.b32.xlu0 %v4274, 28
      %v9000 = vpop.permute.xlu0 %8999
      %9001 = vrot.lane.b32.xlu0 %v4275, 28
      %v9002 = vpop.permute.xlu0 %9001
      %9003 = vrot.lane.b32.xlu0 %v4276, 28
      %v9004 = vpop.permute.xlu0 %9003
      %9005 = vrot.lane.b32.xlu0 %v4277, 28
      %v9006 = vpop.permute.xlu0 %9005
      %9007 = vrot.lane.b32.xlu0 %v4278, 28
      %v9008 = vpop.permute.xlu0 %9007
      %9009 = vrot.lane.b32.xlu0 %v4279, 28
      %v9010 = vpop.permute.xlu0 %9009
      %9011 = vrot.lane.b32.xlu0 %v4280, 28
      %v9012 = vpop.permute.xlu0 %9011
      %9013 = vrot.lane.b32.xlu0 %v4281, 28
      %v9014 = vpop.permute.xlu0 %9013
      %9015 = vrot.lane.b32.xlu0 %v4282, 28
      %v9016 = vpop.permute.xlu0 %9015
      %9017 = vrot.lane.b32.xlu0 %v4283, 28
      %v9018 = vpop.permute.xlu0 %9017
      %9019 = vrot.lane.b32.xlu0 %v4284, 28
      %v9020 = vpop.permute.xlu0 %9019
      %9021 = vrot.lane.b32.xlu0 %v4285, 28
      %v9022 = vpop.permute.xlu0 %9021
      %9023 = vrot.lane.b32.xlu0 %v4286, 28
      %v9024 = vpop.permute.xlu0 %9023
      %9025 = vrot.lane.b32.xlu0 %v4287, 28
      %v9026 = vpop.permute.xlu0 %9025
      %9027 = vrot.lane.b32.xlu0 %v4288, 28
      %v9028 = vpop.permute.xlu0 %9027
      %9029 = vrot.lane.b32.xlu0 %v4289, 28
      %v9030 = vpop.permute.xlu0 %9029
      %9031 = vrot.lane.b32.xlu0 %v4290, 28
      %v9032 = vpop.permute.xlu0 %9031
      %9033 = vrot.lane.b32.xlu0 %v4291, 28
      %v9034 = vpop.permute.xlu0 %9033
      %9035 = vrot.lane.b32.xlu0 %v4292, 28
      %v9036 = vpop.permute.xlu0 %9035
      %9037 = vrot.lane.b32.xlu0 %v4293, 28
      %v9038 = vpop.permute.xlu0 %9037
      %9103 = vrot.lane.b32.xlu0 %v4294, 30
      %v9104 = vpop.permute.xlu0 %9103
      %9105 = vrot.lane.b32.xlu0 %v4295, 30
      %v9106 = vpop.permute.xlu0 %9105
      %9107 = vrot.lane.b32.xlu0 %v4296, 30
      %v9108 = vpop.permute.xlu0 %9107
      %9109 = vrot.lane.b32.xlu0 %v4297, 30
      %v9110 = vpop.permute.xlu0 %9109
      %9111 = vrot.lane.b32.xlu0 %v4298, 30
      %v9112 = vpop.permute.xlu0 %9111
      %9113 = vrot.lane.b32.xlu0 %v4299, 30
      %v9114 = vpop.permute.xlu0 %9113
      %9115 = vrot.lane.b32.xlu0 %v4300, 30
      %v9116 = vpop.permute.xlu0 %9115
      %9117 = vrot.lane.b32.xlu0 %v4301, 30
      %v9118 = vpop.permute.xlu0 %9117
      %9119 = vrot.lane.b32.xlu0 %v4302, 30
      %v9120 = vpop.permute.xlu0 %9119
      %9121 = vrot.lane.b32.xlu0 %v4303, 30
      %v9122 = vpop.permute.xlu0 %9121
      %9123 = vrot.lane.b32.xlu0 %v4304, 30
      %v9124 = vpop.permute.xlu0 %9123
      %9125 = vrot.lane.b32.xlu0 %v4305, 30
      %v9126 = vpop.permute.xlu0 %9125
      %9127 = vrot.lane.b32.xlu0 %v4306, 30
      %v9128 = vpop.permute.xlu0 %9127
      %9129 = vrot.lane.b32.xlu0 %v4307, 30
      %v9130 = vpop.permute.xlu0 %9129
      %9131 = vrot.lane.b32.xlu0 %v4308, 30
      %v9132 = vpop.permute.xlu0 %9131
      %9133 = vrot.lane.b32.xlu0 %v4309, 30
      %v9134 = vpop.permute.xlu0 %9133
      %9135 = vrot.lane.b32.xlu0 %v4310, 30
      %v9136 = vpop.permute.xlu0 %9135
      %9137 = vrot.lane.b32.xlu0 %v4311, 30
      %v9138 = vpop.permute.xlu0 %9137
      %9139 = vrot.lane.b32.xlu0 %v4312, 30
      %v9140 = vpop.permute.xlu0 %9139
      %9141 = vrot.lane.b32.xlu0 %v4313, 30
      %v9142 = vpop.permute.xlu0 %9141
      %9143 = vrot.lane.b32.xlu0 %v4314, 30
      %v9144 = vpop.permute.xlu0 %9143
      %9145 = vrot.lane.b32.xlu0 %v4315, 30
      %v9146 = vpop.permute.xlu0 %9145
      %9147 = vrot.lane.b32.xlu0 %v4316, 30
      %v9148 = vpop.permute.xlu0 %9147
      %9149 = vrot.lane.b32.xlu0 %v4317, 30
      %v9150 = vpop.permute.xlu0 %9149
      %9151 = vrot.lane.b32.xlu0 %v4318, 30
      %v9152 = vpop.permute.xlu0 %9151
      %9153 = vrot.lane.b32.xlu0 %v4319, 30
      %v9154 = vpop.permute.xlu0 %9153
      %9155 = vrot.lane.b32.xlu0 %v4320, 30
      %v9156 = vpop.permute.xlu0 %9155
      %9157 = vrot.lane.b32.xlu0 %v4321, 30
      %v9158 = vpop.permute.xlu0 %9157
      %9159 = vrot.lane.b32.xlu0 %v4322, 30
      %v9160 = vpop.permute.xlu0 %9159
      %9161 = vrot.lane.b32.xlu0 %v4323, 30
      %v9162 = vpop.permute.xlu0 %9161
      %9163 = vrot.lane.b32.xlu0 %v4324, 30
      %v9164 = vpop.permute.xlu0 %9163
      %9165 = vrot.lane.b32.xlu0 %v4325, 30
      %v9166 = vpop.permute.xlu0 %9165
      %v9199 = vsel %vm3198, %v3813, %v7312
      %v9200 = vsel %vm3198, %v3814, %v7314
      %v9201 = vsel %vm3198, %v3815, %v7316
      %v9202 = vsel %vm3198, %v3816, %v7318
      %v9203 = vsel %vm3198, %v3817, %v7320
      %v9204 = vsel %vm3198, %v3818, %v7322
      %v9205 = vsel %vm3198, %v3819, %v7324
      %v9206 = vsel %vm3198, %v3820, %v7326
      %v9207 = vsel %vm3198, %v3821, %v7328
      %v9208 = vsel %vm3198, %v3822, %v7330
      %v9209 = vsel %vm3198, %v3823, %v7332
      %v9210 = vsel %vm3198, %v3824, %v7334
      %v9211 = vsel %vm3198, %v3825, %v7336
      %v9212 = vsel %vm3198, %v3826, %v7338
      %v9213 = vsel %vm3198, %v3827, %v7340
      %v9214 = vsel %vm3198, %v3828, %v7342
      %v9215 = vsel %vm3198, %v3829, %v7344
      %v9216 = vsel %vm3198, %v3830, %v7346
      %v9217 = vsel %vm3198, %v3831, %v7348
      %v9218 = vsel %vm3198, %v3832, %v7350
      %v9219 = vsel %vm3198, %v3833, %v7352
      %v9220 = vsel %vm3198, %v3834, %v7354
      %v9221 = vsel %vm3198, %v3835, %v7356
      %v9222 = vsel %vm3198, %v3836, %v7358
      %v9223 = vsel %vm3198, %v3837, %v7360
      %v9224 = vsel %vm3198, %v3838, %v7362
      %v9225 = vsel %vm3198, %v3839, %v7364
      %v9226 = vsel %vm3198, %v3840, %v7366
      %v9227 = vsel %vm3198, %v3841, %v7368
      %v9228 = vsel %vm3198, %v3842, %v7370
      %v9229 = vsel %vm3198, %v3843, %v7372
      %v9230 = vsel %vm3198, %v3844, %v7374
      %v9231 = vsel %vm526, %v9199, %v7440
      %v9232 = vsel %vm526, %v9200, %v7442
      %v9233 = vsel %vm526, %v9201, %v7444
      %v9234 = vsel %vm526, %v9202, %v7446
      %v9235 = vsel %vm526, %v9203, %v7448
      %v9236 = vsel %vm526, %v9204, %v7450
      %v9237 = vsel %vm526, %v9205, %v7452
      %v9238 = vsel %vm526, %v9206, %v7454
      %v9239 = vsel %vm526, %v9207, %v7456
      %v9240 = vsel %vm526, %v9208, %v7458
      %v9241 = vsel %vm526, %v9209, %v7460
      %v9242 = vsel %vm526, %v9210, %v7462
      %v9243 = vsel %vm526, %v9211, %v7464
      %v9244 = vsel %vm526, %v9212, %v7466
      %v9245 = vsel %vm526, %v9213, %v7468
      %v9246 = vsel %vm526, %v9214, %v7470
      %v9247 = vsel %vm526, %v9215, %v7472
      %v9248 = vsel %vm526, %v9216, %v7474
      %v9249 = vsel %vm526, %v9217, %v7476
      %v9250 = vsel %vm526, %v9218, %v7478
      %v9251 = vsel %vm526, %v9219, %v7480
      %v9252 = vsel %vm526, %v9220, %v7482
      %v9253 = vsel %vm526, %v9221, %v7484
      %v9254 = vsel %vm526, %v9222, %v7486
      %v9255 = vsel %vm526, %v9223, %v7488
      %v9256 = vsel %vm526, %v9224, %v7490
      %v9257 = vsel %vm526, %v9225, %v7492
      %v9258 = vsel %vm526, %v9226, %v7494
      %v9259 = vsel %vm526, %v9227, %v7496
      %v9260 = vsel %vm526, %v9228, %v7498
      %v9261 = vsel %vm526, %v9229, %v7500
      %v9262 = vsel %vm526, %v9230, %v7502
      %v9263 = vsel %vm6856, %v9231, %v7568
      %v9264 = vsel %vm6856, %v9232, %v7570
      %v9265 = vsel %vm6856, %v9233, %v7572
      %v9266 = vsel %vm6856, %v9234, %v7574
      %v9267 = vsel %vm6856, %v9235, %v7576
      %v9268 = vsel %vm6856, %v9236, %v7578
      %v9269 = vsel %vm6856, %v9237, %v7580
      %v9270 = vsel %vm6856, %v9238, %v7582
      %v9271 = vsel %vm6856, %v9239, %v7584
      %v9272 = vsel %vm6856, %v9240, %v7586
      %v9273 = vsel %vm6856, %v9241, %v7588
      %v9274 = vsel %vm6856, %v9242, %v7590
      %v9275 = vsel %vm6856, %v9243, %v7592
      %v9276 = vsel %vm6856, %v9244, %v7594
      %v9277 = vsel %vm6856, %v9245, %v7596
      %v9278 = vsel %vm6856, %v9246, %v7598
      %v9279 = vsel %vm6856, %v9247, %v7600
      %v9280 = vsel %vm6856, %v9248, %v7602
      %v9281 = vsel %vm6856, %v9249, %v7604
      %v9282 = vsel %vm6856, %v9250, %v7606
      %v9283 = vsel %vm6856, %v9251, %v7608
      %v9284 = vsel %vm6856, %v9252, %v7610
      %v9285 = vsel %vm6856, %v9253, %v7612
      %v9286 = vsel %vm6856, %v9254, %v7614
      %v9287 = vsel %vm6856, %v9255, %v7616
      %v9288 = vsel %vm6856, %v9256, %v7618
      %v9289 = vsel %vm6856, %v9257, %v7620
      %v9290 = vsel %vm6856, %v9258, %v7622
      %v9291 = vsel %vm6856, %v9259, %v7624
      %v9292 = vsel %vm6856, %v9260, %v7626
      %v9293 = vsel %vm6856, %v9261, %v7628
      %v9294 = vsel %vm6856, %v9262, %v7630
      %v9295 = vsel %vm2121, %v9263, %v7696
      %v9296 = vsel %vm2121, %v9264, %v7698
      %v9297 = vsel %vm2121, %v9265, %v7700
      %v9298 = vsel %vm2121, %v9266, %v7702
      %v9299 = vsel %vm2121, %v9267, %v7704
      %v9300 = vsel %vm2121, %v9268, %v7706
      %v9301 = vsel %vm2121, %v9269, %v7708
      %v9302 = vsel %vm2121, %v9270, %v7710
      %v9303 = vsel %vm2121, %v9271, %v7712
      %v9304 = vsel %vm2121, %v9272, %v7714
      %v9305 = vsel %vm2121, %v9273, %v7716
      %v9306 = vsel %vm2121, %v9274, %v7718
      %v9307 = vsel %vm2121, %v9275, %v7720
      %v9308 = vsel %vm2121, %v9276, %v7722
      %v9309 = vsel %vm2121, %v9277, %v7724
      %v9310 = vsel %vm2121, %v9278, %v7726
      %v9311 = vsel %vm2121, %v9279, %v7728
      %v9312 = vsel %vm2121, %v9280, %v7730
      %v9313 = vsel %vm2121, %v9281, %v7732
      %v9314 = vsel %vm2121, %v9282, %v7734
      %v9315 = vsel %vm2121, %v9283, %v7736
      %v9316 = vsel %vm2121, %v9284, %v7738
      %v9317 = vsel %vm2121, %v9285, %v7740
      %v9318 = vsel %vm2121, %v9286, %v7742
      %v9319 = vsel %vm2121, %v9287, %v7744
      %v9320 = vsel %vm2121, %v9288, %v7746
      %v9321 = vsel %vm2121, %v9289, %v7748
      %v9322 = vsel %vm2121, %v9290, %v7750
      %v9323 = vsel %vm2121, %v9291, %v7752
      %v9324 = vsel %vm2121, %v9292, %v7754
      %v9325 = vsel %vm2121, %v9293, %v7756
      %v9326 = vsel %vm2121, %v9294, %v7758
      %v9327 = vsel %vm6921, %v9295, %v7824
      %v9328 = vsel %vm6921, %v9296, %v7826
      %v9329 = vsel %vm6921, %v9297, %v7828
      %v9330 = vsel %vm6921, %v9298, %v7830
      %v9331 = vsel %vm6921, %v9299, %v7832
      %v9332 = vsel %vm6921, %v9300, %v7834
      %v9333 = vsel %vm6921, %v9301, %v7836
      %v9334 = vsel %vm6921, %v9302, %v7838
      %v9335 = vsel %vm6921, %v9303, %v7840
      %v9336 = vsel %vm6921, %v9304, %v7842
      %v9337 = vsel %vm6921, %v9305, %v7844
      %v9338 = vsel %vm6921, %v9306, %v7846
      %v9339 = vsel %vm6921, %v9307, %v7848
      %v9340 = vsel %vm6921, %v9308, %v7850
      %v9341 = vsel %vm6921, %v9309, %v7852
      %v9342 = vsel %vm6921, %v9310, %v7854
      %v9343 = vsel %vm6921, %v9311, %v7856
      %v9344 = vsel %vm6921, %v9312, %v7858
      %v9345 = vsel %vm6921, %v9313, %v7860
      %v9346 = vsel %vm6921, %v9314, %v7862
      %v9347 = vsel %vm6921, %v9315, %v7864
      %v9348 = vsel %vm6921, %v9316, %v7866
      %v9349 = vsel %vm6921, %v9317, %v7868
      %v9350 = vsel %vm6921, %v9318, %v7870
      %v9351 = vsel %vm6921, %v9319, %v7872
      %v9352 = vsel %vm6921, %v9320, %v7874
      %v9353 = vsel %vm6921, %v9321, %v7876
      %v9354 = vsel %vm6921, %v9322, %v7878
      %v9355 = vsel %vm6921, %v9323, %v7880
      %v9356 = vsel %vm6921, %v9324, %v7882
      %v9357 = vsel %vm6921, %v9325, %v7884
      %v9358 = vsel %vm6921, %v9326, %v7886
      %v9359 = vsel %vm2154, %v9327, %v7952
      %v9360 = vsel %vm2154, %v9328, %v7954
      %v9361 = vsel %vm2154, %v9329, %v7956
      %v9362 = vsel %vm2154, %v9330, %v7958
      %v9363 = vsel %vm2154, %v9331, %v7960
      %v9364 = vsel %vm2154, %v9332, %v7962
      %v9365 = vsel %vm2154, %v9333, %v7964
      %v9366 = vsel %vm2154, %v9334, %v7966
      %v9367 = vsel %vm2154, %v9335, %v7968
      %v9368 = vsel %vm2154, %v9336, %v7970
      %v9369 = vsel %vm2154, %v9337, %v7972
      %v9370 = vsel %vm2154, %v9338, %v7974
      %v9371 = vsel %vm2154, %v9339, %v7976
      %v9372 = vsel %vm2154, %v9340, %v7978
      %v9373 = vsel %vm2154, %v9341, %v7980
      %v9374 = vsel %vm2154, %v9342, %v7982
      %v9375 = vsel %vm2154, %v9343, %v7984
      %v9376 = vsel %vm2154, %v9344, %v7986
      %v9377 = vsel %vm2154, %v9345, %v7988
      %v9378 = vsel %vm2154, %v9346, %v7990
      %v9379 = vsel %vm2154, %v9347, %v7992
      %v9380 = vsel %vm2154, %v9348, %v7994
      %v9381 = vsel %vm2154, %v9349, %v7996
      %v9382 = vsel %vm2154, %v9350, %v7998
      %v9383 = vsel %vm2154, %v9351, %v8000
      %v9384 = vsel %vm2154, %v9352, %v8002
      %v9385 = vsel %vm2154, %v9353, %v8004
      %v9386 = vsel %vm2154, %v9354, %v8006
      %v9387 = vsel %vm2154, %v9355, %v8008
      %v9388 = vsel %vm2154, %v9356, %v8010
      %v9389 = vsel %vm2154, %v9357, %v8012
      %v9390 = vsel %vm2154, %v9358, %v8014
      %v9391 = vsel %vm6986, %v9359, %v8080
      %v9392 = vsel %vm6986, %v9360, %v8082
      %v9393 = vsel %vm6986, %v9361, %v8084
      %v9394 = vsel %vm6986, %v9362, %v8086
      %v9395 = vsel %vm6986, %v9363, %v8088
      %v9396 = vsel %vm6986, %v9364, %v8090
      %v9397 = vsel %vm6986, %v9365, %v8092
      %v9398 = vsel %vm6986, %v9366, %v8094
      %v9399 = vsel %vm6986, %v9367, %v8096
      %v9400 = vsel %vm6986, %v9368, %v8098
      %v9401 = vsel %vm6986, %v9369, %v8100
      %v9402 = vsel %vm6986, %v9370, %v8102
      %v9403 = vsel %vm6986, %v9371, %v8104
      %v9404 = vsel %vm6986, %v9372, %v8106
      %v9405 = vsel %vm6986, %v9373, %v8108
      %v9406 = vsel %vm6986, %v9374, %v8110
      %v9407 = vsel %vm6986, %v9375, %v8112
      %v9408 = vsel %vm6986, %v9376, %v8114
      %v9409 = vsel %vm6986, %v9377, %v8116
      %v9410 = vsel %vm6986, %v9378, %v8118
      %v9411 = vsel %vm6986, %v9379, %v8120
      %v9412 = vsel %vm6986, %v9380, %v8122
      %v9413 = vsel %vm6986, %v9381, %v8124
      %v9414 = vsel %vm6986, %v9382, %v8126
      %v9415 = vsel %vm6986, %v9383, %v8128
      %v9416 = vsel %vm6986, %v9384, %v8130
      %v9417 = vsel %vm6986, %v9385, %v8132
      %v9418 = vsel %vm6986, %v9386, %v8134
      %v9419 = vsel %vm6986, %v9387, %v8136
      %v9420 = vsel %vm6986, %v9388, %v8138
      %v9421 = vsel %vm6986, %v9389, %v8140
      %v9422 = vsel %vm6986, %v9390, %v8142
      %v9423 = vsel %vm2187, %v9391, %v8208
      %v9424 = vsel %vm2187, %v9392, %v8210
      %v9425 = vsel %vm2187, %v9393, %v8212
      %v9426 = vsel %vm2187, %v9394, %v8214
      %v9427 = vsel %vm2187, %v9395, %v8216
      %v9428 = vsel %vm2187, %v9396, %v8218
      %v9429 = vsel %vm2187, %v9397, %v8220
      %v9430 = vsel %vm2187, %v9398, %v8222
      %v9431 = vsel %vm2187, %v9399, %v8224
      %v9432 = vsel %vm2187, %v9400, %v8226
      %v9433 = vsel %vm2187, %v9401, %v8228
      %v9434 = vsel %vm2187, %v9402, %v8230
      %v9435 = vsel %vm2187, %v9403, %v8232
      %v9436 = vsel %vm2187, %v9404, %v8234
      %v9437 = vsel %vm2187, %v9405, %v8236
      %v9438 = vsel %vm2187, %v9406, %v8238
      %v9439 = vsel %vm2187, %v9407, %v8240
      %v9440 = vsel %vm2187, %v9408, %v8242
      %v9441 = vsel %vm2187, %v9409, %v8244
      %v9442 = vsel %vm2187, %v9410, %v8246
      %v9443 = vsel %vm2187, %v9411, %v8248
      %v9444 = vsel %vm2187, %v9412, %v8250
      %v9445 = vsel %vm2187, %v9413, %v8252
      %v9446 = vsel %vm2187, %v9414, %v8254
      %v9447 = vsel %vm2187, %v9415, %v8256
      %v9448 = vsel %vm2187, %v9416, %v8258
      %v9449 = vsel %vm2187, %v9417, %v8260
      %v9450 = vsel %vm2187, %v9418, %v8262
      %v9451 = vsel %vm2187, %v9419, %v8264
      %v9452 = vsel %vm2187, %v9420, %v8266
      %v9453 = vsel %vm2187, %v9421, %v8268
      %v9454 = vsel %vm2187, %v9422, %v8270
      %v9455 = vsel %vm7051, %v9423, %v8336
      %v9456 = vsel %vm7051, %v9424, %v8338
      %v9457 = vsel %vm7051, %v9425, %v8340
      %v9458 = vsel %vm7051, %v9426, %v8342
      %v9459 = vsel %vm7051, %v9427, %v8344
      %v9460 = vsel %vm7051, %v9428, %v8346
      %v9461 = vsel %vm7051, %v9429, %v8348
      %v9462 = vsel %vm7051, %v9430, %v8350
      %v9463 = vsel %vm7051, %v9431, %v8352
      %v9464 = vsel %vm7051, %v9432, %v8354
      %v9465 = vsel %vm7051, %v9433, %v8356
      %v9466 = vsel %vm7051, %v9434, %v8358
      %v9467 = vsel %vm7051, %v9435, %v8360
      %v9468 = vsel %vm7051, %v9436, %v8362
      %v9469 = vsel %vm7051, %v9437, %v8364
      %v9470 = vsel %vm7051, %v9438, %v8366
      %v9471 = vsel %vm7051, %v9439, %v8368
      %v9472 = vsel %vm7051, %v9440, %v8370
      %v9473 = vsel %vm7051, %v9441, %v8372
      %v9474 = vsel %vm7051, %v9442, %v8374
      %v9475 = vsel %vm7051, %v9443, %v8376
      %v9476 = vsel %vm7051, %v9444, %v8378
      %v9477 = vsel %vm7051, %v9445, %v8380
      %v9478 = vsel %vm7051, %v9446, %v8382
      %v9479 = vsel %vm7051, %v9447, %v8384
      %v9480 = vsel %vm7051, %v9448, %v8386
      %v9481 = vsel %vm7051, %v9449, %v8388
      %v9482 = vsel %vm7051, %v9450, %v8390
      %v9483 = vsel %vm7051, %v9451, %v8392
      %v9484 = vsel %vm7051, %v9452, %v8394
      %v9485 = vsel %vm7051, %v9453, %v8396
      %v9486 = vsel %vm7051, %v9454, %v8398
      %v9487 = vsel %vm2220, %v9455, %v8464
      %v9488 = vsel %vm2220, %v9456, %v8466
      %v9489 = vsel %vm2220, %v9457, %v8468
      %v9490 = vsel %vm2220, %v9458, %v8470
      %v9491 = vsel %vm2220, %v9459, %v8472
      %v9492 = vsel %vm2220, %v9460, %v8474
      %v9493 = vsel %vm2220, %v9461, %v8476
      %v9494 = vsel %vm2220, %v9462, %v8478
      %v9495 = vsel %vm2220, %v9463, %v8480
      %v9496 = vsel %vm2220, %v9464, %v8482
      %v9497 = vsel %vm2220, %v9465, %v8484
      %v9498 = vsel %vm2220, %v9466, %v8486
      %v9499 = vsel %vm2220, %v9467, %v8488
      %v9500 = vsel %vm2220, %v9468, %v8490
      %v9501 = vsel %vm2220, %v9469, %v8492
      %v9502 = vsel %vm2220, %v9470, %v8494
      %v9503 = vsel %vm2220, %v9471, %v8496
      %v9504 = vsel %vm2220, %v9472, %v8498
      %v9505 = vsel %vm2220, %v9473, %v8500
      %v9506 = vsel %vm2220, %v9474, %v8502
      %v9507 = vsel %vm2220, %v9475, %v8504
      %v9508 = vsel %vm2220, %v9476, %v8506
      %v9509 = vsel %vm2220, %v9477, %v8508
      %v9510 = vsel %vm2220, %v9478, %v8510
      %v9511 = vsel %vm2220, %v9479, %v8512
      %v9512 = vsel %vm2220, %v9480, %v8514
      %v9513 = vsel %vm2220, %v9481, %v8516
      %v9514 = vsel %vm2220, %v9482, %v8518
      %v9515 = vsel %vm2220, %v9483, %v8520
      %v9516 = vsel %vm2220, %v9484, %v8522
      %v9517 = vsel %vm2220, %v9485, %v8524
      %v9518 = vsel %vm2220, %v9486, %v8526
      %v9519 = vsel %vm7116, %v9487, %v8592
      %v9520 = vsel %vm7116, %v9488, %v8594
      %v9521 = vsel %vm7116, %v9489, %v8596
      %v9522 = vsel %vm7116, %v9490, %v8598
      %v9523 = vsel %vm7116, %v9491, %v8600
      %v9524 = vsel %vm7116, %v9492, %v8602
      %v9525 = vsel %vm7116, %v9493, %v8604
      %v9526 = vsel %vm7116, %v9494, %v8606
      %v9527 = vsel %vm7116, %v9495, %v8608
      %v9528 = vsel %vm7116, %v9496, %v8610
      %v9529 = vsel %vm7116, %v9497, %v8612
      %v9530 = vsel %vm7116, %v9498, %v8614
      %v9531 = vsel %vm7116, %v9499, %v8616
      %v9532 = vsel %vm7116, %v9500, %v8618
      %v9533 = vsel %vm7116, %v9501, %v8620
      %v9534 = vsel %vm7116, %v9502, %v8622
      %v9535 = vsel %vm7116, %v9503, %v8624
      %v9536 = vsel %vm7116, %v9504, %v8626
      %v9537 = vsel %vm7116, %v9505, %v8628
      %v9538 = vsel %vm7116, %v9506, %v8630
      %v9539 = vsel %vm7116, %v9507, %v8632
      %v9540 = vsel %vm7116, %v9508, %v8634
      %v9541 = vsel %vm7116, %v9509, %v8636
      %v9542 = vsel %vm7116, %v9510, %v8638
      %v9543 = vsel %vm7116, %v9511, %v8640
      %v9544 = vsel %vm7116, %v9512, %v8642
      %v9545 = vsel %vm7116, %v9513, %v8644
      %v9546 = vsel %vm7116, %v9514, %v8646
      %v9547 = vsel %vm7116, %v9515, %v8648
      %v9548 = vsel %vm7116, %v9516, %v8650
      %v9549 = vsel %vm7116, %v9517, %v8652
      %v9550 = vsel %vm7116, %v9518, %v8654
      %v9551 = vsel %vm2253, %v9519, %v8720
      %v9552 = vsel %vm2253, %v9520, %v8722
      %v9553 = vsel %vm2253, %v9521, %v8724
      %v9554 = vsel %vm2253, %v9522, %v8726
      %v9555 = vsel %vm2253, %v9523, %v8728
      %v9556 = vsel %vm2253, %v9524, %v8730
      %v9557 = vsel %vm2253, %v9525, %v8732
      %v9558 = vsel %vm2253, %v9526, %v8734
      %v9559 = vsel %vm2253, %v9527, %v8736
      %v9560 = vsel %vm2253, %v9528, %v8738
      %v9561 = vsel %vm2253, %v9529, %v8740
      %v9562 = vsel %vm2253, %v9530, %v8742
      %v9563 = vsel %vm2253, %v9531, %v8744
      %v9564 = vsel %vm2253, %v9532, %v8746
      %v9565 = vsel %vm2253, %v9533, %v8748
      %v9566 = vsel %vm2253, %v9534, %v8750
      %v9567 = vsel %vm2253, %v9535, %v8752
      %v9568 = vsel %vm2253, %v9536, %v8754
      %v9569 = vsel %vm2253, %v9537, %v8756
      %v9570 = vsel %vm2253, %v9538, %v8758
      %v9571 = vsel %vm2253, %v9539, %v8760
      %v9572 = vsel %vm2253, %v9540, %v8762
      %v9573 = vsel %vm2253, %v9541, %v8764
      %v9574 = vsel %vm2253, %v9542, %v8766
      %v9575 = vsel %vm2253, %v9543, %v8768
      %v9576 = vsel %vm2253, %v9544, %v8770
      %v9577 = vsel %vm2253, %v9545, %v8772
      %v9578 = vsel %vm2253, %v9546, %v8774
      %v9579 = vsel %vm2253, %v9547, %v8776
      %v9580 = vsel %vm2253, %v9548, %v8778
      %v9581 = vsel %vm2253, %v9549, %v8780
      %v9582 = vsel %vm2253, %v9550, %v8782
      %v9583 = vsel %vm7181, %v9551, %v8848
      %v9584 = vsel %vm7181, %v9552, %v8850
      %v9585 = vsel %vm7181, %v9553, %v8852
      %v9586 = vsel %vm7181, %v9554, %v8854
      %v9587 = vsel %vm7181, %v9555, %v8856
      %v9588 = vsel %vm7181, %v9556, %v8858
      %v9589 = vsel %vm7181, %v9557, %v8860
      %v9590 = vsel %vm7181, %v9558, %v8862
      %v9591 = vsel %vm7181, %v9559, %v8864
      %v9592 = vsel %vm7181, %v9560, %v8866
      %v9593 = vsel %vm7181, %v9561, %v8868
      %v9594 = vsel %vm7181, %v9562, %v8870
      %v9595 = vsel %vm7181, %v9563, %v8872
      %v9596 = vsel %vm7181, %v9564, %v8874
      %v9597 = vsel %vm7181, %v9565, %v8876
      %v9598 = vsel %vm7181, %v9566, %v8878
      %v9599 = vsel %vm7181, %v9567, %v8880
      %v9600 = vsel %vm7181, %v9568, %v8882
      %v9601 = vsel %vm7181, %v9569, %v8884
      %v9602 = vsel %vm7181, %v9570, %v8886
      %v9603 = vsel %vm7181, %v9571, %v8888
      %v9604 = vsel %vm7181, %v9572, %v8890
      %v9605 = vsel %vm7181, %v9573, %v8892
      %v9606 = vsel %vm7181, %v9574, %v8894
      %v9607 = vsel %vm7181, %v9575, %v8896
      %v9608 = vsel %vm7181, %v9576, %v8898
      %v9609 = vsel %vm7181, %v9577, %v8900
      %v9610 = vsel %vm7181, %v9578, %v8902
      %v9611 = vsel %vm7181, %v9579, %v8904
      %v9612 = vsel %vm7181, %v9580, %v8906
      %v9613 = vsel %vm7181, %v9581, %v8908
      %v9614 = vsel %vm7181, %v9582, %v8910
      %v9615 = vsel %vm2286, %v9583, %v8976
      %v9616 = vsel %vm2286, %v9584, %v8978
      %v9617 = vsel %vm2286, %v9585, %v8980
      %v9618 = vsel %vm2286, %v9586, %v8982
      %v9619 = vsel %vm2286, %v9587, %v8984
      %v9620 = vsel %vm2286, %v9588, %v8986
      %v9621 = vsel %vm2286, %v9589, %v8988
      %v9622 = vsel %vm2286, %v9590, %v8990
      %v9623 = vsel %vm2286, %v9591, %v8992
      %v9624 = vsel %vm2286, %v9592, %v8994
      %v9625 = vsel %vm2286, %v9593, %v8996
      %v9626 = vsel %vm2286, %v9594, %v8998
      %v9627 = vsel %vm2286, %v9595, %v9000
      %v9628 = vsel %vm2286, %v9596, %v9002
      %v9629 = vsel %vm2286, %v9597, %v9004
      %v9630 = vsel %vm2286, %v9598, %v9006
      %v9631 = vsel %vm2286, %v9599, %v9008
      %v9632 = vsel %vm2286, %v9600, %v9010
      %v9633 = vsel %vm2286, %v9601, %v9012
      %v9634 = vsel %vm2286, %v9602, %v9014
      %v9635 = vsel %vm2286, %v9603, %v9016
      %v9636 = vsel %vm2286, %v9604, %v9018
      %v9637 = vsel %vm2286, %v9605, %v9020
      %v9638 = vsel %vm2286, %v9606, %v9022
      %v9639 = vsel %vm2286, %v9607, %v9024
      %v9640 = vsel %vm2286, %v9608, %v9026
      %v9641 = vsel %vm2286, %v9609, %v9028
      %v9642 = vsel %vm2286, %v9610, %v9030
      %v9643 = vsel %vm2286, %v9611, %v9032
      %v9644 = vsel %vm2286, %v9612, %v9034
      %v9645 = vsel %vm2286, %v9613, %v9036
      %v9646 = vsel %vm2286, %v9614, %v9038
      %v9647 = vsel %vm7246, %v9615, %v9104
      %v9648 = vsel %vm7246, %v9616, %v9106
      %v9649 = vsel %vm7246, %v9617, %v9108
      %v9650 = vsel %vm7246, %v9618, %v9110
      %v9651 = vsel %vm7246, %v9619, %v9112
      %v9652 = vsel %vm7246, %v9620, %v9114
      %v9653 = vsel %vm7246, %v9621, %v9116
      %v9654 = vsel %vm7246, %v9622, %v9118
      %v9655 = vsel %vm7246, %v9623, %v9120
      %v9656 = vsel %vm7246, %v9624, %v9122
      %v9657 = vsel %vm7246, %v9625, %v9124
      %v9658 = vsel %vm7246, %v9626, %v9126
      %v9659 = vsel %vm7246, %v9627, %v9128
      %v9660 = vsel %vm7246, %v9628, %v9130
      %v9661 = vsel %vm7246, %v9629, %v9132
      %v9662 = vsel %vm7246, %v9630, %v9134
      %v9663 = vsel %vm7246, %v9631, %v9136
      %v9664 = vsel %vm7246, %v9632, %v9138
      %v9665 = vsel %vm7246, %v9633, %v9140
      %v9666 = vsel %vm7246, %v9634, %v9142
      %v9667 = vsel %vm7246, %v9635, %v9144
      %v9668 = vsel %vm7246, %v9636, %v9146
      %v9669 = vsel %vm7246, %v9637, %v9148
      %v9670 = vsel %vm7246, %v9638, %v9150
      %v9671 = vsel %vm7246, %v9639, %v9152
      %v9672 = vsel %vm7246, %v9640, %v9154
      %v9673 = vsel %vm7246, %v9641, %v9156
      %v9674 = vsel %vm7246, %v9642, %v9158
      %v9675 = vsel %vm7246, %v9643, %v9160
      %v9676 = vsel %vm7246, %v9644, %v9162
      %v9677 = vsel %vm7246, %v9645, %v9164
      %v9678 = vsel %vm7246, %v9646, %v9166
      %9711 = vrot.lane.b32.xlu0 %v4358, 2
      %v9712 = vpop.permute.xlu0 %9711
      %9713 = vrot.lane.b32.xlu0 %v4359, 2
      %v9714 = vpop.permute.xlu0 %9713
      %9715 = vrot.lane.b32.xlu0 %v4360, 2
      %v9716 = vpop.permute.xlu0 %9715
      %9717 = vrot.lane.b32.xlu0 %v4361, 2
      %v9718 = vpop.permute.xlu0 %9717
      %9719 = vrot.lane.b32.xlu0 %v4362, 2
      %v9720 = vpop.permute.xlu0 %9719
      %9721 = vrot.lane.b32.xlu0 %v4363, 2
      %v9722 = vpop.permute.xlu0 %9721
      %9723 = vrot.lane.b32.xlu0 %v4364, 2
      %v9724 = vpop.permute.xlu0 %9723
      %9725 = vrot.lane.b32.xlu0 %v4365, 2
      %v9726 = vpop.permute.xlu0 %9725
      %9727 = vrot.lane.b32.xlu0 %v4366, 2
      %v9728 = vpop.permute.xlu0 %9727
      %9729 = vrot.lane.b32.xlu0 %v4367, 2
      %v9730 = vpop.permute.xlu0 %9729
      %9731 = vrot.lane.b32.xlu0 %v4368, 2
      %v9732 = vpop.permute.xlu0 %9731
      %9733 = vrot.lane.b32.xlu0 %v4369, 2
      %v9734 = vpop.permute.xlu0 %9733
      %9735 = vrot.lane.b32.xlu0 %v4370, 2
      %v9736 = vpop.permute.xlu0 %9735
      %9737 = vrot.lane.b32.xlu0 %v4371, 2
      %v9738 = vpop.permute.xlu0 %9737
      %9739 = vrot.lane.b32.xlu0 %v4372, 2
      %v9740 = vpop.permute.xlu0 %9739
      %9741 = vrot.lane.b32.xlu0 %v4373, 2
      %v9742 = vpop.permute.xlu0 %9741
      %9743 = vrot.lane.b32.xlu0 %v4374, 2
      %v9744 = vpop.permute.xlu0 %9743
      %9745 = vrot.lane.b32.xlu0 %v4375, 2
      %v9746 = vpop.permute.xlu0 %9745
      %9747 = vrot.lane.b32.xlu0 %v4376, 2
      %v9748 = vpop.permute.xlu0 %9747
      %9749 = vrot.lane.b32.xlu0 %v4377, 2
      %v9750 = vpop.permute.xlu0 %9749
      %9751 = vrot.lane.b32.xlu0 %v4378, 2
      %v9752 = vpop.permute.xlu0 %9751
      %9753 = vrot.lane.b32.xlu0 %v4379, 2
      %v9754 = vpop.permute.xlu0 %9753
      %9755 = vrot.lane.b32.xlu0 %v4380, 2
      %v9756 = vpop.permute.xlu0 %9755
      %9757 = vrot.lane.b32.xlu0 %v4381, 2
      %v9758 = vpop.permute.xlu0 %9757
      %9759 = vrot.lane.b32.xlu0 %v4382, 2
      %v9760 = vpop.permute.xlu0 %9759
      %9761 = vrot.lane.b32.xlu0 %v4383, 2
      %v9762 = vpop.permute.xlu0 %9761
      %9763 = vrot.lane.b32.xlu0 %v4384, 2
      %v9764 = vpop.permute.xlu0 %9763
      %9765 = vrot.lane.b32.xlu0 %v4385, 2
      %v9766 = vpop.permute.xlu0 %9765
      %9767 = vrot.lane.b32.xlu0 %v4386, 2
      %v9768 = vpop.permute.xlu0 %9767
      %9769 = vrot.lane.b32.xlu0 %v4387, 2
      %v9770 = vpop.permute.xlu0 %9769
      %9771 = vrot.lane.b32.xlu0 %v4388, 2
      %v9772 = vpop.permute.xlu0 %9771
      %9773 = vrot.lane.b32.xlu0 %v4389, 2
      %v9774 = vpop.permute.xlu0 %9773
      %9839 = vrot.lane.b32.xlu0 %v4390, 4
      %v9840 = vpop.permute.xlu0 %9839
      %9841 = vrot.lane.b32.xlu0 %v4391, 4
      %v9842 = vpop.permute.xlu0 %9841
      %9843 = vrot.lane.b32.xlu0 %v4392, 4
      %v9844 = vpop.permute.xlu0 %9843
      %9845 = vrot.lane.b32.xlu0 %v4393, 4
      %v9846 = vpop.permute.xlu0 %9845
      %9847 = vrot.lane.b32.xlu0 %v4394, 4
      %v9848 = vpop.permute.xlu0 %9847
      %9849 = vrot.lane.b32.xlu0 %v4395, 4
      %v9850 = vpop.permute.xlu0 %9849
      %9851 = vrot.lane.b32.xlu0 %v4396, 4
      %v9852 = vpop.permute.xlu0 %9851
      %9853 = vrot.lane.b32.xlu0 %v4397, 4
      %v9854 = vpop.permute.xlu0 %9853
      %9855 = vrot.lane.b32.xlu0 %v4398, 4
      %v9856 = vpop.permute.xlu0 %9855
      %9857 = vrot.lane.b32.xlu0 %v4399, 4
      %v9858 = vpop.permute.xlu0 %9857
      %9859 = vrot.lane.b32.xlu0 %v4400, 4
      %v9860 = vpop.permute.xlu0 %9859
      %9861 = vrot.lane.b32.xlu0 %v4401, 4
      %v9862 = vpop.permute.xlu0 %9861
      %9863 = vrot.lane.b32.xlu0 %v4402, 4
      %v9864 = vpop.permute.xlu0 %9863
      %9865 = vrot.lane.b32.xlu0 %v4403, 4
      %v9866 = vpop.permute.xlu0 %9865
      %9867 = vrot.lane.b32.xlu0 %v4404, 4
      %v9868 = vpop.permute.xlu0 %9867
      %9869 = vrot.lane.b32.xlu0 %v4405, 4
      %v9870 = vpop.permute.xlu0 %9869
      %9871 = vrot.lane.b32.xlu0 %v4406, 4
      %v9872 = vpop.permute.xlu0 %9871
      %9873 = vrot.lane.b32.xlu0 %v4407, 4
      %v9874 = vpop.permute.xlu0 %9873
      %9875 = vrot.lane.b32.xlu0 %v4408, 4
      %v9876 = vpop.permute.xlu0 %9875
      %9877 = vrot.lane.b32.xlu0 %v4409, 4
      %v9878 = vpop.permute.xlu0 %9877
      %9879 = vrot.lane.b32.xlu0 %v4410, 4
      %v9880 = vpop.permute.xlu0 %9879
      %9881 = vrot.lane.b32.xlu0 %v4411, 4
      %v9882 = vpop.permute.xlu0 %9881
      %9883 = vrot.lane.b32.xlu0 %v4412, 4
      %v9884 = vpop.permute.xlu0 %9883
      %9885 = vrot.lane.b32.xlu0 %v4413, 4
      %v9886 = vpop.permute.xlu0 %9885
      %9887 = vrot.lane.b32.xlu0 %v4414, 4
      %v9888 = vpop.permute.xlu0 %9887
      %9889 = vrot.lane.b32.xlu0 %v4415, 4
      %v9890 = vpop.permute.xlu0 %9889
      %9891 = vrot.lane.b32.xlu0 %v4416, 4
      %v9892 = vpop.permute.xlu0 %9891
      %9893 = vrot.lane.b32.xlu0 %v4417, 4
      %v9894 = vpop.permute.xlu0 %9893
      %9895 = vrot.lane.b32.xlu0 %v4418, 4
      %v9896 = vpop.permute.xlu0 %9895
      %9897 = vrot.lane.b32.xlu0 %v4419, 4
      %v9898 = vpop.permute.xlu0 %9897
      %9899 = vrot.lane.b32.xlu0 %v4420, 4
      %v9900 = vpop.permute.xlu0 %9899
      %9901 = vrot.lane.b32.xlu0 %v4421, 4
      %v9902 = vpop.permute.xlu0 %9901
      %9967 = vrot.lane.b32.xlu0 %v4423, 6
      %v9968 = vpop.permute.xlu0 %9967
      %9969 = vrot.lane.b32.xlu0 %v4424, 6
      %v9970 = vpop.permute.xlu0 %9969
      %9971 = vrot.lane.b32.xlu0 %v4425, 6
      %v9972 = vpop.permute.xlu0 %9971
      %9973 = vrot.lane.b32.xlu0 %v4426, 6
      %v9974 = vpop.permute.xlu0 %9973
      %9975 = vrot.lane.b32.xlu0 %v4427, 6
      %v9976 = vpop.permute.xlu0 %9975
      %9977 = vrot.lane.b32.xlu0 %v4428, 6
      %v9978 = vpop.permute.xlu0 %9977
      %9979 = vrot.lane.b32.xlu0 %v4429, 6
      %v9980 = vpop.permute.xlu0 %9979
      %9981 = vrot.lane.b32.xlu0 %v4430, 6
      %v9982 = vpop.permute.xlu0 %9981
      %9983 = vrot.lane.b32.xlu0 %v4431, 6
      %v9984 = vpop.permute.xlu0 %9983
      %9985 = vrot.lane.b32.xlu0 %v4432, 6
      %v9986 = vpop.permute.xlu0 %9985
      %9987 = vrot.lane.b32.xlu0 %v4433, 6
      %v9988 = vpop.permute.xlu0 %9987
      %9989 = vrot.lane.b32.xlu0 %v4434, 6
      %v9990 = vpop.permute.xlu0 %9989
      %9991 = vrot.lane.b32.xlu0 %v4435, 6
      %v9992 = vpop.permute.xlu0 %9991
      %9993 = vrot.lane.b32.xlu0 %v4436, 6
      %v9994 = vpop.permute.xlu0 %9993
      %9995 = vrot.lane.b32.xlu0 %v4437, 6
      %v9996 = vpop.permute.xlu0 %9995
      %9997 = vrot.lane.b32.xlu0 %v4438, 6
      %v9998 = vpop.permute.xlu0 %9997
      %9999 = vrot.lane.b32.xlu0 %v4439, 6
      %v10000 = vpop.permute.xlu0 %9999
      %10001 = vrot.lane.b32.xlu0 %v4440, 6
      %v10002 = vpop.permute.xlu0 %10001
      %10003 = vrot.lane.b32.xlu0 %v4441, 6
      %v10004 = vpop.permute.xlu0 %10003
      %10005 = vrot.lane.b32.xlu0 %v4442, 6
      %v10006 = vpop.permute.xlu0 %10005
      %10007 = vrot.lane.b32.xlu0 %v4443, 6
      %v10008 = vpop.permute.xlu0 %10007
      %10009 = vrot.lane.b32.xlu0 %v4444, 6
      %v10010 = vpop.permute.xlu0 %10009
      %10011 = vrot.lane.b32.xlu0 %v4445, 6
      %v10012 = vpop.permute.xlu0 %10011
      %10013 = vrot.lane.b32.xlu0 %v4446, 6
      %v10014 = vpop.permute.xlu0 %10013
      %10015 = vrot.lane.b32.xlu0 %v4447, 6
      %v10016 = vpop.permute.xlu0 %10015
      %10017 = vrot.lane.b32.xlu0 %v4448, 6
      %v10018 = vpop.permute.xlu0 %10017
      %10019 = vrot.lane.b32.xlu0 %v4449, 6
      %v10020 = vpop.permute.xlu0 %10019
      %10021 = vrot.lane.b32.xlu0 %v4450, 6
      %v10022 = vpop.permute.xlu0 %10021
      %10023 = vrot.lane.b32.xlu0 %v4451, 6
      %v10024 = vpop.permute.xlu0 %10023
      %10025 = vrot.lane.b32.xlu0 %v4452, 6
      %v10026 = vpop.permute.xlu0 %10025
      %10027 = vrot.lane.b32.xlu0 %v4453, 6
      %v10028 = vpop.permute.xlu0 %10027
      %10029 = vrot.lane.b32.xlu0 %v4454, 6
      %v10030 = vpop.permute.xlu0 %10029
      %10095 = vrot.lane.b32.xlu0 %v4455, 8
      %v10096 = vpop.permute.xlu0 %10095
      %10097 = vrot.lane.b32.xlu0 %v4456, 8
      %v10098 = vpop.permute.xlu0 %10097
      %10099 = vrot.lane.b32.xlu0 %v4457, 8
      %v10100 = vpop.permute.xlu0 %10099
      %10101 = vrot.lane.b32.xlu0 %v4458, 8
      %v10102 = vpop.permute.xlu0 %10101
      %10103 = vrot.lane.b32.xlu0 %v4459, 8
      %v10104 = vpop.permute.xlu0 %10103
      %10105 = vrot.lane.b32.xlu0 %v4460, 8
      %v10106 = vpop.permute.xlu0 %10105
      %10107 = vrot.lane.b32.xlu0 %v4461, 8
      %v10108 = vpop.permute.xlu0 %10107
      %10109 = vrot.lane.b32.xlu0 %v4462, 8
      %v10110 = vpop.permute.xlu0 %10109
      %10111 = vrot.lane.b32.xlu0 %v4463, 8
      %v10112 = vpop.permute.xlu0 %10111
      %10113 = vrot.lane.b32.xlu0 %v4464, 8
      %v10114 = vpop.permute.xlu0 %10113
      %10115 = vrot.lane.b32.xlu0 %v4465, 8
      %v10116 = vpop.permute.xlu0 %10115
      %10117 = vrot.lane.b32.xlu0 %v4466, 8
      %v10118 = vpop.permute.xlu0 %10117
      %10119 = vrot.lane.b32.xlu0 %v4467, 8
      %v10120 = vpop.permute.xlu0 %10119
      %10121 = vrot.lane.b32.xlu0 %v4468, 8
      %v10122 = vpop.permute.xlu0 %10121
      %10123 = vrot.lane.b32.xlu0 %v4469, 8
      %v10124 = vpop.permute.xlu0 %10123
      %10125 = vrot.lane.b32.xlu0 %v4470, 8
      %v10126 = vpop.permute.xlu0 %10125
      %10127 = vrot.lane.b32.xlu0 %v4471, 8
      %v10128 = vpop.permute.xlu0 %10127
      %10129 = vrot.lane.b32.xlu0 %v4472, 8
      %v10130 = vpop.permute.xlu0 %10129
      %10131 = vrot.lane.b32.xlu0 %v4473, 8
      %v10132 = vpop.permute.xlu0 %10131
      %10133 = vrot.lane.b32.xlu0 %v4474, 8
      %v10134 = vpop.permute.xlu0 %10133
      %10135 = vrot.lane.b32.xlu0 %v4475, 8
      %v10136 = vpop.permute.xlu0 %10135
      %10137 = vrot.lane.b32.xlu0 %v4476, 8
      %v10138 = vpop.permute.xlu0 %10137
      %10139 = vrot.lane.b32.xlu0 %v4477, 8
      %v10140 = vpop.permute.xlu0 %10139
      %10141 = vrot.lane.b32.xlu0 %v4478, 8
      %v10142 = vpop.permute.xlu0 %10141
      %10143 = vrot.lane.b32.xlu0 %v4479, 8
      %v10144 = vpop.permute.xlu0 %10143
      %10145 = vrot.lane.b32.xlu0 %v4480, 8
      %v10146 = vpop.permute.xlu0 %10145
      %10147 = vrot.lane.b32.xlu0 %v4481, 8
      %v10148 = vpop.permute.xlu0 %10147
      %10149 = vrot.lane.b32.xlu0 %v4482, 8
      %v10150 = vpop.permute.xlu0 %10149
      %10151 = vrot.lane.b32.xlu0 %v4483, 8
      %v10152 = vpop.permute.xlu0 %10151
      %10153 = vrot.lane.b32.xlu0 %v4484, 8
      %v10154 = vpop.permute.xlu0 %10153
      %10155 = vrot.lane.b32.xlu0 %v4485, 8
      %v10156 = vpop.permute.xlu0 %10155
      %10157 = vrot.lane.b32.xlu0 %v4486, 8
      %v10158 = vpop.permute.xlu0 %10157
      %10223 = vrot.lane.b32.xlu0 %v4487, 10
      %v10224 = vpop.permute.xlu0 %10223
      %10225 = vrot.lane.b32.xlu0 %v4488, 10
      %v10226 = vpop.permute.xlu0 %10225
      %10227 = vrot.lane.b32.xlu0 %v4489, 10
      %v10228 = vpop.permute.xlu0 %10227
      %10229 = vrot.lane.b32.xlu0 %v4490, 10
      %v10230 = vpop.permute.xlu0 %10229
      %10231 = vrot.lane.b32.xlu0 %v4491, 10
      %v10232 = vpop.permute.xlu0 %10231
      %10233 = vrot.lane.b32.xlu0 %v4492, 10
      %v10234 = vpop.permute.xlu0 %10233
      %10235 = vrot.lane.b32.xlu0 %v4493, 10
      %v10236 = vpop.permute.xlu0 %10235
      %10237 = vrot.lane.b32.xlu0 %v4494, 10
      %v10238 = vpop.permute.xlu0 %10237
      %10239 = vrot.lane.b32.xlu0 %v4495, 10
      %v10240 = vpop.permute.xlu0 %10239
      %10241 = vrot.lane.b32.xlu0 %v4496, 10
      %v10242 = vpop.permute.xlu0 %10241
      %10243 = vrot.lane.b32.xlu0 %v4497, 10
      %v10244 = vpop.permute.xlu0 %10243
      %10245 = vrot.lane.b32.xlu0 %v4498, 10
      %v10246 = vpop.permute.xlu0 %10245
      %10247 = vrot.lane.b32.xlu0 %v4499, 10
      %v10248 = vpop.permute.xlu0 %10247
      %10249 = vrot.lane.b32.xlu0 %v4500, 10
      %v10250 = vpop.permute.xlu0 %10249
      %10251 = vrot.lane.b32.xlu0 %v4501, 10
      %v10252 = vpop.permute.xlu0 %10251
      %10253 = vrot.lane.b32.xlu0 %v4502, 10
      %v10254 = vpop.permute.xlu0 %10253
      %10255 = vrot.lane.b32.xlu0 %v4503, 10
      %v10256 = vpop.permute.xlu0 %10255
      %10257 = vrot.lane.b32.xlu0 %v4504, 10
      %v10258 = vpop.permute.xlu0 %10257
      %10259 = vrot.lane.b32.xlu0 %v4505, 10
      %v10260 = vpop.permute.xlu0 %10259
      %10261 = vrot.lane.b32.xlu0 %v4506, 10
      %v10262 = vpop.permute.xlu0 %10261
      %10263 = vrot.lane.b32.xlu0 %v4507, 10
      %v10264 = vpop.permute.xlu0 %10263
      %10265 = vrot.lane.b32.xlu0 %v4508, 10
      %v10266 = vpop.permute.xlu0 %10265
      %10267 = vrot.lane.b32.xlu0 %v4509, 10
      %v10268 = vpop.permute.xlu0 %10267
      %10269 = vrot.lane.b32.xlu0 %v4510, 10
      %v10270 = vpop.permute.xlu0 %10269
      %10271 = vrot.lane.b32.xlu0 %v4511, 10
      %v10272 = vpop.permute.xlu0 %10271
      %10273 = vrot.lane.b32.xlu0 %v4512, 10
      %v10274 = vpop.permute.xlu0 %10273
      %10275 = vrot.lane.b32.xlu0 %v4513, 10
      %v10276 = vpop.permute.xlu0 %10275
      %10277 = vrot.lane.b32.xlu0 %v4514, 10
      %v10278 = vpop.permute.xlu0 %10277
      %10279 = vrot.lane.b32.xlu0 %v4515, 10
      %v10280 = vpop.permute.xlu0 %10279
      %10281 = vrot.lane.b32.xlu0 %v4516, 10
      %v10282 = vpop.permute.xlu0 %10281
      %10283 = vrot.lane.b32.xlu0 %v4517, 10
      %v10284 = vpop.permute.xlu0 %10283
      %10285 = vrot.lane.b32.xlu0 %v4518, 10
      %v10286 = vpop.permute.xlu0 %10285
      %10351 = vrot.lane.b32.xlu0 %v4519, 12
      %v10352 = vpop.permute.xlu0 %10351
      %10353 = vrot.lane.b32.xlu0 %v4520, 12
      %v10354 = vpop.permute.xlu0 %10353
      %10355 = vrot.lane.b32.xlu0 %v4521, 12
      %v10356 = vpop.permute.xlu0 %10355
      %10357 = vrot.lane.b32.xlu0 %v4522, 12
      %v10358 = vpop.permute.xlu0 %10357
      %10359 = vrot.lane.b32.xlu0 %v4523, 12
      %v10360 = vpop.permute.xlu0 %10359
      %10361 = vrot.lane.b32.xlu0 %v4524, 12
      %v10362 = vpop.permute.xlu0 %10361
      %10363 = vrot.lane.b32.xlu0 %v4525, 12
      %v10364 = vpop.permute.xlu0 %10363
      %10365 = vrot.lane.b32.xlu0 %v4526, 12
      %v10366 = vpop.permute.xlu0 %10365
      %10367 = vrot.lane.b32.xlu0 %v4527, 12
      %v10368 = vpop.permute.xlu0 %10367
      %10369 = vrot.lane.b32.xlu0 %v4528, 12
      %v10370 = vpop.permute.xlu0 %10369
      %10371 = vrot.lane.b32.xlu0 %v4529, 12
      %v10372 = vpop.permute.xlu0 %10371
      %10373 = vrot.lane.b32.xlu0 %v4530, 12
      %v10374 = vpop.permute.xlu0 %10373
      %10375 = vrot.lane.b32.xlu0 %v4531, 12
      %v10376 = vpop.permute.xlu0 %10375
      %10377 = vrot.lane.b32.xlu0 %v4532, 12
      %v10378 = vpop.permute.xlu0 %10377
      %10379 = vrot.lane.b32.xlu0 %v4533, 12
      %v10380 = vpop.permute.xlu0 %10379
      %10381 = vrot.lane.b32.xlu0 %v4534, 12
      %v10382 = vpop.permute.xlu0 %10381
      %10383 = vrot.lane.b32.xlu0 %v4535, 12
      %v10384 = vpop.permute.xlu0 %10383
      %10385 = vrot.lane.b32.xlu0 %v4536, 12
      %v10386 = vpop.permute.xlu0 %10385
      %10387 = vrot.lane.b32.xlu0 %v4537, 12
      %v10388 = vpop.permute.xlu0 %10387
      %10389 = vrot.lane.b32.xlu0 %v4538, 12
      %v10390 = vpop.permute.xlu0 %10389
      %10391 = vrot.lane.b32.xlu0 %v4539, 12
      %v10392 = vpop.permute.xlu0 %10391
      %10393 = vrot.lane.b32.xlu0 %v4540, 12
      %v10394 = vpop.permute.xlu0 %10393
      %10395 = vrot.lane.b32.xlu0 %v4541, 12
      %v10396 = vpop.permute.xlu0 %10395
      %10397 = vrot.lane.b32.xlu0 %v4542, 12
      %v10398 = vpop.permute.xlu0 %10397
      %10399 = vrot.lane.b32.xlu0 %v4543, 12
      %v10400 = vpop.permute.xlu0 %10399
      %10401 = vrot.lane.b32.xlu0 %v4544, 12
      %v10402 = vpop.permute.xlu0 %10401
      %10403 = vrot.lane.b32.xlu0 %v4545, 12
      %v10404 = vpop.permute.xlu0 %10403
      %10405 = vrot.lane.b32.xlu0 %v4546, 12
      %v10406 = vpop.permute.xlu0 %10405
      %10407 = vrot.lane.b32.xlu0 %v4547, 12
      %v10408 = vpop.permute.xlu0 %10407
      %10409 = vrot.lane.b32.xlu0 %v4548, 12
      %v10410 = vpop.permute.xlu0 %10409
      %10411 = vrot.lane.b32.xlu0 %v4549, 12
      %v10412 = vpop.permute.xlu0 %10411
      %10413 = vrot.lane.b32.xlu0 %v4550, 12
      %v10414 = vpop.permute.xlu0 %10413
      %10479 = vrot.lane.b32.xlu0 %v4551, 14
      %v10480 = vpop.permute.xlu0 %10479
      %10481 = vrot.lane.b32.xlu0 %v4552, 14
      %v10482 = vpop.permute.xlu0 %10481
      %10483 = vrot.lane.b32.xlu0 %v4553, 14
      %v10484 = vpop.permute.xlu0 %10483
      %10485 = vrot.lane.b32.xlu0 %v4554, 14
      %v10486 = vpop.permute.xlu0 %10485
      %10487 = vrot.lane.b32.xlu0 %v4555, 14
      %v10488 = vpop.permute.xlu0 %10487
      %10489 = vrot.lane.b32.xlu0 %v4556, 14
      %v10490 = vpop.permute.xlu0 %10489
      %10491 = vrot.lane.b32.xlu0 %v4557, 14
      %v10492 = vpop.permute.xlu0 %10491
      %10493 = vrot.lane.b32.xlu0 %v4558, 14
      %v10494 = vpop.permute.xlu0 %10493
      %10495 = vrot.lane.b32.xlu0 %v4559, 14
      %v10496 = vpop.permute.xlu0 %10495
      %10497 = vrot.lane.b32.xlu0 %v4560, 14
      %v10498 = vpop.permute.xlu0 %10497
      %10499 = vrot.lane.b32.xlu0 %v4561, 14
      %v10500 = vpop.permute.xlu0 %10499
      %10501 = vrot.lane.b32.xlu0 %v4562, 14
      %v10502 = vpop.permute.xlu0 %10501
      %10503 = vrot.lane.b32.xlu0 %v4563, 14
      %v10504 = vpop.permute.xlu0 %10503
      %10505 = vrot.lane.b32.xlu0 %v4564, 14
      %v10506 = vpop.permute.xlu0 %10505
      %10507 = vrot.lane.b32.xlu0 %v4565, 14
      %v10508 = vpop.permute.xlu0 %10507
      %10509 = vrot.lane.b32.xlu0 %v4566, 14
      %v10510 = vpop.permute.xlu0 %10509
      %10511 = vrot.lane.b32.xlu0 %v4567, 14
      %v10512 = vpop.permute.xlu0 %10511
      %10513 = vrot.lane.b32.xlu0 %v4568, 14
      %v10514 = vpop.permute.xlu0 %10513
      %10515 = vrot.lane.b32.xlu0 %v4569, 14
      %v10516 = vpop.permute.xlu0 %10515
      %10517 = vrot.lane.b32.xlu0 %v4570, 14
      %v10518 = vpop.permute.xlu0 %10517
      %10519 = vrot.lane.b32.xlu0 %v4571, 14
      %v10520 = vpop.permute.xlu0 %10519
      %10521 = vrot.lane.b32.xlu0 %v4572, 14
      %v10522 = vpop.permute.xlu0 %10521
      %10523 = vrot.lane.b32.xlu0 %v4573, 14
      %v10524 = vpop.permute.xlu0 %10523
      %10525 = vrot.lane.b32.xlu0 %v4574, 14
      %v10526 = vpop.permute.xlu0 %10525
      %10527 = vrot.lane.b32.xlu0 %v4575, 14
      %v10528 = vpop.permute.xlu0 %10527
      %10529 = vrot.lane.b32.xlu0 %v4576, 14
      %v10530 = vpop.permute.xlu0 %10529
      %10531 = vrot.lane.b32.xlu0 %v4577, 14
      %v10532 = vpop.permute.xlu0 %10531
      %10533 = vrot.lane.b32.xlu0 %v4578, 14
      %v10534 = vpop.permute.xlu0 %10533
      %10535 = vrot.lane.b32.xlu0 %v4579, 14
      %v10536 = vpop.permute.xlu0 %10535
      %10537 = vrot.lane.b32.xlu0 %v4580, 14
      %v10538 = vpop.permute.xlu0 %10537
      %10539 = vrot.lane.b32.xlu0 %v4581, 14
      %v10540 = vpop.permute.xlu0 %10539
      %10541 = vrot.lane.b32.xlu0 %v4582, 14
      %v10542 = vpop.permute.xlu0 %10541
      %10607 = vrot.lane.b32.xlu0 %v4583, 16
      %v10608 = vpop.permute.xlu0 %10607
      %10609 = vrot.lane.b32.xlu0 %v4584, 16
      %v10610 = vpop.permute.xlu0 %10609
      %10611 = vrot.lane.b32.xlu0 %v4585, 16
      %v10612 = vpop.permute.xlu0 %10611
      %10613 = vrot.lane.b32.xlu0 %v4586, 16
      %v10614 = vpop.permute.xlu0 %10613
      %10615 = vrot.lane.b32.xlu0 %v4587, 16
      %v10616 = vpop.permute.xlu0 %10615
      %10617 = vrot.lane.b32.xlu0 %v4588, 16
      %v10618 = vpop.permute.xlu0 %10617
      %10619 = vrot.lane.b32.xlu0 %v4589, 16
      %v10620 = vpop.permute.xlu0 %10619
      %10621 = vrot.lane.b32.xlu0 %v4590, 16
      %v10622 = vpop.permute.xlu0 %10621
      %10623 = vrot.lane.b32.xlu0 %v4591, 16
      %v10624 = vpop.permute.xlu0 %10623
      %10625 = vrot.lane.b32.xlu0 %v4592, 16
      %v10626 = vpop.permute.xlu0 %10625
      %10627 = vrot.lane.b32.xlu0 %v4593, 16
      %v10628 = vpop.permute.xlu0 %10627
      %10629 = vrot.lane.b32.xlu0 %v4594, 16
      %v10630 = vpop.permute.xlu0 %10629
      %10631 = vrot.lane.b32.xlu0 %v4595, 16
      %v10632 = vpop.permute.xlu0 %10631
      %10633 = vrot.lane.b32.xlu0 %v4596, 16
      %v10634 = vpop.permute.xlu0 %10633
      %10635 = vrot.lane.b32.xlu0 %v4597, 16
      %v10636 = vpop.permute.xlu0 %10635
      %10637 = vrot.lane.b32.xlu0 %v4598, 16
      %v10638 = vpop.permute.xlu0 %10637
      %10639 = vrot.lane.b32.xlu0 %v4599, 16
      %v10640 = vpop.permute.xlu0 %10639
      %10641 = vrot.lane.b32.xlu0 %v4600, 16
      %v10642 = vpop.permute.xlu0 %10641
      %10643 = vrot.lane.b32.xlu0 %v4601, 16
      %v10644 = vpop.permute.xlu0 %10643
      %10645 = vrot.lane.b32.xlu0 %v4602, 16
      %v10646 = vpop.permute.xlu0 %10645
      %10647 = vrot.lane.b32.xlu0 %v4603, 16
      %v10648 = vpop.permute.xlu0 %10647
      %10649 = vrot.lane.b32.xlu0 %v4604, 16
      %v10650 = vpop.permute.xlu0 %10649
      %10651 = vrot.lane.b32.xlu0 %v4605, 16
      %v10652 = vpop.permute.xlu0 %10651
      %10653 = vrot.lane.b32.xlu0 %v4606, 16
      %v10654 = vpop.permute.xlu0 %10653
      %10655 = vrot.lane.b32.xlu0 %v4607, 16
      %v10656 = vpop.permute.xlu0 %10655
      %10657 = vrot.lane.b32.xlu0 %v4608, 16
      %v10658 = vpop.permute.xlu0 %10657
      %10659 = vrot.lane.b32.xlu0 %v4609, 16
      %v10660 = vpop.permute.xlu0 %10659
      %10661 = vrot.lane.b32.xlu0 %v4610, 16
      %v10662 = vpop.permute.xlu0 %10661
      %10663 = vrot.lane.b32.xlu0 %v4611, 16
      %v10664 = vpop.permute.xlu0 %10663
      %10665 = vrot.lane.b32.xlu0 %v4612, 16
      %v10666 = vpop.permute.xlu0 %10665
      %10667 = vrot.lane.b32.xlu0 %v4613, 16
      %v10668 = vpop.permute.xlu0 %10667
      %10669 = vrot.lane.b32.xlu0 %v4614, 16
      %v10670 = vpop.permute.xlu0 %10669
      %10735 = vrot.lane.b32.xlu0 %v4615, 18
      %v10736 = vpop.permute.xlu0 %10735
      %10737 = vrot.lane.b32.xlu0 %v4616, 18
      %v10738 = vpop.permute.xlu0 %10737
      %10739 = vrot.lane.b32.xlu0 %v4617, 18
      %v10740 = vpop.permute.xlu0 %10739
      %10741 = vrot.lane.b32.xlu0 %v4618, 18
      %v10742 = vpop.permute.xlu0 %10741
      %10743 = vrot.lane.b32.xlu0 %v4619, 18
      %v10744 = vpop.permute.xlu0 %10743
      %10745 = vrot.lane.b32.xlu0 %v4620, 18
      %v10746 = vpop.permute.xlu0 %10745
      %10747 = vrot.lane.b32.xlu0 %v4621, 18
      %v10748 = vpop.permute.xlu0 %10747
      %10749 = vrot.lane.b32.xlu0 %v4622, 18
      %v10750 = vpop.permute.xlu0 %10749
      %10751 = vrot.lane.b32.xlu0 %v4623, 18
      %v10752 = vpop.permute.xlu0 %10751
      %10753 = vrot.lane.b32.xlu0 %v4624, 18
      %v10754 = vpop.permute.xlu0 %10753
      %10755 = vrot.lane.b32.xlu0 %v4625, 18
      %v10756 = vpop.permute.xlu0 %10755
      %10757 = vrot.lane.b32.xlu0 %v4626, 18
      %v10758 = vpop.permute.xlu0 %10757
      %10759 = vrot.lane.b32.xlu0 %v4627, 18
      %v10760 = vpop.permute.xlu0 %10759
      %10761 = vrot.lane.b32.xlu0 %v4628, 18
      %v10762 = vpop.permute.xlu0 %10761
      %10763 = vrot.lane.b32.xlu0 %v4629, 18
      %v10764 = vpop.permute.xlu0 %10763
      %10765 = vrot.lane.b32.xlu0 %v4630, 18
      %v10766 = vpop.permute.xlu0 %10765
      %10767 = vrot.lane.b32.xlu0 %v4631, 18
      %v10768 = vpop.permute.xlu0 %10767
      %10769 = vrot.lane.b32.xlu0 %v4632, 18
      %v10770 = vpop.permute.xlu0 %10769
      %10771 = vrot.lane.b32.xlu0 %v4633, 18
      %v10772 = vpop.permute.xlu0 %10771
      %10773 = vrot.lane.b32.xlu0 %v4634, 18
      %v10774 = vpop.permute.xlu0 %10773
      %10775 = vrot.lane.b32.xlu0 %v4635, 18
      %v10776 = vpop.permute.xlu0 %10775
      %10777 = vrot.lane.b32.xlu0 %v4636, 18
      %v10778 = vpop.permute.xlu0 %10777
      %10779 = vrot.lane.b32.xlu0 %v4637, 18
      %v10780 = vpop.permute.xlu0 %10779
      %10781 = vrot.lane.b32.xlu0 %v4638, 18
      %v10782 = vpop.permute.xlu0 %10781
      %10783 = vrot.lane.b32.xlu0 %v4639, 18
      %v10784 = vpop.permute.xlu0 %10783
      %10785 = vrot.lane.b32.xlu0 %v4640, 18
      %v10786 = vpop.permute.xlu0 %10785
      %10787 = vrot.lane.b32.xlu0 %v4641, 18
      %v10788 = vpop.permute.xlu0 %10787
      %10789 = vrot.lane.b32.xlu0 %v4642, 18
      %v10790 = vpop.permute.xlu0 %10789
      %10791 = vrot.lane.b32.xlu0 %v4643, 18
      %v10792 = vpop.permute.xlu0 %10791
      %10793 = vrot.lane.b32.xlu0 %v4644, 18
      %v10794 = vpop.permute.xlu0 %10793
      %10795 = vrot.lane.b32.xlu0 %v4645, 18
      %v10796 = vpop.permute.xlu0 %10795
      %10797 = vrot.lane.b32.xlu0 %v4646, 18
      %v10798 = vpop.permute.xlu0 %10797
      %10863 = vrot.lane.b32.xlu0 %v4648, 20
      %v10864 = vpop.permute.xlu0 %10863
      %10865 = vrot.lane.b32.xlu0 %v4649, 20
      %v10866 = vpop.permute.xlu0 %10865
      %10867 = vrot.lane.b32.xlu0 %v4650, 20
      %v10868 = vpop.permute.xlu0 %10867
      %10869 = vrot.lane.b32.xlu0 %v4651, 20
      %v10870 = vpop.permute.xlu0 %10869
      %10871 = vrot.lane.b32.xlu0 %v4652, 20
      %v10872 = vpop.permute.xlu0 %10871
      %10873 = vrot.lane.b32.xlu0 %v4653, 20
      %v10874 = vpop.permute.xlu0 %10873
      %10875 = vrot.lane.b32.xlu0 %v4654, 20
      %v10876 = vpop.permute.xlu0 %10875
      %10877 = vrot.lane.b32.xlu0 %v4655, 20
      %v10878 = vpop.permute.xlu0 %10877
      %10879 = vrot.lane.b32.xlu0 %v4656, 20
      %v10880 = vpop.permute.xlu0 %10879
      %10881 = vrot.lane.b32.xlu0 %v4657, 20
      %v10882 = vpop.permute.xlu0 %10881
      %10883 = vrot.lane.b32.xlu0 %v4658, 20
      %v10884 = vpop.permute.xlu0 %10883
      %10885 = vrot.lane.b32.xlu0 %v4659, 20
      %v10886 = vpop.permute.xlu0 %10885
      %10887 = vrot.lane.b32.xlu0 %v4660, 20
      %v10888 = vpop.permute.xlu0 %10887
      %10889 = vrot.lane.b32.xlu0 %v4661, 20
      %v10890 = vpop.permute.xlu0 %10889
      %10891 = vrot.lane.b32.xlu0 %v4662, 20
      %v10892 = vpop.permute.xlu0 %10891
      %10893 = vrot.lane.b32.xlu0 %v4663, 20
      %v10894 = vpop.permute.xlu0 %10893
      %10895 = vrot.lane.b32.xlu0 %v4664, 20
      %v10896 = vpop.permute.xlu0 %10895
      %10897 = vrot.lane.b32.xlu0 %v4665, 20
      %v10898 = vpop.permute.xlu0 %10897
      %10899 = vrot.lane.b32.xlu0 %v4666, 20
      %v10900 = vpop.permute.xlu0 %10899
      %10901 = vrot.lane.b32.xlu0 %v4667, 20
      %v10902 = vpop.permute.xlu0 %10901
      %10903 = vrot.lane.b32.xlu0 %v4668, 20
      %v10904 = vpop.permute.xlu0 %10903
      %10905 = vrot.lane.b32.xlu0 %v4669, 20
      %v10906 = vpop.permute.xlu0 %10905
      %10907 = vrot.lane.b32.xlu0 %v4670, 20
      %v10908 = vpop.permute.xlu0 %10907
      %10909 = vrot.lane.b32.xlu0 %v4671, 20
      %v10910 = vpop.permute.xlu0 %10909
      %10911 = vrot.lane.b32.xlu0 %v4672, 20
      %v10912 = vpop.permute.xlu0 %10911
      %10913 = vrot.lane.b32.xlu0 %v4673, 20
      %v10914 = vpop.permute.xlu0 %10913
      %10915 = vrot.lane.b32.xlu0 %v4674, 20
      %v10916 = vpop.permute.xlu0 %10915
      %10917 = vrot.lane.b32.xlu0 %v4675, 20
      %v10918 = vpop.permute.xlu0 %10917
      %10919 = vrot.lane.b32.xlu0 %v4676, 20
      %v10920 = vpop.permute.xlu0 %10919
      %10921 = vrot.lane.b32.xlu0 %v4677, 20
      %v10922 = vpop.permute.xlu0 %10921
      %10923 = vrot.lane.b32.xlu0 %v4678, 20
      %v10924 = vpop.permute.xlu0 %10923
      %10925 = vrot.lane.b32.xlu0 %v4679, 20
      %v10926 = vpop.permute.xlu0 %10925
      %10991 = vrot.lane.b32.xlu0 %v4680, 22
      %v10992 = vpop.permute.xlu0 %10991
      %10993 = vrot.lane.b32.xlu0 %v4681, 22
      %v10994 = vpop.permute.xlu0 %10993
      %10995 = vrot.lane.b32.xlu0 %v4682, 22
      %v10996 = vpop.permute.xlu0 %10995
      %10997 = vrot.lane.b32.xlu0 %v4683, 22
      %v10998 = vpop.permute.xlu0 %10997
      %10999 = vrot.lane.b32.xlu0 %v4684, 22
      %v11000 = vpop.permute.xlu0 %10999
      %11001 = vrot.lane.b32.xlu0 %v4685, 22
      %v11002 = vpop.permute.xlu0 %11001
      %11003 = vrot.lane.b32.xlu0 %v4686, 22
      %v11004 = vpop.permute.xlu0 %11003
      %11005 = vrot.lane.b32.xlu0 %v4687, 22
      %v11006 = vpop.permute.xlu0 %11005
      %11007 = vrot.lane.b32.xlu0 %v4688, 22
      %v11008 = vpop.permute.xlu0 %11007
      %11009 = vrot.lane.b32.xlu0 %v4689, 22
      %v11010 = vpop.permute.xlu0 %11009
      %11011 = vrot.lane.b32.xlu0 %v4690, 22
      %v11012 = vpop.permute.xlu0 %11011
      %11013 = vrot.lane.b32.xlu0 %v4691, 22
      %v11014 = vpop.permute.xlu0 %11013
      %11015 = vrot.lane.b32.xlu0 %v4692, 22
      %v11016 = vpop.permute.xlu0 %11015
      %11017 = vrot.lane.b32.xlu0 %v4693, 22
      %v11018 = vpop.permute.xlu0 %11017
      %11019 = vrot.lane.b32.xlu0 %v4694, 22
      %v11020 = vpop.permute.xlu0 %11019
      %11021 = vrot.lane.b32.xlu0 %v4695, 22
      %v11022 = vpop.permute.xlu0 %11021
      %11023 = vrot.lane.b32.xlu0 %v4696, 22
      %v11024 = vpop.permute.xlu0 %11023
      %11025 = vrot.lane.b32.xlu0 %v4697, 22
      %v11026 = vpop.permute.xlu0 %11025
      %11027 = vrot.lane.b32.xlu0 %v4698, 22
      %v11028 = vpop.permute.xlu0 %11027
      %11029 = vrot.lane.b32.xlu0 %v4699, 22
      %v11030 = vpop.permute.xlu0 %11029
      %11031 = vrot.lane.b32.xlu0 %v4700, 22
      %v11032 = vpop.permute.xlu0 %11031
      %11033 = vrot.lane.b32.xlu0 %v4701, 22
      %v11034 = vpop.permute.xlu0 %11033
      %11035 = vrot.lane.b32.xlu0 %v4702, 22
      %v11036 = vpop.permute.xlu0 %11035
      %11037 = vrot.lane.b32.xlu0 %v4703, 22
      %v11038 = vpop.permute.xlu0 %11037
      %11039 = vrot.lane.b32.xlu0 %v4704, 22
      %v11040 = vpop.permute.xlu0 %11039
      %11041 = vrot.lane.b32.xlu0 %v4705, 22
      %v11042 = vpop.permute.xlu0 %11041
      %11043 = vrot.lane.b32.xlu0 %v4706, 22
      %v11044 = vpop.permute.xlu0 %11043
      %11045 = vrot.lane.b32.xlu0 %v4707, 22
      %v11046 = vpop.permute.xlu0 %11045
      %11047 = vrot.lane.b32.xlu0 %v4708, 22
      %v11048 = vpop.permute.xlu0 %11047
      %11049 = vrot.lane.b32.xlu0 %v4709, 22
      %v11050 = vpop.permute.xlu0 %11049
      %11051 = vrot.lane.b32.xlu0 %v4710, 22
      %v11052 = vpop.permute.xlu0 %11051
      %11053 = vrot.lane.b32.xlu0 %v4711, 22
      %v11054 = vpop.permute.xlu0 %11053
      %11119 = vrot.lane.b32.xlu0 %v4712, 24
      %v11120 = vpop.permute.xlu0 %11119
      %11121 = vrot.lane.b32.xlu0 %v4713, 24
      %v11122 = vpop.permute.xlu0 %11121
      %11123 = vrot.lane.b32.xlu0 %v4714, 24
      %v11124 = vpop.permute.xlu0 %11123
      %11125 = vrot.lane.b32.xlu0 %v4715, 24
      %v11126 = vpop.permute.xlu0 %11125
      %11127 = vrot.lane.b32.xlu0 %v4716, 24
      %v11128 = vpop.permute.xlu0 %11127
      %11129 = vrot.lane.b32.xlu0 %v4717, 24
      %v11130 = vpop.permute.xlu0 %11129
      %11131 = vrot.lane.b32.xlu0 %v4718, 24
      %v11132 = vpop.permute.xlu0 %11131
      %11133 = vrot.lane.b32.xlu0 %v4719, 24
      %v11134 = vpop.permute.xlu0 %11133
      %11135 = vrot.lane.b32.xlu0 %v4720, 24
      %v11136 = vpop.permute.xlu0 %11135
      %11137 = vrot.lane.b32.xlu0 %v4721, 24
      %v11138 = vpop.permute.xlu0 %11137
      %11139 = vrot.lane.b32.xlu0 %v4722, 24
      %v11140 = vpop.permute.xlu0 %11139
      %11141 = vrot.lane.b32.xlu0 %v4723, 24
      %v11142 = vpop.permute.xlu0 %11141
      %11143 = vrot.lane.b32.xlu0 %v4724, 24
      %v11144 = vpop.permute.xlu0 %11143
      %11145 = vrot.lane.b32.xlu0 %v4725, 24
      %v11146 = vpop.permute.xlu0 %11145
      %11147 = vrot.lane.b32.xlu0 %v4726, 24
      %v11148 = vpop.permute.xlu0 %11147
      %11149 = vrot.lane.b32.xlu0 %v4727, 24
      %v11150 = vpop.permute.xlu0 %11149
      %11151 = vrot.lane.b32.xlu0 %v4728, 24
      %v11152 = vpop.permute.xlu0 %11151
      %11153 = vrot.lane.b32.xlu0 %v4729, 24
      %v11154 = vpop.permute.xlu0 %11153
      %11155 = vrot.lane.b32.xlu0 %v4730, 24
      %v11156 = vpop.permute.xlu0 %11155
      %11157 = vrot.lane.b32.xlu0 %v4731, 24
      %v11158 = vpop.permute.xlu0 %11157
      %11159 = vrot.lane.b32.xlu0 %v4732, 24
      %v11160 = vpop.permute.xlu0 %11159
      %11161 = vrot.lane.b32.xlu0 %v4733, 24
      %v11162 = vpop.permute.xlu0 %11161
      %11163 = vrot.lane.b32.xlu0 %v4734, 24
      %v11164 = vpop.permute.xlu0 %11163
      %11165 = vrot.lane.b32.xlu0 %v4735, 24
      %v11166 = vpop.permute.xlu0 %11165
      %11167 = vrot.lane.b32.xlu0 %v4736, 24
      %v11168 = vpop.permute.xlu0 %11167
      %11169 = vrot.lane.b32.xlu0 %v4737, 24
      %v11170 = vpop.permute.xlu0 %11169
      %11171 = vrot.lane.b32.xlu0 %v4738, 24
      %v11172 = vpop.permute.xlu0 %11171
      %11173 = vrot.lane.b32.xlu0 %v4739, 24
      %v11174 = vpop.permute.xlu0 %11173
      %11175 = vrot.lane.b32.xlu0 %v4740, 24
      %v11176 = vpop.permute.xlu0 %11175
      %11177 = vrot.lane.b32.xlu0 %v4741, 24
      %v11178 = vpop.permute.xlu0 %11177
      %11179 = vrot.lane.b32.xlu0 %v4742, 24
      %v11180 = vpop.permute.xlu0 %11179
      %11181 = vrot.lane.b32.xlu0 %v4743, 24
      %v11182 = vpop.permute.xlu0 %11181
      %11247 = vrot.lane.b32.xlu0 %v4744, 26
      %v11248 = vpop.permute.xlu0 %11247
      %11249 = vrot.lane.b32.xlu0 %v4745, 26
      %v11250 = vpop.permute.xlu0 %11249
      %11251 = vrot.lane.b32.xlu0 %v4746, 26
      %v11252 = vpop.permute.xlu0 %11251
      %11253 = vrot.lane.b32.xlu0 %v4747, 26
      %v11254 = vpop.permute.xlu0 %11253
      %11255 = vrot.lane.b32.xlu0 %v4748, 26
      %v11256 = vpop.permute.xlu0 %11255
      %11257 = vrot.lane.b32.xlu0 %v4749, 26
      %v11258 = vpop.permute.xlu0 %11257
      %11259 = vrot.lane.b32.xlu0 %v4750, 26
      %v11260 = vpop.permute.xlu0 %11259
      %11261 = vrot.lane.b32.xlu0 %v4751, 26
      %v11262 = vpop.permute.xlu0 %11261
      %11263 = vrot.lane.b32.xlu0 %v4752, 26
      %v11264 = vpop.permute.xlu0 %11263
      %11265 = vrot.lane.b32.xlu0 %v4753, 26
      %v11266 = vpop.permute.xlu0 %11265
      %11267 = vrot.lane.b32.xlu0 %v4754, 26
      %v11268 = vpop.permute.xlu0 %11267
      %11269 = vrot.lane.b32.xlu0 %v4755, 26
      %v11270 = vpop.permute.xlu0 %11269
      %11271 = vrot.lane.b32.xlu0 %v4756, 26
      %v11272 = vpop.permute.xlu0 %11271
      %11273 = vrot.lane.b32.xlu0 %v4757, 26
      %v11274 = vpop.permute.xlu0 %11273
      %11275 = vrot.lane.b32.xlu0 %v4758, 26
      %v11276 = vpop.permute.xlu0 %11275
      %11277 = vrot.lane.b32.xlu0 %v4759, 26
      %v11278 = vpop.permute.xlu0 %11277
      %11279 = vrot.lane.b32.xlu0 %v4760, 26
      %v11280 = vpop.permute.xlu0 %11279
      %11281 = vrot.lane.b32.xlu0 %v4761, 26
      %v11282 = vpop.permute.xlu0 %11281
      %11283 = vrot.lane.b32.xlu0 %v4762, 26
      %v11284 = vpop.permute.xlu0 %11283
      %11285 = vrot.lane.b32.xlu0 %v4763, 26
      %v11286 = vpop.permute.xlu0 %11285
      %11287 = vrot.lane.b32.xlu0 %v4764, 26
      %v11288 = vpop.permute.xlu0 %11287
      %11289 = vrot.lane.b32.xlu0 %v4765, 26
      %v11290 = vpop.permute.xlu0 %11289
      %11291 = vrot.lane.b32.xlu0 %v4766, 26
      %v11292 = vpop.permute.xlu0 %11291
      %11293 = vrot.lane.b32.xlu0 %v4767, 26
      %v11294 = vpop.permute.xlu0 %11293
      %11295 = vrot.lane.b32.xlu0 %v4768, 26
      %v11296 = vpop.permute.xlu0 %11295
      %11297 = vrot.lane.b32.xlu0 %v4769, 26
      %v11298 = vpop.permute.xlu0 %11297
      %11299 = vrot.lane.b32.xlu0 %v4770, 26
      %v11300 = vpop.permute.xlu0 %11299
      %11301 = vrot.lane.b32.xlu0 %v4771, 26
      %v11302 = vpop.permute.xlu0 %11301
      %11303 = vrot.lane.b32.xlu0 %v4772, 26
      %v11304 = vpop.permute.xlu0 %11303
      %11305 = vrot.lane.b32.xlu0 %v4773, 26
      %v11306 = vpop.permute.xlu0 %11305
      %11307 = vrot.lane.b32.xlu0 %v4774, 26
      %v11308 = vpop.permute.xlu0 %11307
      %11309 = vrot.lane.b32.xlu0 %v4775, 26
      %v11310 = vpop.permute.xlu0 %11309
      %11375 = vrot.lane.b32.xlu0 %v4776, 28
      %v11376 = vpop.permute.xlu0 %11375
      %11377 = vrot.lane.b32.xlu0 %v4777, 28
      %v11378 = vpop.permute.xlu0 %11377
      %11379 = vrot.lane.b32.xlu0 %v4778, 28
      %v11380 = vpop.permute.xlu0 %11379
      %11381 = vrot.lane.b32.xlu0 %v4779, 28
      %v11382 = vpop.permute.xlu0 %11381
      %11383 = vrot.lane.b32.xlu0 %v4780, 28
      %v11384 = vpop.permute.xlu0 %11383
      %11385 = vrot.lane.b32.xlu0 %v4781, 28
      %v11386 = vpop.permute.xlu0 %11385
      %11387 = vrot.lane.b32.xlu0 %v4782, 28
      %v11388 = vpop.permute.xlu0 %11387
      %11389 = vrot.lane.b32.xlu0 %v4783, 28
      %v11390 = vpop.permute.xlu0 %11389
      %11391 = vrot.lane.b32.xlu0 %v4784, 28
      %v11392 = vpop.permute.xlu0 %11391
      %11393 = vrot.lane.b32.xlu0 %v4785, 28
      %v11394 = vpop.permute.xlu0 %11393
      %11395 = vrot.lane.b32.xlu0 %v4786, 28
      %v11396 = vpop.permute.xlu0 %11395
      %11397 = vrot.lane.b32.xlu0 %v4787, 28
      %v11398 = vpop.permute.xlu0 %11397
      %11399 = vrot.lane.b32.xlu0 %v4788, 28
      %v11400 = vpop.permute.xlu0 %11399
      %11401 = vrot.lane.b32.xlu0 %v4789, 28
      %v11402 = vpop.permute.xlu0 %11401
      %11403 = vrot.lane.b32.xlu0 %v4790, 28
      %v11404 = vpop.permute.xlu0 %11403
      %11405 = vrot.lane.b32.xlu0 %v4791, 28
      %v11406 = vpop.permute.xlu0 %11405
      %11407 = vrot.lane.b32.xlu0 %v4792, 28
      %v11408 = vpop.permute.xlu0 %11407
      %11409 = vrot.lane.b32.xlu0 %v4793, 28
      %v11410 = vpop.permute.xlu0 %11409
      %11411 = vrot.lane.b32.xlu0 %v4794, 28
      %v11412 = vpop.permute.xlu0 %11411
      %11413 = vrot.lane.b32.xlu0 %v4795, 28
      %v11414 = vpop.permute.xlu0 %11413
      %11415 = vrot.lane.b32.xlu0 %v4796, 28
      %v11416 = vpop.permute.xlu0 %11415
      %11417 = vrot.lane.b32.xlu0 %v4797, 28
      %v11418 = vpop.permute.xlu0 %11417
      %11419 = vrot.lane.b32.xlu0 %v4798, 28
      %v11420 = vpop.permute.xlu0 %11419
      %11421 = vrot.lane.b32.xlu0 %v4799, 28
      %v11422 = vpop.permute.xlu0 %11421
      %11423 = vrot.lane.b32.xlu0 %v4800, 28
      %v11424 = vpop.permute.xlu0 %11423
      %11425 = vrot.lane.b32.xlu0 %v4801, 28
      %v11426 = vpop.permute.xlu0 %11425
      %11427 = vrot.lane.b32.xlu0 %v4802, 28
      %v11428 = vpop.permute.xlu0 %11427
      %11429 = vrot.lane.b32.xlu0 %v4803, 28
      %v11430 = vpop.permute.xlu0 %11429
      %11431 = vrot.lane.b32.xlu0 %v4804, 28
      %v11432 = vpop.permute.xlu0 %11431
      %11433 = vrot.lane.b32.xlu0 %v4805, 28
      %v11434 = vpop.permute.xlu0 %11433
      %11435 = vrot.lane.b32.xlu0 %v4806, 28
      %v11436 = vpop.permute.xlu0 %11435
      %11437 = vrot.lane.b32.xlu0 %v4807, 28
      %v11438 = vpop.permute.xlu0 %11437
      %11503 = vrot.lane.b32.xlu0 %v4808, 30
      %v11504 = vpop.permute.xlu0 %11503
      %11505 = vrot.lane.b32.xlu0 %v4809, 30
      %v11506 = vpop.permute.xlu0 %11505
      %11507 = vrot.lane.b32.xlu0 %v4810, 30
      %v11508 = vpop.permute.xlu0 %11507
      %11509 = vrot.lane.b32.xlu0 %v4811, 30
      %v11510 = vpop.permute.xlu0 %11509
      %11511 = vrot.lane.b32.xlu0 %v4812, 30
      %v11512 = vpop.permute.xlu0 %11511
      %11513 = vrot.lane.b32.xlu0 %v4813, 30
      %v11514 = vpop.permute.xlu0 %11513
      %11515 = vrot.lane.b32.xlu0 %v4814, 30
      %v11516 = vpop.permute.xlu0 %11515
      %11517 = vrot.lane.b32.xlu0 %v4815, 30
      %v11518 = vpop.permute.xlu0 %11517
      %11519 = vrot.lane.b32.xlu0 %v4816, 30
      %v11520 = vpop.permute.xlu0 %11519
      %11521 = vrot.lane.b32.xlu0 %v4817, 30
      %v11522 = vpop.permute.xlu0 %11521
      %11523 = vrot.lane.b32.xlu0 %v4818, 30
      %v11524 = vpop.permute.xlu0 %11523
      %11525 = vrot.lane.b32.xlu0 %v4819, 30
      %v11526 = vpop.permute.xlu0 %11525
      %11527 = vrot.lane.b32.xlu0 %v4820, 30
      %v11528 = vpop.permute.xlu0 %11527
      %11529 = vrot.lane.b32.xlu0 %v4821, 30
      %v11530 = vpop.permute.xlu0 %11529
      %11531 = vrot.lane.b32.xlu0 %v4822, 30
      %v11532 = vpop.permute.xlu0 %11531
      %11533 = vrot.lane.b32.xlu0 %v4823, 30
      %v11534 = vpop.permute.xlu0 %11533
      %11535 = vrot.lane.b32.xlu0 %v4824, 30
      %v11536 = vpop.permute.xlu0 %11535
      %11537 = vrot.lane.b32.xlu0 %v4825, 30
      %v11538 = vpop.permute.xlu0 %11537
      %11539 = vrot.lane.b32.xlu0 %v4826, 30
      %v11540 = vpop.permute.xlu0 %11539
      %11541 = vrot.lane.b32.xlu0 %v4827, 30
      %v11542 = vpop.permute.xlu0 %11541
      %11543 = vrot.lane.b32.xlu0 %v4828, 30
      %v11544 = vpop.permute.xlu0 %11543
      %11545 = vrot.lane.b32.xlu0 %v4829, 30
      %v11546 = vpop.permute.xlu0 %11545
      %11547 = vrot.lane.b32.xlu0 %v4830, 30
      %v11548 = vpop.permute.xlu0 %11547
      %11549 = vrot.lane.b32.xlu0 %v4831, 30
      %v11550 = vpop.permute.xlu0 %11549
      %11551 = vrot.lane.b32.xlu0 %v4832, 30
      %v11552 = vpop.permute.xlu0 %11551
      %11553 = vrot.lane.b32.xlu0 %v4833, 30
      %v11554 = vpop.permute.xlu0 %11553
      %11555 = vrot.lane.b32.xlu0 %v4834, 30
      %v11556 = vpop.permute.xlu0 %11555
      %11557 = vrot.lane.b32.xlu0 %v4835, 30
      %v11558 = vpop.permute.xlu0 %11557
      %11559 = vrot.lane.b32.xlu0 %v4836, 30
      %v11560 = vpop.permute.xlu0 %11559
      %11561 = vrot.lane.b32.xlu0 %v4837, 30
      %v11562 = vpop.permute.xlu0 %11561
      %11563 = vrot.lane.b32.xlu0 %v4838, 30
      %v11564 = vpop.permute.xlu0 %11563
      %11565 = vrot.lane.b32.xlu0 %v4839, 30
      %v11566 = vpop.permute.xlu0 %11565
      %v11599 = vsel %vm3198, %v4326, %v9712
      %v11600 = vsel %vm3198, %v4327, %v9714
      %v11601 = vsel %vm3198, %v4328, %v9716
      %v11602 = vsel %vm3198, %v4329, %v9718
      %v11603 = vsel %vm3198, %v4330, %v9720
      %v11604 = vsel %vm3198, %v4331, %v9722
      %v11605 = vsel %vm3198, %v4332, %v9724
      %v11606 = vsel %vm3198, %v4333, %v9726
      %v11607 = vsel %vm3198, %v4334, %v9728
      %v11608 = vsel %vm3198, %v4335, %v9730
      %v11609 = vsel %vm3198, %v4336, %v9732
      %v11610 = vsel %vm3198, %v4337, %v9734
      %v11611 = vsel %vm3198, %v4338, %v9736
      %v11612 = vsel %vm3198, %v4339, %v9738
      %v11613 = vsel %vm3198, %v4340, %v9740
      %v11614 = vsel %vm3198, %v4341, %v9742
      %v11615 = vsel %vm3198, %v4342, %v9744
      %v11616 = vsel %vm3198, %v4343, %v9746
      %v11617 = vsel %vm3198, %v4344, %v9748
      %v11618 = vsel %vm3198, %v4345, %v9750
      %v11619 = vsel %vm3198, %v4346, %v9752
      %v11620 = vsel %vm3198, %v4347, %v9754
      %v11621 = vsel %vm3198, %v4348, %v9756
      %v11622 = vsel %vm3198, %v4349, %v9758
      %v11623 = vsel %vm3198, %v4350, %v9760
      %v11624 = vsel %vm3198, %v4351, %v9762
      %v11625 = vsel %vm3198, %v4352, %v9764
      %v11626 = vsel %vm3198, %v4353, %v9766
      %v11627 = vsel %vm3198, %v4354, %v9768
      %v11628 = vsel %vm3198, %v4355, %v9770
      %v11629 = vsel %vm3198, %v4356, %v9772
      %v11630 = vsel %vm3198, %v4357, %v9774
      %v11631 = vsel %vm526, %v11599, %v9840
      %v11632 = vsel %vm526, %v11600, %v9842
      %v11633 = vsel %vm526, %v11601, %v9844
      %v11634 = vsel %vm526, %v11602, %v9846
      %v11635 = vsel %vm526, %v11603, %v9848
      %v11636 = vsel %vm526, %v11604, %v9850
      %v11637 = vsel %vm526, %v11605, %v9852
      %v11638 = vsel %vm526, %v11606, %v9854
      %v11639 = vsel %vm526, %v11607, %v9856
      %v11640 = vsel %vm526, %v11608, %v9858
      %v11641 = vsel %vm526, %v11609, %v9860
      %v11642 = vsel %vm526, %v11610, %v9862
      %v11643 = vsel %vm526, %v11611, %v9864
      %v11644 = vsel %vm526, %v11612, %v9866
      %v11645 = vsel %vm526, %v11613, %v9868
      %v11646 = vsel %vm526, %v11614, %v9870
      %v11647 = vsel %vm526, %v11615, %v9872
      %v11648 = vsel %vm526, %v11616, %v9874
      %v11649 = vsel %vm526, %v11617, %v9876
      %v11650 = vsel %vm526, %v11618, %v9878
      %v11651 = vsel %vm526, %v11619, %v9880
      %v11652 = vsel %vm526, %v11620, %v9882
      %v11653 = vsel %vm526, %v11621, %v9884
      %v11654 = vsel %vm526, %v11622, %v9886
      %v11655 = vsel %vm526, %v11623, %v9888
      %v11656 = vsel %vm526, %v11624, %v9890
      %v11657 = vsel %vm526, %v11625, %v9892
      %v11658 = vsel %vm526, %v11626, %v9894
      %v11659 = vsel %vm526, %v11627, %v9896
      %v11660 = vsel %vm526, %v11628, %v9898
      %v11661 = vsel %vm526, %v11629, %v9900
      %v11662 = vsel %vm526, %v11630, %v9902
      %v11663 = vsel %vm6856, %v11631, %v9968
      %v11664 = vsel %vm6856, %v11632, %v9970
      %v11665 = vsel %vm6856, %v11633, %v9972
      %v11666 = vsel %vm6856, %v11634, %v9974
      %v11667 = vsel %vm6856, %v11635, %v9976
      %v11668 = vsel %vm6856, %v11636, %v9978
      %v11669 = vsel %vm6856, %v11637, %v9980
      %v11670 = vsel %vm6856, %v11638, %v9982
      %v11671 = vsel %vm6856, %v11639, %v9984
      %v11672 = vsel %vm6856, %v11640, %v9986
      %v11673 = vsel %vm6856, %v11641, %v9988
      %v11674 = vsel %vm6856, %v11642, %v9990
      %v11675 = vsel %vm6856, %v11643, %v9992
      %v11676 = vsel %vm6856, %v11644, %v9994
      %v11677 = vsel %vm6856, %v11645, %v9996
      %v11678 = vsel %vm6856, %v11646, %v9998
      %v11679 = vsel %vm6856, %v11647, %v10000
      %v11680 = vsel %vm6856, %v11648, %v10002
      %v11681 = vsel %vm6856, %v11649, %v10004
      %v11682 = vsel %vm6856, %v11650, %v10006
      %v11683 = vsel %vm6856, %v11651, %v10008
      %v11684 = vsel %vm6856, %v11652, %v10010
      %v11685 = vsel %vm6856, %v11653, %v10012
      %v11686 = vsel %vm6856, %v11654, %v10014
      %v11687 = vsel %vm6856, %v11655, %v10016
      %v11688 = vsel %vm6856, %v11656, %v10018
      %v11689 = vsel %vm6856, %v11657, %v10020
      %v11690 = vsel %vm6856, %v11658, %v10022
      %v11691 = vsel %vm6856, %v11659, %v10024
      %v11692 = vsel %vm6856, %v11660, %v10026
      %v11693 = vsel %vm6856, %v11661, %v10028
      %v11694 = vsel %vm6856, %v11662, %v10030
      %v11695 = vsel %vm2121, %v11663, %v10096
      %v11696 = vsel %vm2121, %v11664, %v10098
      %v11697 = vsel %vm2121, %v11665, %v10100
      %v11698 = vsel %vm2121, %v11666, %v10102
      %v11699 = vsel %vm2121, %v11667, %v10104
      %v11700 = vsel %vm2121, %v11668, %v10106
      %v11701 = vsel %vm2121, %v11669, %v10108
      %v11702 = vsel %vm2121, %v11670, %v10110
      %v11703 = vsel %vm2121, %v11671, %v10112
      %v11704 = vsel %vm2121, %v11672, %v10114
      %v11705 = vsel %vm2121, %v11673, %v10116
      %v11706 = vsel %vm2121, %v11674, %v10118
      %v11707 = vsel %vm2121, %v11675, %v10120
      %v11708 = vsel %vm2121, %v11676, %v10122
      %v11709 = vsel %vm2121, %v11677, %v10124
      %v11710 = vsel %vm2121, %v11678, %v10126
      %v11711 = vsel %vm2121, %v11679, %v10128
      %v11712 = vsel %vm2121, %v11680, %v10130
      %v11713 = vsel %vm2121, %v11681, %v10132
      %v11714 = vsel %vm2121, %v11682, %v10134
      %v11715 = vsel %vm2121, %v11683, %v10136
      %v11716 = vsel %vm2121, %v11684, %v10138
      %v11717 = vsel %vm2121, %v11685, %v10140
      %v11718 = vsel %vm2121, %v11686, %v10142
      %v11719 = vsel %vm2121, %v11687, %v10144
      %v11720 = vsel %vm2121, %v11688, %v10146
      %v11721 = vsel %vm2121, %v11689, %v10148
      %v11722 = vsel %vm2121, %v11690, %v10150
      %v11723 = vsel %vm2121, %v11691, %v10152
      %v11724 = vsel %vm2121, %v11692, %v10154
      %v11725 = vsel %vm2121, %v11693, %v10156
      %v11726 = vsel %vm2121, %v11694, %v10158
      %v11727 = vsel %vm6921, %v11695, %v10224
      %v11728 = vsel %vm6921, %v11696, %v10226
      %v11729 = vsel %vm6921, %v11697, %v10228
      %v11730 = vsel %vm6921, %v11698, %v10230
      %v11731 = vsel %vm6921, %v11699, %v10232
      %v11732 = vsel %vm6921, %v11700, %v10234
      %v11733 = vsel %vm6921, %v11701, %v10236
      %v11734 = vsel %vm6921, %v11702, %v10238
      %v11735 = vsel %vm6921, %v11703, %v10240
      %v11736 = vsel %vm6921, %v11704, %v10242
      %v11737 = vsel %vm6921, %v11705, %v10244
      %v11738 = vsel %vm6921, %v11706, %v10246
      %v11739 = vsel %vm6921, %v11707, %v10248
      %v11740 = vsel %vm6921, %v11708, %v10250
      %v11741 = vsel %vm6921, %v11709, %v10252
      %v11742 = vsel %vm6921, %v11710, %v10254
      %v11743 = vsel %vm6921, %v11711, %v10256
      %v11744 = vsel %vm6921, %v11712, %v10258
      %v11745 = vsel %vm6921, %v11713, %v10260
      %v11746 = vsel %vm6921, %v11714, %v10262
      %v11747 = vsel %vm6921, %v11715, %v10264
      %v11748 = vsel %vm6921, %v11716, %v10266
      %v11749 = vsel %vm6921, %v11717, %v10268
      %v11750 = vsel %vm6921, %v11718, %v10270
      %v11751 = vsel %vm6921, %v11719, %v10272
      %v11752 = vsel %vm6921, %v11720, %v10274
      %v11753 = vsel %vm6921, %v11721, %v10276
      %v11754 = vsel %vm6921, %v11722, %v10278
      %v11755 = vsel %vm6921, %v11723, %v10280
      %v11756 = vsel %vm6921, %v11724, %v10282
      %v11757 = vsel %vm6921, %v11725, %v10284
      %v11758 = vsel %vm6921, %v11726, %v10286
      %v11759 = vsel %vm2154, %v11727, %v10352
      %v11760 = vsel %vm2154, %v11728, %v10354
      %v11761 = vsel %vm2154, %v11729, %v10356
      %v11762 = vsel %vm2154, %v11730, %v10358
      %v11763 = vsel %vm2154, %v11731, %v10360
      %v11764 = vsel %vm2154, %v11732, %v10362
      %v11765 = vsel %vm2154, %v11733, %v10364
      %v11766 = vsel %vm2154, %v11734, %v10366
      %v11767 = vsel %vm2154, %v11735, %v10368
      %v11768 = vsel %vm2154, %v11736, %v10370
      %v11769 = vsel %vm2154, %v11737, %v10372
      %v11770 = vsel %vm2154, %v11738, %v10374
      %v11771 = vsel %vm2154, %v11739, %v10376
      %v11772 = vsel %vm2154, %v11740, %v10378
      %v11773 = vsel %vm2154, %v11741, %v10380
      %v11774 = vsel %vm2154, %v11742, %v10382
      %v11775 = vsel %vm2154, %v11743, %v10384
      %v11776 = vsel %vm2154, %v11744, %v10386
      %v11777 = vsel %vm2154, %v11745, %v10388
      %v11778 = vsel %vm2154, %v11746, %v10390
      %v11779 = vsel %vm2154, %v11747, %v10392
      %v11780 = vsel %vm2154, %v11748, %v10394
      %v11781 = vsel %vm2154, %v11749, %v10396
      %v11782 = vsel %vm2154, %v11750, %v10398
      %v11783 = vsel %vm2154, %v11751, %v10400
      %v11784 = vsel %vm2154, %v11752, %v10402
      %v11785 = vsel %vm2154, %v11753, %v10404
      %v11786 = vsel %vm2154, %v11754, %v10406
      %v11787 = vsel %vm2154, %v11755, %v10408
      %v11788 = vsel %vm2154, %v11756, %v10410
      %v11789 = vsel %vm2154, %v11757, %v10412
      %v11790 = vsel %vm2154, %v11758, %v10414
      %v11791 = vsel %vm6986, %v11759, %v10480
      %v11792 = vsel %vm6986, %v11760, %v10482
      %v11793 = vsel %vm6986, %v11761, %v10484
      %v11794 = vsel %vm6986, %v11762, %v10486
      %v11795 = vsel %vm6986, %v11763, %v10488
      %v11796 = vsel %vm6986, %v11764, %v10490
      %v11797 = vsel %vm6986, %v11765, %v10492
      %v11798 = vsel %vm6986, %v11766, %v10494
      %v11799 = vsel %vm6986, %v11767, %v10496
      %v11800 = vsel %vm6986, %v11768, %v10498
      %v11801 = vsel %vm6986, %v11769, %v10500
      %v11802 = vsel %vm6986, %v11770, %v10502
      %v11803 = vsel %vm6986, %v11771, %v10504
      %v11804 = vsel %vm6986, %v11772, %v10506
      %v11805 = vsel %vm6986, %v11773, %v10508
      %v11806 = vsel %vm6986, %v11774, %v10510
      %v11807 = vsel %vm6986, %v11775, %v10512
      %v11808 = vsel %vm6986, %v11776, %v10514
      %v11809 = vsel %vm6986, %v11777, %v10516
      %v11810 = vsel %vm6986, %v11778, %v10518
      %v11811 = vsel %vm6986, %v11779, %v10520
      %v11812 = vsel %vm6986, %v11780, %v10522
      %v11813 = vsel %vm6986, %v11781, %v10524
      %v11814 = vsel %vm6986, %v11782, %v10526
      %v11815 = vsel %vm6986, %v11783, %v10528
      %v11816 = vsel %vm6986, %v11784, %v10530
      %v11817 = vsel %vm6986, %v11785, %v10532
      %v11818 = vsel %vm6986, %v11786, %v10534
      %v11819 = vsel %vm6986, %v11787, %v10536
      %v11820 = vsel %vm6986, %v11788, %v10538
      %v11821 = vsel %vm6986, %v11789, %v10540
      %v11822 = vsel %vm6986, %v11790, %v10542
      %v11823 = vsel %vm2187, %v11791, %v10608
      %v11824 = vsel %vm2187, %v11792, %v10610
      %v11825 = vsel %vm2187, %v11793, %v10612
      %v11826 = vsel %vm2187, %v11794, %v10614
      %v11827 = vsel %vm2187, %v11795, %v10616
      %v11828 = vsel %vm2187, %v11796, %v10618
      %v11829 = vsel %vm2187, %v11797, %v10620
      %v11830 = vsel %vm2187, %v11798, %v10622
      %v11831 = vsel %vm2187, %v11799, %v10624
      %v11832 = vsel %vm2187, %v11800, %v10626
      %v11833 = vsel %vm2187, %v11801, %v10628
      %v11834 = vsel %vm2187, %v11802, %v10630
      %v11835 = vsel %vm2187, %v11803, %v10632
      %v11836 = vsel %vm2187, %v11804, %v10634
      %v11837 = vsel %vm2187, %v11805, %v10636
      %v11838 = vsel %vm2187, %v11806, %v10638
      %v11839 = vsel %vm2187, %v11807, %v10640
      %v11840 = vsel %vm2187, %v11808, %v10642
      %v11841 = vsel %vm2187, %v11809, %v10644
      %v11842 = vsel %vm2187, %v11810, %v10646
      %v11843 = vsel %vm2187, %v11811, %v10648
      %v11844 = vsel %vm2187, %v11812, %v10650
      %v11845 = vsel %vm2187, %v11813, %v10652
      %v11846 = vsel %vm2187, %v11814, %v10654
      %v11847 = vsel %vm2187, %v11815, %v10656
      %v11848 = vsel %vm2187, %v11816, %v10658
      %v11849 = vsel %vm2187, %v11817, %v10660
      %v11850 = vsel %vm2187, %v11818, %v10662
      %v11851 = vsel %vm2187, %v11819, %v10664
      %v11852 = vsel %vm2187, %v11820, %v10666
      %v11853 = vsel %vm2187, %v11821, %v10668
      %v11854 = vsel %vm2187, %v11822, %v10670
      %v11855 = vsel %vm7051, %v11823, %v10736
      %v11856 = vsel %vm7051, %v11824, %v10738
      %v11857 = vsel %vm7051, %v11825, %v10740
      %v11858 = vsel %vm7051, %v11826, %v10742
      %v11859 = vsel %vm7051, %v11827, %v10744
      %v11860 = vsel %vm7051, %v11828, %v10746
      %v11861 = vsel %vm7051, %v11829, %v10748
      %v11862 = vsel %vm7051, %v11830, %v10750
      %v11863 = vsel %vm7051, %v11831, %v10752
      %v11864 = vsel %vm7051, %v11832, %v10754
      %v11865 = vsel %vm7051, %v11833, %v10756
      %v11866 = vsel %vm7051, %v11834, %v10758
      %v11867 = vsel %vm7051, %v11835, %v10760
      %v11868 = vsel %vm7051, %v11836, %v10762
      %v11869 = vsel %vm7051, %v11837, %v10764
      %v11870 = vsel %vm7051, %v11838, %v10766
      %v11871 = vsel %vm7051, %v11839, %v10768
      %v11872 = vsel %vm7051, %v11840, %v10770
      %v11873 = vsel %vm7051, %v11841, %v10772
      %v11874 = vsel %vm7051, %v11842, %v10774
      %v11875 = vsel %vm7051, %v11843, %v10776
      %v11876 = vsel %vm7051, %v11844, %v10778
      %v11877 = vsel %vm7051, %v11845, %v10780
      %v11878 = vsel %vm7051, %v11846, %v10782
      %v11879 = vsel %vm7051, %v11847, %v10784
      %v11880 = vsel %vm7051, %v11848, %v10786
      %v11881 = vsel %vm7051, %v11849, %v10788
      %v11882 = vsel %vm7051, %v11850, %v10790
      %v11883 = vsel %vm7051, %v11851, %v10792
      %v11884 = vsel %vm7051, %v11852, %v10794
      %v11885 = vsel %vm7051, %v11853, %v10796
      %v11886 = vsel %vm7051, %v11854, %v10798
      %v11887 = vsel %vm2220, %v11855, %v10864
      %v11888 = vsel %vm2220, %v11856, %v10866
      %v11889 = vsel %vm2220, %v11857, %v10868
      %v11890 = vsel %vm2220, %v11858, %v10870
      %v11891 = vsel %vm2220, %v11859, %v10872
      %v11892 = vsel %vm2220, %v11860, %v10874
      %v11893 = vsel %vm2220, %v11861, %v10876
      %v11894 = vsel %vm2220, %v11862, %v10878
      %v11895 = vsel %vm2220, %v11863, %v10880
      %v11896 = vsel %vm2220, %v11864, %v10882
      %v11897 = vsel %vm2220, %v11865, %v10884
      %v11898 = vsel %vm2220, %v11866, %v10886
      %v11899 = vsel %vm2220, %v11867, %v10888
      %v11900 = vsel %vm2220, %v11868, %v10890
      %v11901 = vsel %vm2220, %v11869, %v10892
      %v11902 = vsel %vm2220, %v11870, %v10894
      %v11903 = vsel %vm2220, %v11871, %v10896
      %v11904 = vsel %vm2220, %v11872, %v10898
      %v11905 = vsel %vm2220, %v11873, %v10900
      %v11906 = vsel %vm2220, %v11874, %v10902
      %v11907 = vsel %vm2220, %v11875, %v10904
      %v11908 = vsel %vm2220, %v11876, %v10906
      %v11909 = vsel %vm2220, %v11877, %v10908
      %v11910 = vsel %vm2220, %v11878, %v10910
      %v11911 = vsel %vm2220, %v11879, %v10912
      %v11912 = vsel %vm2220, %v11880, %v10914
      %v11913 = vsel %vm2220, %v11881, %v10916
      %v11914 = vsel %vm2220, %v11882, %v10918
      %v11915 = vsel %vm2220, %v11883, %v10920
      %v11916 = vsel %vm2220, %v11884, %v10922
      %v11917 = vsel %vm2220, %v11885, %v10924
      %v11918 = vsel %vm2220, %v11886, %v10926
      %v11919 = vsel %vm7116, %v11887, %v10992
      %v11920 = vsel %vm7116, %v11888, %v10994
      %v11921 = vsel %vm7116, %v11889, %v10996
      %v11922 = vsel %vm7116, %v11890, %v10998
      %v11923 = vsel %vm7116, %v11891, %v11000
      %v11924 = vsel %vm7116, %v11892, %v11002
      %v11925 = vsel %vm7116, %v11893, %v11004
      %v11926 = vsel %vm7116, %v11894, %v11006
      %v11927 = vsel %vm7116, %v11895, %v11008
      %v11928 = vsel %vm7116, %v11896, %v11010
      %v11929 = vsel %vm7116, %v11897, %v11012
      %v11930 = vsel %vm7116, %v11898, %v11014
      %v11931 = vsel %vm7116, %v11899, %v11016
      %v11932 = vsel %vm7116, %v11900, %v11018
      %v11933 = vsel %vm7116, %v11901, %v11020
      %v11934 = vsel %vm7116, %v11902, %v11022
      %v11935 = vsel %vm7116, %v11903, %v11024
      %v11936 = vsel %vm7116, %v11904, %v11026
      %v11937 = vsel %vm7116, %v11905, %v11028
      %v11938 = vsel %vm7116, %v11906, %v11030
      %v11939 = vsel %vm7116, %v11907, %v11032
      %v11940 = vsel %vm7116, %v11908, %v11034
      %v11941 = vsel %vm7116, %v11909, %v11036
      %v11942 = vsel %vm7116, %v11910, %v11038
      %v11943 = vsel %vm7116, %v11911, %v11040
      %v11944 = vsel %vm7116, %v11912, %v11042
      %v11945 = vsel %vm7116, %v11913, %v11044
      %v11946 = vsel %vm7116, %v11914, %v11046
      %v11947 = vsel %vm7116, %v11915, %v11048
      %v11948 = vsel %vm7116, %v11916, %v11050
      %v11949 = vsel %vm7116, %v11917, %v11052
      %v11950 = vsel %vm7116, %v11918, %v11054
      %v11951 = vsel %vm2253, %v11919, %v11120
      %v11952 = vsel %vm2253, %v11920, %v11122
      %v11953 = vsel %vm2253, %v11921, %v11124
      %v11954 = vsel %vm2253, %v11922, %v11126
      %v11955 = vsel %vm2253, %v11923, %v11128
      %v11956 = vsel %vm2253, %v11924, %v11130
      %v11957 = vsel %vm2253, %v11925, %v11132
      %v11958 = vsel %vm2253, %v11926, %v11134
      %v11959 = vsel %vm2253, %v11927, %v11136
      %v11960 = vsel %vm2253, %v11928, %v11138
      %v11961 = vsel %vm2253, %v11929, %v11140
      %v11962 = vsel %vm2253, %v11930, %v11142
      %v11963 = vsel %vm2253, %v11931, %v11144
      %v11964 = vsel %vm2253, %v11932, %v11146
      %v11965 = vsel %vm2253, %v11933, %v11148
      %v11966 = vsel %vm2253, %v11934, %v11150
      %v11967 = vsel %vm2253, %v11935, %v11152
      %v11968 = vsel %vm2253, %v11936, %v11154
      %v11969 = vsel %vm2253, %v11937, %v11156
      %v11970 = vsel %vm2253, %v11938, %v11158
      %v11971 = vsel %vm2253, %v11939, %v11160
      %v11972 = vsel %vm2253, %v11940, %v11162
      %v11973 = vsel %vm2253, %v11941, %v11164
      %v11974 = vsel %vm2253, %v11942, %v11166
      %v11975 = vsel %vm2253, %v11943, %v11168
      %v11976 = vsel %vm2253, %v11944, %v11170
      %v11977 = vsel %vm2253, %v11945, %v11172
      %v11978 = vsel %vm2253, %v11946, %v11174
      %v11979 = vsel %vm2253, %v11947, %v11176
      %v11980 = vsel %vm2253, %v11948, %v11178
      %v11981 = vsel %vm2253, %v11949, %v11180
      %v11982 = vsel %vm2253, %v11950, %v11182
      %v11983 = vsel %vm7181, %v11951, %v11248
      %v11984 = vsel %vm7181, %v11952, %v11250
      %v11985 = vsel %vm7181, %v11953, %v11252
      %v11986 = vsel %vm7181, %v11954, %v11254
      %v11987 = vsel %vm7181, %v11955, %v11256
      %v11988 = vsel %vm7181, %v11956, %v11258
      %v11989 = vsel %vm7181, %v11957, %v11260
      %v11990 = vsel %vm7181, %v11958, %v11262
      %v11991 = vsel %vm7181, %v11959, %v11264
      %v11992 = vsel %vm7181, %v11960, %v11266
      %v11993 = vsel %vm7181, %v11961, %v11268
      %v11994 = vsel %vm7181, %v11962, %v11270
      %v11995 = vsel %vm7181, %v11963, %v11272
      %v11996 = vsel %vm7181, %v11964, %v11274
      %v11997 = vsel %vm7181, %v11965, %v11276
      %v11998 = vsel %vm7181, %v11966, %v11278
      %v11999 = vsel %vm7181, %v11967, %v11280
      %v12000 = vsel %vm7181, %v11968, %v11282
      %v12001 = vsel %vm7181, %v11969, %v11284
      %v12002 = vsel %vm7181, %v11970, %v11286
      %v12003 = vsel %vm7181, %v11971, %v11288
      %v12004 = vsel %vm7181, %v11972, %v11290
      %v12005 = vsel %vm7181, %v11973, %v11292
      %v12006 = vsel %vm7181, %v11974, %v11294
      %v12007 = vsel %vm7181, %v11975, %v11296
      %v12008 = vsel %vm7181, %v11976, %v11298
      %v12009 = vsel %vm7181, %v11977, %v11300
      %v12010 = vsel %vm7181, %v11978, %v11302
      %v12011 = vsel %vm7181, %v11979, %v11304
      %v12012 = vsel %vm7181, %v11980, %v11306
      %v12013 = vsel %vm7181, %v11981, %v11308
      %v12014 = vsel %vm7181, %v11982, %v11310
      %v12015 = vsel %vm2286, %v11983, %v11376
      %v12016 = vsel %vm2286, %v11984, %v11378
      %v12017 = vsel %vm2286, %v11985, %v11380
      %v12018 = vsel %vm2286, %v11986, %v11382
      %v12019 = vsel %vm2286, %v11987, %v11384
      %v12020 = vsel %vm2286, %v11988, %v11386
      %v12021 = vsel %vm2286, %v11989, %v11388
      %v12022 = vsel %vm2286, %v11990, %v11390
      %v12023 = vsel %vm2286, %v11991, %v11392
      %v12024 = vsel %vm2286, %v11992, %v11394
      %v12025 = vsel %vm2286, %v11993, %v11396
      %v12026 = vsel %vm2286, %v11994, %v11398
      %v12027 = vsel %vm2286, %v11995, %v11400
      %v12028 = vsel %vm2286, %v11996, %v11402
      %v12029 = vsel %vm2286, %v11997, %v11404
      %v12030 = vsel %vm2286, %v11998, %v11406
      %v12031 = vsel %vm2286, %v11999, %v11408
      %v12032 = vsel %vm2286, %v12000, %v11410
      %v12033 = vsel %vm2286, %v12001, %v11412
      %v12034 = vsel %vm2286, %v12002, %v11414
      %v12035 = vsel %vm2286, %v12003, %v11416
      %v12036 = vsel %vm2286, %v12004, %v11418
      %v12037 = vsel %vm2286, %v12005, %v11420
      %v12038 = vsel %vm2286, %v12006, %v11422
      %v12039 = vsel %vm2286, %v12007, %v11424
      %v12040 = vsel %vm2286, %v12008, %v11426
      %v12041 = vsel %vm2286, %v12009, %v11428
      %v12042 = vsel %vm2286, %v12010, %v11430
      %v12043 = vsel %vm2286, %v12011, %v11432
      %v12044 = vsel %vm2286, %v12012, %v11434
      %v12045 = vsel %vm2286, %v12013, %v11436
      %v12046 = vsel %vm2286, %v12014, %v11438
      %v12047 = vsel %vm7246, %v12015, %v11504
      %v12048 = vsel %vm7246, %v12016, %v11506
      %v12049 = vsel %vm7246, %v12017, %v11508
      %v12050 = vsel %vm7246, %v12018, %v11510
      %v12051 = vsel %vm7246, %v12019, %v11512
      %v12052 = vsel %vm7246, %v12020, %v11514
      %v12053 = vsel %vm7246, %v12021, %v11516
      %v12054 = vsel %vm7246, %v12022, %v11518
      %v12055 = vsel %vm7246, %v12023, %v11520
      %v12056 = vsel %vm7246, %v12024, %v11522
      %v12057 = vsel %vm7246, %v12025, %v11524
      %v12058 = vsel %vm7246, %v12026, %v11526
      %v12059 = vsel %vm7246, %v12027, %v11528
      %v12060 = vsel %vm7246, %v12028, %v11530
      %v12061 = vsel %vm7246, %v12029, %v11532
      %v12062 = vsel %vm7246, %v12030, %v11534
      %v12063 = vsel %vm7246, %v12031, %v11536
      %v12064 = vsel %vm7246, %v12032, %v11538
      %v12065 = vsel %vm7246, %v12033, %v11540
      %v12066 = vsel %vm7246, %v12034, %v11542
      %v12067 = vsel %vm7246, %v12035, %v11544
      %v12068 = vsel %vm7246, %v12036, %v11546
      %v12069 = vsel %vm7246, %v12037, %v11548
      %v12070 = vsel %vm7246, %v12038, %v11550
      %v12071 = vsel %vm7246, %v12039, %v11552
      %v12072 = vsel %vm7246, %v12040, %v11554
      %v12073 = vsel %vm7246, %v12041, %v11556
      %v12074 = vsel %vm7246, %v12042, %v11558
      %v12075 = vsel %vm7246, %v12043, %v11560
      %v12076 = vsel %vm7246, %v12044, %v11562
      %v12077 = vsel %vm7246, %v12045, %v11564
      %v12078 = vsel %vm7246, %v12046, %v11566
      %12111 = vrot.lane.b32.xlu0 %v9647, 32
      %v12112 = vpop.permute.xlu0 %12111
      %12113 = vrot.lane.b32.xlu0 %v9648, 32
      %v12114 = vpop.permute.xlu0 %12113
      %12115 = vrot.lane.b32.xlu0 %v9649, 32
      %v12116 = vpop.permute.xlu0 %12115
      %12117 = vrot.lane.b32.xlu0 %v9650, 32
      %v12118 = vpop.permute.xlu0 %12117
      %12119 = vrot.lane.b32.xlu0 %v9651, 32
      %v12120 = vpop.permute.xlu0 %12119
      %12121 = vrot.lane.b32.xlu0 %v9652, 32
      %v12122 = vpop.permute.xlu0 %12121
      %12123 = vrot.lane.b32.xlu0 %v9653, 32
      %v12124 = vpop.permute.xlu0 %12123
      %12125 = vrot.lane.b32.xlu0 %v9654, 32
      %v12126 = vpop.permute.xlu0 %12125
      %12127 = vrot.lane.b32.xlu0 %v9655, 32
      %v12128 = vpop.permute.xlu0 %12127
      %12129 = vrot.lane.b32.xlu0 %v9656, 32
      %v12130 = vpop.permute.xlu0 %12129
      %12131 = vrot.lane.b32.xlu0 %v9657, 32
      %v12132 = vpop.permute.xlu0 %12131
      %12133 = vrot.lane.b32.xlu0 %v9658, 32
      %v12134 = vpop.permute.xlu0 %12133
      %12135 = vrot.lane.b32.xlu0 %v9659, 32
      %v12136 = vpop.permute.xlu0 %12135
      %12137 = vrot.lane.b32.xlu0 %v9660, 32
      %v12138 = vpop.permute.xlu0 %12137
      %12139 = vrot.lane.b32.xlu0 %v9661, 32
      %v12140 = vpop.permute.xlu0 %12139
      %12141 = vrot.lane.b32.xlu0 %v9662, 32
      %v12142 = vpop.permute.xlu0 %12141
      %12143 = vrot.lane.b32.xlu0 %v9663, 32
      %v12144 = vpop.permute.xlu0 %12143
      %12145 = vrot.lane.b32.xlu0 %v9664, 32
      %v12146 = vpop.permute.xlu0 %12145
      %12147 = vrot.lane.b32.xlu0 %v9665, 32
      %v12148 = vpop.permute.xlu0 %12147
      %12149 = vrot.lane.b32.xlu0 %v9666, 32
      %v12150 = vpop.permute.xlu0 %12149
      %12151 = vrot.lane.b32.xlu0 %v9667, 32
      %v12152 = vpop.permute.xlu0 %12151
      %12153 = vrot.lane.b32.xlu0 %v9668, 32
      %v12154 = vpop.permute.xlu0 %12153
      %12155 = vrot.lane.b32.xlu0 %v9669, 32
      %v12156 = vpop.permute.xlu0 %12155
      %12157 = vrot.lane.b32.xlu0 %v9670, 32
      %v12158 = vpop.permute.xlu0 %12157
      %12159 = vrot.lane.b32.xlu0 %v9671, 32
      %v12160 = vpop.permute.xlu0 %12159
      %12161 = vrot.lane.b32.xlu0 %v9672, 32
      %v12162 = vpop.permute.xlu0 %12161
      %12163 = vrot.lane.b32.xlu0 %v9673, 32
      %v12164 = vpop.permute.xlu0 %12163
      %12165 = vrot.lane.b32.xlu0 %v9674, 32
      %v12166 = vpop.permute.xlu0 %12165
      %12167 = vrot.lane.b32.xlu0 %v9675, 32
      %v12168 = vpop.permute.xlu0 %12167
      %12169 = vrot.lane.b32.xlu0 %v9676, 32
      %v12170 = vpop.permute.xlu0 %12169
      %12171 = vrot.lane.b32.xlu0 %v9677, 32
      %v12172 = vpop.permute.xlu0 %12171
      %12173 = vrot.lane.b32.xlu0 %v9678, 32
      %v12174 = vpop.permute.xlu0 %12173
      %12239 = vrot.lane.b32.xlu0 %v12047, 64
      %v12240 = vpop.permute.xlu0 %12239
      %12241 = vrot.lane.b32.xlu0 %v12048, 64
      %v12242 = vpop.permute.xlu0 %12241
      %12243 = vrot.lane.b32.xlu0 %v12049, 64
      %v12244 = vpop.permute.xlu0 %12243
      %12245 = vrot.lane.b32.xlu0 %v12050, 64
      %v12246 = vpop.permute.xlu0 %12245
      %12247 = vrot.lane.b32.xlu0 %v12051, 64
      %v12248 = vpop.permute.xlu0 %12247
      %12249 = vrot.lane.b32.xlu0 %v12052, 64
      %v12250 = vpop.permute.xlu0 %12249
      %12251 = vrot.lane.b32.xlu0 %v12053, 64
      %v12252 = vpop.permute.xlu0 %12251
      %12253 = vrot.lane.b32.xlu0 %v12054, 64
      %v12254 = vpop.permute.xlu0 %12253
      %12255 = vrot.lane.b32.xlu0 %v12055, 64
      %v12256 = vpop.permute.xlu0 %12255
      %12257 = vrot.lane.b32.xlu0 %v12056, 64
      %v12258 = vpop.permute.xlu0 %12257
      %12259 = vrot.lane.b32.xlu0 %v12057, 64
      %v12260 = vpop.permute.xlu0 %12259
      %12261 = vrot.lane.b32.xlu0 %v12058, 64
      %v12262 = vpop.permute.xlu0 %12261
      %12263 = vrot.lane.b32.xlu0 %v12059, 64
      %v12264 = vpop.permute.xlu0 %12263
      %12265 = vrot.lane.b32.xlu0 %v12060, 64
      %v12266 = vpop.permute.xlu0 %12265
      %12267 = vrot.lane.b32.xlu0 %v12061, 64
      %v12268 = vpop.permute.xlu0 %12267
      %12269 = vrot.lane.b32.xlu0 %v12062, 64
      %v12270 = vpop.permute.xlu0 %12269
      %12271 = vrot.lane.b32.xlu0 %v12063, 64
      %v12272 = vpop.permute.xlu0 %12271
      %12273 = vrot.lane.b32.xlu0 %v12064, 64
      %v12274 = vpop.permute.xlu0 %12273
      %12275 = vrot.lane.b32.xlu0 %v12065, 64
      %v12276 = vpop.permute.xlu0 %12275
      %12277 = vrot.lane.b32.xlu0 %v12066, 64
      %v12278 = vpop.permute.xlu0 %12277
      %12279 = vrot.lane.b32.xlu0 %v12067, 64
      %v12280 = vpop.permute.xlu0 %12279
      %12281 = vrot.lane.b32.xlu0 %v12068, 64
      %v12282 = vpop.permute.xlu0 %12281
      %12283 = vrot.lane.b32.xlu0 %v12069, 64
      %v12284 = vpop.permute.xlu0 %12283
      %12285 = vrot.lane.b32.xlu0 %v12070, 64
      %v12286 = vpop.permute.xlu0 %12285
      %12287 = vrot.lane.b32.xlu0 %v12071, 64
      %v12288 = vpop.permute.xlu0 %12287
      %12289 = vrot.lane.b32.xlu0 %v12072, 64
      %v12290 = vpop.permute.xlu0 %12289
      %12291 = vrot.lane.b32.xlu0 %v12073, 64
      %v12292 = vpop.permute.xlu0 %12291
      %12293 = vrot.lane.b32.xlu0 %v12074, 64
      %v12294 = vpop.permute.xlu0 %12293
      %12295 = vrot.lane.b32.xlu0 %v12075, 64
      %v12296 = vpop.permute.xlu0 %12295
      %12297 = vrot.lane.b32.xlu0 %v12076, 64
      %v12298 = vpop.permute.xlu0 %12297
      %12299 = vrot.lane.b32.xlu0 %v12077, 64
      %v12300 = vpop.permute.xlu0 %12299
      %12301 = vrot.lane.b32.xlu0 %v12078, 64
      %v12302 = vpop.permute.xlu0 %12301
      %12367 = vrot.lane.b32.xlu0 %v4840, 96
      %v12368 = vpop.permute.xlu0 %12367
      %12369 = vrot.lane.b32.xlu0 %v4841, 96
      %v12370 = vpop.permute.xlu0 %12369
      %12371 = vrot.lane.b32.xlu0 %v4842, 96
      %v12372 = vpop.permute.xlu0 %12371
      %12373 = vrot.lane.b32.xlu0 %v4843, 96
      %v12374 = vpop.permute.xlu0 %12373
      %12375 = vrot.lane.b32.xlu0 %v4844, 96
      %v12376 = vpop.permute.xlu0 %12375
      %12377 = vrot.lane.b32.xlu0 %v4845, 96
      %v12378 = vpop.permute.xlu0 %12377
      %12379 = vrot.lane.b32.xlu0 %v4846, 96
      %v12380 = vpop.permute.xlu0 %12379
      %12381 = vrot.lane.b32.xlu0 %v4847, 96
      %v12382 = vpop.permute.xlu0 %12381
      %12383 = vrot.lane.b32.xlu0 %v4848, 96
      %v12384 = vpop.permute.xlu0 %12383
      %12385 = vrot.lane.b32.xlu0 %v4849, 96
      %v12386 = vpop.permute.xlu0 %12385
      %12387 = vrot.lane.b32.xlu0 %v4850, 96
      %v12388 = vpop.permute.xlu0 %12387
      %12389 = vrot.lane.b32.xlu0 %v4851, 96
      %v12390 = vpop.permute.xlu0 %12389
      %12391 = vrot.lane.b32.xlu0 %v4852, 96
      %v12392 = vpop.permute.xlu0 %12391
      %12393 = vrot.lane.b32.xlu0 %v4853, 96
      %v12394 = vpop.permute.xlu0 %12393
      %12395 = vrot.lane.b32.xlu0 %v4854, 96
      %v12396 = vpop.permute.xlu0 %12395
      %12397 = vrot.lane.b32.xlu0 %v4855, 96
      %v12398 = vpop.permute.xlu0 %12397
      %12399 = vrot.lane.b32.xlu0 %v4856, 96
      %v12400 = vpop.permute.xlu0 %12399
      %12401 = vrot.lane.b32.xlu0 %v4857, 96
      %v12402 = vpop.permute.xlu0 %12401
      %12403 = vrot.lane.b32.xlu0 %v4858, 96
      %v12404 = vpop.permute.xlu0 %12403
      %12405 = vrot.lane.b32.xlu0 %v4859, 96
      %v12406 = vpop.permute.xlu0 %12405
      %12407 = vrot.lane.b32.xlu0 %v4860, 96
      %v12408 = vpop.permute.xlu0 %12407
      %12409 = vrot.lane.b32.xlu0 %v4861, 96
      %v12410 = vpop.permute.xlu0 %12409
      %12411 = vrot.lane.b32.xlu0 %v4862, 96
      %v12412 = vpop.permute.xlu0 %12411
      %12413 = vrot.lane.b32.xlu0 %v4863, 96
      %v12414 = vpop.permute.xlu0 %12413
      %12415 = vrot.lane.b32.xlu0 %v4864, 96
      %v12416 = vpop.permute.xlu0 %12415
      %12417 = vrot.lane.b32.xlu0 %v4865, 96
      %v12418 = vpop.permute.xlu0 %12417
      %12419 = vrot.lane.b32.xlu0 %v4866, 96
      %v12420 = vpop.permute.xlu0 %12419
      %12421 = vrot.lane.b32.xlu0 %v4867, 96
      %v12422 = vpop.permute.xlu0 %12421
      %12423 = vrot.lane.b32.xlu0 %v4868, 96
      %v12424 = vpop.permute.xlu0 %12423
      %12425 = vrot.lane.b32.xlu0 %v4869, 96
      %v12426 = vpop.permute.xlu0 %12425
      %12427 = vrot.lane.b32.xlu0 %v4870, 96
      %v12428 = vpop.permute.xlu0 %12427
      %12429 = vrot.lane.b32.xlu0 %v4871, 96
      %v12430 = vpop.permute.xlu0 %12429
      %v12463 = vsel %vm2319, %v7247, %v12112
      %v12464 = vsel %vm2319, %v7248, %v12114
      %v12465 = vsel %vm2319, %v7249, %v12116
      %v12466 = vsel %vm2319, %v7250, %v12118
      %v12467 = vsel %vm2319, %v7251, %v12120
      %v12468 = vsel %vm2319, %v7252, %v12122
      %v12469 = vsel %vm2319, %v7253, %v12124
      %v12470 = vsel %vm2319, %v7254, %v12126
      %v12471 = vsel %vm2319, %v7255, %v12128
      %v12472 = vsel %vm2319, %v7256, %v12130
      %v12473 = vsel %vm2319, %v7257, %v12132
      %v12474 = vsel %vm2319, %v7258, %v12134
      %v12475 = vsel %vm2319, %v7259, %v12136
      %v12476 = vsel %vm2319, %v7260, %v12138
      %v12477 = vsel %vm2319, %v7261, %v12140
      %v12478 = vsel %vm2319, %v7262, %v12142
      %v12479 = vsel %vm2319, %v7263, %v12144
      %v12480 = vsel %vm2319, %v7264, %v12146
      %v12481 = vsel %vm2319, %v7265, %v12148
      %v12482 = vsel %vm2319, %v7266, %v12150
      %v12483 = vsel %vm2319, %v7267, %v12152
      %v12484 = vsel %vm2319, %v7268, %v12154
      %v12485 = vsel %vm2319, %v7269, %v12156
      %v12486 = vsel %vm2319, %v7270, %v12158
      %v12487 = vsel %vm2319, %v7271, %v12160
      %v12488 = vsel %vm2319, %v7272, %v12162
      %v12489 = vsel %vm2319, %v7273, %v12164
      %v12490 = vsel %vm2319, %v7274, %v12166
      %v12491 = vsel %vm2319, %v7275, %v12168
      %v12492 = vsel %vm2319, %v7276, %v12170
      %v12493 = vsel %vm2319, %v7277, %v12172
      %v12494 = vsel %vm2319, %v7278, %v12174
      %vm12495 = vcmask 523264
      %v12496 = vsel %vm12495, %v12463, %v12240
      %v12497 = vsel %vm12495, %v12464, %v12242
      %v12498 = vsel %vm12495, %v12465, %v12244
      %v12499 = vsel %vm12495, %v12466, %v12246
      %v12500 = vsel %vm12495, %v12467, %v12248
      %v12501 = vsel %vm12495, %v12468, %v12250
      %v12502 = vsel %vm12495, %v12469, %v12252
      %v12503 = vsel %vm12495, %v12470, %v12254
      %v12504 = vsel %vm12495, %v12471, %v12256
      %v12505 = vsel %vm12495, %v12472, %v12258
      %v12506 = vsel %vm12495, %v12473, %v12260
      %v12507 = vsel %vm12495, %v12474, %v12262
      %v12508 = vsel %vm12495, %v12475, %v12264
      %v12509 = vsel %vm12495, %v12476, %v12266
      %v12510 = vsel %vm12495, %v12477, %v12268
      %v12511 = vsel %vm12495, %v12478, %v12270
      %v12512 = vsel %vm12495, %v12479, %v12272
      %v12513 = vsel %vm12495, %v12480, %v12274
      %v12514 = vsel %vm12495, %v12481, %v12276
      %v12515 = vsel %vm12495, %v12482, %v12278
      %v12516 = vsel %vm12495, %v12483, %v12280
      %v12517 = vsel %vm12495, %v12484, %v12282
      %v12518 = vsel %vm12495, %v12485, %v12284
      %v12519 = vsel %vm12495, %v12486, %v12286
      %v12520 = vsel %vm12495, %v12487, %v12288
      %v12521 = vsel %vm12495, %v12488, %v12290
      %v12522 = vsel %vm12495, %v12489, %v12292
      %v12523 = vsel %vm12495, %v12490, %v12294
      %v12524 = vsel %vm12495, %v12491, %v12296
      %v12525 = vsel %vm12495, %v12492, %v12298
      %v12526 = vsel %vm12495, %v12493, %v12300
      %v12527 = vsel %vm12495, %v12494, %v12302
      %vm12528 = vcmask 785408
      %v12529 = vsel %vm12528, %v12496, %v12368
      %v12530 = vsel %vm12528, %v12497, %v12370
      %v12531 = vsel %vm12528, %v12498, %v12372
      %v12532 = vsel %vm12528, %v12499, %v12374
      %v12533 = vsel %vm12528, %v12500, %v12376
      %v12534 = vsel %vm12528, %v12501, %v12378
      %v12535 = vsel %vm12528, %v12502, %v12380
      %v12536 = vsel %vm12528, %v12503, %v12382
      %v12537 = vsel %vm12528, %v12504, %v12384
      %v12538 = vsel %vm12528, %v12505, %v12386
      %v12539 = vsel %vm12528, %v12506, %v12388
      %v12540 = vsel %vm12528, %v12507, %v12390
      %v12541 = vsel %vm12528, %v12508, %v12392
      %v12542 = vsel %vm12528, %v12509, %v12394
      %v12543 = vsel %vm12528, %v12510, %v12396
      %v12544 = vsel %vm12528, %v12511, %v12398
      %v12545 = vsel %vm12528, %v12512, %v12400
      %v12546 = vsel %vm12528, %v12513, %v12402
      %v12547 = vsel %vm12528, %v12514, %v12404
      %v12548 = vsel %vm12528, %v12515, %v12406
      %v12549 = vsel %vm12528, %v12516, %v12408
      %v12550 = vsel %vm12528, %v12517, %v12410
      %v12551 = vsel %vm12528, %v12518, %v12412
      %v12552 = vsel %vm12528, %v12519, %v12414
      %v12553 = vsel %vm12528, %v12520, %v12416
      %v12554 = vsel %vm12528, %v12521, %v12418
      %v12555 = vsel %vm12528, %v12522, %v12420
      %v12556 = vsel %vm12528, %v12523, %v12422
      %v12557 = vsel %vm12528, %v12524, %v12424
      %v12558 = vsel %vm12528, %v12525, %v12426
      %v12559 = vsel %vm12528, %v12526, %v12428
      %v12560 = vsel %vm12528, %v12527, %v12430
      %v12561 = vld [vmem:[%s15] sm:$0xff]
      %v12562 = vld [vmem:[%s15 + $0x8] sm:$0xff]
      %v12563 = vld [vmem:[%s15 + $0x10] sm:$0xff]
      %v12564 = vld [vmem:[%s15 + $0x18] sm:$0xff]
      %v12565 = vld [vmem:[%s15 + $0x20] sm:$0xff]
      %v12566 = vld [vmem:[%s15 + $0x28] sm:$0xff]
      %v12567 = vld [vmem:[%s15 + $0x30] sm:$0xff]
      %v12568 = vld [vmem:[%s15 + $0x38] sm:$0xff]
      %v12569 = vld [vmem:[%s15 + $0x40] sm:$0xff]
      %v12570 = vld [vmem:[%s15 + $0x48] sm:$0xff]
      %v12571 = vld [vmem:[%s15 + $0x50] sm:$0xff]
      %v12572 = vld [vmem:[%s15 + $0x58] sm:$0xff]
      %v12573 = vld [vmem:[%s15 + $0x60] sm:$0x3]
      %vm12574 = vcmask 801792
      %v12576 = vsel %vm12574, %v12529, 0
      %v12579 = vsel %vm12574, %v12530, 0
      %v12582 = vsel %vm12574, %v12531, 0
      %v12585 = vsel %vm12574, %v12532, 0
      %v12588 = vsel %vm12574, %v12533, 0
      %v12591 = vsel %vm12574, %v12534, 0
      %v12594 = vsel %vm12574, %v12535, 0
      %v12597 = vsel %vm12574, %v12536, 0
      %v12600 = vsel %vm12574, %v12537, 0
      %v12603 = vsel %vm12574, %v12538, 0
      %v12606 = vsel %vm12574, %v12539, 0
      %v12609 = vsel %vm12574, %v12540, 0
      %v12612 = vsel %vm12574, %v12541, 0
      %v12615 = vsel %vm12574, %v12542, 0
      %v12618 = vsel %vm12574, %v12543, 0
      %v12621 = vsel %vm12574, %v12544, 0
      %v12624 = vsel %vm12574, %v12545, 0
      %v12627 = vsel %vm12574, %v12546, 0
      %v12630 = vsel %vm12574, %v12547, 0
      %v12633 = vsel %vm12574, %v12548, 0
      %v12636 = vsel %vm12574, %v12549, 0
      %v12639 = vsel %vm12574, %v12550, 0
      %v12642 = vsel %vm12574, %v12551, 0
      %v12645 = vsel %vm12574, %v12552, 0
      %v12648 = vsel %vm12574, %v12553, 0
      %v12651 = vsel %vm12574, %v12554, 0
      %v12654 = vsel %vm12574, %v12555, 0
      %v12657 = vsel %vm12574, %v12556, 0
      %v12660 = vsel %vm12574, %v12557, 0
      %v12663 = vsel %vm12574, %v12558, 0
      %v12666 = vsel %vm12574, %v12559, 0
      %v12669 = vsel %vm12574, %v12560, 0
      %vm12671 = vcmask 1041408
      %v12673 = vsel %vm12671, %v12573, 0
      %12675 = vmatprep.subr.mxu0 0.0
      %12676 = vmatpush1.msra.mxu0 %v12561
      %12677 = vmatprep.subr.mxu0 0.0
      %12678 = vmatpush1.msra.mxu0 %v12562
      %12679 = vmatprep.subr.mxu0 0.0
      %12680 = vmatpush1.msra.mxu0 %v12563
      %12681 = vmatprep.subr.mxu0 0.0
      %12682 = vmatpush1.msra.mxu0 %v12564
      %12683 = vmatprep.subr.mxu0 0.0
      %12684 = vmatpush1.msra.mxu0 %v12565
      %12685 = vmatprep.subr.mxu0 0.0
      %12686 = vmatpush1.msra.mxu0 %v12566
      %12687 = vmatprep.subr.mxu0 0.0
      %12688 = vmatpush1.msra.mxu0 %v12567
      %12689 = vmatprep.subr.mxu0 0.0
      %12690 = vmatpush1.msra.mxu0 %v12568
      %12691 = vmatprep.subr.mxu0 0.0
      %12692 = vmatpush1.msra.mxu0 %v12569
      %12693 = vmatprep.subr.mxu0 0.0
      %12694 = vmatpush1.msra.mxu0 %v12570
      %12695 = vmatprep.subr.mxu0 0.0
      %12696 = vmatpush1.msra.mxu0 %v12571
      %12697 = vmatprep.subr.mxu0 0.0
      %12698 = vmatpush1.msra.mxu0 %v12572
      %12699 = vmatprep.subr.mxu0 0.0
      %12700 = vmatpush1.msra.mxu0 %v12673
      %12701 = vmatprep.subr.mxu0 0.0
      %12702 = vmatpush1.msra.mxu0 0.0
      %12703 = vmatprep.subr.mxu0 0.0
      %12704 = vmatpush1.msra.mxu0 0.0
      %12705 = vmatprep.subr.mxu0 0.0
      %12706 = vmatpush1.msra.mxu0 0.0
      %12707 = vmatprep.subr.mxu0 0.0
      %12708 = vmatpush1.msra.mxu0 0.0
      %12709 = vmatprep.subr.mxu0 0.0
      %12710 = vmatpush1.msra.mxu0 0.0
      %12711 = vmatprep.subr.mxu0 0.0
      %12712 = vmatpush1.msra.mxu0 0.0
      %12713 = vmatprep.subr.mxu0 0.0
      %12714 = vmatpush1.msra.mxu0 0.0
      %12715 = vmatprep.subr.mxu0 0.0
      %12716 = vmatpush1.msra.mxu0 0.0
      %12717 = vmatprep.subr.mxu0 0.0
      %12718 = vmatpush1.msra.mxu0 0.0
      %12719 = vmatprep.subr.mxu0 0.0
      %12720 = vmatpush1.msra.mxu0 0.0
      %12721 = vmatprep.subr.mxu0 0.0
      %12722 = vmatpush1.msra.mxu0 0.0
      %12723 = vmatprep.subr.mxu0 0.0
      %12724 = vmatpush1.msra.mxu0 0.0
      %12725 = vmatprep.subr.mxu0 0.0
      %12726 = vmatpush1.msra.mxu0 0.0
      %12727 = vmatprep.subr.mxu0 0.0
      %12728 = vmatpush1.msra.mxu0 0.0
      %12729 = vmatprep.subr.mxu0 0.0
      %12730 = vmatpush1.msra.mxu0 0.0
      %12731 = vmatprep.subr.mxu0 0.0
      %12732 = vmatpush1.msra.mxu0 0.0
      %12733 = vmatprep.subr.mxu0 0.0
      %12734 = vmatpush1.msra.mxu0 0.0
      %12735 = vmatprep.subr.mxu0 0.0
      %12736 = vmatpush1.msra.mxu0 0.0
      %12737 = vmatprep.subr.mxu0 0.0
      %12738 = vmatpush1.msra.mxu0 0.0
      %12739 = vmatprep.mubr.f32.mxu0 0.0
      %12740 = vmatmul.mubr.f32.gmra.mrb[0].mxu0 %v12576
      %v12741 = vpop.f32.mrb[0].mxu0
      %v12742 = vadd.f32 0.0, %v12741
      %v12743 = vpop.f32.mrb[0].mxu0
      %12744 = vmatprep.mubr.f32.mxu0 0.0
      %12745 = vmatmul.mubr.f32.gmra.mrb[0].mxu0 %v12579
      %v12746 = vpop.f32.mrb[0].mxu0
      %v12747 = vadd.f32 0.0, %v12746
      %v12748 = vpop.f32.mrb[0].mxu0
      %12749 = vmatprep.mubr.f32.mxu0 0.0
      %12750 = vmatmul.mubr.f32.gmra.mrb[0].mxu0 %v12582
      %v12751 = vpop.f32.mrb[0].mxu0
      %v12752 = vadd.f32 0.0, %v12751
      %v12753 = vpop.f32.mrb[0].mxu0
      %12754 = vmatprep.mubr.f32.mxu0 0.0
      %12755 = vmatmul.mubr.f32.gmra.mrb[0].mxu0 %v12585
      %v12756 = vpop.f32.mrb[0].mxu0
      %v12757 = vadd.f32 0.0, %v12756
      %v12758 = vpop.f32.mrb[0].mxu0
      %12759 = vmatprep.mubr.f32.mxu0 0.0
      %12760 = vmatmul.mubr.f32.gmra.mrb[0].mxu0 %v12588
      %v12761 = vpop.f32.mrb[0].mxu0
      %v12762 = vadd.f32 0.0, %v12761
      %v12763 = vpop.f32.mrb[0].mxu0
      %12764 = vmatprep.mubr.f32.mxu0 0.0
      %12765 = vmatmul.mubr.f32.gmra.mrb[0].mxu0 %v12591
      %v12766 = vpop.f32.mrb[0].mxu0
      %v12767 = vadd.f32 0.0, %v12766
      %v12768 = vpop.f32.mrb[0].mxu0
      %12769 = vmatprep.mubr.f32.mxu0 0.0
      %12770 = vmatmul.mubr.f32.gmra.mrb[0].mxu0 %v12594
      %v12771 = vpop.f32.mrb[0].mxu0
      %v12772 = vadd.f32 0.0, %v12771
      %v12773 = vpop.f32.mrb[0].mxu0
      %12774 = vmatprep.mubr.f32.mxu0 0.0
      %12775 = vmatmul.mubr.f32.gmra.mrb[0].mxu0 %v12597
      %v12776 = vpop.f32.mrb[0].mxu0
      %v12777 = vadd.f32 0.0, %v12776
      %v12778 = vpop.f32.mrb[0].mxu0
      %12779 = vmatprep.mubr.f32.mxu0 0.0
      %12780 = vmatmul.mubr.f32.gmra.mrb[0].mxu0 %v12600
      %v12781 = vpop.f32.mrb[0].mxu0
      %v12782 = vadd.f32 0.0, %v12781
      %v12783 = vpop.f32.mrb[0].mxu0
      %12784 = vmatprep.mubr.f32.mxu0 0.0
      %12785 = vmatmul.mubr.f32.gmra.mrb[0].mxu0 %v12603
      %v12786 = vpop.f32.mrb[0].mxu0
      %v12787 = vadd.f32 0.0, %v12786
      %v12788 = vpop.f32.mrb[0].mxu0
      %12789 = vmatprep.mubr.f32.mxu0 0.0
      %12790 = vmatmul.mubr.f32.gmra.mrb[0].mxu0 %v12606
      %v12791 = vpop.f32.mrb[0].mxu0
      %v12792 = vadd.f32 0.0, %v12791
      %v12793 = vpop.f32.mrb[0].mxu0
      %12794 = vmatprep.mubr.f32.mxu0 0.0
      %12795 = vmatmul.mubr.f32.gmra.mrb[0].mxu0 %v12609
      %v12796 = vpop.f32.mrb[0].mxu0
      %v12797 = vadd.f32 0.0, %v12796
      %v12798 = vpop.f32.mrb[0].mxu0
      %12799 = vmatprep.mubr.f32.mxu0 0.0
      %12800 = vmatmul.mubr.f32.gmra.mrb[0].mxu0 %v12612
      %v12801 = vpop.f32.mrb[0].mxu0
      %v12802 = vadd.f32 0.0, %v12801
      %v12803 = vpop.f32.mrb[0].mxu0
      %12804 = vmatprep.mubr.f32.mxu0 0.0
      %12805 = vmatmul.mubr.f32.gmra.mrb[0].mxu0 %v12615
      %v12806 = vpop.f32.mrb[0].mxu0
      %v12807 = vadd.f32 0.0, %v12806
      %v12808 = vpop.f32.mrb[0].mxu0
      %12809 = vmatprep.mubr.f32.mxu0 0.0
      %12810 = vmatmul.mubr.f32.gmra.mrb[0].mxu0 %v12618
      %v12811 = vpop.f32.mrb[0].mxu0
      %v12812 = vadd.f32 0.0, %v12811
      %v12813 = vpop.f32.mrb[0].mxu0
      %12814 = vmatprep.mubr.f32.mxu0 0.0
      %12815 = vmatmul.mubr.f32.gmra.mrb[0].mxu0 %v12621
      %v12816 = vpop.f32.mrb[0].mxu0
      %v12817 = vadd.f32 0.0, %v12816
      %v12818 = vpop.f32.mrb[0].mxu0
      %12819 = vmatprep.mubr.f32.mxu0 0.0
      %12820 = vmatmul.mubr.f32.gmra.mrb[0].mxu0 %v12624
      %v12821 = vpop.f32.mrb[0].mxu0
      %v12822 = vadd.f32 0.0, %v12821
      %v12823 = vpop.f32.mrb[0].mxu0
      %12824 = vmatprep.mubr.f32.mxu0 0.0
      %12825 = vmatmul.mubr.f32.gmra.mrb[0].mxu0 %v12627
      %v12826 = vpop.f32.mrb[0].mxu0
      %v12827 = vadd.f32 0.0, %v12826
      %v12828 = vpop.f32.mrb[0].mxu0
      %12829 = vmatprep.mubr.f32.mxu0 0.0
      %12830 = vmatmul.mubr.f32.gmra.mrb[0].mxu0 %v12630
      %v12831 = vpop.f32.mrb[0].mxu0
      %v12832 = vadd.f32 0.0, %v12831
      %v12833 = vpop.f32.mrb[0].mxu0
      %12834 = vmatprep.mubr.f32.mxu0 0.0
      %12835 = vmatmul.mubr.f32.gmra.mrb[0].mxu0 %v12633
      %v12836 = vpop.f32.mrb[0].mxu0
      %v12837 = vadd.f32 0.0, %v12836
      %v12838 = vpop.f32.mrb[0].mxu0
      %12839 = vmatprep.mubr.f32.mxu0 0.0
      %12840 = vmatmul.mubr.f32.gmra.mrb[0].mxu0 %v12636
      %v12841 = vpop.f32.mrb[0].mxu0
      %v12842 = vadd.f32 0.0, %v12841
      %v12843 = vpop.f32.mrb[0].mxu0
      %12844 = vmatprep.mubr.f32.mxu0 0.0
      %12845 = vmatmul.mubr.f32.gmra.mrb[0].mxu0 %v12639
      %v12846 = vpop.f32.mrb[0].mxu0
      %v12847 = vadd.f32 0.0, %v12846
      %v12848 = vpop.f32.mrb[0].mxu0
      %12849 = vmatprep.mubr.f32.mxu0 0.0
      %12850 = vmatmul.mubr.f32.gmra.mrb[0].mxu0 %v12642
      %v12851 = vpop.f32.mrb[0].mxu0
      %v12852 = vadd.f32 0.0, %v12851
      %v12853 = vpop.f32.mrb[0].mxu0
      %12854 = vmatprep.mubr.f32.mxu0 0.0
      %12855 = vmatmul.mubr.f32.gmra.mrb[0].mxu0 %v12645
      %v12856 = vpop.f32.mrb[0].mxu0
      %v12857 = vadd.f32 0.0, %v12856
      %v12858 = vpop.f32.mrb[0].mxu0
      %12859 = vmatprep.mubr.f32.mxu0 0.0
      %12860 = vmatmul.mubr.f32.gmra.mrb[0].mxu0 %v12648
      %v12861 = vpop.f32.mrb[0].mxu0
      %v12862 = vadd.f32 0.0, %v12861
      %v12863 = vpop.f32.mrb[0].mxu0
      %12864 = vmatprep.mubr.f32.mxu0 0.0
      %12865 = vmatmul.mubr.f32.gmra.mrb[0].mxu0 %v12651
      %v12866 = vpop.f32.mrb[0].mxu0
      %v12867 = vadd.f32 0.0, %v12866
      %v12868 = vpop.f32.mrb[0].mxu0
      %12869 = vmatprep.mubr.f32.mxu0 0.0
      %12870 = vmatmul.mubr.f32.gmra.mrb[0].mxu0 %v12654
      %v12871 = vpop.f32.mrb[0].mxu0
      %v12872 = vadd.f32 0.0, %v12871
      %v12873 = vpop.f32.mrb[0].mxu0
      %12874 = vmatprep.mubr.f32.mxu0 0.0
      %12875 = vmatmul.mubr.f32.gmra.mrb[0].mxu0 %v12657
      %v12876 = vpop.f32.mrb[0].mxu0
      %v12877 = vadd.f32 0.0, %v12876
      %v12878 = vpop.f32.mrb[0].mxu0
      %12879 = vmatprep.mubr.f32.mxu0 0.0
      %12880 = vmatmul.mubr.f32.gmra.mrb[0].mxu0 %v12660
      %v12881 = vpop.f32.mrb[0].mxu0
      %v12882 = vadd.f32 0.0, %v12881
      %v12883 = vpop.f32.mrb[0].mxu0
      %12884 = vmatprep.mubr.f32.mxu0 0.0
      %12885 = vmatmul.mubr.f32.gmra.mrb[0].mxu0 %v12663
      %v12886 = vpop.f32.mrb[0].mxu0
      %v12887 = vadd.f32 0.0, %v12886
      %v12888 = vpop.f32.mrb[0].mxu0
      %12889 = vmatprep.mubr.f32.mxu0 0.0
      %12890 = vmatmul.mubr.f32.gmra.mrb[0].mxu0 %v12666
      %v12891 = vpop.f32.mrb[0].mxu0
      %v12892 = vadd.f32 0.0, %v12891
      %v12893 = vpop.f32.mrb[0].mxu0
      %12894 = vmatprep.mubr.f32.mxu0 0.0
      %12895 = vmatmul.mubr.f32.gmra.mrb[0].mxu0 %v12669
      %v12896 = vpop.f32.mrb[0].mxu0
      %v12897 = vadd.f32 0.0, %v12896
      %v12898 = vpop.f32.mrb[0].mxu0
      %12899 = vdwg.mxu0
      %v12900 = vsub.f32 0.0, %v12742
      %v12901 = vsub.f32 0.0, %v12747
      %v12902 = vsub.f32 0.0, %v12752
      %v12903 = vsub.f32 0.0, %v12757
      %v12904 = vsub.f32 0.0, %v12762
      %v12905 = vsub.f32 0.0, %v12767
      %v12906 = vsub.f32 0.0, %v12772
      %v12907 = vsub.f32 0.0, %v12777
      %v12908 = vsub.f32 0.0, %v12782
      %v12909 = vsub.f32 0.0, %v12787
      %v12910 = vsub.f32 0.0, %v12792
      %v12911 = vsub.f32 0.0, %v12797
      %v12912 = vsub.f32 0.0, %v12802
      %v12913 = vsub.f32 0.0, %v12807
      %v12914 = vsub.f32 0.0, %v12812
      %v12915 = vsub.f32 0.0, %v12817
      %v12916 = vsub.f32 0.0, %v12822
      %v12917 = vsub.f32 0.0, %v12827
      %v12918 = vsub.f32 0.0, %v12832
      %v12919 = vsub.f32 0.0, %v12837
      %v12920 = vsub.f32 0.0, %v12842
      %v12921 = vsub.f32 0.0, %v12847
      %v12922 = vsub.f32 0.0, %v12852
      %v12923 = vsub.f32 0.0, %v12857
      %v12924 = vsub.f32 0.0, %v12862
      %v12925 = vsub.f32 0.0, %v12867
      %v12926 = vsub.f32 0.0, %v12872
      %v12927 = vsub.f32 0.0, %v12877
      %v12928 = vsub.f32 0.0, %v12882
      %v12929 = vsub.f32 0.0, %v12887
      %v12930 = vsub.f32 0.0, %v12892
      %v12931 = vsub.f32 0.0, %v12897
      %v12932 = vmul.f32 %v12900, 1.442695
      %v12933 = vpow.pop %v12932
      %v12934 = vmul.f32 %v12901, 1.442695
      %v12935 = vpow.pop %v12934
      %v12936 = vmul.f32 %v12902, 1.442695
      %v12937 = vpow.pop %v12936
      %v12938 = vmul.f32 %v12903, 1.442695
      %v12939 = vpow.pop %v12938
      %v12940 = vmul.f32 %v12904, 1.442695
      %v12941 = vpow.pop %v12940
      %v12942 = vmul.f32 %v12905, 1.442695
      %v12943 = vpow.pop %v12942
      %v12944 = vmul.f32 %v12906, 1.442695
      %v12945 = vpow.pop %v12944
      %v12946 = vmul.f32 %v12907, 1.442695
      %v12947 = vpow.pop %v12946
      %v12948 = vmul.f32 %v12908, 1.442695
      %v12949 = vpow.pop %v12948
      %v12950 = vmul.f32 %v12909, 1.442695
      %v12951 = vpow.pop %v12950
      %v12952 = vmul.f32 %v12910, 1.442695
      %v12953 = vpow.pop %v12952
      %v12954 = vmul.f32 %v12911, 1.442695
      %v12955 = vpow.pop %v12954
      %v12956 = vmul.f32 %v12912, 1.442695
      %v12957 = vpow.pop %v12956
      %v12958 = vmul.f32 %v12913, 1.442695
      %v12959 = vpow.pop %v12958
      %v12960 = vmul.f32 %v12914, 1.442695
      %v12961 = vpow.pop %v12960
      %v12962 = vmul.f32 %v12915, 1.442695
      %v12963 = vpow.pop %v12962
      %v12964 = vmul.f32 %v12916, 1.442695
      %v12965 = vpow.pop %v12964
      %v12966 = vmul.f32 %v12917, 1.442695
      %v12967 = vpow.pop %v12966
      %v12968 = vmul.f32 %v12918, 1.442695
      %v12969 = vpow.pop %v12968
      %v12970 = vmul.f32 %v12919, 1.442695
      %v12971 = vpow.pop %v12970
      %v12972 = vmul.f32 %v12920, 1.442695
      %v12973 = vpow.pop %v12972
      %v12974 = vmul.f32 %v12921, 1.442695
      %v12975 = vpow.pop %v12974
      %v12976 = vmul.f32 %v12922, 1.442695
      %v12977 = vpow.pop %v12976
      %v12978 = vmul.f32 %v12923, 1.442695
      %v12979 = vpow.pop %v12978
      %v12980 = vmul.f32 %v12924, 1.442695
      %v12981 = vpow.pop %v12980
      %v12982 = vmul.f32 %v12925, 1.442695
      %v12983 = vpow.pop %v12982
      %v12984 = vmul.f32 %v12926, 1.442695
      %v12985 = vpow.pop %v12984
      %v12986 = vmul.f32 %v12927, 1.442695
      %v12987 = vpow.pop %v12986
      %v12988 = vmul.f32 %v12928, 1.442695
      %v12989 = vpow.pop %v12988
      %v12990 = vmul.f32 %v12929, 1.442695
      %v12991 = vpow.pop %v12990
      %v12992 = vmul.f32 %v12930, 1.442695
      %v12993 = vpow.pop %v12992
      %v12994 = vmul.f32 %v12931, 1.442695
      %v12995 = vpow.pop %v12994
      %v12996 = vadd.f32 %v12933, 1.0
      %v12997 = vadd.f32 %v12935, 1.0
      %v12998 = vadd.f32 %v12937, 1.0
      %v12999 = vadd.f32 %v12939, 1.0
      %v13000 = vadd.f32 %v12941, 1.0
      %v13001 = vadd.f32 %v12943, 1.0
      %v13002 = vadd.f32 %v12945, 1.0
      %v13003 = vadd.f32 %v12947, 1.0
      %v13004 = vadd.f32 %v12949, 1.0
      %v13005 = vadd.f32 %v12951, 1.0
      %v13006 = vadd.f32 %v12953, 1.0
      %v13007 = vadd.f32 %v12955, 1.0
      %v13008 = vadd.f32 %v12957, 1.0
      %v13009 = vadd.f32 %v12959, 1.0
      %v13010 = vadd.f32 %v12961, 1.0
      %v13011 = vadd.f32 %v12963, 1.0
      %v13012 = vadd.f32 %v12965, 1.0
      %v13013 = vadd.f32 %v12967, 1.0
      %v13014 = vadd.f32 %v12969, 1.0
      %v13015 = vadd.f32 %v12971, 1.0
      %v13016 = vadd.f32 %v12973, 1.0
      %v13017 = vadd.f32 %v12975, 1.0
      %v13018 = vadd.f32 %v12977, 1.0
      %v13019 = vadd.f32 %v12979, 1.0
      %v13020 = vadd.f32 %v12981, 1.0
      %v13021 = vadd.f32 %v12983, 1.0
      %v13022 = vadd.f32 %v12985, 1.0
      %v13023 = vadd.f32 %v12987, 1.0
      %v13024 = vadd.f32 %v12989, 1.0
      %v13025 = vadd.f32 %v12991, 1.0
      %v13026 = vadd.f32 %v12993, 1.0
      %v13027 = vadd.f32 %v12995, 1.0
      %v13028 = vrcp.pop %v12996
      %v13029 = vrcp.pop %v12997
      %v13030 = vrcp.pop %v12998
      %v13031 = vrcp.pop %v12999
      %v13032 = vrcp.pop %v13000
      %v13033 = vrcp.pop %v13001
      %v13034 = vrcp.pop %v13002
      %v13035 = vrcp.pop %v13003
      %v13036 = vrcp.pop %v13004
      %v13037 = vrcp.pop %v13005
      %v13038 = vrcp.pop %v13006
      %v13039 = vrcp.pop %v13007
      %v13040 = vrcp.pop %v13008
      %v13041 = vrcp.pop %v13009
      %v13042 = vrcp.pop %v13010
      %v13043 = vrcp.pop %v13011
      %v13044 = vrcp.pop %v13012
      %v13045 = vrcp.pop %v13013
      %v13046 = vrcp.pop %v13014
      %v13047 = vrcp.pop %v13015
      %v13048 = vrcp.pop %v13016
      %v13049 = vrcp.pop %v13017
      %v13050 = vrcp.pop %v13018
      %v13051 = vrcp.pop %v13019
      %v13052 = vrcp.pop %v13020
      %v13053 = vrcp.pop %v13021
      %v13054 = vrcp.pop %v13022
      %v13055 = vrcp.pop %v13023
      %v13056 = vrcp.pop %v13024
      %v13057 = vrcp.pop %v13025
      %v13058 = vrcp.pop %v13026
      %v13059 = vrcp.pop %v13027
      %13061 = vset.pattern.permute.xlu0 0
      %13062 = vperm.xlu0 %13061, %v13028
      %v13063 = vpop.permute.xlu0 %13062
      %13066 = vset.pattern.permute.xlu0 0
      %13067 = vperm.xlu0 %13066, %v13029
      %v13068 = vpop.permute.xlu0 %13067
      %13071 = vset.pattern.permute.xlu0 0
      %13072 = vperm.xlu0 %13071, %v13030
      %v13073 = vpop.permute.xlu0 %13072
      %13076 = vset.pattern.permute.xlu0 0
      %13077 = vperm.xlu0 %13076, %v13031
      %v13078 = vpop.permute.xlu0 %13077
      %13081 = vset.pattern.permute.xlu0 0
      %13082 = vperm.xlu0 %13081, %v13032
      %v13083 = vpop.permute.xlu0 %13082
      %13086 = vset.pattern.permute.xlu0 0
      %13087 = vperm.xlu0 %13086, %v13033
      %v13088 = vpop.permute.xlu0 %13087
      %13091 = vset.pattern.permute.xlu0 0
      %13092 = vperm.xlu0 %13091, %v13034
      %v13093 = vpop.permute.xlu0 %13092
      %13096 = vset.pattern.permute.xlu0 0
      %13097 = vperm.xlu0 %13096, %v13035
      %v13098 = vpop.permute.xlu0 %13097
      %13101 = vset.pattern.permute.xlu0 0
      %13102 = vperm.xlu0 %13101, %v13036
      %v13103 = vpop.permute.xlu0 %13102
      %13106 = vset.pattern.permute.xlu0 0
      %13107 = vperm.xlu0 %13106, %v13037
      %v13108 = vpop.permute.xlu0 %13107
      %13111 = vset.pattern.permute.xlu0 0
      %13112 = vperm.xlu0 %13111, %v13038
      %v13113 = vpop.permute.xlu0 %13112
      %13116 = vset.pattern.permute.xlu0 0
      %13117 = vperm.xlu0 %13116, %v13039
      %v13118 = vpop.permute.xlu0 %13117
      %13121 = vset.pattern.permute.xlu0 0
      %13122 = vperm.xlu0 %13121, %v13040
      %v13123 = vpop.permute.xlu0 %13122
      %13126 = vset.pattern.permute.xlu0 0
      %13127 = vperm.xlu0 %13126, %v13041
      %v13128 = vpop.permute.xlu0 %13127
      %13131 = vset.pattern.permute.xlu0 0
      %13132 = vperm.xlu0 %13131, %v13042
      %v13133 = vpop.permute.xlu0 %13132
      %13136 = vset.pattern.permute.xlu0 0
      %13137 = vperm.xlu0 %13136, %v13043
      %v13138 = vpop.permute.xlu0 %13137
      %13141 = vset.pattern.permute.xlu0 0
      %13142 = vperm.xlu0 %13141, %v13044
      %v13143 = vpop.permute.xlu0 %13142
      %13146 = vset.pattern.permute.xlu0 0
      %13147 = vperm.xlu0 %13146, %v13045
      %v13148 = vpop.permute.xlu0 %13147
      %13151 = vset.pattern.permute.xlu0 0
      %13152 = vperm.xlu0 %13151, %v13046
      %v13153 = vpop.permute.xlu0 %13152
      %13156 = vset.pattern.permute.xlu0 0
      %13157 = vperm.xlu0 %13156, %v13047
      %v13158 = vpop.permute.xlu0 %13157
      %13161 = vset.pattern.permute.xlu0 0
      %13162 = vperm.xlu0 %13161, %v13048
      %v13163 = vpop.permute.xlu0 %13162
      %13166 = vset.pattern.permute.xlu0 0
      %13167 = vperm.xlu0 %13166, %v13049
      %v13168 = vpop.permute.xlu0 %13167
      %13171 = vset.pattern.permute.xlu0 0
      %13172 = vperm.xlu0 %13171, %v13050
      %v13173 = vpop.permute.xlu0 %13172
      %13176 = vset.pattern.permute.xlu0 0
      %13177 = vperm.xlu0 %13176, %v13051
      %v13178 = vpop.permute.xlu0 %13177
      %13181 = vset.pattern.permute.xlu0 0
      %13182 = vperm.xlu0 %13181, %v13052
      %v13183 = vpop.permute.xlu0 %13182
      %13186 = vset.pattern.permute.xlu0 0
      %13187 = vperm.xlu0 %13186, %v13053
      %v13188 = vpop.permute.xlu0 %13187
      %13191 = vset.pattern.permute.xlu0 0
      %13192 = vperm.xlu0 %13191, %v13054
      %v13193 = vpop.permute.xlu0 %13192
      %13196 = vset.pattern.permute.xlu0 0
      %13197 = vperm.xlu0 %13196, %v13055
      %v13198 = vpop.permute.xlu0 %13197
      %13201 = vset.pattern.permute.xlu0 0
      %13202 = vperm.xlu0 %13201, %v13056
      %v13203 = vpop.permute.xlu0 %13202
      %13206 = vset.pattern.permute.xlu0 0
      %13207 = vperm.xlu0 %13206, %v13057
      %v13208 = vpop.permute.xlu0 %13207
      %13211 = vset.pattern.permute.xlu0 0
      %13212 = vperm.xlu0 %13211, %v13058
      %v13213 = vpop.permute.xlu0 %13212
      %13216 = vset.pattern.permute.xlu0 0
      %13217 = vperm.xlu0 %13216, %v13059
      %v13218 = vpop.permute.xlu0 %13217
      %13220 = vxpose.xlu0.b32.start [1/16] %v13063, 128
      %13221 = vxpose.xlu0.b32.cont [2/16] %v13068, 128
      %13222 = vxpose.xlu0.b32.cont [3/16] %v13073, 128
      %13223 = vxpose.xlu0.b32.cont [4/16] %v13078, 128
      %13224 = vxpose.xlu0.b32.cont [5/16] %v13083, 128
      %13225 = vxpose.xlu0.b32.cont [6/16] %v13088, 128
      %13226 = vxpose.xlu0.b32.cont [7/16] %v13093, 128
      %13227 = vxpose.xlu0.b32.cont [8/16] %v13098, 128
      %13228 = vxpose.xlu0.b32.cont [9/16] %v13103, 128
      %13229 = vxpose.xlu0.b32.cont [10/16] %v13108, 128
      %13230 = vxpose.xlu0.b32.cont [11/16] %v13113, 128
      %13231 = vxpose.xlu0.b32.cont [12/16] %v13118, 128
      %13232 = vxpose.xlu0.b32.cont [13/16] %v13123, 128
      %13233 = vxpose.xlu0.b32.cont [14/16] %v13128, 128
      %13234 = vxpose.xlu0.b32.cont [15/16] %v13133, 128
      %13235 = vxpose.xlu0.b32.end [16/16] %v13138, 128
      %v13236 = vpop.trf.xlu0
      %v13237 = vpop.trf.xlu0
      %v13238 = vpop.trf.xlu0
      %v13239 = vpop.trf.xlu0
      %v13240 = vpop.trf.xlu0
      %v13241 = vpop.trf.xlu0
      %v13242 = vpop.trf.xlu0
      %v13243 = vpop.trf.xlu0
      %v13244 = vpop.trf.xlu0
      %v13245 = vpop.trf.xlu0
      %v13246 = vpop.trf.xlu0
      %v13247 = vpop.trf.xlu0
      %v13248 = vpop.trf.xlu0
      %v13249 = vpop.trf.xlu0
      %v13250 = vpop.trf.xlu0
      %v13251 = vpop.trf.xlu0
      %13252 = vxpose.xlu0.b32.start [1/16] %v13143, 128
      %13253 = vxpose.xlu0.b32.cont [2/16] %v13148, 128
      %13254 = vxpose.xlu0.b32.cont [3/16] %v13153, 128
      %13255 = vxpose.xlu0.b32.cont [4/16] %v13158, 128
      %13256 = vxpose.xlu0.b32.cont [5/16] %v13163, 128
      %13257 = vxpose.xlu0.b32.cont [6/16] %v13168, 128
      %13258 = vxpose.xlu0.b32.cont [7/16] %v13173, 128
      %13259 = vxpose.xlu0.b32.cont [8/16] %v13178, 128
      %13260 = vxpose.xlu0.b32.cont [9/16] %v13183, 128
      %13261 = vxpose.xlu0.b32.cont [10/16] %v13188, 128
      %13262 = vxpose.xlu0.b32.cont [11/16] %v13193, 128
      %13263 = vxpose.xlu0.b32.cont [12/16] %v13198, 128
      %13264 = vxpose.xlu0.b32.cont [13/16] %v13203, 128
      %13265 = vxpose.xlu0.b32.cont [14/16] %v13208, 128
      %13266 = vxpose.xlu0.b32.cont [15/16] %v13213, 128
      %13267 = vxpose.xlu0.b32.end [16/16] %v13218, 128
      %v13268 = vpop.trf.xlu0
      %v13269 = vpop.trf.xlu0
      %v13270 = vpop.trf.xlu0
      %v13271 = vpop.trf.xlu0
      %v13272 = vpop.trf.xlu0
      %v13273 = vpop.trf.xlu0
      %v13274 = vpop.trf.xlu0
      %v13275 = vpop.trf.xlu0
      %v13276 = vpop.trf.xlu0
      %v13277 = vpop.trf.xlu0
      %v13278 = vpop.trf.xlu0
      %v13279 = vpop.trf.xlu0
      %v13280 = vpop.trf.xlu0
      %v13281 = vpop.trf.xlu0
      %v13282 = vpop.trf.xlu0
      %v13283 = vpop.trf.xlu0
      %v13284 = vmul.f32 %v3096, %v13236
      %v13285 = vmul.f32 %v3097, %v13268
      %v13286 = vmul.f32 %v3098, %v13237
      %v13287 = vmul.f32 %v3099, %v13269
      %v13288 = vld [vmem:[%s10] sm:$0xff]
      %v13289 = vld [vmem:[%s10 + $0x8] sm:$0xff]
      %v13291 = vsel %vm526, %v13288, 0
      %v13294 = vsel %vm526, %v13289, 0
      %13296 = vmatprep.subr.mxu0 %v533
      %13297 = vmatpush1.msra.mxu0 %v531
      %13298 = vmatprep.subr.mxu0 0.0
      %13299 = vmatpush1.msra.mxu0 0.0
      %13300 = vmatprep.subr.mxu0 0.0
      %13301 = vmatpush1.msra.mxu0 0.0
      %13302 = vmatprep.subr.mxu0 0.0
      %13303 = vmatpush1.msra.mxu0 0.0
      %13304 = vmatprep.subr.mxu0 0.0
      %13305 = vmatpush1.msra.mxu0 0.0
      %13306 = vmatprep.subr.mxu0 0.0
      %13307 = vmatpush1.msra.mxu0 0.0
      %13308 = vmatprep.subr.mxu0 0.0
      %13309 = vmatpush1.msra.mxu0 0.0
      %13310 = vmatprep.subr.mxu0 0.0
      %13311 = vmatpush1.msra.mxu0 0.0
      %13312 = vmatprep.subr.mxu0 0.0
      %13313 = vmatpush1.msra.mxu0 0.0
      %13314 = vmatprep.subr.mxu0 0.0
      %13315 = vmatpush1.msra.mxu0 0.0
      %13316 = vmatprep.subr.mxu0 0.0
      %13317 = vmatpush1.msra.mxu0 0.0
      %13318 = vmatprep.subr.mxu0 0.0
      %13319 = vmatpush1.msra.mxu0 0.0
      %13320 = vmatprep.subr.mxu0 0.0
      %13321 = vmatpush1.msra.mxu0 0.0
      %13322 = vmatprep.subr.mxu0 0.0
      %13323 = vmatpush1.msra.mxu0 0.0
      %13324 = vmatprep.subr.mxu0 0.0
      %13325 = vmatpush1.msra.mxu0 0.0
      %13326 = vmatprep.subr.mxu0 0.0
      %13327 = vmatpush1.msra.mxu0 0.0
      %13328 = vmatprep.subr.mxu0 0.0
      %13329 = vmatpush1.msra.mxu0 0.0
      %13330 = vmatprep.subr.mxu0 0.0
      %13331 = vmatpush1.msra.mxu0 0.0
      %13332 = vmatprep.subr.mxu0 0.0
      %13333 = vmatpush1.msra.mxu0 0.0
      %13334 = vmatprep.subr.mxu0 0.0
      %13335 = vmatpush1.msra.mxu0 0.0
      %13336 = vmatprep.subr.mxu0 0.0
      %13337 = vmatpush1.msra.mxu0 0.0
      %13338 = vmatprep.subr.mxu0 0.0
      %13339 = vmatpush1.msra.mxu0 0.0
      %13340 = vmatprep.subr.mxu0 0.0
      %13341 = vmatpush1.msra.mxu0 0.0
      %13342 = vmatprep.subr.mxu0 0.0
      %13343 = vmatpush1.msra.mxu0 0.0
      %13344 = vmatprep.subr.mxu0 0.0
      %13345 = vmatpush1.msra.mxu0 0.0
      %13346 = vmatprep.subr.mxu0 0.0
      %13347 = vmatpush1.msra.mxu0 0.0
      %13348 = vmatprep.subr.mxu0 0.0
      %13349 = vmatpush1.msra.mxu0 0.0
      %13350 = vmatprep.subr.mxu0 0.0
      %13351 = vmatpush1.msra.mxu0 0.0
      %13352 = vmatprep.subr.mxu0 0.0
      %13353 = vmatpush1.msra.mxu0 0.0
      %13354 = vmatprep.subr.mxu0 0.0
      %13355 = vmatpush1.msra.mxu0 0.0
      %13356 = vmatprep.subr.mxu0 0.0
      %13357 = vmatpush1.msra.mxu0 0.0
      %13358 = vmatprep.subr.mxu0 0.0
      %13359 = vmatpush1.msra.mxu0 0.0
      %13360 = vmatprep.mubr.f32.mxu0 0.0
      %13361 = vmatmul.mubr.f32.gmra.mrb[0].mxu0 %v13291
      %v13362 = vpop.f32.mrb[0].mxu0
      %v13363 = vadd.f32 0.0, %v13362
      %v13364 = vpop.f32.mrb[0].mxu0
      %v13365 = vadd.f32 0.0, %v13364
      %13366 = vmatprep.mubr.f32.mxu0 0.0
      %13367 = vmatmul.mubr.f32.gmra.mrb[0].mxu0 %v13294
      %v13368 = vpop.f32.mrb[0].mxu0
      %v13369 = vadd.f32 0.0, %v13368
      %v13370 = vpop.f32.mrb[0].mxu0
      %v13371 = vadd.f32 0.0, %v13370
      %13372 = vdwg.mxu0
      %v13373 = vld [vmem:[%s11] sm:$0xff]
      %v13374 = vld [vmem:[%s11 + $0x8] sm:$0xff]
      %13376 = vset.pattern.permute.xlu0 0
      %13377 = vperm.xlu0 %13376, %v13373
      %v13378 = vpop.permute.xlu0 %13377
      %13381 = vset.pattern.permute.xlu0 0
      %13382 = vperm.xlu0 %13381, %v13374
      %v13383 = vpop.permute.xlu0 %13382
      %v13385 = vmul.f32 %v13363, %v13378
      %v13386 = vmul.f32 %v13365, %v13378
      %v13387 = vmul.f32 %v13369, %v13383
      %v13388 = vmul.f32 %v13371, %v13383
      %v13389 = vld [vmem:[%s12] sm:$0xff]
      %v13390 = vld [vmem:[%s12 + $0x8] sm:$0xff]
      %13392 = vset.pattern.permute.xlu0 0
      %13393 = vperm.xlu0 %13392, %v13389
      %v13394 = vpop.permute.xlu0 %13393
      %13397 = vset.pattern.permute.xlu0 0
      %13398 = vperm.xlu0 %13397, %v13390
      %v13399 = vpop.permute.xlu0 %13398
      %v13401 = vadd.f32 %v13385, %v13394
      %v13402 = vadd.f32 %v13386, %v13394
      %v13403 = vadd.f32 %v13387, %v13399
      %v13404 = vadd.f32 %v13388, %v13399
      %v13405 = vadd.f32 %v13284, %v13401
      %v13406 = vadd.f32 %v13285, %v13402
      %v13407 = vadd.f32 %v13286, %v13403
      %v13408 = vadd.f32 %v13287, %v13404
      %v13409 = vmax.f32 %v13405, 0.0
      %v13410 = vmax.f32 %v13406, 0.0
      %v13411 = vmax.f32 %v13407, 0.0
      %v13412 = vmax.f32 %v13408, 0.0
      %13413 = vst [vmem:[%s521] sm:$0xff] %v13409
      %13414 = vst [vmem:[%s521 + $0x8] sm:$0xff] %v13410
      %13415 = vst [vmem:[%s521 + $0x10] sm:$0xff] %v13411
      %13416 = vst [vmem:[%s521 + $0x18] sm:$0xff] %v13412
      %p13417 = scmp.lt.s32.totalorder %s27, 1
      %s13418 = scalar_select %p13417, %s27, 1
      %s13419 = smul.addr %s13418, 4
      %s13420 = smul.addr %s13419, 8
      %s13421 = scalar_lea.vmem %s16, %s13420
      // Predicated region
      $region85: #{bottleneck_forward.1} parent=83 // pred_check
        %p13422 = pneg %p386
      $region86: #{bottleneck_forward.1} parent=83 // pred_check_branch
        %13424 = sbr.rel (%p13422) target = $region88
      $region87: #{bottleneck_forward.1} parent=83 // pred_region
        _
      $region88: #{bottleneck_forward.1} parent=83 // pred_fallthru
        _
    $region84: #{bottleneck_forward.1} parent=5 // pred_fallthru
      _
    %p13425 = scmp.le.s32.totalorder 2, %s22
    // Predicated region
    $region89: #{bottleneck_forward.1} parent=5 // pred_check
      %p13426 = pneg %p13425
    $region90: #{bottleneck_forward.1} parent=5 // pred_check_branch
      %13428 = sbr.rel (%p13426) target = $region92
    $region91: #{bottleneck_forward.1} parent=5 // pred_region
      %s13429 = ssub.s32 %s22, 2
      // Predicated region
      $region93: #{bottleneck_forward.1} parent=91 // pred_check
        %p13430 = pneg %p392
      $region94: #{bottleneck_forward.1} parent=91 // pred_check_branch
        %13432 = sbr.rel (%p13430) target = $region96
      $region95: #{bottleneck_forward.1} parent=91 // pred_region
        %p13433 = scmp.lt.s32.totalorder %s28, 1
        %s13434 = scalar_select %p13433, %s28, 1
        %s13435 = smul.addr %s13434, 4
        %s13436 = smul.addr %s13435, 8
        %s13437 = scalar_lea.vmem %s16, %s13436
      $region96: #{bottleneck_forward.1} parent=91 // pred_fallthru
        _
    $region92: #{bottleneck_forward.1} parent=5 // pred_fallthru
      _
  $region6: #{bottleneck_forward.1} parent=0 // loop_footer
    %s26 = sadd.s32 1, %s22
  $region7: #{bottleneck_forward.1} parent=0 // loop_footer_branch
    %21 = sbr.rel target = $region3
  $region8: #{bottleneck_forward.1} parent=0 // loop_exit
    _

</llo_original>
